<compile_context>
chip_gen: v7x
topology: tpu7x:2x2x1
jax: 0.10.0
libtpu: 0.0.40
codegen_flags: <defaults>
</compile_context>

<pallas_src>
import jax
import jax.numpy as jnp
from jax.experimental import pallas as pl
from jax.experimental.pallas import tpu as pltpu

EMB = 8             # emb_size
N_SPARSE = 26       # number of sparse (categorical) fields (CIN assumes 26)
N_FILTERS = 12      # CIN filters per layer
N_FILTERS_PAD = 16  # pad 12 -> 16 so per-fl slices of A are sublane aligned
N_LAYERS = 3        # CIN depth
HIDDEN = (256, 128)
BN_EPS = 1e-5


def _round_up(x, m):
    return (x + m - 1) // m * m


# ----------------------------------------------------------------------------
# Fused kernel: CIN stack + DNN tower + output head, one batch tile per step.
#
# Layout (per batch tile of size bt, N = EMB * bt lanes):
#   x0t  : [1, 26, N] bf16   x0t[0, f, k*bt + b] = emb2[b, f, k]   (CIN domain)
#   x0ft : [208, bt]  bf16   x0ft[f*EMB + k, b]  = emb2[b, f, k]   (DNN domain)
#   lin  : [1, bt]    f32    first-order part, already * w_out_lin + b_out
#   Wr_l : [FL*16, 26] bf16  Wr_l[fl*16 + o, f0] = W_l[o, fl*26 + f0] (o<12)
#   bc_l / whc_l : [16, 1]   conv bias / CIN head weight, zero-padded rows 12..15
#   w1t/w2t : BN-folded, transposed DNN weights (bf16), b1c/b2c f32 columns.
# ----------------------------------------------------------------------------
def xdeepfm_kernel(x0t_ref, x0ft_ref, lin_ref,
                   wr0_ref, bc0_ref, wr1_ref, bc1_ref, wr2_ref, bc2_ref,
                   whc0_ref, whc1_ref, whc2_ref,
                   w1_ref, b1_ref, w2_ref, b2_ref, wdnn_ref,
                   out_ref):
    f32 = jnp.float32
    x0 = x0t_ref[0]                            # [26, N] bf16, lanes n = k*bt + b
    n_lanes = x0.shape[1]
    bt = out_ref.shape[1]
    emb = n_lanes // bt

    def cin_layer(xl, w_ref, b_ref):
        # out_l[o, n] = sum_{fl, f0} W_l[o, fl*26+f0] * xl[fl, n] * x0[f0, n] + b_l[o]
        # Step 1 (MXU, one matmul): A[(fl, o), n] = sum_f0 Wr[fl*16+o, f0] * x0[f0, n]
        # Step 2 (VPU): out_l = sum_fl A[fl*16:(fl+1)*16, :] * xl[fl, :] + b_l
        n_prev = w_ref.shape[0] // N_FILTERS_PAD
        a = jnp.dot(w_ref[...], x0, preferred_element_type=f32)     # [n_prev*16, N] f32
        acc = None
        for fl in range(n_prev):
            blk = a[fl * N_FILTERS_PAD:(fl + 1) * N_FILTERS_PAD, :] * xl[fl:fl + 1, :]
            acc = blk if acc is None else acc + blk
        return acc + b_ref[...]                 # [16, N] f32; rows 12..15 stay zero

    out0 = cin_layer(x0, wr0_ref, bc0_ref)      # [16, N]
    out1 = cin_layer(out0, wr1_ref, bc1_ref)    # [16, N]
    out2 = cin_layer(out1, wr2_ref, bc2_ref)    # [16, N]

    # Head, CIN branch: weight the feature-map rows (sublane reduce), then
    # sum-pool over the embedding dim = add the 8 lane-aligned bt-wide slices.
    u = (jnp.sum(out0 * whc0_ref[...], axis=0, keepdims=True)
         + jnp.sum(out1 * whc1_ref[...], axis=0, keepdims=True)
         + jnp.sum(out2 * whc2_ref[...], axis=0, keepdims=True))     # [1, N]
    cin_head = u[:, 0:bt]
    for k in range(1, emb):
        cin_head = cin_head + u[:, k * bt:(k + 1) * bt]              # [1, bt]

    # DNN tower in the transposed domain (batch in lanes), BN already folded.
    # TODO(synk): dropout is identity (inference mode); BN uses running stats.
    h = jnp.dot(w1_ref[...], x0ft_ref[...],
                preferred_element_type=f32) + b1_ref[...]            # [256, bt]
    h = jnp.maximum(h, 0.0)
    h = jnp.dot(w2_ref[...], h.astype(jnp.bfloat16),
                preferred_element_type=f32) + b2_ref[...]            # [128, bt]
    h = jnp.maximum(h, 0.0)
    dnn_head = jnp.sum(h * wdnn_ref[...], axis=0, keepdims=True)     # [1, bt]

    z = lin_ref[...] + cin_head + dnn_head                           # [1, bt]
    out_ref[...] = jax.nn.sigmoid(z)


# ----------------------------------------------------------------------------
# Parameter preparation: CIN weight re-layout + zero-padding, BN folding,
# weight transposes, bf16 casts.  Done once, outside the kernel.
# ----------------------------------------------------------------------------
def prepare_params(p):
    kp = {
        "emb1": p["emb1"], "emb2": p["emb2"],
        "wd": p["wd"], "bd": p["bd"],
        "w_out_lin": p["w_out_lin"], "b_out": p["b_out"],
    }
    fls = [N_SPARSE, N_FILTERS, N_FILTERS]
    pad_o = N_FILTERS_PAD - N_FILTERS
    wr, bc, whc = [], [], []
    for l in range(N_LAYERS):
        w = p["cin_w"][l].reshape(N_FILTERS, fls[l], N_SPARSE).transpose(1, 0, 2)
        w = jnp.pad(w, ((0, 0), (0, pad_o), (0, 0)))                 # [FL, 16, 26]
        wr.append(w.reshape(fls[l] * N_FILTERS_PAD, N_SPARSE).astype(jnp.bfloat16))
        bc.append(jnp.pad(p["cin_b"][l].reshape(N_FILTERS, 1),
                          ((0, pad_o), (0, 0))).astype(jnp.float32))  # [16, 1]
        whc.append(jnp.pad(p["w_out_cin"][l * N_FILTERS:(l + 1) * N_FILTERS],
                           ((0, pad_o), (0, 0))).astype(jnp.float32))  # [16, 1]
    kp["cin_wr"], kp["cin_bc"], kp["w_cin"] = wr, bc, whc

    def fold(w, b, g, beta, m, v):
        s = g / jnp.sqrt(v + BN_EPS)                                  # [1, out]
        wt = (w * s).T.astype(jnp.bfloat16)                           # [out, in] bf16
        bcol = ((b - m) * s + beta).T.astype(jnp.float32)             # [out, 1]
        return wt, bcol

    kp["w1t"], kp["b1c"] = fold(p["w1"], p["b1"], p["g1"], p["be1"], p["m1"], p["v1"])
    kp["w2t"], kp["b2c"] = fold(p["w2"], p["b2"], p["g2"], p["be2"], p["m2"], p["v2"])
    kp["w_dnn"] = p["w_out_dnn"]                                      # [128, 1]
    return kp


# ----------------------------------------------------------------------------
# Forward: embedding gathers + first-order linear part are plain-JAX glue,
# everything else runs in the fused kernel over a parallel batch-tile grid.
# ----------------------------------------------------------------------------
def xdeepfm_forward(kp, X_sparse, X_dense, block_b=None):
    B = X_sparse.shape[0]
    idx = jnp.arange(N_SPARSE)[None, :]

    fm1 = kp["emb1"][idx, X_sparse]                                   # [B, 26]
    x0 = kp["emb2"][idx, X_sparse]                                    # [B, 26, 8]

    # FM first-order part, with the head's lin weight and output bias folded in.
    lin = jnp.sum(fm1, axis=1, keepdims=True) + X_dense @ kp["wd"] + kp["bd"]
    lin = lin * kp["w_out_lin"][0, 0] + kp["b_out"][0, 0]             # [B, 1]

    if block_b is None:
        tiles128 = _round_up(max(B, 1), 128) // 128
        # Prefer >=2 batch tiles when the batch allows it (keeps both v7x
        # TensorCores busy); cap the tile at 512 samples (= 4096 CIN lanes).
        block_b = 128 * max(1, min(4, (tiles128 + 1) // 2))
    bt = block_b
    assert bt % 128 == 0, "block_b must be a multiple of 128"
    b_pad = _round_up(B, bt)
    n_tiles = b_pad // bt
    if b_pad != B:
        x0 = jnp.pad(x0, ((0, b_pad - B), (0, 0), (0, 0)))
        lin = jnp.pad(lin, ((0, b_pad - B), (0, 0)))

    n_lanes = bt * EMB
    # CIN domain: per-tile lanes ordered n = k*bt + b, so sum-pooling over the
    # embedding dim is 8 lane-tile-aligned slices (no pooling matrix needed).
    x0t = (x0.reshape(n_tiles, bt, N_SPARSE, EMB)
             .transpose(0, 2, 3, 1)
             .reshape(n_tiles, N_SPARSE, n_lanes)
             .astype(jnp.bfloat16))                                   # [T, 26, 8*bt]
    # DNN domain: features in sublanes, batch in lanes.
    x0ft = x0.reshape(b_pad, N_SPARSE * EMB).T.astype(jnp.bfloat16)   # [208, B_pad]
    lin_row = lin.T                                                   # [1, B_pad]

    def full(a):
        nd = a.ndim
        return pl.BlockSpec(a.shape, lambda t, nd=nd: (0,) * nd)

    out = pl.pallas_call(
        xdeepfm_kernel,
        grid=(n_tiles,),
        in_specs=[
            pl.BlockSpec((1, N_SPARSE, n_lanes), lambda t: (t, 0, 0)),   # x0t
            pl.BlockSpec((N_SPARSE * EMB, bt), lambda t: (0, t)),        # x0ft
            pl.BlockSpec((1, bt), lambda t: (0, t)),                     # lin_row
            full(kp["cin_wr"][0]), full(kp["cin_bc"][0]),
            full(kp["cin_wr"][1]), full(kp["cin_bc"][1]),
            full(kp["cin_wr"][2]), full(kp["cin_bc"][2]),
            full(kp["w_cin"][0]), full(kp["w_cin"][1]), full(kp["w_cin"][2]),
            full(kp["w1t"]), full(kp["b1c"]),
            full(kp["w2t"]), full(kp["b2c"]),
            full(kp["w_dnn"]),
        ],
        out_specs=pl.BlockSpec((1, bt), lambda t: (0, t)),
        out_shape=jax.ShapeDtypeStruct((1, b_pad), jnp.float32),
        compiler_params=pltpu.CompilerParams(
            dimension_semantics=("parallel",),
            vmem_limit_bytes=32 * 1024 * 1024),
    )(x0t, x0ft, lin_row,
      kp["cin_wr"][0], kp["cin_bc"][0],
      kp["cin_wr"][1], kp["cin_bc"][1],
      kp["cin_wr"][2], kp["cin_bc"][2],
      kp["w_cin"][0], kp["w_cin"][1], kp["w_cin"][2],
      kp["w1t"], kp["b1c"], kp["w2t"], kp["b2c"],
      kp["w_dnn"])

    return out[:, :B].T                                               # [B, 1]


# ----------------------------------------------------------------------------
# Pure-JAX reference (f32, unfused) for validation.
# ----------------------------------------------------------------------------
def xdeepfm_reference(p, X_sparse, X_dense):
    B = X_sparse.shape[0]
    idx = jnp.arange(N_SPARSE)[None, :]
    fm1 = p["emb1"][idx, X_sparse]
    x0 = p["emb2"][idx, X_sparse]
    lin = jnp.sum(fm1, axis=1, keepdims=True) + X_dense @ p["wd"] + p["bd"]

    xl = x0
    pools = []
    for l in range(N_LAYERS):
        z = (xl[:, :, None, :] * x0[:, None, :, :]).reshape(B, -1, EMB)
        outm = jnp.einsum("oc,bck->bok", p["cin_w"][l], z) + p["cin_b"][l][None, :, None]
        pools.append(jnp.sum(outm, axis=-1))
        xl = outm
    cin_pool = jnp.concatenate(pools, axis=-1)                        # [B, 36]

    def layer(h, w, b, g, beta, m, v):
        h = h @ w + b
        h = (h - m) / jnp.sqrt(v + BN_EPS) * g + beta
        return jnp.maximum(h, 0.0)

    h = x0.reshape(B, N_SPARSE * EMB)
    h = layer(h, p["w1"], p["b1"], p["g1"], p["be1"], p["m1"], p["v1"])
    h = layer(h, p["w2"], p["b2"], p["g2"], p["be2"], p["m2"], p["v2"])

    z = (lin * p["w_out_lin"][0, 0] + cin_pool @ p["w_out_cin"]
         + h @ p["w_out_dnn"] + p["b_out"][0, 0])
    return jax.nn.sigmoid(z)


# ----------------------------------------------------------------------------
# Deterministic synthetic parameters (no checkpoint load)
# ----------------------------------------------------------------------------
def init_params(key, voc=10, n_dense=5):
    keys = jax.random.split(key, 20)
    p = {}
    p["emb1"] = jax.random.normal(keys[0], (N_SPARSE, voc), jnp.float32) * 0.1
    p["emb2"] = jax.random.normal(keys[1], (N_SPARSE, voc, EMB), jnp.float32) * 0.1

    fls = [N_SPARSE, N_FILTERS, N_FILTERS]
    p["cin_w"] = [jax.random.normal(keys[2 + l], (N_FILTERS, N_SPARSE * fls[l]),
                                    jnp.float32) * 0.05 for l in range(N_LAYERS)]
    p["cin_b"] = [jax.random.normal(keys[5 + l], (N_FILTERS,),
                                    jnp.float32) * 0.05 for l in range(N_LAYERS)]

    d0 = N_SPARSE * EMB
    p["w1"] = jax.random.normal(keys[8], (d0, HIDDEN[0]), jnp.float32) * 0.05
    p["b1"] = jax.random.normal(keys[9], (1, HIDDEN[0]), jnp.float32) * 0.05
    p["g1"] = jnp.ones((1, HIDDEN[0]), jnp.float32)
    p["be1"] = jnp.zeros((1, HIDDEN[0]), jnp.float32)
    p["m1"] = jnp.zeros((1, HIDDEN[0]), jnp.float32)
    p["v1"] = jnp.ones((1, HIDDEN[0]), jnp.float32)

    p["w2"] = jax.random.normal(keys[10], (HIDDEN[0], HIDDEN[1]), jnp.float32) * 0.05
    p["b2"] = jax.random.normal(keys[11], (1, HIDDEN[1]), jnp.float32) * 0.05
    p["g2"] = jnp.ones((1, HIDDEN[1]), jnp.float32)
    p["be2"] = jnp.zeros((1, HIDDEN[1]), jnp.float32)
    p["m2"] = jnp.zeros((1, HIDDEN[1]), jnp.float32)
    p["v2"] = jnp.ones((1, HIDDEN[1]), jnp.float32)

    p["wd"] = jax.random.normal(keys[12], (n_dense, 1), jnp.float32) * 0.1
    p["bd"] = jax.random.normal(keys[13], (1, 1), jnp.float32) * 0.1

    total = 1 + N_LAYERS * N_FILTERS + HIDDEN[1]        # = 165
    w_out = jax.random.normal(keys[14], (total, 1), jnp.float32) * 0.1
    p["w_out_lin"] = w_out[0:1]                         # [1, 1]
    p["w_out_cin"] = w_out[1:1 + N_LAYERS * N_FILTERS]  # [36, 1]
    p["w_out_dnn"] = w_out[1 + N_LAYERS * N_FILTERS:]   # [128, 1]
    p["b_out"] = jax.random.normal(keys[15], (1, 1), jnp.float32) * 0.1
    return p


if __name__ == "__main__":
    key = jax.random.PRNGKey(0)
    kp_key, ks1, kd1, ks2, kd2 = jax.random.split(key, 5)
    VOC, N_DENSE = 10, 5

    raw = init_params(kp_key, voc=VOC, n_dense=N_DENSE)
    kparams = prepare_params(raw)
    fwd = jax.jit(xdeepfm_forward, static_argnames=("block_b",))

    # Case 1: small batch, single 128-sample tile (default tiling).
    B1 = 4
    Xs1 = jax.random.randint(ks1, (B1, N_SPARSE), 0, VOC)
    Xd1 = jax.random.normal(kd1, (B1, N_DENSE), jnp.float32)
    out1 = jax.block_until_ready(fwd(kparams, Xs1, Xd1))
    ref1 = xdeepfm_reference(raw, Xs1, Xd1)
    assert out1.shape == (B1, 1)
    assert bool(jnp.all(jnp.isfinite(out1)))
    assert bool(jnp.allclose(out1, ref1, atol=2e-2, rtol=2e-2))

    # Case 2: exercises the multi-tile parallel batch grid (2 tiles of 128).
    B2 = 200
    Xs2 = jax.random.randint(ks2, (B2, N_SPARSE), 0, VOC)
    Xd2 = jax.random.normal(kd2, (B2, N_DENSE), jnp.float32)
    out2 = jax.block_until_ready(fwd(kparams, Xs2, Xd2, block_b=128))
    ref2 = xdeepfm_reference(raw, Xs2, Xd2)
    assert out2.shape == (B2, 1)
    assert bool(jnp.all(jnp.isfinite(out2)))
    assert bool(jnp.allclose(out2, ref2, atol=2e-2, rtol=2e-2))

    print("KERNEL_OK")
</pallas_src>

<mosaic_0001>
module attributes {stable_mosaic.version = 11 : i64} {
  func.func @xdeepfm_kernel(%arg0: i32, %arg1: memref<1x26x1024xbf16, #tpu.memory_space<vmem>>, %arg2: memref<208x128xbf16, #tpu.memory_space<vmem>>, %arg3: memref<1x128xf32, #tpu.memory_space<vmem>>, %arg4: memref<416x26xbf16, #tpu.memory_space<vmem>>, %arg5: memref<16x1xf32, #tpu.memory_space<vmem>>, %arg6: memref<192x26xbf16, #tpu.memory_space<vmem>>, %arg7: memref<16x1xf32, #tpu.memory_space<vmem>>, %arg8: memref<192x26xbf16, #tpu.memory_space<vmem>>, %arg9: memref<16x1xf32, #tpu.memory_space<vmem>>, %arg10: memref<16x1xf32, #tpu.memory_space<vmem>>, %arg11: memref<16x1xf32, #tpu.memory_space<vmem>>, %arg12: memref<16x1xf32, #tpu.memory_space<vmem>>, %arg13: memref<256x208xbf16, #tpu.memory_space<vmem>>, %arg14: memref<256x1xf32, #tpu.memory_space<vmem>>, %arg15: memref<128x256xbf16, #tpu.memory_space<vmem>>, %arg16: memref<128x1xf32, #tpu.memory_space<vmem>>, %arg17: memref<128x1xf32, #tpu.memory_space<vmem>>, %arg18: memref<1x128xf32, #tpu.memory_space<vmem>>) attributes {dimension_semantics = [#tpu.dimension_semantics<parallel>], iteration_bounds = array<i64: 1>, scalar_prefetch = 0 : i64, scratch_operands = 0 : i64, tpu.core_type = #tpu.core_type<tc>, window_params = [{transform_indices = @transform_0, window_bounds = array<i64: 1, 26, 1024>}, {transform_indices = @transform_1, window_bounds = array<i64: 208, 128>}, {transform_indices = @transform_2, window_bounds = array<i64: 1, 128>}, {pipeline_mode = #tpu.pipeline_mode<synchronous>, transform_indices = @transform_3, window_bounds = array<i64: 416, 26>}, {pipeline_mode = #tpu.pipeline_mode<synchronous>, transform_indices = @transform_4, window_bounds = array<i64: 16, 1>}, {pipeline_mode = #tpu.pipeline_mode<synchronous>, transform_indices = @transform_5, window_bounds = array<i64: 192, 26>}, {pipeline_mode = #tpu.pipeline_mode<synchronous>, transform_indices = @transform_6, window_bounds = array<i64: 16, 1>}, {pipeline_mode = #tpu.pipeline_mode<synchronous>, transform_indices = @transform_7, window_bounds = array<i64: 192, 26>}, {pipeline_mode = #tpu.pipeline_mode<synchronous>, transform_indices = @transform_8, window_bounds = array<i64: 16, 1>}, {pipeline_mode = #tpu.pipeline_mode<synchronous>, transform_indices = @transform_9, window_bounds = array<i64: 16, 1>}, {pipeline_mode = #tpu.pipeline_mode<synchronous>, transform_indices = @transform_10, window_bounds = array<i64: 16, 1>}, {pipeline_mode = #tpu.pipeline_mode<synchronous>, transform_indices = @transform_11, window_bounds = array<i64: 16, 1>}, {pipeline_mode = #tpu.pipeline_mode<synchronous>, transform_indices = @transform_12, window_bounds = array<i64: 256, 208>}, {pipeline_mode = #tpu.pipeline_mode<synchronous>, transform_indices = @transform_13, window_bounds = array<i64: 256, 1>}, {pipeline_mode = #tpu.pipeline_mode<synchronous>, transform_indices = @transform_14, window_bounds = array<i64: 128, 256>}, {pipeline_mode = #tpu.pipeline_mode<synchronous>, transform_indices = @transform_15, window_bounds = array<i64: 128, 1>}, {pipeline_mode = #tpu.pipeline_mode<synchronous>, transform_indices = @transform_16, window_bounds = array<i64: 128, 1>}, {transform_indices = @transform_17, window_bounds = array<i64: 1, 128>}]} {
    %c0 = arith.constant 0 : index
    %c0_0 = arith.constant 0 : index
    %c0_1 = arith.constant 0 : index
    %0 = vector.load %arg1[%c0, %c0_0, %c0_1] : memref<1x26x1024xbf16, #tpu.memory_space<vmem>>, vector<1x26x1024xbf16>
    %1 = vector.shape_cast %0 : vector<1x26x1024xbf16> to vector<26x1024xbf16>
    %c0_2 = arith.constant 0 : index
    %c0_3 = arith.constant 0 : index
    %2 = vector.load %arg4[%c0_2, %c0_3] : memref<416x26xbf16, #tpu.memory_space<vmem>>, vector<416x26xbf16>
    %cst = arith.constant dense<0.000000e+00> : vector<416x1024xf32>
    %3 = tpu.matmul %2, %1, %cst {dimension_numbers = #tpu.dot_dimension_numbers<[1], [0], [0], [1], [0, 0, 1, 1], [], []>} : vector<416x26xbf16>, vector<26x1024xbf16>, vector<416x1024xf32> -> vector<416x1024xf32>
    %4 = vector.extract_strided_slice %3 {offsets = [0, 0], sizes = [16, 1024], strides = [1, 1]} : vector<416x1024xf32> to vector<16x1024xf32>
    %5 = vector.extract_strided_slice %1 {offsets = [0, 0], sizes = [1, 1024], strides = [1, 1]} : vector<26x1024xbf16> to vector<1x1024xbf16>
    %6 = arith.extf %5 : vector<1x1024xbf16> to vector<1x1024xf32>
    %7 = vector.broadcast %6 : vector<1x1024xf32> to vector<16x1024xf32>
    %8 = arith.mulf %4, %7 : vector<16x1024xf32>
    %9 = vector.extract_strided_slice %3 {offsets = [16, 0], sizes = [16, 1024], strides = [1, 1]} : vector<416x1024xf32> to vector<16x1024xf32>
    %10 = vector.extract_strided_slice %1 {offsets = [1, 0], sizes = [1, 1024], strides = [1, 1]} : vector<26x1024xbf16> to vector<1x1024xbf16>
    %11 = arith.extf %10 : vector<1x1024xbf16> to vector<1x1024xf32>
    %12 = vector.broadcast %11 : vector<1x1024xf32> to vector<16x1024xf32>
    %13 = arith.mulf %9, %12 : vector<16x1024xf32>
    %14 = arith.addf %8, %13 : vector<16x1024xf32>
    %15 = vector.extract_strided_slice %3 {offsets = [32, 0], sizes = [16, 1024], strides = [1, 1]} : vector<416x1024xf32> to vector<16x1024xf32>
    %16 = vector.extract_strided_slice %1 {offsets = [2, 0], sizes = [1, 1024], strides = [1, 1]} : vector<26x1024xbf16> to vector<1x1024xbf16>
    %17 = arith.extf %16 : vector<1x1024xbf16> to vector<1x1024xf32>
    %18 = vector.broadcast %17 : vector<1x1024xf32> to vector<16x1024xf32>
    %19 = arith.mulf %15, %18 : vector<16x1024xf32>
    %20 = arith.addf %14, %19 : vector<16x1024xf32>
    %21 = vector.extract_strided_slice %3 {offsets = [48, 0], sizes = [16, 1024], strides = [1, 1]} : vector<416x1024xf32> to vector<16x1024xf32>
    %22 = vector.extract_strided_slice %1 {offsets = [3, 0], sizes = [1, 1024], strides = [1, 1]} : vector<26x1024xbf16> to vector<1x1024xbf16>
    %23 = arith.extf %22 : vector<1x1024xbf16> to vector<1x1024xf32>
    %24 = vector.broadcast %23 : vector<1x1024xf32> to vector<16x1024xf32>
    %25 = arith.mulf %21, %24 : vector<16x1024xf32>
    %26 = arith.addf %20, %25 : vector<16x1024xf32>
    %27 = vector.extract_strided_slice %3 {offsets = [64, 0], sizes = [16, 1024], strides = [1, 1]} : vector<416x1024xf32> to vector<16x1024xf32>
    %28 = vector.extract_strided_slice %1 {offsets = [4, 0], sizes = [1, 1024], strides = [1, 1]} : vector<26x1024xbf16> to vector<1x1024xbf16>
    %29 = arith.extf %28 : vector<1x1024xbf16> to vector<1x1024xf32>
    %30 = vector.broadcast %29 : vector<1x1024xf32> to vector<16x1024xf32>
    %31 = arith.mulf %27, %30 : vector<16x1024xf32>
    %32 = arith.addf %26, %31 : vector<16x1024xf32>
    %33 = vector.extract_strided_slice %3 {offsets = [80, 0], sizes = [16, 1024], strides = [1, 1]} : vector<416x1024xf32> to vector<16x1024xf32>
    %34 = vector.extract_strided_slice %1 {offsets = [5, 0], sizes = [1, 1024], strides = [1, 1]} : vector<26x1024xbf16> to vector<1x1024xbf16>
    %35 = arith.extf %34 : vector<1x1024xbf16> to vector<1x1024xf32>
    %36 = vector.broadcast %35 : vector<1x1024xf32> to vector<16x1024xf32>
    %37 = arith.mulf %33, %36 : vector<16x1024xf32>
    %38 = arith.addf %32, %37 : vector<16x1024xf32>
    %39 = vector.extract_strided_slice %3 {offsets = [96, 0], sizes = [16, 1024], strides = [1, 1]} : vector<416x1024xf32> to vector<16x1024xf32>
    %40 = vector.extract_strided_slice %1 {offsets = [6, 0], sizes = [1, 1024], strides = [1, 1]} : vector<26x1024xbf16> to vector<1x1024xbf16>
    %41 = arith.extf %40 : vector<1x1024xbf16> to vector<1x1024xf32>
    %42 = vector.broadcast %41 : vector<1x1024xf32> to vector<16x1024xf32>
    %43 = arith.mulf %39, %42 : vector<16x1024xf32>
    %44 = arith.addf %38, %43 : vector<16x1024xf32>
    %45 = vector.extract_strided_slice %3 {offsets = [112, 0], sizes = [16, 1024], strides = [1, 1]} : vector<416x1024xf32> to vector<16x1024xf32>
    %46 = vector.extract_strided_slice %1 {offsets = [7, 0], sizes = [1, 1024], strides = [1, 1]} : vector<26x1024xbf16> to vector<1x1024xbf16>
    %47 = arith.extf %46 : vector<1x1024xbf16> to vector<1x1024xf32>
    %48 = vector.broadcast %47 : vector<1x1024xf32> to vector<16x1024xf32>
    %49 = arith.mulf %45, %48 : vector<16x1024xf32>
    %50 = arith.addf %44, %49 : vector<16x1024xf32>
    %51 = vector.extract_strided_slice %3 {offsets = [128, 0], sizes = [16, 1024], strides = [1, 1]} : vector<416x1024xf32> to vector<16x1024xf32>
    %52 = vector.extract_strided_slice %1 {offsets = [8, 0], sizes = [1, 1024], strides = [1, 1]} : vector<26x1024xbf16> to vector<1x1024xbf16>
    %53 = arith.extf %52 : vector<1x1024xbf16> to vector<1x1024xf32>
    %54 = vector.broadcast %53 : vector<1x1024xf32> to vector<16x1024xf32>
    %55 = arith.mulf %51, %54 : vector<16x1024xf32>
    %56 = arith.addf %50, %55 : vector<16x1024xf32>
    %57 = vector.extract_strided_slice %3 {offsets = [144, 0], sizes = [16, 1024], strides = [1, 1]} : vector<416x1024xf32> to vector<16x1024xf32>
    %58 = vector.extract_strided_slice %1 {offsets = [9, 0], sizes = [1, 1024], strides = [1, 1]} : vector<26x1024xbf16> to vector<1x1024xbf16>
    %59 = arith.extf %58 : vector<1x1024xbf16> to vector<1x1024xf32>
    %60 = vector.broadcast %59 : vector<1x1024xf32> to vector<16x1024xf32>
    %61 = arith.mulf %57, %60 : vector<16x1024xf32>
    %62 = arith.addf %56, %61 : vector<16x1024xf32>
    %63 = vector.extract_strided_slice %3 {offsets = [160, 0], sizes = [16, 1024], strides = [1, 1]} : vector<416x1024xf32> to vector<16x1024xf32>
    %64 = vector.extract_strided_slice %1 {offsets = [10, 0], sizes = [1, 1024], strides = [1, 1]} : vector<26x1024xbf16> to vector<1x1024xbf16>
    %65 = arith.extf %64 : vector<1x1024xbf16> to vector<1x1024xf32>
    %66 = vector.broadcast %65 : vector<1x1024xf32> to vector<16x1024xf32>
    %67 = arith.mulf %63, %66 : vector<16x1024xf32>
    %68 = arith.addf %62, %67 : vector<16x1024xf32>
    %69 = vector.extract_strided_slice %3 {offsets = [176, 0], sizes = [16, 1024], strides = [1, 1]} : vector<416x1024xf32> to vector<16x1024xf32>
    %70 = vector.extract_strided_slice %1 {offsets = [11, 0], sizes = [1, 1024], strides = [1, 1]} : vector<26x1024xbf16> to vector<1x1024xbf16>
    %71 = arith.extf %70 : vector<1x1024xbf16> to vector<1x1024xf32>
    %72 = vector.broadcast %71 : vector<1x1024xf32> to vector<16x1024xf32>
    %73 = arith.mulf %69, %72 : vector<16x1024xf32>
    %74 = arith.addf %68, %73 : vector<16x1024xf32>
    %75 = vector.extract_strided_slice %3 {offsets = [192, 0], sizes = [16, 1024], strides = [1, 1]} : vector<416x1024xf32> to vector<16x1024xf32>
    %76 = vector.extract_strided_slice %1 {offsets = [12, 0], sizes = [1, 1024], strides = [1, 1]} : vector<26x1024xbf16> to vector<1x1024xbf16>
    %77 = arith.extf %76 : vector<1x1024xbf16> to vector<1x1024xf32>
    %78 = vector.broadcast %77 : vector<1x1024xf32> to vector<16x1024xf32>
    %79 = arith.mulf %75, %78 : vector<16x1024xf32>
    %80 = arith.addf %74, %79 : vector<16x1024xf32>
    %81 = vector.extract_strided_slice %3 {offsets = [208, 0], sizes = [16, 1024], strides = [1, 1]} : vector<416x1024xf32> to vector<16x1024xf32>
    %82 = vector.extract_strided_slice %1 {offsets = [13, 0], sizes = [1, 1024], strides = [1, 1]} : vector<26x1024xbf16> to vector<1x1024xbf16>
    %83 = arith.extf %82 : vector<1x1024xbf16> to vector<1x1024xf32>
    %84 = vector.broadcast %83 : vector<1x1024xf32> to vector<16x1024xf32>
    %85 = arith.mulf %81, %84 : vector<16x1024xf32>
    %86 = arith.addf %80, %85 : vector<16x1024xf32>
    %87 = vector.extract_strided_slice %3 {offsets = [224, 0], sizes = [16, 1024], strides = [1, 1]} : vector<416x1024xf32> to vector<16x1024xf32>
    %88 = vector.extract_strided_slice %1 {offsets = [14, 0], sizes = [1, 1024], strides = [1, 1]} : vector<26x1024xbf16> to vector<1x1024xbf16>
    %89 = arith.extf %88 : vector<1x1024xbf16> to vector<1x1024xf32>
    %90 = vector.broadcast %89 : vector<1x1024xf32> to vector<16x1024xf32>
    %91 = arith.mulf %87, %90 : vector<16x1024xf32>
    %92 = arith.addf %86, %91 : vector<16x1024xf32>
    %93 = vector.extract_strided_slice %3 {offsets = [240, 0], sizes = [16, 1024], strides = [1, 1]} : vector<416x1024xf32> to vector<16x1024xf32>
    %94 = vector.extract_strided_slice %1 {offsets = [15, 0], sizes = [1, 1024], strides = [1, 1]} : vector<26x1024xbf16> to vector<1x1024xbf16>
    %95 = arith.extf %94 : vector<1x1024xbf16> to vector<1x1024xf32>
    %96 = vector.broadcast %95 : vector<1x1024xf32> to vector<16x1024xf32>
    %97 = arith.mulf %93, %96 : vector<16x1024xf32>
    %98 = arith.addf %92, %97 : vector<16x1024xf32>
    %99 = vector.extract_strided_slice %3 {offsets = [256, 0], sizes = [16, 1024], strides = [1, 1]} : vector<416x1024xf32> to vector<16x1024xf32>
    %100 = vector.extract_strided_slice %1 {offsets = [16, 0], sizes = [1, 1024], strides = [1, 1]} : vector<26x1024xbf16> to vector<1x1024xbf16>
    %101 = arith.extf %100 : vector<1x1024xbf16> to vector<1x1024xf32>
    %102 = vector.broadcast %101 : vector<1x1024xf32> to vector<16x1024xf32>
    %103 = arith.mulf %99, %102 : vector<16x1024xf32>
    %104 = arith.addf %98, %103 : vector<16x1024xf32>
    %105 = vector.extract_strided_slice %3 {offsets = [272, 0], sizes = [16, 1024], strides = [1, 1]} : vector<416x1024xf32> to vector<16x1024xf32>
    %106 = vector.extract_strided_slice %1 {offsets = [17, 0], sizes = [1, 1024], strides = [1, 1]} : vector<26x1024xbf16> to vector<1x1024xbf16>
    %107 = arith.extf %106 : vector<1x1024xbf16> to vector<1x1024xf32>
    %108 = vector.broadcast %107 : vector<1x1024xf32> to vector<16x1024xf32>
    %109 = arith.mulf %105, %108 : vector<16x1024xf32>
    %110 = arith.addf %104, %109 : vector<16x1024xf32>
    %111 = vector.extract_strided_slice %3 {offsets = [288, 0], sizes = [16, 1024], strides = [1, 1]} : vector<416x1024xf32> to vector<16x1024xf32>
    %112 = vector.extract_strided_slice %1 {offsets = [18, 0], sizes = [1, 1024], strides = [1, 1]} : vector<26x1024xbf16> to vector<1x1024xbf16>
    %113 = arith.extf %112 : vector<1x1024xbf16> to vector<1x1024xf32>
    %114 = vector.broadcast %113 : vector<1x1024xf32> to vector<16x1024xf32>
    %115 = arith.mulf %111, %114 : vector<16x1024xf32>
    %116 = arith.addf %110, %115 : vector<16x1024xf32>
    %117 = vector.extract_strided_slice %3 {offsets = [304, 0], sizes = [16, 1024], strides = [1, 1]} : vector<416x1024xf32> to vector<16x1024xf32>
    %118 = vector.extract_strided_slice %1 {offsets = [19, 0], sizes = [1, 1024], strides = [1, 1]} : vector<26x1024xbf16> to vector<1x1024xbf16>
    %119 = arith.extf %118 : vector<1x1024xbf16> to vector<1x1024xf32>
    %120 = vector.broadcast %119 : vector<1x1024xf32> to vector<16x1024xf32>
    %121 = arith.mulf %117, %120 : vector<16x1024xf32>
    %122 = arith.addf %116, %121 : vector<16x1024xf32>
    %123 = vector.extract_strided_slice %3 {offsets = [320, 0], sizes = [16, 1024], strides = [1, 1]} : vector<416x1024xf32> to vector<16x1024xf32>
    %124 = vector.extract_strided_slice %1 {offsets = [20, 0], sizes = [1, 1024], strides = [1, 1]} : vector<26x1024xbf16> to vector<1x1024xbf16>
    %125 = arith.extf %124 : vector<1x1024xbf16> to vector<1x1024xf32>
    %126 = vector.broadcast %125 : vector<1x1024xf32> to vector<16x1024xf32>
    %127 = arith.mulf %123, %126 : vector<16x1024xf32>
    %128 = arith.addf %122, %127 : vector<16x1024xf32>
    %129 = vector.extract_strided_slice %3 {offsets = [336, 0], sizes = [16, 1024], strides = [1, 1]} : vector<416x1024xf32> to vector<16x1024xf32>
    %130 = vector.extract_strided_slice %1 {offsets = [21, 0], sizes = [1, 1024], strides = [1, 1]} : vector<26x1024xbf16> to vector<1x1024xbf16>
    %131 = arith.extf %130 : vector<1x1024xbf16> to vector<1x1024xf32>
    %132 = vector.broadcast %131 : vector<1x1024xf32> to vector<16x1024xf32>
    %133 = arith.mulf %129, %132 : vector<16x1024xf32>
    %134 = arith.addf %128, %133 : vector<16x1024xf32>
    %135 = vector.extract_strided_slice %3 {offsets = [352, 0], sizes = [16, 1024], strides = [1, 1]} : vector<416x1024xf32> to vector<16x1024xf32>
    %136 = vector.extract_strided_slice %1 {offsets = [22, 0], sizes = [1, 1024], strides = [1, 1]} : vector<26x1024xbf16> to vector<1x1024xbf16>
    %137 = arith.extf %136 : vector<1x1024xbf16> to vector<1x1024xf32>
    %138 = vector.broadcast %137 : vector<1x1024xf32> to vector<16x1024xf32>
    %139 = arith.mulf %135, %138 : vector<16x1024xf32>
    %140 = arith.addf %134, %139 : vector<16x1024xf32>
    %141 = vector.extract_strided_slice %3 {offsets = [368, 0], sizes = [16, 1024], strides = [1, 1]} : vector<416x1024xf32> to vector<16x1024xf32>
    %142 = vector.extract_strided_slice %1 {offsets = [23, 0], sizes = [1, 1024], strides = [1, 1]} : vector<26x1024xbf16> to vector<1x1024xbf16>
    %143 = arith.extf %142 : vector<1x1024xbf16> to vector<1x1024xf32>
    %144 = vector.broadcast %143 : vector<1x1024xf32> to vector<16x1024xf32>
    %145 = arith.mulf %141, %144 : vector<16x1024xf32>
    %146 = arith.addf %140, %145 : vector<16x1024xf32>
    %147 = vector.extract_strided_slice %3 {offsets = [384, 0], sizes = [16, 1024], strides = [1, 1]} : vector<416x1024xf32> to vector<16x1024xf32>
    %148 = vector.extract_strided_slice %1 {offsets = [24, 0], sizes = [1, 1024], strides = [1, 1]} : vector<26x1024xbf16> to vector<1x1024xbf16>
    %149 = arith.extf %148 : vector<1x1024xbf16> to vector<1x1024xf32>
    %150 = vector.broadcast %149 : vector<1x1024xf32> to vector<16x1024xf32>
    %151 = arith.mulf %147, %150 : vector<16x1024xf32>
    %152 = arith.addf %146, %151 : vector<16x1024xf32>
    %153 = vector.extract_strided_slice %3 {offsets = [400, 0], sizes = [16, 1024], strides = [1, 1]} : vector<416x1024xf32> to vector<16x1024xf32>
    %154 = vector.extract_strided_slice %1 {offsets = [25, 0], sizes = [1, 1024], strides = [1, 1]} : vector<26x1024xbf16> to vector<1x1024xbf16>
    %155 = arith.extf %154 : vector<1x1024xbf16> to vector<1x1024xf32>
    %156 = vector.broadcast %155 : vector<1x1024xf32> to vector<16x1024xf32>
    %157 = arith.mulf %153, %156 : vector<16x1024xf32>
    %158 = arith.addf %152, %157 : vector<16x1024xf32>
    %c0_4 = arith.constant 0 : index
    %c0_5 = arith.constant 0 : index
    %159 = vector.load %arg5[%c0_4, %c0_5] : memref<16x1xf32, #tpu.memory_space<vmem>>, vector<16x1xf32>
    %160 = vector.broadcast %159 : vector<16x1xf32> to vector<16x1024xf32>
    %161 = arith.addf %158, %160 : vector<16x1024xf32>
    %c0_6 = arith.constant 0 : index
    %c0_7 = arith.constant 0 : index
    %162 = vector.load %arg6[%c0_6, %c0_7] : memref<192x26xbf16, #tpu.memory_space<vmem>>, vector<192x26xbf16>
    %cst_8 = arith.constant dense<0.000000e+00> : vector<192x1024xf32>
    %163 = tpu.matmul %162, %1, %cst_8 {dimension_numbers = #tpu.dot_dimension_numbers<[1], [0], [0], [1], [0, 0, 1, 1], [], []>} : vector<192x26xbf16>, vector<26x1024xbf16>, vector<192x1024xf32> -> vector<192x1024xf32>
    %164 = vector.extract_strided_slice %163 {offsets = [0, 0], sizes = [16, 1024], strides = [1, 1]} : vector<192x1024xf32> to vector<16x1024xf32>
    %165 = vector.extract_strided_slice %161 {offsets = [0, 0], sizes = [1, 1024], strides = [1, 1]} : vector<16x1024xf32> to vector<1x1024xf32>
    %166 = vector.broadcast %165 : vector<1x1024xf32> to vector<16x1024xf32>
    %167 = arith.mulf %164, %166 : vector<16x1024xf32>
    %168 = vector.extract_strided_slice %163 {offsets = [16, 0], sizes = [16, 1024], strides = [1, 1]} : vector<192x1024xf32> to vector<16x1024xf32>
    %169 = vector.extract_strided_slice %161 {offsets = [1, 0], sizes = [1, 1024], strides = [1, 1]} : vector<16x1024xf32> to vector<1x1024xf32>
    %170 = vector.broadcast %169 : vector<1x1024xf32> to vector<16x1024xf32>
    %171 = arith.mulf %168, %170 : vector<16x1024xf32>
    %172 = arith.addf %167, %171 : vector<16x1024xf32>
    %173 = vector.extract_strided_slice %163 {offsets = [32, 0], sizes = [16, 1024], strides = [1, 1]} : vector<192x1024xf32> to vector<16x1024xf32>
    %174 = vector.extract_strided_slice %161 {offsets = [2, 0], sizes = [1, 1024], strides = [1, 1]} : vector<16x1024xf32> to vector<1x1024xf32>
    %175 = vector.broadcast %174 : vector<1x1024xf32> to vector<16x1024xf32>
    %176 = arith.mulf %173, %175 : vector<16x1024xf32>
    %177 = arith.addf %172, %176 : vector<16x1024xf32>
    %178 = vector.extract_strided_slice %163 {offsets = [48, 0], sizes = [16, 1024], strides = [1, 1]} : vector<192x1024xf32> to vector<16x1024xf32>
    %179 = vector.extract_strided_slice %161 {offsets = [3, 0], sizes = [1, 1024], strides = [1, 1]} : vector<16x1024xf32> to vector<1x1024xf32>
    %180 = vector.broadcast %179 : vector<1x1024xf32> to vector<16x1024xf32>
    %181 = arith.mulf %178, %180 : vector<16x1024xf32>
    %182 = arith.addf %177, %181 : vector<16x1024xf32>
    %183 = vector.extract_strided_slice %163 {offsets = [64, 0], sizes = [16, 1024], strides = [1, 1]} : vector<192x1024xf32> to vector<16x1024xf32>
    %184 = vector.extract_strided_slice %161 {offsets = [4, 0], sizes = [1, 1024], strides = [1, 1]} : vector<16x1024xf32> to vector<1x1024xf32>
    %185 = vector.broadcast %184 : vector<1x1024xf32> to vector<16x1024xf32>
    %186 = arith.mulf %183, %185 : vector<16x1024xf32>
    %187 = arith.addf %182, %186 : vector<16x1024xf32>
    %188 = vector.extract_strided_slice %163 {offsets = [80, 0], sizes = [16, 1024], strides = [1, 1]} : vector<192x1024xf32> to vector<16x1024xf32>
    %189 = vector.extract_strided_slice %161 {offsets = [5, 0], sizes = [1, 1024], strides = [1, 1]} : vector<16x1024xf32> to vector<1x1024xf32>
    %190 = vector.broadcast %189 : vector<1x1024xf32> to vector<16x1024xf32>
    %191 = arith.mulf %188, %190 : vector<16x1024xf32>
    %192 = arith.addf %187, %191 : vector<16x1024xf32>
    %193 = vector.extract_strided_slice %163 {offsets = [96, 0], sizes = [16, 1024], strides = [1, 1]} : vector<192x1024xf32> to vector<16x1024xf32>
    %194 = vector.extract_strided_slice %161 {offsets = [6, 0], sizes = [1, 1024], strides = [1, 1]} : vector<16x1024xf32> to vector<1x1024xf32>
    %195 = vector.broadcast %194 : vector<1x1024xf32> to vector<16x1024xf32>
    %196 = arith.mulf %193, %195 : vector<16x1024xf32>
    %197 = arith.addf %192, %196 : vector<16x1024xf32>
    %198 = vector.extract_strided_slice %163 {offsets = [112, 0], sizes = [16, 1024], strides = [1, 1]} : vector<192x1024xf32> to vector<16x1024xf32>
    %199 = vector.extract_strided_slice %161 {offsets = [7, 0], sizes = [1, 1024], strides = [1, 1]} : vector<16x1024xf32> to vector<1x1024xf32>
    %200 = vector.broadcast %199 : vector<1x1024xf32> to vector<16x1024xf32>
    %201 = arith.mulf %198, %200 : vector<16x1024xf32>
    %202 = arith.addf %197, %201 : vector<16x1024xf32>
    %203 = vector.extract_strided_slice %163 {offsets = [128, 0], sizes = [16, 1024], strides = [1, 1]} : vector<192x1024xf32> to vector<16x1024xf32>
    %204 = vector.extract_strided_slice %161 {offsets = [8, 0], sizes = [1, 1024], strides = [1, 1]} : vector<16x1024xf32> to vector<1x1024xf32>
    %205 = vector.broadcast %204 : vector<1x1024xf32> to vector<16x1024xf32>
    %206 = arith.mulf %203, %205 : vector<16x1024xf32>
    %207 = arith.addf %202, %206 : vector<16x1024xf32>
    %208 = vector.extract_strided_slice %163 {offsets = [144, 0], sizes = [16, 1024], strides = [1, 1]} : vector<192x1024xf32> to vector<16x1024xf32>
    %209 = vector.extract_strided_slice %161 {offsets = [9, 0], sizes = [1, 1024], strides = [1, 1]} : vector<16x1024xf32> to vector<1x1024xf32>
    %210 = vector.broadcast %209 : vector<1x1024xf32> to vector<16x1024xf32>
    %211 = arith.mulf %208, %210 : vector<16x1024xf32>
    %212 = arith.addf %207, %211 : vector<16x1024xf32>
    %213 = vector.extract_strided_slice %163 {offsets = [160, 0], sizes = [16, 1024], strides = [1, 1]} : vector<192x1024xf32> to vector<16x1024xf32>
    %214 = vector.extract_strided_slice %161 {offsets = [10, 0], sizes = [1, 1024], strides = [1, 1]} : vector<16x1024xf32> to vector<1x1024xf32>
    %215 = vector.broadcast %214 : vector<1x1024xf32> to vector<16x1024xf32>
    %216 = arith.mulf %213, %215 : vector<16x1024xf32>
    %217 = arith.addf %212, %216 : vector<16x1024xf32>
    %218 = vector.extract_strided_slice %163 {offsets = [176, 0], sizes = [16, 1024], strides = [1, 1]} : vector<192x1024xf32> to vector<16x1024xf32>
    %219 = vector.extract_strided_slice %161 {offsets = [11, 0], sizes = [1, 1024], strides = [1, 1]} : vector<16x1024xf32> to vector<1x1024xf32>
    %220 = vector.broadcast %219 : vector<1x1024xf32> to vector<16x1024xf32>
    %221 = arith.mulf %218, %220 : vector<16x1024xf32>
    %222 = arith.addf %217, %221 : vector<16x1024xf32>
    %c0_9 = arith.constant 0 : index
    %c0_10 = arith.constant 0 : index
    %223 = vector.load %arg7[%c0_9, %c0_10] : memref<16x1xf32, #tpu.memory_space<vmem>>, vector<16x1xf32>
    %224 = vector.broadcast %223 : vector<16x1xf32> to vector<16x1024xf32>
    %225 = arith.addf %222, %224 : vector<16x1024xf32>
    %c0_11 = arith.constant 0 : index
    %c0_12 = arith.constant 0 : index
    %226 = vector.load %arg8[%c0_11, %c0_12] : memref<192x26xbf16, #tpu.memory_space<vmem>>, vector<192x26xbf16>
    %cst_13 = arith.constant dense<0.000000e+00> : vector<192x1024xf32>
    %227 = tpu.matmul %226, %1, %cst_13 {dimension_numbers = #tpu.dot_dimension_numbers<[1], [0], [0], [1], [0, 0, 1, 1], [], []>} : vector<192x26xbf16>, vector<26x1024xbf16>, vector<192x1024xf32> -> vector<192x1024xf32>
    %228 = vector.extract_strided_slice %227 {offsets = [0, 0], sizes = [16, 1024], strides = [1, 1]} : vector<192x1024xf32> to vector<16x1024xf32>
    %229 = vector.extract_strided_slice %225 {offsets = [0, 0], sizes = [1, 1024], strides = [1, 1]} : vector<16x1024xf32> to vector<1x1024xf32>
    %230 = vector.broadcast %229 : vector<1x1024xf32> to vector<16x1024xf32>
    %231 = arith.mulf %228, %230 : vector<16x1024xf32>
    %232 = vector.extract_strided_slice %227 {offsets = [16, 0], sizes = [16, 1024], strides = [1, 1]} : vector<192x1024xf32> to vector<16x1024xf32>
    %233 = vector.extract_strided_slice %225 {offsets = [1, 0], sizes = [1, 1024], strides = [1, 1]} : vector<16x1024xf32> to vector<1x1024xf32>
    %234 = vector.broadcast %233 : vector<1x1024xf32> to vector<16x1024xf32>
    %235 = arith.mulf %232, %234 : vector<16x1024xf32>
    %236 = arith.addf %231, %235 : vector<16x1024xf32>
    %237 = vector.extract_strided_slice %227 {offsets = [32, 0], sizes = [16, 1024], strides = [1, 1]} : vector<192x1024xf32> to vector<16x1024xf32>
    %238 = vector.extract_strided_slice %225 {offsets = [2, 0], sizes = [1, 1024], strides = [1, 1]} : vector<16x1024xf32> to vector<1x1024xf32>
    %239 = vector.broadcast %238 : vector<1x1024xf32> to vector<16x1024xf32>
    %240 = arith.mulf %237, %239 : vector<16x1024xf32>
    %241 = arith.addf %236, %240 : vector<16x1024xf32>
    %242 = vector.extract_strided_slice %227 {offsets = [48, 0], sizes = [16, 1024], strides = [1, 1]} : vector<192x1024xf32> to vector<16x1024xf32>
    %243 = vector.extract_strided_slice %225 {offsets = [3, 0], sizes = [1, 1024], strides = [1, 1]} : vector<16x1024xf32> to vector<1x1024xf32>
    %244 = vector.broadcast %243 : vector<1x1024xf32> to vector<16x1024xf32>
    %245 = arith.mulf %242, %244 : vector<16x1024xf32>
    %246 = arith.addf %241, %245 : vector<16x1024xf32>
    %247 = vector.extract_strided_slice %227 {offsets = [64, 0], sizes = [16, 1024], strides = [1, 1]} : vector<192x1024xf32> to vector<16x1024xf32>
    %248 = vector.extract_strided_slice %225 {offsets = [4, 0], sizes = [1, 1024], strides = [1, 1]} : vector<16x1024xf32> to vector<1x1024xf32>
    %249 = vector.broadcast %248 : vector<1x1024xf32> to vector<16x1024xf32>
    %250 = arith.mulf %247, %249 : vector<16x1024xf32>
    %251 = arith.addf %246, %250 : vector<16x1024xf32>
    %252 = vector.extract_strided_slice %227 {offsets = [80, 0], sizes = [16, 1024], strides = [1, 1]} : vector<192x1024xf32> to vector<16x1024xf32>
    %253 = vector.extract_strided_slice %225 {offsets = [5, 0], sizes = [1, 1024], strides = [1, 1]} : vector<16x1024xf32> to vector<1x1024xf32>
    %254 = vector.broadcast %253 : vector<1x1024xf32> to vector<16x1024xf32>
    %255 = arith.mulf %252, %254 : vector<16x1024xf32>
    %256 = arith.addf %251, %255 : vector<16x1024xf32>
    %257 = vector.extract_strided_slice %227 {offsets = [96, 0], sizes = [16, 1024], strides = [1, 1]} : vector<192x1024xf32> to vector<16x1024xf32>
    %258 = vector.extract_strided_slice %225 {offsets = [6, 0], sizes = [1, 1024], strides = [1, 1]} : vector<16x1024xf32> to vector<1x1024xf32>
    %259 = vector.broadcast %258 : vector<1x1024xf32> to vector<16x1024xf32>
    %260 = arith.mulf %257, %259 : vector<16x1024xf32>
    %261 = arith.addf %256, %260 : vector<16x1024xf32>
    %262 = vector.extract_strided_slice %227 {offsets = [112, 0], sizes = [16, 1024], strides = [1, 1]} : vector<192x1024xf32> to vector<16x1024xf32>
    %263 = vector.extract_strided_slice %225 {offsets = [7, 0], sizes = [1, 1024], strides = [1, 1]} : vector<16x1024xf32> to vector<1x1024xf32>
    %264 = vector.broadcast %263 : vector<1x1024xf32> to vector<16x1024xf32>
    %265 = arith.mulf %262, %264 : vector<16x1024xf32>
    %266 = arith.addf %261, %265 : vector<16x1024xf32>
    %267 = vector.extract_strided_slice %227 {offsets = [128, 0], sizes = [16, 1024], strides = [1, 1]} : vector<192x1024xf32> to vector<16x1024xf32>
    %268 = vector.extract_strided_slice %225 {offsets = [8, 0], sizes = [1, 1024], strides = [1, 1]} : vector<16x1024xf32> to vector<1x1024xf32>
    %269 = vector.broadcast %268 : vector<1x1024xf32> to vector<16x1024xf32>
    %270 = arith.mulf %267, %269 : vector<16x1024xf32>
    %271 = arith.addf %266, %270 : vector<16x1024xf32>
    %272 = vector.extract_strided_slice %227 {offsets = [144, 0], sizes = [16, 1024], strides = [1, 1]} : vector<192x1024xf32> to vector<16x1024xf32>
    %273 = vector.extract_strided_slice %225 {offsets = [9, 0], sizes = [1, 1024], strides = [1, 1]} : vector<16x1024xf32> to vector<1x1024xf32>
    %274 = vector.broadcast %273 : vector<1x1024xf32> to vector<16x1024xf32>
    %275 = arith.mulf %272, %274 : vector<16x1024xf32>
    %276 = arith.addf %271, %275 : vector<16x1024xf32>
    %277 = vector.extract_strided_slice %227 {offsets = [160, 0], sizes = [16, 1024], strides = [1, 1]} : vector<192x1024xf32> to vector<16x1024xf32>
    %278 = vector.extract_strided_slice %225 {offsets = [10, 0], sizes = [1, 1024], strides = [1, 1]} : vector<16x1024xf32> to vector<1x1024xf32>
    %279 = vector.broadcast %278 : vector<1x1024xf32> to vector<16x1024xf32>
    %280 = arith.mulf %277, %279 : vector<16x1024xf32>
    %281 = arith.addf %276, %280 : vector<16x1024xf32>
    %282 = vector.extract_strided_slice %227 {offsets = [176, 0], sizes = [16, 1024], strides = [1, 1]} : vector<192x1024xf32> to vector<16x1024xf32>
    %283 = vector.extract_strided_slice %225 {offsets = [11, 0], sizes = [1, 1024], strides = [1, 1]} : vector<16x1024xf32> to vector<1x1024xf32>
    %284 = vector.broadcast %283 : vector<1x1024xf32> to vector<16x1024xf32>
    %285 = arith.mulf %282, %284 : vector<16x1024xf32>
    %286 = arith.addf %281, %285 : vector<16x1024xf32>
    %c0_14 = arith.constant 0 : index
    %c0_15 = arith.constant 0 : index
    %287 = vector.load %arg9[%c0_14, %c0_15] : memref<16x1xf32, #tpu.memory_space<vmem>>, vector<16x1xf32>
    %288 = vector.broadcast %287 : vector<16x1xf32> to vector<16x1024xf32>
    %289 = arith.addf %286, %288 : vector<16x1024xf32>
    %c0_16 = arith.constant 0 : index
    %c0_17 = arith.constant 0 : index
    %290 = vector.load %arg10[%c0_16, %c0_17] : memref<16x1xf32, #tpu.memory_space<vmem>>, vector<16x1xf32>
    %291 = vector.broadcast %290 : vector<16x1xf32> to vector<16x1024xf32>
    %292 = arith.mulf %161, %291 : vector<16x1024xf32>
    %cst_18 = arith.constant dense<0.000000e+00> : vector<1024xf32>
    %293 = vector.multi_reduction <add>, %292, %cst_18 [0] : vector<16x1024xf32> to vector<1024xf32>
    %294 = vector.shape_cast %293 : vector<1024xf32> to vector<1x1024xf32>
    %c0_19 = arith.constant 0 : index
    %c0_20 = arith.constant 0 : index
    %295 = vector.load %arg11[%c0_19, %c0_20] : memref<16x1xf32, #tpu.memory_space<vmem>>, vector<16x1xf32>
    %296 = vector.broadcast %295 : vector<16x1xf32> to vector<16x1024xf32>
    %297 = arith.mulf %225, %296 : vector<16x1024xf32>
    %cst_21 = arith.constant dense<0.000000e+00> : vector<1024xf32>
    %298 = vector.multi_reduction <add>, %297, %cst_21 [0] : vector<16x1024xf32> to vector<1024xf32>
    %299 = vector.shape_cast %298 : vector<1024xf32> to vector<1x1024xf32>
    %300 = arith.addf %294, %299 : vector<1x1024xf32>
    %c0_22 = arith.constant 0 : index
    %c0_23 = arith.constant 0 : index
    %301 = vector.load %arg12[%c0_22, %c0_23] : memref<16x1xf32, #tpu.memory_space<vmem>>, vector<16x1xf32>
    %302 = vector.broadcast %301 : vector<16x1xf32> to vector<16x1024xf32>
    %303 = arith.mulf %289, %302 : vector<16x1024xf32>
    %cst_24 = arith.constant dense<0.000000e+00> : vector<1024xf32>
    %304 = vector.multi_reduction <add>, %303, %cst_24 [0] : vector<16x1024xf32> to vector<1024xf32>
    %305 = vector.shape_cast %304 : vector<1024xf32> to vector<1x1024xf32>
    %306 = arith.addf %300, %305 : vector<1x1024xf32>
    %307 = vector.extract_strided_slice %306 {offsets = [0, 0], sizes = [1, 128], strides = [1, 1]} : vector<1x1024xf32> to vector<1x128xf32>
    %308 = vector.extract_strided_slice %306 {offsets = [0, 128], sizes = [1, 128], strides = [1, 1]} : vector<1x1024xf32> to vector<1x128xf32>
    %309 = arith.addf %307, %308 : vector<1x128xf32>
    %310 = vector.extract_strided_slice %306 {offsets = [0, 256], sizes = [1, 128], strides = [1, 1]} : vector<1x1024xf32> to vector<1x128xf32>
    %311 = arith.addf %309, %310 : vector<1x128xf32>
    %312 = vector.extract_strided_slice %306 {offsets = [0, 384], sizes = [1, 128], strides = [1, 1]} : vector<1x1024xf32> to vector<1x128xf32>
    %313 = arith.addf %311, %312 : vector<1x128xf32>
    %314 = vector.extract_strided_slice %306 {offsets = [0, 512], sizes = [1, 128], strides = [1, 1]} : vector<1x1024xf32> to vector<1x128xf32>
    %315 = arith.addf %313, %314 : vector<1x128xf32>
    %316 = vector.extract_strided_slice %306 {offsets = [0, 640], sizes = [1, 128], strides = [1, 1]} : vector<1x1024xf32> to vector<1x128xf32>
    %317 = arith.addf %315, %316 : vector<1x128xf32>
    %318 = vector.extract_strided_slice %306 {offsets = [0, 768], sizes = [1, 128], strides = [1, 1]} : vector<1x1024xf32> to vector<1x128xf32>
    %319 = arith.addf %317, %318 : vector<1x128xf32>
    %320 = vector.extract_strided_slice %306 {offsets = [0, 896], sizes = [1, 128], strides = [1, 1]} : vector<1x1024xf32> to vector<1x128xf32>
    %321 = arith.addf %319, %320 : vector<1x128xf32>
    %c0_25 = arith.constant 0 : index
    %c0_26 = arith.constant 0 : index
    %322 = vector.load %arg13[%c0_25, %c0_26] : memref<256x208xbf16, #tpu.memory_space<vmem>>, vector<256x208xbf16>
    %c0_27 = arith.constant 0 : index
    %c0_28 = arith.constant 0 : index
    %323 = vector.load %arg2[%c0_27, %c0_28] : memref<208x128xbf16, #tpu.memory_space<vmem>>, vector<208x128xbf16>
    %cst_29 = arith.constant dense<0.000000e+00> : vector<256x128xf32>
    %324 = tpu.matmul %322, %323, %cst_29 {dimension_numbers = #tpu.dot_dimension_numbers<[1], [0], [0], [1], [0, 0, 1, 1], [], []>} : vector<256x208xbf16>, vector<208x128xbf16>, vector<256x128xf32> -> vector<256x128xf32>
    %c0_30 = arith.constant 0 : index
    %c0_31 = arith.constant 0 : index
    %325 = vector.load %arg14[%c0_30, %c0_31] : memref<256x1xf32, #tpu.memory_space<vmem>>, vector<256x1xf32>
    %326 = vector.broadcast %325 : vector<256x1xf32> to vector<256x128xf32>
    %327 = arith.addf %324, %326 : vector<256x128xf32>
    %cst_32 = arith.constant 0.000000e+00 : f32
    %328 = vector.broadcast %cst_32 : f32 to vector<256x128xf32>
    %329 = arith.maximumf %327, %328 : vector<256x128xf32>
    %c0_33 = arith.constant 0 : index
    %c0_34 = arith.constant 0 : index
    %330 = vector.load %arg15[%c0_33, %c0_34] : memref<128x256xbf16, #tpu.memory_space<vmem>>, vector<128x256xbf16>
    %331 = arith.truncf %329 : vector<256x128xf32> to vector<256x128xbf16>
    %cst_35 = arith.constant dense<0.000000e+00> : vector<128x128xf32>
    %332 = tpu.matmul %330, %331, %cst_35 {dimension_numbers = #tpu.dot_dimension_numbers<[1], [0], [0], [1], [0, 0, 1, 1], [], []>} : vector<128x256xbf16>, vector<256x128xbf16>, vector<128x128xf32> -> vector<128x128xf32>
    %c0_36 = arith.constant 0 : index
    %c0_37 = arith.constant 0 : index
    %333 = vector.load %arg16[%c0_36, %c0_37] : memref<128x1xf32, #tpu.memory_space<vmem>>, vector<128x1xf32>
    %334 = vector.broadcast %333 : vector<128x1xf32> to vector<128x128xf32>
    %335 = arith.addf %332, %334 : vector<128x128xf32>
    %cst_38 = arith.constant 0.000000e+00 : f32
    %336 = vector.broadcast %cst_38 : f32 to vector<128x128xf32>
    %337 = arith.maximumf %335, %336 : vector<128x128xf32>
    %c0_39 = arith.constant 0 : index
    %c0_40 = arith.constant 0 : index
    %338 = vector.load %arg17[%c0_39, %c0_40] : memref<128x1xf32, #tpu.memory_space<vmem>>, vector<128x1xf32>
    %339 = vector.broadcast %338 : vector<128x1xf32> to vector<128x128xf32>
    %340 = arith.mulf %337, %339 : vector<128x128xf32>
    %cst_41 = arith.constant dense<0.000000e+00> : vector<128xf32>
    %341 = vector.multi_reduction <add>, %340, %cst_41 [0] : vector<128x128xf32> to vector<128xf32>
    %342 = vector.shape_cast %341 : vector<128xf32> to vector<1x128xf32>
    %c0_42 = arith.constant 0 : index
    %c0_43 = arith.constant 0 : index
    %343 = vector.load %arg3[%c0_42, %c0_43] : memref<1x128xf32, #tpu.memory_space<vmem>>, vector<1x128xf32>
    %344 = arith.addf %343, %321 : vector<1x128xf32>
    %345 = arith.addf %344, %342 : vector<1x128xf32>
    %346 = arith.negf %345 : vector<1x128xf32>
    %347 = math.exp %346 : vector<1x128xf32>
    %cst_44 = arith.constant 1.000000e+00 : f32
    %348 = vector.broadcast %cst_44 : f32 to vector<1x128xf32>
    %349 = arith.addf %348, %347 : vector<1x128xf32>
    %350 = arith.divf %348, %349 : vector<1x128xf32>
    %c0_45 = arith.constant 0 : index
    %c0_46 = arith.constant 0 : index
    %351 = vector.load %arg18[%c0_45, %c0_46] : memref<1x128xf32, #tpu.memory_space<vmem>>, vector<1x128xf32>
    tpu.vector_store %arg18[%c0_45, %c0_46], %350 {strides = array<i32>} : memref<1x128xf32, #tpu.memory_space<vmem>>, vector<1x128xf32>,
    return
  }
  func.func @transform_0(%arg0: i32) -> (i32, i32, i32) {
    %c0_i32 = arith.constant 0 : i32
    %c0_i32_0 = arith.constant 0 : i32
    %c0_i32_1 = arith.constant 0 : i32
    return %arg0, %c0_i32, %c0_i32_0 : i32, i32, i32
  }
  func.func @transform_1(%arg0: i32) -> (i32, i32) {
    %c0_i32 = arith.constant 0 : i32
    %c0_i32_0 = arith.constant 0 : i32
    return %c0_i32, %arg0 : i32, i32
  }
  func.func @transform_2(%arg0: i32) -> (i32, i32) {
    %c0_i32 = arith.constant 0 : i32
    %c0_i32_0 = arith.constant 0 : i32
    return %c0_i32, %arg0 : i32, i32
  }
  func.func @transform_3(%arg0: i32) -> (i32, i32) {
    %c0_i32 = arith.constant 0 : i32
    %c0_i32_0 = arith.constant 0 : i32
    %c0_i32_1 = arith.constant 0 : i32
    return %c0_i32, %c0_i32_0 : i32, i32
  }
  func.func @transform_4(%arg0: i32) -> (i32, i32) {
    %c0_i32 = arith.constant 0 : i32
    %c0_i32_0 = arith.constant 0 : i32
    %c0_i32_1 = arith.constant 0 : i32
    return %c0_i32, %c0_i32_0 : i32, i32
  }
  func.func @transform_5(%arg0: i32) -> (i32, i32) {
    %c0_i32 = arith.constant 0 : i32
    %c0_i32_0 = arith.constant 0 : i32
    %c0_i32_1 = arith.constant 0 : i32
    return %c0_i32, %c0_i32_0 : i32, i32
  }
  func.func @transform_6(%arg0: i32) -> (i32, i32) {
    %c0_i32 = arith.constant 0 : i32
    %c0_i32_0 = arith.constant 0 : i32
    %c0_i32_1 = arith.constant 0 : i32
    return %c0_i32, %c0_i32_0 : i32, i32
  }
  func.func @transform_7(%arg0: i32) -> (i32, i32) {
    %c0_i32 = arith.constant 0 : i32
    %c0_i32_0 = arith.constant 0 : i32
    %c0_i32_1 = arith.constant 0 : i32
    return %c0_i32, %c0_i32_0 : i32, i32
  }
  func.func @transform_8(%arg0: i32) -> (i32, i32) {
    %c0_i32 = arith.constant 0 : i32
    %c0_i32_0 = arith.constant 0 : i32
    %c0_i32_1 = arith.constant 0 : i32
    return %c0_i32, %c0_i32_0 : i32, i32
  }
  func.func @transform_9(%arg0: i32) -> (i32, i32) {
    %c0_i32 = arith.constant 0 : i32
    %c0_i32_0 = arith.constant 0 : i32
    %c0_i32_1 = arith.constant 0 : i32
    return %c0_i32, %c0_i32_0 : i32, i32
  }
  func.func @transform_10(%arg0: i32) -> (i32, i32) {
    %c0_i32 = arith.constant 0 : i32
    %c0_i32_0 = arith.constant 0 : i32
    %c0_i32_1 = arith.constant 0 : i32
    return %c0_i32, %c0_i32_0 : i32, i32
  }
  func.func @transform_11(%arg0: i32) -> (i32, i32) {
    %c0_i32 = arith.constant 0 : i32
    %c0_i32_0 = arith.constant 0 : i32
    %c0_i32_1 = arith.constant 0 : i32
    return %c0_i32, %c0_i32_0 : i32, i32
  }
  func.func @transform_12(%arg0: i32) -> (i32, i32) {
    %c0_i32 = arith.constant 0 : i32
    %c0_i32_0 = arith.constant 0 : i32
    %c0_i32_1 = arith.constant 0 : i32
    return %c0_i32, %c0_i32_0 : i32, i32
  }
  func.func @transform_13(%arg0: i32) -> (i32, i32) {
    %c0_i32 = arith.constant 0 : i32
    %c0_i32_0 = arith.constant 0 : i32
    %c0_i32_1 = arith.constant 0 : i32
    return %c0_i32, %c0_i32_0 : i32, i32
  }
  func.func @transform_14(%arg0: i32) -> (i32, i32) {
    %c0_i32 = arith.constant 0 : i32
    %c0_i32_0 = arith.constant 0 : i32
    %c0_i32_1 = arith.constant 0 : i32
    return %c0_i32, %c0_i32_0 : i32, i32
  }
  func.func @transform_15(%arg0: i32) -> (i32, i32) {
    %c0_i32 = arith.constant 0 : i32
    %c0_i32_0 = arith.constant 0 : i32
    %c0_i32_1 = arith.constant 0 : i32
    return %c0_i32, %c0_i32_0 : i32, i32
  }
  func.func @transform_16(%arg0: i32) -> (i32, i32) {
    %c0_i32 = arith.constant 0 : i32
    %c0_i32_0 = arith.constant 0 : i32
    %c0_i32_1 = arith.constant 0 : i32
    return %c0_i32, %c0_i32_0 : i32, i32
  }
  func.func @transform_17(%arg0: i32) -> (i32, i32) {
    %c0_i32 = arith.constant 0 : i32
    %c0_i32_0 = arith.constant 0 : i32
    return %c0_i32, %arg0 : i32, i32
  }
}

</mosaic_0001>

<llo_original>
// kernel: xdeepfm_forward.1
$region0: #{xdeepfm_forward.1}
  #allocation0 [shape = 'u32[]', space=smem, size = 0x4, offset = 0x4, fixed_abs, tag = 'smem constant byte address 0x4 - core index']
  #allocation1 [shape = 'u32[144,128]{1,0:T(1,128)}', space=vmem, size = 0x12000, scoped, tag = 'internal scratch']
  %s0 = inlined_call_operand.vmem [shape: bf16[1,26,1024], index: 0, kind: input, shape index: {}]
  %s1 = inlined_call_operand.vmem [shape: bf16[208,128], index: 1, kind: input, shape index: {}]
  %s2 = inlined_call_operand.vmem [shape: f32[1,128], index: 2, kind: input, shape index: {}]
  %s3 = inlined_call_operand.vmem [shape: bf16[416,26], index: 3, kind: input, shape index: {}]
  %s4 = inlined_call_operand.vmem [shape: f32[16,1], index: 4, kind: input, shape index: {}]
  %s5 = inlined_call_operand.vmem [shape: bf16[192,26], index: 5, kind: input, shape index: {}]
  %s6 = inlined_call_operand.vmem [shape: f32[16,1], index: 6, kind: input, shape index: {}]
  %s7 = inlined_call_operand.vmem [shape: bf16[192,26], index: 7, kind: input, shape index: {}]
  %s8 = inlined_call_operand.vmem [shape: f32[16,1], index: 8, kind: input, shape index: {}]
  %s9 = inlined_call_operand.vmem [shape: f32[16,1], index: 9, kind: input, shape index: {}]
  %s10 = inlined_call_operand.vmem [shape: f32[16,1], index: 10, kind: input, shape index: {}]
  %s11 = inlined_call_operand.vmem [shape: f32[16,1], index: 11, kind: input, shape index: {}]
  %s12 = inlined_call_operand.vmem [shape: bf16[256,208], index: 12, kind: input, shape index: {}]
  %s13 = inlined_call_operand.vmem [shape: f32[256,1], index: 13, kind: input, shape index: {}]
  %s14 = inlined_call_operand.vmem [shape: bf16[128,256], index: 14, kind: input, shape index: {}]
  %s15 = inlined_call_operand.vmem [shape: f32[128,1], index: 15, kind: input, shape index: {}]
  %s16 = inlined_call_operand.vmem [shape: f32[128,1], index: 16, kind: input, shape index: {}]
  %s17 = inlined_call_operand.vmem [shape: f32[1,128], index: 17, kind: output, shape index: {}]
  %s18 = sld [smem:[#allocation0]]
  $region78: #{xdeepfm_forward.1} parent=0
    _
  %s20 = ssub.s32 1, %s18
  %s21 = scalar_select 0, %s20, %s18
  // Predicated region
  $region2: #{xdeepfm_forward.1} parent=0 // pred_check
    _
  $region3: #{xdeepfm_forward.1} parent=0 // pred_check_branch
    %23 = sbr.rel (0) target = $region5
  $region4: #{xdeepfm_forward.1} parent=0 // pred_region
    _
  $region5: #{xdeepfm_forward.1} parent=0 // pred_fallthru
    _
  // Predicated region
  $region6: #{xdeepfm_forward.1} parent=0 // pred_check
    _
  $region7: #{xdeepfm_forward.1} parent=0 // pred_check_branch
    %25 = sbr.rel (0) target = $region9
  $region8: #{xdeepfm_forward.1} parent=0 // pred_region
    _
  $region9: #{xdeepfm_forward.1} parent=0 // pred_fallthru
    _
  // Predicated region
  $region10: #{xdeepfm_forward.1} parent=0 // pred_check
    _
  $region11: #{xdeepfm_forward.1} parent=0 // pred_check_branch
    %27 = sbr.rel (0) target = $region13
  $region12: #{xdeepfm_forward.1} parent=0 // pred_region
    _
  $region13: #{xdeepfm_forward.1} parent=0 // pred_fallthru
    _
  // Predicated region
  $region14: #{xdeepfm_forward.1} parent=0 // pred_check
    _
  $region15: #{xdeepfm_forward.1} parent=0 // pred_check_branch
    %29 = sbr.rel (0) target = $region17
  $region16: #{xdeepfm_forward.1} parent=0 // pred_region
    _
  $region17: #{xdeepfm_forward.1} parent=0 // pred_fallthru
    _
  // Predicated region
  $region18: #{xdeepfm_forward.1} parent=0 // pred_check
    _
  $region19: #{xdeepfm_forward.1} parent=0 // pred_check_branch
    %31 = sbr.rel (0) target = $region21
  $region20: #{xdeepfm_forward.1} parent=0 // pred_region
    _
  $region21: #{xdeepfm_forward.1} parent=0 // pred_fallthru
    _
  // Predicated region
  $region22: #{xdeepfm_forward.1} parent=0 // pred_check
    _
  $region23: #{xdeepfm_forward.1} parent=0 // pred_check_branch
    %33 = sbr.rel (0) target = $region25
  $region24: #{xdeepfm_forward.1} parent=0 // pred_region
    _
  $region25: #{xdeepfm_forward.1} parent=0 // pred_fallthru
    _
  // Predicated region
  $region26: #{xdeepfm_forward.1} parent=0 // pred_check
    _
  $region27: #{xdeepfm_forward.1} parent=0 // pred_check_branch
    %35 = sbr.rel (0) target = $region29
  $region28: #{xdeepfm_forward.1} parent=0 // pred_region
    _
  $region29: #{xdeepfm_forward.1} parent=0 // pred_fallthru
    _
  // Predicated region
  $region30: #{xdeepfm_forward.1} parent=0 // pred_check
    _
  $region31: #{xdeepfm_forward.1} parent=0 // pred_check_branch
    %37 = sbr.rel (0) target = $region33
  $region32: #{xdeepfm_forward.1} parent=0 // pred_region
    _
  $region33: #{xdeepfm_forward.1} parent=0 // pred_fallthru
    _
  // Predicated region
  $region34: #{xdeepfm_forward.1} parent=0 // pred_check
    _
  $region35: #{xdeepfm_forward.1} parent=0 // pred_check_branch
    %39 = sbr.rel (0) target = $region37
  $region36: #{xdeepfm_forward.1} parent=0 // pred_region
    _
  $region37: #{xdeepfm_forward.1} parent=0 // pred_fallthru
    _
  // Predicated region
  $region38: #{xdeepfm_forward.1} parent=0 // pred_check
    _
  $region39: #{xdeepfm_forward.1} parent=0 // pred_check_branch
    %41 = sbr.rel (0) target = $region41
  $region40: #{xdeepfm_forward.1} parent=0 // pred_region
    _
  $region41: #{xdeepfm_forward.1} parent=0 // pred_fallthru
    _
  // Predicated region
  $region42: #{xdeepfm_forward.1} parent=0 // pred_check
    _
  $region43: #{xdeepfm_forward.1} parent=0 // pred_check_branch
    %43 = sbr.rel (0) target = $region45
  $region44: #{xdeepfm_forward.1} parent=0 // pred_region
    _
  $region45: #{xdeepfm_forward.1} parent=0 // pred_fallthru
    _
  // Predicated region
  $region46: #{xdeepfm_forward.1} parent=0 // pred_check
    _
  $region47: #{xdeepfm_forward.1} parent=0 // pred_check_branch
    %45 = sbr.rel (0) target = $region49
  $region48: #{xdeepfm_forward.1} parent=0 // pred_region
    _
  $region49: #{xdeepfm_forward.1} parent=0 // pred_fallthru
    _
  // Predicated region
  $region50: #{xdeepfm_forward.1} parent=0 // pred_check
    _
  $region51: #{xdeepfm_forward.1} parent=0 // pred_check_branch
    %47 = sbr.rel (0) target = $region53
  $region52: #{xdeepfm_forward.1} parent=0 // pred_region
    _
  $region53: #{xdeepfm_forward.1} parent=0 // pred_fallthru
    _
  // Predicated region
  $region54: #{xdeepfm_forward.1} parent=0 // pred_check
    _
  $region55: #{xdeepfm_forward.1} parent=0 // pred_check_branch
    %49 = sbr.rel (0) target = $region57
  $region56: #{xdeepfm_forward.1} parent=0 // pred_region
    _
  $region57: #{xdeepfm_forward.1} parent=0 // pred_fallthru
    _
  // Predicated region
  $region58: #{xdeepfm_forward.1} parent=0 // pred_check
    _
  $region59: #{xdeepfm_forward.1} parent=0 // pred_check_branch
    %51 = sbr.rel (0) target = $region61
  $region60: #{xdeepfm_forward.1} parent=0 // pred_region
    _
  $region61: #{xdeepfm_forward.1} parent=0 // pred_fallthru
    _
  // Predicated region
  $region62: #{xdeepfm_forward.1} parent=0 // pred_check
    _
  $region63: #{xdeepfm_forward.1} parent=0 // pred_check_branch
    %53 = sbr.rel (0) target = $region65
  $region64: #{xdeepfm_forward.1} parent=0 // pred_region
    _
  $region65: #{xdeepfm_forward.1} parent=0 // pred_fallthru
    _
  // Predicated region
  $region66: #{xdeepfm_forward.1} parent=0 // pred_check
    _
  $region67: #{xdeepfm_forward.1} parent=0 // pred_check_branch
    %55 = sbr.rel (0) target = $region69
  $region68: #{xdeepfm_forward.1} parent=0 // pred_region
    _
  $region69: #{xdeepfm_forward.1} parent=0 // pred_fallthru
    _
  %v57 = vld [vmem:[%s0] sm:$0xff]
  %v58 = vld [vmem:[%s0 + $0x8] sm:$0xff]
  %v59 = vld [vmem:[%s0 + $0x10] sm:$0xff]
  %v60 = vld [vmem:[%s0 + $0x18] sm:$0xff]
  %v61 = vld [vmem:[%s0 + $0x20] sm:$0xff]
  %v62 = vld [vmem:[%s0 + $0x28] sm:$0xff]
  %v63 = vld [vmem:[%s0 + $0x30] sm:$0xff]
  %v64 = vld [vmem:[%s0 + $0x38] sm:$0xff]
  %v65 = vld [vmem:[%s0 + $0x40] sm:$0xff]
  %v66 = vld [vmem:[%s0 + $0x48] sm:$0xff]
  %v67 = vld [vmem:[%s0 + $0x50] sm:$0xff]
  %v68 = vld [vmem:[%s0 + $0x58] sm:$0xff]
  %v69 = vld [vmem:[%s0 + $0x60] sm:$0x11]
  %v70 = vld [vmem:[%s0 + $0x68] sm:$0x11]
  %v71 = vld [vmem:[%s0 + $0x70] sm:$0x11]
  %v72 = vld [vmem:[%s0 + $0x78] sm:$0x11]
  %v73 = vld [vmem:[%s3] sm:$0xf]
  %v74 = vld [vmem:[%s3 + $0x4] sm:$0xf]
  %v75 = vld [vmem:[%s3 + $0x8] sm:$0xf]
  %v76 = vld [vmem:[%s3 + $0xc] sm:$0xf]
  %v77 = vld [vmem:[%s3 + $0x10] sm:$0xf]
  %v78 = vld [vmem:[%s3 + $0x14] sm:$0xf]
  %v79 = vld [vmem:[%s3 + $0x18] sm:$0xf]
  %v80 = vld [vmem:[%s3 + $0x1c] sm:$0xf]
  %v81 = vld [vmem:[%s3 + $0x20] sm:$0xf]
  %v82 = vld [vmem:[%s3 + $0x24] sm:$0xf]
  %v83 = vld [vmem:[%s3 + $0x28] sm:$0xf]
  %v84 = vld [vmem:[%s3 + $0x2c] sm:$0xf]
  %v85 = vld [vmem:[%s3 + $0x30] sm:$0xf]
  %v86 = vld [vmem:[%s3 + $0x34] sm:$0xf]
  %v87 = vld [vmem:[%s3 + $0x38] sm:$0xf]
  %v88 = vld [vmem:[%s3 + $0x3c] sm:$0xf]
  %v89 = vld [vmem:[%s3 + $0x40] sm:$0xf]
  %v90 = vld [vmem:[%s3 + $0x44] sm:$0xf]
  %v91 = vld [vmem:[%s3 + $0x48] sm:$0xf]
  %v92 = vld [vmem:[%s3 + $0x4c] sm:$0xf]
  %v93 = vld [vmem:[%s3 + $0x50] sm:$0xf]
  %v94 = vld [vmem:[%s3 + $0x54] sm:$0xf]
  %v95 = vld [vmem:[%s3 + $0x58] sm:$0xf]
  %v96 = vld [vmem:[%s3 + $0x5c] sm:$0xf]
  %v97 = vld [vmem:[%s3 + $0x60] sm:$0xf]
  %v98 = vld [vmem:[%s3 + $0x64] sm:$0xf]
  %v99 = vld [vmem:[%s3 + $0x68] sm:$0xf]
  %v100 = vld [vmem:[%s3 + $0x6c] sm:$0xf]
  %v101 = vld [vmem:[%s3 + $0x70] sm:$0xf]
  %v102 = vld [vmem:[%s3 + $0x74] sm:$0xf]
  %v103 = vld [vmem:[%s3 + $0x78] sm:$0xf]
  %v104 = vld [vmem:[%s3 + $0x7c] sm:$0xf]
  %v105 = vld [vmem:[%s3 + $0x80] sm:$0xf]
  %v106 = vld [vmem:[%s3 + $0x84] sm:$0xf]
  %v107 = vld [vmem:[%s3 + $0x88] sm:$0xf]
  %v108 = vld [vmem:[%s3 + $0x8c] sm:$0xf]
  %v109 = vld [vmem:[%s3 + $0x90] sm:$0xf]
  %v110 = vld [vmem:[%s3 + $0x94] sm:$0xf]
  %v111 = vld [vmem:[%s3 + $0x98] sm:$0xf]
  %v112 = vld [vmem:[%s3 + $0x9c] sm:$0xf]
  %v113 = vld [vmem:[%s3 + $0xa0] sm:$0xf]
  %v114 = vld [vmem:[%s3 + $0xa4] sm:$0xf]
  %v115 = vld [vmem:[%s3 + $0xa8] sm:$0xf]
  %v116 = vld [vmem:[%s3 + $0xac] sm:$0xf]
  %v117 = vld [vmem:[%s3 + $0xb0] sm:$0xf]
  %v118 = vld [vmem:[%s3 + $0xb4] sm:$0xf]
  %v119 = vld [vmem:[%s3 + $0xb8] sm:$0xf]
  %v120 = vld [vmem:[%s3 + $0xbc] sm:$0xf]
  %v121 = vld [vmem:[%s3 + $0xc0] sm:$0xf]
  %v122 = vld [vmem:[%s3 + $0xc4] sm:$0xf]
  %v123 = vld [vmem:[%s3 + $0xc8] sm:$0xf]
  %v124 = vld [vmem:[%s3 + $0xcc] sm:$0xf]
  %v177 = vunpack.c.l.b16 %v73
  %v178 = vunpack.c.l.b16 %v74
  %v179 = vunpack.c.l.b16 %v75
  %v180 = vunpack.c.l.b16 %v76
  %v181 = vunpack.c.l.b16 %v77
  %v182 = vunpack.c.l.b16 %v78
  %v183 = vunpack.c.l.b16 %v79
  %v184 = vunpack.c.l.b16 %v80
  %v185 = vunpack.c.l.b16 %v81
  %v186 = vunpack.c.l.b16 %v82
  %v187 = vunpack.c.l.b16 %v83
  %v188 = vunpack.c.l.b16 %v84
  %v189 = vunpack.c.l.b16 %v85
  %v190 = vunpack.c.l.b16 %v86
  %v191 = vunpack.c.l.b16 %v87
  %v192 = vunpack.c.l.b16 %v88
  %v193 = vunpack.c.l.b16 %v89
  %v194 = vunpack.c.l.b16 %v90
  %v195 = vunpack.c.l.b16 %v91
  %v196 = vunpack.c.l.b16 %v92
  %v197 = vunpack.c.l.b16 %v93
  %v198 = vunpack.c.l.b16 %v94
  %v199 = vunpack.c.l.b16 %v95
  %v200 = vunpack.c.l.b16 %v96
  %v201 = vunpack.c.l.b16 %v97
  %v202 = vunpack.c.l.b16 %v98
  %v203 = vunpack.c.l.b16 %v99
  %v204 = vunpack.c.l.b16 %v100
  %v205 = vunpack.c.l.b16 %v101
  %v206 = vunpack.c.l.b16 %v102
  %v207 = vunpack.c.l.b16 %v103
  %v208 = vunpack.c.l.b16 %v104
  %v209 = vunpack.c.l.b16 %v105
  %v210 = vunpack.c.l.b16 %v106
  %v211 = vunpack.c.l.b16 %v107
  %v212 = vunpack.c.l.b16 %v108
  %v213 = vunpack.c.l.b16 %v109
  %v214 = vunpack.c.l.b16 %v110
  %v215 = vunpack.c.l.b16 %v111
  %v216 = vunpack.c.l.b16 %v112
  %v217 = vunpack.c.l.b16 %v113
  %v218 = vunpack.c.l.b16 %v114
  %v219 = vunpack.c.l.b16 %v115
  %v220 = vunpack.c.l.b16 %v116
  %v221 = vunpack.c.l.b16 %v117
  %v222 = vunpack.c.l.b16 %v118
  %v223 = vunpack.c.l.b16 %v119
  %v224 = vunpack.c.l.b16 %v120
  %v225 = vunpack.c.l.b16 %v121
  %v226 = vunpack.c.l.b16 %v122
  %v227 = vunpack.c.l.b16 %v123
  %v228 = vunpack.c.l.b16 %v124
  %v229 = vpack.c.b16 %v178, %v177
  %v230 = vpack.c.b16 %v180, %v179
  %v231 = vpack.c.b16 %v182, %v181
  %v232 = vpack.c.b16 %v184, %v183
  %v233 = vpack.c.b16 %v186, %v185
  %v234 = vpack.c.b16 %v188, %v187
  %v235 = vpack.c.b16 %v190, %v189
  %v236 = vpack.c.b16 %v192, %v191
  %v237 = vpack.c.b16 %v194, %v193
  %v238 = vpack.c.b16 %v196, %v195
  %v239 = vpack.c.b16 %v198, %v197
  %v240 = vpack.c.b16 %v200, %v199
  %v241 = vpack.c.b16 %v202, %v201
  %v242 = vpack.c.b16 %v204, %v203
  %v243 = vpack.c.b16 %v206, %v205
  %v244 = vpack.c.b16 %v208, %v207
  %v245 = vpack.c.b16 %v210, %v209
  %v246 = vpack.c.b16 %v212, %v211
  %v247 = vpack.c.b16 %v214, %v213
  %v248 = vpack.c.b16 %v216, %v215
  %v249 = vpack.c.b16 %v218, %v217
  %v250 = vpack.c.b16 %v220, %v219
  %v251 = vpack.c.b16 %v222, %v221
  %v252 = vpack.c.b16 %v224, %v223
  %v253 = vpack.c.b16 %v226, %v225
  %v254 = vpack.c.b16 %v228, %v227
  %v271 = vunpack.c.l.b16 %v57
  %v272 = vunpack.c.h.b16 %v57
  %v273 = vunpack.c.l.b16 %v58
  %v274 = vunpack.c.h.b16 %v58
  %v275 = vunpack.c.l.b16 %v59
  %v276 = vunpack.c.h.b16 %v59
  %v277 = vunpack.c.l.b16 %v60
  %v278 = vunpack.c.h.b16 %v60
  %v279 = vunpack.c.l.b16 %v61
  %v280 = vunpack.c.h.b16 %v61
  %v281 = vunpack.c.l.b16 %v62
  %v282 = vunpack.c.h.b16 %v62
  %v283 = vunpack.c.l.b16 %v63
  %v284 = vunpack.c.h.b16 %v63
  %v285 = vunpack.c.l.b16 %v64
  %v286 = vunpack.c.h.b16 %v64
  %v287 = vunpack.c.l.b16 %v65
  %v288 = vunpack.c.h.b16 %v65
  %v289 = vunpack.c.l.b16 %v66
  %v290 = vunpack.c.h.b16 %v66
  %v291 = vunpack.c.l.b16 %v67
  %v292 = vunpack.c.h.b16 %v67
  %v293 = vunpack.c.l.b16 %v68
  %v294 = vunpack.c.h.b16 %v68
  %v295 = vunpack.c.l.b16 %v69
  %v296 = vunpack.c.h.b16 %v69
  %v297 = vunpack.c.l.b16 %v70
  %v298 = vunpack.c.h.b16 %v70
  %v299 = vunpack.c.l.b16 %v71
  %v300 = vunpack.c.h.b16 %v71
  %v301 = vunpack.c.l.b16 %v72
  %v302 = vunpack.c.h.b16 %v72
  %v303 = vpack.c.b16 %v279, %v271
  %v304 = vpack.c.b16 %v280, %v272
  %v305 = vpack.c.b16 %v281, %v273
  %v306 = vpack.c.b16 %v282, %v274
  %v307 = vpack.c.b16 %v283, %v275
  %v308 = vpack.c.b16 %v284, %v276
  %v309 = vpack.c.b16 %v285, %v277
  %v310 = vpack.c.b16 %v286, %v278
  %v311 = vpack.c.b16 %v295, %v287
  %v312 = vpack.c.b16 %v296, %v288
  %v313 = vpack.c.b16 %v297, %v289
  %v314 = vpack.c.b16 %v298, %v290
  %v315 = vpack.c.b16 %v299, %v291
  %v316 = vpack.c.b16 %v300, %v292
  %v317 = vpack.c.b16 %v301, %v293
  %v318 = vpack.c.b16 %v302, %v294
  %vm327 = vcmask 211968
  %v329 = vsel %vm327, %v229, 0
  %v332 = vsel %vm327, %v230, 0
  %v335 = vsel %vm327, %v231, 0
  %v338 = vsel %vm327, %v232, 0
  %v341 = vsel %vm327, %v233, 0
  %v344 = vsel %vm327, %v234, 0
  %v347 = vsel %vm327, %v235, 0
  %v350 = vsel %vm327, %v236, 0
  %v353 = vsel %vm327, %v237, 0
  %v356 = vsel %vm327, %v238, 0
  %v359 = vsel %vm327, %v239, 0
  %v362 = vsel %vm327, %v240, 0
  %v365 = vsel %vm327, %v241, 0
  %v368 = vsel %vm327, %v242, 0
  %v371 = vsel %vm327, %v243, 0
  %v374 = vsel %vm327, %v244, 0
  %v377 = vsel %vm327, %v245, 0
  %v380 = vsel %vm327, %v246, 0
  %v383 = vsel %vm327, %v247, 0
  %v386 = vsel %vm327, %v248, 0
  %v389 = vsel %vm327, %v249, 0
  %v392 = vsel %vm327, %v250, 0
  %v395 = vsel %vm327, %v251, 0
  %v398 = vsel %vm327, %v252, 0
  %v401 = vsel %vm327, %v253, 0
  %v404 = vsel %vm327, %v254, 0
  %vm406 = vcmask 1044480
  %v408 = vsel %vm406, %v311, 0
  %v411 = vsel %vm406, %v312, 0
  %v414 = vsel %vm406, %v313, 0
  %v417 = vsel %vm406, %v314, 0
  %v420 = vsel %vm406, %v315, 0
  %v423 = vsel %vm406, %v316, 0
  %v426 = vsel %vm406, %v317, 0
  %v429 = vsel %vm406, %v318, 0
  %431 = vmatprep.subr.bf16.mxu0 %v304
  %432 = vmatpush1.bf16.msra.mxu0 %v303
  %433 = vmatprep.subr.bf16.mxu0 %v411
  %434 = vmatpush1.bf16.msra.mxu0 %v408
  %435 = vmatprep.subr.bf16.mxu0 0
  %436 = vmatpush1.bf16.msra.mxu0 0
  %437 = vmatprep.subr.bf16.mxu0 0
  %438 = vmatpush1.bf16.msra.mxu0 0
  %439 = vmatprep.subr.bf16.mxu0 0
  %440 = vmatpush1.bf16.msra.mxu0 0
  %441 = vmatprep.subr.bf16.mxu0 0
  %442 = vmatpush1.bf16.msra.mxu0 0
  %443 = vmatprep.subr.bf16.mxu0 0
  %444 = vmatpush1.bf16.msra.mxu0 0
  %445 = vmatprep.subr.bf16.mxu0 0
  %446 = vmatpush1.bf16.msra.mxu0 0
  %447 = vmatprep.subr.bf16.mxu0 0
  %448 = vmatpush1.bf16.msra.mxu0 0
  %449 = vmatprep.subr.bf16.mxu0 0
  %450 = vmatpush1.bf16.msra.mxu0 0
  %451 = vmatprep.subr.bf16.mxu0 0
  %452 = vmatpush1.bf16.msra.mxu0 0
  %453 = vmatprep.subr.bf16.mxu0 0
  %454 = vmatpush1.bf16.msra.mxu0 0
  %455 = vmatprep.subr.bf16.mxu0 0
  %456 = vmatpush1.bf16.msra.mxu0 0
  %457 = vmatprep.subr.bf16.mxu0 0
  %458 = vmatpush1.bf16.msra.mxu0 0
  %459 = vmatprep.subr.bf16.mxu0 0
  %460 = vmatpush1.bf16.msra.mxu0 0
  %461 = vmatprep.subr.bf16.mxu0 0
  %462 = vmatpush1.bf16.msra.mxu0 0
  %463 = vmatprep.mubr.bf16.mxu0 0
  %464 = vmatmul.mubr.bf16.gmra.mrb[0].mxu0 %v329
  %v465 = vpop.f32.mrb[0].mxu0
  %v466 = vadd.f32 0.0, %v465
  %v467 = vpop.f32.mrb[0].mxu0
  %v468 = vadd.f32 0.0, %v467
  %v469 = vpop.f32.mrb[0].mxu0
  %v470 = vadd.f32 0.0, %v469
  %v471 = vpop.f32.mrb[0].mxu0
  %v472 = vadd.f32 0.0, %v471
  %473 = vmatprep.mubr.bf16.mxu0 0
  %474 = vmatmul.mubr.bf16.gmra.mrb[0].mxu0 %v332
  %v475 = vpop.f32.mrb[0].mxu0
  %v476 = vadd.f32 0.0, %v475
  %v477 = vpop.f32.mrb[0].mxu0
  %v478 = vadd.f32 0.0, %v477
  %v479 = vpop.f32.mrb[0].mxu0
  %v480 = vadd.f32 0.0, %v479
  %v481 = vpop.f32.mrb[0].mxu0
  %v482 = vadd.f32 0.0, %v481
  %483 = vmatprep.mubr.bf16.mxu0 0
  %484 = vmatmul.mubr.bf16.gmra.mrb[0].mxu0 %v335
  %v485 = vpop.f32.mrb[0].mxu0
  %v486 = vadd.f32 0.0, %v485
  %v487 = vpop.f32.mrb[0].mxu0
  %v488 = vadd.f32 0.0, %v487
  %v489 = vpop.f32.mrb[0].mxu0
  %v490 = vadd.f32 0.0, %v489
  %v491 = vpop.f32.mrb[0].mxu0
  %v492 = vadd.f32 0.0, %v491
  %493 = vmatprep.mubr.bf16.mxu0 0
  %494 = vmatmul.mubr.bf16.gmra.mrb[0].mxu0 %v338
  %v495 = vpop.f32.mrb[0].mxu0
  %v496 = vadd.f32 0.0, %v495
  %v497 = vpop.f32.mrb[0].mxu0
  %v498 = vadd.f32 0.0, %v497
  %v499 = vpop.f32.mrb[0].mxu0
  %v500 = vadd.f32 0.0, %v499
  %v501 = vpop.f32.mrb[0].mxu0
  %v502 = vadd.f32 0.0, %v501
  %503 = vmatprep.mubr.bf16.mxu0 0
  %504 = vmatmul.mubr.bf16.gmra.mrb[0].mxu0 %v341
  %v505 = vpop.f32.mrb[0].mxu0
  %v506 = vadd.f32 0.0, %v505
  %v507 = vpop.f32.mrb[0].mxu0
  %v508 = vadd.f32 0.0, %v507
  %v509 = vpop.f32.mrb[0].mxu0
  %v510 = vadd.f32 0.0, %v509
  %v511 = vpop.f32.mrb[0].mxu0
  %v512 = vadd.f32 0.0, %v511
  %513 = vmatprep.mubr.bf16.mxu0 0
  %514 = vmatmul.mubr.bf16.gmra.mrb[0].mxu0 %v344
  %v515 = vpop.f32.mrb[0].mxu0
  %v516 = vadd.f32 0.0, %v515
  %v517 = vpop.f32.mrb[0].mxu0
  %v518 = vadd.f32 0.0, %v517
  %v519 = vpop.f32.mrb[0].mxu0
  %v520 = vadd.f32 0.0, %v519
  %v521 = vpop.f32.mrb[0].mxu0
  %v522 = vadd.f32 0.0, %v521
  %523 = vmatprep.mubr.bf16.mxu0 0
  %524 = vmatmul.mubr.bf16.gmra.mrb[0].mxu0 %v347
  %v525 = vpop.f32.mrb[0].mxu0
  %v526 = vadd.f32 0.0, %v525
  %v527 = vpop.f32.mrb[0].mxu0
  %v528 = vadd.f32 0.0, %v527
  %v529 = vpop.f32.mrb[0].mxu0
  %v530 = vadd.f32 0.0, %v529
  %v531 = vpop.f32.mrb[0].mxu0
  %v532 = vadd.f32 0.0, %v531
  %533 = vmatprep.mubr.bf16.mxu0 0
  %534 = vmatmul.mubr.bf16.gmra.mrb[0].mxu0 %v350
  %v535 = vpop.f32.mrb[0].mxu0
  %v536 = vadd.f32 0.0, %v535
  %v537 = vpop.f32.mrb[0].mxu0
  %v538 = vadd.f32 0.0, %v537
  %v539 = vpop.f32.mrb[0].mxu0
  %v540 = vadd.f32 0.0, %v539
  %v541 = vpop.f32.mrb[0].mxu0
  %v542 = vadd.f32 0.0, %v541
  %543 = vmatprep.mubr.bf16.mxu0 0
  %544 = vmatmul.mubr.bf16.gmra.mrb[0].mxu0 %v353
  %v545 = vpop.f32.mrb[0].mxu0
  %v546 = vadd.f32 0.0, %v545
  %v547 = vpop.f32.mrb[0].mxu0
  %v548 = vadd.f32 0.0, %v547
  %v549 = vpop.f32.mrb[0].mxu0
  %v550 = vadd.f32 0.0, %v549
  %v551 = vpop.f32.mrb[0].mxu0
  %v552 = vadd.f32 0.0, %v551
  %553 = vmatprep.mubr.bf16.mxu0 0
  %554 = vmatmul.mubr.bf16.gmra.mrb[0].mxu0 %v356
  %v555 = vpop.f32.mrb[0].mxu0
  %v556 = vadd.f32 0.0, %v555
  %v557 = vpop.f32.mrb[0].mxu0
  %v558 = vadd.f32 0.0, %v557
  %v559 = vpop.f32.mrb[0].mxu0
  %v560 = vadd.f32 0.0, %v559
  %v561 = vpop.f32.mrb[0].mxu0
  %v562 = vadd.f32 0.0, %v561
  %563 = vmatprep.mubr.bf16.mxu0 0
  %564 = vmatmul.mubr.bf16.gmra.mrb[0].mxu0 %v359
  %v565 = vpop.f32.mrb[0].mxu0
  %v566 = vadd.f32 0.0, %v565
  %v567 = vpop.f32.mrb[0].mxu0
  %v568 = vadd.f32 0.0, %v567
  %v569 = vpop.f32.mrb[0].mxu0
  %v570 = vadd.f32 0.0, %v569
  %v571 = vpop.f32.mrb[0].mxu0
  %v572 = vadd.f32 0.0, %v571
  %573 = vmatprep.mubr.bf16.mxu0 0
  %574 = vmatmul.mubr.bf16.gmra.mrb[0].mxu0 %v362
  %v575 = vpop.f32.mrb[0].mxu0
  %v576 = vadd.f32 0.0, %v575
  %v577 = vpop.f32.mrb[0].mxu0
  %v578 = vadd.f32 0.0, %v577
  %v579 = vpop.f32.mrb[0].mxu0
  %v580 = vadd.f32 0.0, %v579
  %v581 = vpop.f32.mrb[0].mxu0
  %v582 = vadd.f32 0.0, %v581
  %583 = vmatprep.mubr.bf16.mxu0 0
  %584 = vmatmul.mubr.bf16.gmra.mrb[0].mxu0 %v365
  %v585 = vpop.f32.mrb[0].mxu0
  %v586 = vadd.f32 0.0, %v585
  %v587 = vpop.f32.mrb[0].mxu0
  %v588 = vadd.f32 0.0, %v587
  %v589 = vpop.f32.mrb[0].mxu0
  %v590 = vadd.f32 0.0, %v589
  %v591 = vpop.f32.mrb[0].mxu0
  %v592 = vadd.f32 0.0, %v591
  %593 = vmatprep.mubr.bf16.mxu0 0
  %594 = vmatmul.mubr.bf16.gmra.mrb[0].mxu0 %v368
  %v595 = vpop.f32.mrb[0].mxu0
  %v596 = vadd.f32 0.0, %v595
  %v597 = vpop.f32.mrb[0].mxu0
  %v598 = vadd.f32 0.0, %v597
  %v599 = vpop.f32.mrb[0].mxu0
  %v600 = vadd.f32 0.0, %v599
  %v601 = vpop.f32.mrb[0].mxu0
  %v602 = vadd.f32 0.0, %v601
  %603 = vmatprep.mubr.bf16.mxu0 0
  %604 = vmatmul.mubr.bf16.gmra.mrb[0].mxu0 %v371
  %v605 = vpop.f32.mrb[0].mxu0
  %v606 = vadd.f32 0.0, %v605
  %v607 = vpop.f32.mrb[0].mxu0
  %v608 = vadd.f32 0.0, %v607
  %v609 = vpop.f32.mrb[0].mxu0
  %v610 = vadd.f32 0.0, %v609
  %v611 = vpop.f32.mrb[0].mxu0
  %v612 = vadd.f32 0.0, %v611
  %613 = vmatprep.mubr.bf16.mxu0 0
  %614 = vmatmul.mubr.bf16.gmra.mrb[0].mxu0 %v374
  %v615 = vpop.f32.mrb[0].mxu0
  %v616 = vadd.f32 0.0, %v615
  %v617 = vpop.f32.mrb[0].mxu0
  %v618 = vadd.f32 0.0, %v617
  %v619 = vpop.f32.mrb[0].mxu0
  %v620 = vadd.f32 0.0, %v619
  %v621 = vpop.f32.mrb[0].mxu0
  %v622 = vadd.f32 0.0, %v621
  %623 = vmatprep.mubr.bf16.mxu0 0
  %624 = vmatmul.mubr.bf16.gmra.mrb[0].mxu0 %v377
  %v625 = vpop.f32.mrb[0].mxu0
  %v626 = vadd.f32 0.0, %v625
  %v627 = vpop.f32.mrb[0].mxu0
  %v628 = vadd.f32 0.0, %v627
  %v629 = vpop.f32.mrb[0].mxu0
  %v630 = vadd.f32 0.0, %v629
  %v631 = vpop.f32.mrb[0].mxu0
  %v632 = vadd.f32 0.0, %v631
  %633 = vmatprep.mubr.bf16.mxu0 0
  %634 = vmatmul.mubr.bf16.gmra.mrb[0].mxu0 %v380
  %v635 = vpop.f32.mrb[0].mxu0
  %v636 = vadd.f32 0.0, %v635
  %v637 = vpop.f32.mrb[0].mxu0
  %v638 = vadd.f32 0.0, %v637
  %v639 = vpop.f32.mrb[0].mxu0
  %v640 = vadd.f32 0.0, %v639
  %v641 = vpop.f32.mrb[0].mxu0
  %v642 = vadd.f32 0.0, %v641
  %643 = vmatprep.mubr.bf16.mxu0 0
  %644 = vmatmul.mubr.bf16.gmra.mrb[0].mxu0 %v383
  %v645 = vpop.f32.mrb[0].mxu0
  %v646 = vadd.f32 0.0, %v645
  %v647 = vpop.f32.mrb[0].mxu0
  %v648 = vadd.f32 0.0, %v647
  %v649 = vpop.f32.mrb[0].mxu0
  %v650 = vadd.f32 0.0, %v649
  %v651 = vpop.f32.mrb[0].mxu0
  %v652 = vadd.f32 0.0, %v651
  %653 = vmatprep.mubr.bf16.mxu0 0
  %654 = vmatmul.mubr.bf16.gmra.mrb[0].mxu0 %v386
  %v655 = vpop.f32.mrb[0].mxu0
  %v656 = vadd.f32 0.0, %v655
  %v657 = vpop.f32.mrb[0].mxu0
  %v658 = vadd.f32 0.0, %v657
  %v659 = vpop.f32.mrb[0].mxu0
  %v660 = vadd.f32 0.0, %v659
  %v661 = vpop.f32.mrb[0].mxu0
  %v662 = vadd.f32 0.0, %v661
  %663 = vmatprep.mubr.bf16.mxu0 0
  %664 = vmatmul.mubr.bf16.gmra.mrb[0].mxu0 %v389
  %v665 = vpop.f32.mrb[0].mxu0
  %v666 = vadd.f32 0.0, %v665
  %v667 = vpop.f32.mrb[0].mxu0
  %v668 = vadd.f32 0.0, %v667
  %v669 = vpop.f32.mrb[0].mxu0
  %v670 = vadd.f32 0.0, %v669
  %v671 = vpop.f32.mrb[0].mxu0
  %v672 = vadd.f32 0.0, %v671
  %673 = vmatprep.mubr.bf16.mxu0 0
  %674 = vmatmul.mubr.bf16.gmra.mrb[0].mxu0 %v392
  %v675 = vpop.f32.mrb[0].mxu0
  %v676 = vadd.f32 0.0, %v675
  %v677 = vpop.f32.mrb[0].mxu0
  %v678 = vadd.f32 0.0, %v677
  %v679 = vpop.f32.mrb[0].mxu0
  %v680 = vadd.f32 0.0, %v679
  %v681 = vpop.f32.mrb[0].mxu0
  %v682 = vadd.f32 0.0, %v681
  %683 = vmatprep.mubr.bf16.mxu0 0
  %684 = vmatmul.mubr.bf16.gmra.mrb[0].mxu0 %v395
  %v685 = vpop.f32.mrb[0].mxu0
  %v686 = vadd.f32 0.0, %v685
  %v687 = vpop.f32.mrb[0].mxu0
  %v688 = vadd.f32 0.0, %v687
  %v689 = vpop.f32.mrb[0].mxu0
  %v690 = vadd.f32 0.0, %v689
  %v691 = vpop.f32.mrb[0].mxu0
  %v692 = vadd.f32 0.0, %v691
  %693 = vmatprep.mubr.bf16.mxu0 0
  %694 = vmatmul.mubr.bf16.gmra.mrb[0].mxu0 %v398
  %v695 = vpop.f32.mrb[0].mxu0
  %v696 = vadd.f32 0.0, %v695
  %v697 = vpop.f32.mrb[0].mxu0
  %v698 = vadd.f32 0.0, %v697
  %v699 = vpop.f32.mrb[0].mxu0
  %v700 = vadd.f32 0.0, %v699
  %v701 = vpop.f32.mrb[0].mxu0
  %v702 = vadd.f32 0.0, %v701
  %703 = vmatprep.mubr.bf16.mxu0 0
  %704 = vmatmul.mubr.bf16.gmra.mrb[0].mxu0 %v401
  %v705 = vpop.f32.mrb[0].mxu0
  %v706 = vadd.f32 0.0, %v705
  %v707 = vpop.f32.mrb[0].mxu0
  %v708 = vadd.f32 0.0, %v707
  %v709 = vpop.f32.mrb[0].mxu0
  %v710 = vadd.f32 0.0, %v709
  %v711 = vpop.f32.mrb[0].mxu0
  %v712 = vadd.f32 0.0, %v711
  %713 = vmatprep.mubr.bf16.mxu0 0
  %714 = vmatmul.mubr.bf16.gmra.mrb[0].mxu0 %v404
  %v715 = vpop.f32.mrb[0].mxu0
  %v716 = vadd.f32 0.0, %v715
  %v717 = vpop.f32.mrb[0].mxu0
  %v718 = vadd.f32 0.0, %v717
  %v719 = vpop.f32.mrb[0].mxu0
  %v720 = vadd.f32 0.0, %v719
  %v721 = vpop.f32.mrb[0].mxu0
  %v722 = vadd.f32 0.0, %v721
  %723 = vdwg.mxu0
  %724 = vmatprep.subr.bf16.mxu0 %v306
  %725 = vmatpush1.bf16.msra.mxu0 %v305
  %726 = vmatprep.subr.bf16.mxu0 %v417
  %727 = vmatpush1.bf16.msra.mxu0 %v414
  %728 = vmatprep.subr.bf16.mxu0 0
  %729 = vmatpush1.bf16.msra.mxu0 0
  %730 = vmatprep.subr.bf16.mxu0 0
  %731 = vmatpush1.bf16.msra.mxu0 0
  %732 = vmatprep.subr.bf16.mxu0 0
  %733 = vmatpush1.bf16.msra.mxu0 0
  %734 = vmatprep.subr.bf16.mxu0 0
  %735 = vmatpush1.bf16.msra.mxu0 0
  %736 = vmatprep.subr.bf16.mxu0 0
  %737 = vmatpush1.bf16.msra.mxu0 0
  %738 = vmatprep.subr.bf16.mxu0 0
  %739 = vmatpush1.bf16.msra.mxu0 0
  %740 = vmatprep.subr.bf16.mxu0 0
  %741 = vmatpush1.bf16.msra.mxu0 0
  %742 = vmatprep.subr.bf16.mxu0 0
  %743 = vmatpush1.bf16.msra.mxu0 0
  %744 = vmatprep.subr.bf16.mxu0 0
  %745 = vmatpush1.bf16.msra.mxu0 0
  %746 = vmatprep.subr.bf16.mxu0 0
  %747 = vmatpush1.bf16.msra.mxu0 0
  %748 = vmatprep.subr.bf16.mxu0 0
  %749 = vmatpush1.bf16.msra.mxu0 0
  %750 = vmatprep.subr.bf16.mxu0 0
  %751 = vmatpush1.bf16.msra.mxu0 0
  %752 = vmatprep.subr.bf16.mxu0 0
  %753 = vmatpush1.bf16.msra.mxu0 0
  %754 = vmatprep.subr.bf16.mxu0 0
  %755 = vmatpush1.bf16.msra.mxu0 0
  %756 = vmatprep.mubr.bf16.mxu0 0
  %757 = vmatmul.mubr.bf16.gmra.mrb[0].mxu0 %v329
  %v758 = vpop.f32.mrb[0].mxu0
  %v759 = vadd.f32 0.0, %v758
  %v760 = vpop.f32.mrb[0].mxu0
  %v761 = vadd.f32 0.0, %v760
  %v762 = vpop.f32.mrb[0].mxu0
  %v763 = vadd.f32 0.0, %v762
  %v764 = vpop.f32.mrb[0].mxu0
  %v765 = vadd.f32 0.0, %v764
  %766 = vmatprep.mubr.bf16.mxu0 0
  %767 = vmatmul.mubr.bf16.gmra.mrb[0].mxu0 %v332
  %v768 = vpop.f32.mrb[0].mxu0
  %v769 = vadd.f32 0.0, %v768
  %v770 = vpop.f32.mrb[0].mxu0
  %v771 = vadd.f32 0.0, %v770
  %v772 = vpop.f32.mrb[0].mxu0
  %v773 = vadd.f32 0.0, %v772
  %v774 = vpop.f32.mrb[0].mxu0
  %v775 = vadd.f32 0.0, %v774
  %776 = vmatprep.mubr.bf16.mxu0 0
  %777 = vmatmul.mubr.bf16.gmra.mrb[0].mxu0 %v335
  %v778 = vpop.f32.mrb[0].mxu0
  %v779 = vadd.f32 0.0, %v778
  %v780 = vpop.f32.mrb[0].mxu0
  %v781 = vadd.f32 0.0, %v780
  %v782 = vpop.f32.mrb[0].mxu0
  %v783 = vadd.f32 0.0, %v782
  %v784 = vpop.f32.mrb[0].mxu0
  %v785 = vadd.f32 0.0, %v784
  %786 = vmatprep.mubr.bf16.mxu0 0
  %787 = vmatmul.mubr.bf16.gmra.mrb[0].mxu0 %v338
  %v788 = vpop.f32.mrb[0].mxu0
  %v789 = vadd.f32 0.0, %v788
  %v790 = vpop.f32.mrb[0].mxu0
  %v791 = vadd.f32 0.0, %v790
  %v792 = vpop.f32.mrb[0].mxu0
  %v793 = vadd.f32 0.0, %v792
  %v794 = vpop.f32.mrb[0].mxu0
  %v795 = vadd.f32 0.0, %v794
  %796 = vmatprep.mubr.bf16.mxu0 0
  %797 = vmatmul.mubr.bf16.gmra.mrb[0].mxu0 %v341
  %v798 = vpop.f32.mrb[0].mxu0
  %v799 = vadd.f32 0.0, %v798
  %v800 = vpop.f32.mrb[0].mxu0
  %v801 = vadd.f32 0.0, %v800
  %v802 = vpop.f32.mrb[0].mxu0
  %v803 = vadd.f32 0.0, %v802
  %v804 = vpop.f32.mrb[0].mxu0
  %v805 = vadd.f32 0.0, %v804
  %806 = vmatprep.mubr.bf16.mxu0 0
  %807 = vmatmul.mubr.bf16.gmra.mrb[0].mxu0 %v344
  %v808 = vpop.f32.mrb[0].mxu0
  %v809 = vadd.f32 0.0, %v808
  %v810 = vpop.f32.mrb[0].mxu0
  %v811 = vadd.f32 0.0, %v810
  %v812 = vpop.f32.mrb[0].mxu0
  %v813 = vadd.f32 0.0, %v812
  %v814 = vpop.f32.mrb[0].mxu0
  %v815 = vadd.f32 0.0, %v814
  %816 = vmatprep.mubr.bf16.mxu0 0
  %817 = vmatmul.mubr.bf16.gmra.mrb[0].mxu0 %v347
  %v818 = vpop.f32.mrb[0].mxu0
  %v819 = vadd.f32 0.0, %v818
  %v820 = vpop.f32.mrb[0].mxu0
  %v821 = vadd.f32 0.0, %v820
  %v822 = vpop.f32.mrb[0].mxu0
  %v823 = vadd.f32 0.0, %v822
  %v824 = vpop.f32.mrb[0].mxu0
  %v825 = vadd.f32 0.0, %v824
  %826 = vmatprep.mubr.bf16.mxu0 0
  %827 = vmatmul.mubr.bf16.gmra.mrb[0].mxu0 %v350
  %v828 = vpop.f32.mrb[0].mxu0
  %v829 = vadd.f32 0.0, %v828
  %v830 = vpop.f32.mrb[0].mxu0
  %v831 = vadd.f32 0.0, %v830
  %v832 = vpop.f32.mrb[0].mxu0
  %v833 = vadd.f32 0.0, %v832
  %v834 = vpop.f32.mrb[0].mxu0
  %v835 = vadd.f32 0.0, %v834
  %836 = vmatprep.mubr.bf16.mxu0 0
  %837 = vmatmul.mubr.bf16.gmra.mrb[0].mxu0 %v353
  %v838 = vpop.f32.mrb[0].mxu0
  %v839 = vadd.f32 0.0, %v838
  %v840 = vpop.f32.mrb[0].mxu0
  %v841 = vadd.f32 0.0, %v840
  %v842 = vpop.f32.mrb[0].mxu0
  %v843 = vadd.f32 0.0, %v842
  %v844 = vpop.f32.mrb[0].mxu0
  %v845 = vadd.f32 0.0, %v844
  %846 = vmatprep.mubr.bf16.mxu0 0
  %847 = vmatmul.mubr.bf16.gmra.mrb[0].mxu0 %v356
  %v848 = vpop.f32.mrb[0].mxu0
  %v849 = vadd.f32 0.0, %v848
  %v850 = vpop.f32.mrb[0].mxu0
  %v851 = vadd.f32 0.0, %v850
  %v852 = vpop.f32.mrb[0].mxu0
  %v853 = vadd.f32 0.0, %v852
  %v854 = vpop.f32.mrb[0].mxu0
  %v855 = vadd.f32 0.0, %v854
  %856 = vmatprep.mubr.bf16.mxu0 0
  %857 = vmatmul.mubr.bf16.gmra.mrb[0].mxu0 %v359
  %v858 = vpop.f32.mrb[0].mxu0
  %v859 = vadd.f32 0.0, %v858
  %v860 = vpop.f32.mrb[0].mxu0
  %v861 = vadd.f32 0.0, %v860
  %v862 = vpop.f32.mrb[0].mxu0
  %v863 = vadd.f32 0.0, %v862
  %v864 = vpop.f32.mrb[0].mxu0
  %v865 = vadd.f32 0.0, %v864
  %866 = vmatprep.mubr.bf16.mxu0 0
  %867 = vmatmul.mubr.bf16.gmra.mrb[0].mxu0 %v362
  %v868 = vpop.f32.mrb[0].mxu0
  %v869 = vadd.f32 0.0, %v868
  %v870 = vpop.f32.mrb[0].mxu0
  %v871 = vadd.f32 0.0, %v870
  %v872 = vpop.f32.mrb[0].mxu0
  %v873 = vadd.f32 0.0, %v872
  %v874 = vpop.f32.mrb[0].mxu0
  %v875 = vadd.f32 0.0, %v874
  %876 = vmatprep.mubr.bf16.mxu0 0
  %877 = vmatmul.mubr.bf16.gmra.mrb[0].mxu0 %v365
  %v878 = vpop.f32.mrb[0].mxu0
  %v879 = vadd.f32 0.0, %v878
  %v880 = vpop.f32.mrb[0].mxu0
  %v881 = vadd.f32 0.0, %v880
  %v882 = vpop.f32.mrb[0].mxu0
  %v883 = vadd.f32 0.0, %v882
  %v884 = vpop.f32.mrb[0].mxu0
  %v885 = vadd.f32 0.0, %v884
  %886 = vmatprep.mubr.bf16.mxu0 0
  %887 = vmatmul.mubr.bf16.gmra.mrb[0].mxu0 %v368
  %v888 = vpop.f32.mrb[0].mxu0
  %v889 = vadd.f32 0.0, %v888
  %v890 = vpop.f32.mrb[0].mxu0
  %v891 = vadd.f32 0.0, %v890
  %v892 = vpop.f32.mrb[0].mxu0
  %v893 = vadd.f32 0.0, %v892
  %v894 = vpop.f32.mrb[0].mxu0
  %v895 = vadd.f32 0.0, %v894
  %896 = vmatprep.mubr.bf16.mxu0 0
  %897 = vmatmul.mubr.bf16.gmra.mrb[0].mxu0 %v371
  %v898 = vpop.f32.mrb[0].mxu0
  %v899 = vadd.f32 0.0, %v898
  %v900 = vpop.f32.mrb[0].mxu0
  %v901 = vadd.f32 0.0, %v900
  %v902 = vpop.f32.mrb[0].mxu0
  %v903 = vadd.f32 0.0, %v902
  %v904 = vpop.f32.mrb[0].mxu0
  %v905 = vadd.f32 0.0, %v904
  %906 = vmatprep.mubr.bf16.mxu0 0
  %907 = vmatmul.mubr.bf16.gmra.mrb[0].mxu0 %v374
  %v908 = vpop.f32.mrb[0].mxu0
  %v909 = vadd.f32 0.0, %v908
  %v910 = vpop.f32.mrb[0].mxu0
  %v911 = vadd.f32 0.0, %v910
  %v912 = vpop.f32.mrb[0].mxu0
  %v913 = vadd.f32 0.0, %v912
  %v914 = vpop.f32.mrb[0].mxu0
  %v915 = vadd.f32 0.0, %v914
  %916 = vmatprep.mubr.bf16.mxu0 0
  %917 = vmatmul.mubr.bf16.gmra.mrb[0].mxu0 %v377
  %v918 = vpop.f32.mrb[0].mxu0
  %v919 = vadd.f32 0.0, %v918
  %v920 = vpop.f32.mrb[0].mxu0
  %v921 = vadd.f32 0.0, %v920
  %v922 = vpop.f32.mrb[0].mxu0
  %v923 = vadd.f32 0.0, %v922
  %v924 = vpop.f32.mrb[0].mxu0
  %v925 = vadd.f32 0.0, %v924
  %926 = vmatprep.mubr.bf16.mxu0 0
  %927 = vmatmul.mubr.bf16.gmra.mrb[0].mxu0 %v380
  %v928 = vpop.f32.mrb[0].mxu0
  %v929 = vadd.f32 0.0, %v928
  %v930 = vpop.f32.mrb[0].mxu0
  %v931 = vadd.f32 0.0, %v930
  %v932 = vpop.f32.mrb[0].mxu0
  %v933 = vadd.f32 0.0, %v932
  %v934 = vpop.f32.mrb[0].mxu0
  %v935 = vadd.f32 0.0, %v934
  %936 = vmatprep.mubr.bf16.mxu0 0
  %937 = vmatmul.mubr.bf16.gmra.mrb[0].mxu0 %v383
  %v938 = vpop.f32.mrb[0].mxu0
  %v939 = vadd.f32 0.0, %v938
  %v940 = vpop.f32.mrb[0].mxu0
  %v941 = vadd.f32 0.0, %v940
  %v942 = vpop.f32.mrb[0].mxu0
  %v943 = vadd.f32 0.0, %v942
  %v944 = vpop.f32.mrb[0].mxu0
  %v945 = vadd.f32 0.0, %v944
  %946 = vmatprep.mubr.bf16.mxu0 0
  %947 = vmatmul.mubr.bf16.gmra.mrb[0].mxu0 %v386
  %v948 = vpop.f32.mrb[0].mxu0
  %v949 = vadd.f32 0.0, %v948
  %v950 = vpop.f32.mrb[0].mxu0
  %v951 = vadd.f32 0.0, %v950
  %v952 = vpop.f32.mrb[0].mxu0
  %v953 = vadd.f32 0.0, %v952
  %v954 = vpop.f32.mrb[0].mxu0
  %v955 = vadd.f32 0.0, %v954
  %956 = vmatprep.mubr.bf16.mxu0 0
  %957 = vmatmul.mubr.bf16.gmra.mrb[0].mxu0 %v389
  %v958 = vpop.f32.mrb[0].mxu0
  %v959 = vadd.f32 0.0, %v958
  %v960 = vpop.f32.mrb[0].mxu0
  %v961 = vadd.f32 0.0, %v960
  %v962 = vpop.f32.mrb[0].mxu0
  %v963 = vadd.f32 0.0, %v962
  %v964 = vpop.f32.mrb[0].mxu0
  %v965 = vadd.f32 0.0, %v964
  %966 = vmatprep.mubr.bf16.mxu0 0
  %967 = vmatmul.mubr.bf16.gmra.mrb[0].mxu0 %v392
  %v968 = vpop.f32.mrb[0].mxu0
  %v969 = vadd.f32 0.0, %v968
  %v970 = vpop.f32.mrb[0].mxu0
  %v971 = vadd.f32 0.0, %v970
  %v972 = vpop.f32.mrb[0].mxu0
  %v973 = vadd.f32 0.0, %v972
  %v974 = vpop.f32.mrb[0].mxu0
  %v975 = vadd.f32 0.0, %v974
  %976 = vmatprep.mubr.bf16.mxu0 0
  %977 = vmatmul.mubr.bf16.gmra.mrb[0].mxu0 %v395
  %v978 = vpop.f32.mrb[0].mxu0
  %v979 = vadd.f32 0.0, %v978
  %v980 = vpop.f32.mrb[0].mxu0
  %v981 = vadd.f32 0.0, %v980
  %v982 = vpop.f32.mrb[0].mxu0
  %v983 = vadd.f32 0.0, %v982
  %v984 = vpop.f32.mrb[0].mxu0
  %v985 = vadd.f32 0.0, %v984
  %986 = vmatprep.mubr.bf16.mxu0 0
  %987 = vmatmul.mubr.bf16.gmra.mrb[0].mxu0 %v398
  %v988 = vpop.f32.mrb[0].mxu0
  %v989 = vadd.f32 0.0, %v988
  %v990 = vpop.f32.mrb[0].mxu0
  %v991 = vadd.f32 0.0, %v990
  %v992 = vpop.f32.mrb[0].mxu0
  %v993 = vadd.f32 0.0, %v992
  %v994 = vpop.f32.mrb[0].mxu0
  %v995 = vadd.f32 0.0, %v994
  %996 = vmatprep.mubr.bf16.mxu0 0
  %997 = vmatmul.mubr.bf16.gmra.mrb[0].mxu0 %v401
  %v998 = vpop.f32.mrb[0].mxu0
  %v999 = vadd.f32 0.0, %v998
  %v1000 = vpop.f32.mrb[0].mxu0
  %v1001 = vadd.f32 0.0, %v1000
  %v1002 = vpop.f32.mrb[0].mxu0
  %v1003 = vadd.f32 0.0, %v1002
  %v1004 = vpop.f32.mrb[0].mxu0
  %v1005 = vadd.f32 0.0, %v1004
  %1006 = vmatprep.mubr.bf16.mxu0 0
  %1007 = vmatmul.mubr.bf16.gmra.mrb[0].mxu0 %v404
  %v1008 = vpop.f32.mrb[0].mxu0
  %v1009 = vadd.f32 0.0, %v1008
  %v1010 = vpop.f32.mrb[0].mxu0
  %v1011 = vadd.f32 0.0, %v1010
  %v1012 = vpop.f32.mrb[0].mxu0
  %v1013 = vadd.f32 0.0, %v1012
  %v1014 = vpop.f32.mrb[0].mxu0
  %v1015 = vadd.f32 0.0, %v1014
  %1016 = vdwg.mxu0
  %1017 = vmatprep.subr.bf16.mxu0 %v308
  %1018 = vmatpush1.bf16.msra.mxu0 %v307
  %1019 = vmatprep.subr.bf16.mxu0 %v423
  %1020 = vmatpush1.bf16.msra.mxu0 %v420
  %1021 = vmatprep.subr.bf16.mxu0 0
  %1022 = vmatpush1.bf16.msra.mxu0 0
  %1023 = vmatprep.subr.bf16.mxu0 0
  %1024 = vmatpush1.bf16.msra.mxu0 0
  %1025 = vmatprep.subr.bf16.mxu0 0
  %1026 = vmatpush1.bf16.msra.mxu0 0
  %1027 = vmatprep.subr.bf16.mxu0 0
  %1028 = vmatpush1.bf16.msra.mxu0 0
  %1029 = vmatprep.subr.bf16.mxu0 0
  %1030 = vmatpush1.bf16.msra.mxu0 0
  %1031 = vmatprep.subr.bf16.mxu0 0
  %1032 = vmatpush1.bf16.msra.mxu0 0
  %1033 = vmatprep.subr.bf16.mxu0 0
  %1034 = vmatpush1.bf16.msra.mxu0 0
  %1035 = vmatprep.subr.bf16.mxu0 0
  %1036 = vmatpush1.bf16.msra.mxu0 0
  %1037 = vmatprep.subr.bf16.mxu0 0
  %1038 = vmatpush1.bf16.msra.mxu0 0
  %1039 = vmatprep.subr.bf16.mxu0 0
  %1040 = vmatpush1.bf16.msra.mxu0 0
  %1041 = vmatprep.subr.bf16.mxu0 0
  %1042 = vmatpush1.bf16.msra.mxu0 0
  %1043 = vmatprep.subr.bf16.mxu0 0
  %1044 = vmatpush1.bf16.msra.mxu0 0
  %1045 = vmatprep.subr.bf16.mxu0 0
  %1046 = vmatpush1.bf16.msra.mxu0 0
  %1047 = vmatprep.subr.bf16.mxu0 0
  %1048 = vmatpush1.bf16.msra.mxu0 0
  %1049 = vmatprep.mubr.bf16.mxu0 0
  %1050 = vmatmul.mubr.bf16.gmra.mrb[0].mxu0 %v329
  %v1051 = vpop.f32.mrb[0].mxu0
  %v1052 = vadd.f32 0.0, %v1051
  %v1053 = vpop.f32.mrb[0].mxu0
  %v1054 = vadd.f32 0.0, %v1053
  %v1055 = vpop.f32.mrb[0].mxu0
  %v1056 = vadd.f32 0.0, %v1055
  %v1057 = vpop.f32.mrb[0].mxu0
  %v1058 = vadd.f32 0.0, %v1057
  %1059 = vmatprep.mubr.bf16.mxu0 0
  %1060 = vmatmul.mubr.bf16.gmra.mrb[0].mxu0 %v332
  %v1061 = vpop.f32.mrb[0].mxu0
  %v1062 = vadd.f32 0.0, %v1061
  %v1063 = vpop.f32.mrb[0].mxu0
  %v1064 = vadd.f32 0.0, %v1063
  %v1065 = vpop.f32.mrb[0].mxu0
  %v1066 = vadd.f32 0.0, %v1065
  %v1067 = vpop.f32.mrb[0].mxu0
  %v1068 = vadd.f32 0.0, %v1067
  %1069 = vmatprep.mubr.bf16.mxu0 0
  %1070 = vmatmul.mubr.bf16.gmra.mrb[0].mxu0 %v335
  %v1071 = vpop.f32.mrb[0].mxu0
  %v1072 = vadd.f32 0.0, %v1071
  %v1073 = vpop.f32.mrb[0].mxu0
  %v1074 = vadd.f32 0.0, %v1073
  %v1075 = vpop.f32.mrb[0].mxu0
  %v1076 = vadd.f32 0.0, %v1075
  %v1077 = vpop.f32.mrb[0].mxu0
  %v1078 = vadd.f32 0.0, %v1077
  %1079 = vmatprep.mubr.bf16.mxu0 0
  %1080 = vmatmul.mubr.bf16.gmra.mrb[0].mxu0 %v338
  %v1081 = vpop.f32.mrb[0].mxu0
  %v1082 = vadd.f32 0.0, %v1081
  %v1083 = vpop.f32.mrb[0].mxu0
  %v1084 = vadd.f32 0.0, %v1083
  %v1085 = vpop.f32.mrb[0].mxu0
  %v1086 = vadd.f32 0.0, %v1085
  %v1087 = vpop.f32.mrb[0].mxu0
  %v1088 = vadd.f32 0.0, %v1087
  %1089 = vmatprep.mubr.bf16.mxu0 0
  %1090 = vmatmul.mubr.bf16.gmra.mrb[0].mxu0 %v341
  %v1091 = vpop.f32.mrb[0].mxu0
  %v1092 = vadd.f32 0.0, %v1091
  %v1093 = vpop.f32.mrb[0].mxu0
  %v1094 = vadd.f32 0.0, %v1093
  %v1095 = vpop.f32.mrb[0].mxu0
  %v1096 = vadd.f32 0.0, %v1095
  %v1097 = vpop.f32.mrb[0].mxu0
  %v1098 = vadd.f32 0.0, %v1097
  %1099 = vmatprep.mubr.bf16.mxu0 0
  %1100 = vmatmul.mubr.bf16.gmra.mrb[0].mxu0 %v344
  %v1101 = vpop.f32.mrb[0].mxu0
  %v1102 = vadd.f32 0.0, %v1101
  %v1103 = vpop.f32.mrb[0].mxu0
  %v1104 = vadd.f32 0.0, %v1103
  %v1105 = vpop.f32.mrb[0].mxu0
  %v1106 = vadd.f32 0.0, %v1105
  %v1107 = vpop.f32.mrb[0].mxu0
  %v1108 = vadd.f32 0.0, %v1107
  %1109 = vmatprep.mubr.bf16.mxu0 0
  %1110 = vmatmul.mubr.bf16.gmra.mrb[0].mxu0 %v347
  %v1111 = vpop.f32.mrb[0].mxu0
  %v1112 = vadd.f32 0.0, %v1111
  %v1113 = vpop.f32.mrb[0].mxu0
  %v1114 = vadd.f32 0.0, %v1113
  %v1115 = vpop.f32.mrb[0].mxu0
  %v1116 = vadd.f32 0.0, %v1115
  %v1117 = vpop.f32.mrb[0].mxu0
  %v1118 = vadd.f32 0.0, %v1117
  %1119 = vmatprep.mubr.bf16.mxu0 0
  %1120 = vmatmul.mubr.bf16.gmra.mrb[0].mxu0 %v350
  %v1121 = vpop.f32.mrb[0].mxu0
  %v1122 = vadd.f32 0.0, %v1121
  %v1123 = vpop.f32.mrb[0].mxu0
  %v1124 = vadd.f32 0.0, %v1123
  %v1125 = vpop.f32.mrb[0].mxu0
  %v1126 = vadd.f32 0.0, %v1125
  %v1127 = vpop.f32.mrb[0].mxu0
  %v1128 = vadd.f32 0.0, %v1127
  %1129 = vmatprep.mubr.bf16.mxu0 0
  %1130 = vmatmul.mubr.bf16.gmra.mrb[0].mxu0 %v353
  %v1131 = vpop.f32.mrb[0].mxu0
  %v1132 = vadd.f32 0.0, %v1131
  %v1133 = vpop.f32.mrb[0].mxu0
  %v1134 = vadd.f32 0.0, %v1133
  %v1135 = vpop.f32.mrb[0].mxu0
  %v1136 = vadd.f32 0.0, %v1135
  %v1137 = vpop.f32.mrb[0].mxu0
  %v1138 = vadd.f32 0.0, %v1137
  %1139 = vmatprep.mubr.bf16.mxu0 0
  %1140 = vmatmul.mubr.bf16.gmra.mrb[0].mxu0 %v356
  %v1141 = vpop.f32.mrb[0].mxu0
  %v1142 = vadd.f32 0.0, %v1141
  %v1143 = vpop.f32.mrb[0].mxu0
  %v1144 = vadd.f32 0.0, %v1143
  %v1145 = vpop.f32.mrb[0].mxu0
  %v1146 = vadd.f32 0.0, %v1145
  %v1147 = vpop.f32.mrb[0].mxu0
  %v1148 = vadd.f32 0.0, %v1147
  %1149 = vmatprep.mubr.bf16.mxu0 0
  %1150 = vmatmul.mubr.bf16.gmra.mrb[0].mxu0 %v359
  %v1151 = vpop.f32.mrb[0].mxu0
  %v1152 = vadd.f32 0.0, %v1151
  %v1153 = vpop.f32.mrb[0].mxu0
  %v1154 = vadd.f32 0.0, %v1153
  %v1155 = vpop.f32.mrb[0].mxu0
  %v1156 = vadd.f32 0.0, %v1155
  %v1157 = vpop.f32.mrb[0].mxu0
  %v1158 = vadd.f32 0.0, %v1157
  %1159 = vmatprep.mubr.bf16.mxu0 0
  %1160 = vmatmul.mubr.bf16.gmra.mrb[0].mxu0 %v362
  %v1161 = vpop.f32.mrb[0].mxu0
  %v1162 = vadd.f32 0.0, %v1161
  %v1163 = vpop.f32.mrb[0].mxu0
  %v1164 = vadd.f32 0.0, %v1163
  %v1165 = vpop.f32.mrb[0].mxu0
  %v1166 = vadd.f32 0.0, %v1165
  %v1167 = vpop.f32.mrb[0].mxu0
  %v1168 = vadd.f32 0.0, %v1167
  %1169 = vmatprep.mubr.bf16.mxu0 0
  %1170 = vmatmul.mubr.bf16.gmra.mrb[0].mxu0 %v365
  %v1171 = vpop.f32.mrb[0].mxu0
  %v1172 = vadd.f32 0.0, %v1171
  %v1173 = vpop.f32.mrb[0].mxu0
  %v1174 = vadd.f32 0.0, %v1173
  %v1175 = vpop.f32.mrb[0].mxu0
  %v1176 = vadd.f32 0.0, %v1175
  %v1177 = vpop.f32.mrb[0].mxu0
  %v1178 = vadd.f32 0.0, %v1177
  %1179 = vmatprep.mubr.bf16.mxu0 0
  %1180 = vmatmul.mubr.bf16.gmra.mrb[0].mxu0 %v368
  %v1181 = vpop.f32.mrb[0].mxu0
  %v1182 = vadd.f32 0.0, %v1181
  %v1183 = vpop.f32.mrb[0].mxu0
  %v1184 = vadd.f32 0.0, %v1183
  %v1185 = vpop.f32.mrb[0].mxu0
  %v1186 = vadd.f32 0.0, %v1185
  %v1187 = vpop.f32.mrb[0].mxu0
  %v1188 = vadd.f32 0.0, %v1187
  %1189 = vmatprep.mubr.bf16.mxu0 0
  %1190 = vmatmul.mubr.bf16.gmra.mrb[0].mxu0 %v371
  %v1191 = vpop.f32.mrb[0].mxu0
  %v1192 = vadd.f32 0.0, %v1191
  %v1193 = vpop.f32.mrb[0].mxu0
  %v1194 = vadd.f32 0.0, %v1193
  %v1195 = vpop.f32.mrb[0].mxu0
  %v1196 = vadd.f32 0.0, %v1195
  %v1197 = vpop.f32.mrb[0].mxu0
  %v1198 = vadd.f32 0.0, %v1197
  %1199 = vmatprep.mubr.bf16.mxu0 0
  %1200 = vmatmul.mubr.bf16.gmra.mrb[0].mxu0 %v374
  %v1201 = vpop.f32.mrb[0].mxu0
  %v1202 = vadd.f32 0.0, %v1201
  %v1203 = vpop.f32.mrb[0].mxu0
  %v1204 = vadd.f32 0.0, %v1203
  %v1205 = vpop.f32.mrb[0].mxu0
  %v1206 = vadd.f32 0.0, %v1205
  %v1207 = vpop.f32.mrb[0].mxu0
  %v1208 = vadd.f32 0.0, %v1207
  %1209 = vmatprep.mubr.bf16.mxu0 0
  %1210 = vmatmul.mubr.bf16.gmra.mrb[0].mxu0 %v377
  %v1211 = vpop.f32.mrb[0].mxu0
  %v1212 = vadd.f32 0.0, %v1211
  %v1213 = vpop.f32.mrb[0].mxu0
  %v1214 = vadd.f32 0.0, %v1213
  %v1215 = vpop.f32.mrb[0].mxu0
  %v1216 = vadd.f32 0.0, %v1215
  %v1217 = vpop.f32.mrb[0].mxu0
  %v1218 = vadd.f32 0.0, %v1217
  %1219 = vmatprep.mubr.bf16.mxu0 0
  %1220 = vmatmul.mubr.bf16.gmra.mrb[0].mxu0 %v380
  %v1221 = vpop.f32.mrb[0].mxu0
  %v1222 = vadd.f32 0.0, %v1221
  %v1223 = vpop.f32.mrb[0].mxu0
  %v1224 = vadd.f32 0.0, %v1223
  %v1225 = vpop.f32.mrb[0].mxu0
  %v1226 = vadd.f32 0.0, %v1225
  %v1227 = vpop.f32.mrb[0].mxu0
  %v1228 = vadd.f32 0.0, %v1227
  %1229 = vmatprep.mubr.bf16.mxu0 0
  %1230 = vmatmul.mubr.bf16.gmra.mrb[0].mxu0 %v383
  %v1231 = vpop.f32.mrb[0].mxu0
  %v1232 = vadd.f32 0.0, %v1231
  %v1233 = vpop.f32.mrb[0].mxu0
  %v1234 = vadd.f32 0.0, %v1233
  %v1235 = vpop.f32.mrb[0].mxu0
  %v1236 = vadd.f32 0.0, %v1235
  %v1237 = vpop.f32.mrb[0].mxu0
  %v1238 = vadd.f32 0.0, %v1237
  %1239 = vmatprep.mubr.bf16.mxu0 0
  %1240 = vmatmul.mubr.bf16.gmra.mrb[0].mxu0 %v386
  %v1241 = vpop.f32.mrb[0].mxu0
  %v1242 = vadd.f32 0.0, %v1241
  %v1243 = vpop.f32.mrb[0].mxu0
  %v1244 = vadd.f32 0.0, %v1243
  %v1245 = vpop.f32.mrb[0].mxu0
  %v1246 = vadd.f32 0.0, %v1245
  %v1247 = vpop.f32.mrb[0].mxu0
  %v1248 = vadd.f32 0.0, %v1247
  %1249 = vmatprep.mubr.bf16.mxu0 0
  %1250 = vmatmul.mubr.bf16.gmra.mrb[0].mxu0 %v389
  %v1251 = vpop.f32.mrb[0].mxu0
  %v1252 = vadd.f32 0.0, %v1251
  %v1253 = vpop.f32.mrb[0].mxu0
  %v1254 = vadd.f32 0.0, %v1253
  %v1255 = vpop.f32.mrb[0].mxu0
  %v1256 = vadd.f32 0.0, %v1255
  %v1257 = vpop.f32.mrb[0].mxu0
  %v1258 = vadd.f32 0.0, %v1257
  %1259 = vmatprep.mubr.bf16.mxu0 0
  %1260 = vmatmul.mubr.bf16.gmra.mrb[0].mxu0 %v392
  %v1261 = vpop.f32.mrb[0].mxu0
  %v1262 = vadd.f32 0.0, %v1261
  %v1263 = vpop.f32.mrb[0].mxu0
  %v1264 = vadd.f32 0.0, %v1263
  %v1265 = vpop.f32.mrb[0].mxu0
  %v1266 = vadd.f32 0.0, %v1265
  %v1267 = vpop.f32.mrb[0].mxu0
  %v1268 = vadd.f32 0.0, %v1267
  %1269 = vmatprep.mubr.bf16.mxu0 0
  %1270 = vmatmul.mubr.bf16.gmra.mrb[0].mxu0 %v395
  %v1271 = vpop.f32.mrb[0].mxu0
  %v1272 = vadd.f32 0.0, %v1271
  %v1273 = vpop.f32.mrb[0].mxu0
  %v1274 = vadd.f32 0.0, %v1273
  %v1275 = vpop.f32.mrb[0].mxu0
  %v1276 = vadd.f32 0.0, %v1275
  %v1277 = vpop.f32.mrb[0].mxu0
  %v1278 = vadd.f32 0.0, %v1277
  %1279 = vmatprep.mubr.bf16.mxu0 0
  %1280 = vmatmul.mubr.bf16.gmra.mrb[0].mxu0 %v398
  %v1281 = vpop.f32.mrb[0].mxu0
  %v1282 = vadd.f32 0.0, %v1281
  %v1283 = vpop.f32.mrb[0].mxu0
  %v1284 = vadd.f32 0.0, %v1283
  %v1285 = vpop.f32.mrb[0].mxu0
  %v1286 = vadd.f32 0.0, %v1285
  %v1287 = vpop.f32.mrb[0].mxu0
  %v1288 = vadd.f32 0.0, %v1287
  %1289 = vmatprep.mubr.bf16.mxu0 0
  %1290 = vmatmul.mubr.bf16.gmra.mrb[0].mxu0 %v401
  %v1291 = vpop.f32.mrb[0].mxu0
  %v1292 = vadd.f32 0.0, %v1291
  %v1293 = vpop.f32.mrb[0].mxu0
  %v1294 = vadd.f32 0.0, %v1293
  %v1295 = vpop.f32.mrb[0].mxu0
  %v1296 = vadd.f32 0.0, %v1295
  %v1297 = vpop.f32.mrb[0].mxu0
  %v1298 = vadd.f32 0.0, %v1297
  %1299 = vmatprep.mubr.bf16.mxu0 0
  %1300 = vmatmul.mubr.bf16.gmra.mrb[0].mxu0 %v404
  %v1301 = vpop.f32.mrb[0].mxu0
  %v1302 = vadd.f32 0.0, %v1301
  %v1303 = vpop.f32.mrb[0].mxu0
  %v1304 = vadd.f32 0.0, %v1303
  %v1305 = vpop.f32.mrb[0].mxu0
  %v1306 = vadd.f32 0.0, %v1305
  %v1307 = vpop.f32.mrb[0].mxu0
  %v1308 = vadd.f32 0.0, %v1307
  %1309 = vdwg.mxu0
  %1310 = vmatprep.subr.bf16.mxu0 %v310
  %1311 = vmatpush1.bf16.msra.mxu0 %v309
  %1312 = vmatprep.subr.bf16.mxu0 %v429
  %1313 = vmatpush1.bf16.msra.mxu0 %v426
  %1314 = vmatprep.subr.bf16.mxu0 0
  %1315 = vmatpush1.bf16.msra.mxu0 0
  %1316 = vmatprep.subr.bf16.mxu0 0
  %1317 = vmatpush1.bf16.msra.mxu0 0
  %1318 = vmatprep.subr.bf16.mxu0 0
  %1319 = vmatpush1.bf16.msra.mxu0 0
  %1320 = vmatprep.subr.bf16.mxu0 0
  %1321 = vmatpush1.bf16.msra.mxu0 0
  %1322 = vmatprep.subr.bf16.mxu0 0
  %1323 = vmatpush1.bf16.msra.mxu0 0
  %1324 = vmatprep.subr.bf16.mxu0 0
  %1325 = vmatpush1.bf16.msra.mxu0 0
  %1326 = vmatprep.subr.bf16.mxu0 0
  %1327 = vmatpush1.bf16.msra.mxu0 0
  %1328 = vmatprep.subr.bf16.mxu0 0
  %1329 = vmatpush1.bf16.msra.mxu0 0
  %1330 = vmatprep.subr.bf16.mxu0 0
  %1331 = vmatpush1.bf16.msra.mxu0 0
  %1332 = vmatprep.subr.bf16.mxu0 0
  %1333 = vmatpush1.bf16.msra.mxu0 0
  %1334 = vmatprep.subr.bf16.mxu0 0
  %1335 = vmatpush1.bf16.msra.mxu0 0
  %1336 = vmatprep.subr.bf16.mxu0 0
  %1337 = vmatpush1.bf16.msra.mxu0 0
  %1338 = vmatprep.subr.bf16.mxu0 0
  %1339 = vmatpush1.bf16.msra.mxu0 0
  %1340 = vmatprep.subr.bf16.mxu0 0
  %1341 = vmatpush1.bf16.msra.mxu0 0
  %1342 = vmatprep.mubr.bf16.mxu0 0
  %1343 = vmatmul.mubr.bf16.gmra.mrb[0].mxu0 %v329
  %v1344 = vpop.f32.mrb[0].mxu0
  %v1345 = vadd.f32 0.0, %v1344
  %v1346 = vpop.f32.mrb[0].mxu0
  %v1347 = vadd.f32 0.0, %v1346
  %v1348 = vpop.f32.mrb[0].mxu0
  %v1349 = vadd.f32 0.0, %v1348
  %v1350 = vpop.f32.mrb[0].mxu0
  %v1351 = vadd.f32 0.0, %v1350
  %1352 = vmatprep.mubr.bf16.mxu0 0
  %1353 = vmatmul.mubr.bf16.gmra.mrb[0].mxu0 %v332
  %v1354 = vpop.f32.mrb[0].mxu0
  %v1355 = vadd.f32 0.0, %v1354
  %v1356 = vpop.f32.mrb[0].mxu0
  %v1357 = vadd.f32 0.0, %v1356
  %v1358 = vpop.f32.mrb[0].mxu0
  %v1359 = vadd.f32 0.0, %v1358
  %v1360 = vpop.f32.mrb[0].mxu0
  %v1361 = vadd.f32 0.0, %v1360
  %1362 = vmatprep.mubr.bf16.mxu0 0
  %1363 = vmatmul.mubr.bf16.gmra.mrb[0].mxu0 %v335
  %v1364 = vpop.f32.mrb[0].mxu0
  %v1365 = vadd.f32 0.0, %v1364
  %v1366 = vpop.f32.mrb[0].mxu0
  %v1367 = vadd.f32 0.0, %v1366
  %v1368 = vpop.f32.mrb[0].mxu0
  %v1369 = vadd.f32 0.0, %v1368
  %v1370 = vpop.f32.mrb[0].mxu0
  %v1371 = vadd.f32 0.0, %v1370
  %1372 = vmatprep.mubr.bf16.mxu0 0
  %1373 = vmatmul.mubr.bf16.gmra.mrb[0].mxu0 %v338
  %v1374 = vpop.f32.mrb[0].mxu0
  %v1375 = vadd.f32 0.0, %v1374
  %v1376 = vpop.f32.mrb[0].mxu0
  %v1377 = vadd.f32 0.0, %v1376
  %v1378 = vpop.f32.mrb[0].mxu0
  %v1379 = vadd.f32 0.0, %v1378
  %v1380 = vpop.f32.mrb[0].mxu0
  %v1381 = vadd.f32 0.0, %v1380
  %1382 = vmatprep.mubr.bf16.mxu0 0
  %1383 = vmatmul.mubr.bf16.gmra.mrb[0].mxu0 %v341
  %v1384 = vpop.f32.mrb[0].mxu0
  %v1385 = vadd.f32 0.0, %v1384
  %v1386 = vpop.f32.mrb[0].mxu0
  %v1387 = vadd.f32 0.0, %v1386
  %v1388 = vpop.f32.mrb[0].mxu0
  %v1389 = vadd.f32 0.0, %v1388
  %v1390 = vpop.f32.mrb[0].mxu0
  %v1391 = vadd.f32 0.0, %v1390
  %1392 = vmatprep.mubr.bf16.mxu0 0
  %1393 = vmatmul.mubr.bf16.gmra.mrb[0].mxu0 %v344
  %v1394 = vpop.f32.mrb[0].mxu0
  %v1395 = vadd.f32 0.0, %v1394
  %v1396 = vpop.f32.mrb[0].mxu0
  %v1397 = vadd.f32 0.0, %v1396
  %v1398 = vpop.f32.mrb[0].mxu0
  %v1399 = vadd.f32 0.0, %v1398
  %v1400 = vpop.f32.mrb[0].mxu0
  %v1401 = vadd.f32 0.0, %v1400
  %1402 = vmatprep.mubr.bf16.mxu0 0
  %1403 = vmatmul.mubr.bf16.gmra.mrb[0].mxu0 %v347
  %v1404 = vpop.f32.mrb[0].mxu0
  %v1405 = vadd.f32 0.0, %v1404
  %v1406 = vpop.f32.mrb[0].mxu0
  %v1407 = vadd.f32 0.0, %v1406
  %v1408 = vpop.f32.mrb[0].mxu0
  %v1409 = vadd.f32 0.0, %v1408
  %v1410 = vpop.f32.mrb[0].mxu0
  %v1411 = vadd.f32 0.0, %v1410
  %1412 = vmatprep.mubr.bf16.mxu0 0
  %1413 = vmatmul.mubr.bf16.gmra.mrb[0].mxu0 %v350
  %v1414 = vpop.f32.mrb[0].mxu0
  %v1415 = vadd.f32 0.0, %v1414
  %v1416 = vpop.f32.mrb[0].mxu0
  %v1417 = vadd.f32 0.0, %v1416
  %v1418 = vpop.f32.mrb[0].mxu0
  %v1419 = vadd.f32 0.0, %v1418
  %v1420 = vpop.f32.mrb[0].mxu0
  %v1421 = vadd.f32 0.0, %v1420
  %1422 = vmatprep.mubr.bf16.mxu0 0
  %1423 = vmatmul.mubr.bf16.gmra.mrb[0].mxu0 %v353
  %v1424 = vpop.f32.mrb[0].mxu0
  %v1425 = vadd.f32 0.0, %v1424
  %v1426 = vpop.f32.mrb[0].mxu0
  %v1427 = vadd.f32 0.0, %v1426
  %v1428 = vpop.f32.mrb[0].mxu0
  %v1429 = vadd.f32 0.0, %v1428
  %v1430 = vpop.f32.mrb[0].mxu0
  %v1431 = vadd.f32 0.0, %v1430
  %1432 = vmatprep.mubr.bf16.mxu0 0
  %1433 = vmatmul.mubr.bf16.gmra.mrb[0].mxu0 %v356
  %v1434 = vpop.f32.mrb[0].mxu0
  %v1435 = vadd.f32 0.0, %v1434
  %v1436 = vpop.f32.mrb[0].mxu0
  %v1437 = vadd.f32 0.0, %v1436
  %v1438 = vpop.f32.mrb[0].mxu0
  %v1439 = vadd.f32 0.0, %v1438
  %v1440 = vpop.f32.mrb[0].mxu0
  %v1441 = vadd.f32 0.0, %v1440
  %1442 = vmatprep.mubr.bf16.mxu0 0
  %1443 = vmatmul.mubr.bf16.gmra.mrb[0].mxu0 %v359
  %v1444 = vpop.f32.mrb[0].mxu0
  %v1445 = vadd.f32 0.0, %v1444
  %v1446 = vpop.f32.mrb[0].mxu0
  %v1447 = vadd.f32 0.0, %v1446
  %v1448 = vpop.f32.mrb[0].mxu0
  %v1449 = vadd.f32 0.0, %v1448
  %v1450 = vpop.f32.mrb[0].mxu0
  %v1451 = vadd.f32 0.0, %v1450
  %1452 = vmatprep.mubr.bf16.mxu0 0
  %1453 = vmatmul.mubr.bf16.gmra.mrb[0].mxu0 %v362
  %v1454 = vpop.f32.mrb[0].mxu0
  %v1455 = vadd.f32 0.0, %v1454
  %v1456 = vpop.f32.mrb[0].mxu0
  %v1457 = vadd.f32 0.0, %v1456
  %v1458 = vpop.f32.mrb[0].mxu0
  %v1459 = vadd.f32 0.0, %v1458
  %v1460 = vpop.f32.mrb[0].mxu0
  %v1461 = vadd.f32 0.0, %v1460
  %1462 = vmatprep.mubr.bf16.mxu0 0
  %1463 = vmatmul.mubr.bf16.gmra.mrb[0].mxu0 %v365
  %v1464 = vpop.f32.mrb[0].mxu0
  %v1465 = vadd.f32 0.0, %v1464
  %v1466 = vpop.f32.mrb[0].mxu0
  %v1467 = vadd.f32 0.0, %v1466
  %v1468 = vpop.f32.mrb[0].mxu0
  %v1469 = vadd.f32 0.0, %v1468
  %v1470 = vpop.f32.mrb[0].mxu0
  %v1471 = vadd.f32 0.0, %v1470
  %1472 = vmatprep.mubr.bf16.mxu0 0
  %1473 = vmatmul.mubr.bf16.gmra.mrb[0].mxu0 %v368
  %v1474 = vpop.f32.mrb[0].mxu0
  %v1475 = vadd.f32 0.0, %v1474
  %v1476 = vpop.f32.mrb[0].mxu0
  %v1477 = vadd.f32 0.0, %v1476
  %v1478 = vpop.f32.mrb[0].mxu0
  %v1479 = vadd.f32 0.0, %v1478
  %v1480 = vpop.f32.mrb[0].mxu0
  %v1481 = vadd.f32 0.0, %v1480
  %1482 = vmatprep.mubr.bf16.mxu0 0
  %1483 = vmatmul.mubr.bf16.gmra.mrb[0].mxu0 %v371
  %v1484 = vpop.f32.mrb[0].mxu0
  %v1485 = vadd.f32 0.0, %v1484
  %v1486 = vpop.f32.mrb[0].mxu0
  %v1487 = vadd.f32 0.0, %v1486
  %v1488 = vpop.f32.mrb[0].mxu0
  %v1489 = vadd.f32 0.0, %v1488
  %v1490 = vpop.f32.mrb[0].mxu0
  %v1491 = vadd.f32 0.0, %v1490
  %1492 = vmatprep.mubr.bf16.mxu0 0
  %1493 = vmatmul.mubr.bf16.gmra.mrb[0].mxu0 %v374
  %v1494 = vpop.f32.mrb[0].mxu0
  %v1495 = vadd.f32 0.0, %v1494
  %v1496 = vpop.f32.mrb[0].mxu0
  %v1497 = vadd.f32 0.0, %v1496
  %v1498 = vpop.f32.mrb[0].mxu0
  %v1499 = vadd.f32 0.0, %v1498
  %v1500 = vpop.f32.mrb[0].mxu0
  %v1501 = vadd.f32 0.0, %v1500
  %1502 = vmatprep.mubr.bf16.mxu0 0
  %1503 = vmatmul.mubr.bf16.gmra.mrb[0].mxu0 %v377
  %v1504 = vpop.f32.mrb[0].mxu0
  %v1505 = vadd.f32 0.0, %v1504
  %v1506 = vpop.f32.mrb[0].mxu0
  %v1507 = vadd.f32 0.0, %v1506
  %v1508 = vpop.f32.mrb[0].mxu0
  %v1509 = vadd.f32 0.0, %v1508
  %v1510 = vpop.f32.mrb[0].mxu0
  %v1511 = vadd.f32 0.0, %v1510
  %1512 = vmatprep.mubr.bf16.mxu0 0
  %1513 = vmatmul.mubr.bf16.gmra.mrb[0].mxu0 %v380
  %v1514 = vpop.f32.mrb[0].mxu0
  %v1515 = vadd.f32 0.0, %v1514
  %v1516 = vpop.f32.mrb[0].mxu0
  %v1517 = vadd.f32 0.0, %v1516
  %v1518 = vpop.f32.mrb[0].mxu0
  %v1519 = vadd.f32 0.0, %v1518
  %v1520 = vpop.f32.mrb[0].mxu0
  %v1521 = vadd.f32 0.0, %v1520
  %1522 = vmatprep.mubr.bf16.mxu0 0
  %1523 = vmatmul.mubr.bf16.gmra.mrb[0].mxu0 %v383
  %v1524 = vpop.f32.mrb[0].mxu0
  %v1525 = vadd.f32 0.0, %v1524
  %v1526 = vpop.f32.mrb[0].mxu0
  %v1527 = vadd.f32 0.0, %v1526
  %v1528 = vpop.f32.mrb[0].mxu0
  %v1529 = vadd.f32 0.0, %v1528
  %v1530 = vpop.f32.mrb[0].mxu0
  %v1531 = vadd.f32 0.0, %v1530
  %1532 = vmatprep.mubr.bf16.mxu0 0
  %1533 = vmatmul.mubr.bf16.gmra.mrb[0].mxu0 %v386
  %v1534 = vpop.f32.mrb[0].mxu0
  %v1535 = vadd.f32 0.0, %v1534
  %v1536 = vpop.f32.mrb[0].mxu0
  %v1537 = vadd.f32 0.0, %v1536
  %v1538 = vpop.f32.mrb[0].mxu0
  %v1539 = vadd.f32 0.0, %v1538
  %v1540 = vpop.f32.mrb[0].mxu0
  %v1541 = vadd.f32 0.0, %v1540
  %1542 = vmatprep.mubr.bf16.mxu0 0
  %1543 = vmatmul.mubr.bf16.gmra.mrb[0].mxu0 %v389
  %v1544 = vpop.f32.mrb[0].mxu0
  %v1545 = vadd.f32 0.0, %v1544
  %v1546 = vpop.f32.mrb[0].mxu0
  %v1547 = vadd.f32 0.0, %v1546
  %v1548 = vpop.f32.mrb[0].mxu0
  %v1549 = vadd.f32 0.0, %v1548
  %v1550 = vpop.f32.mrb[0].mxu0
  %v1551 = vadd.f32 0.0, %v1550
  %1552 = vmatprep.mubr.bf16.mxu0 0
  %1553 = vmatmul.mubr.bf16.gmra.mrb[0].mxu0 %v392
  %v1554 = vpop.f32.mrb[0].mxu0
  %v1555 = vadd.f32 0.0, %v1554
  %v1556 = vpop.f32.mrb[0].mxu0
  %v1557 = vadd.f32 0.0, %v1556
  %v1558 = vpop.f32.mrb[0].mxu0
  %v1559 = vadd.f32 0.0, %v1558
  %v1560 = vpop.f32.mrb[0].mxu0
  %v1561 = vadd.f32 0.0, %v1560
  %1562 = vmatprep.mubr.bf16.mxu0 0
  %1563 = vmatmul.mubr.bf16.gmra.mrb[0].mxu0 %v395
  %v1564 = vpop.f32.mrb[0].mxu0
  %v1565 = vadd.f32 0.0, %v1564
  %v1566 = vpop.f32.mrb[0].mxu0
  %v1567 = vadd.f32 0.0, %v1566
  %v1568 = vpop.f32.mrb[0].mxu0
  %v1569 = vadd.f32 0.0, %v1568
  %v1570 = vpop.f32.mrb[0].mxu0
  %v1571 = vadd.f32 0.0, %v1570
  %1572 = vmatprep.mubr.bf16.mxu0 0
  %1573 = vmatmul.mubr.bf16.gmra.mrb[0].mxu0 %v398
  %v1574 = vpop.f32.mrb[0].mxu0
  %v1575 = vadd.f32 0.0, %v1574
  %v1576 = vpop.f32.mrb[0].mxu0
  %v1577 = vadd.f32 0.0, %v1576
  %v1578 = vpop.f32.mrb[0].mxu0
  %v1579 = vadd.f32 0.0, %v1578
  %v1580 = vpop.f32.mrb[0].mxu0
  %v1581 = vadd.f32 0.0, %v1580
  %1582 = vmatprep.mubr.bf16.mxu0 0
  %1583 = vmatmul.mubr.bf16.gmra.mrb[0].mxu0 %v401
  %v1584 = vpop.f32.mrb[0].mxu0
  %v1585 = vadd.f32 0.0, %v1584
  %v1586 = vpop.f32.mrb[0].mxu0
  %v1587 = vadd.f32 0.0, %v1586
  %v1588 = vpop.f32.mrb[0].mxu0
  %v1589 = vadd.f32 0.0, %v1588
  %v1590 = vpop.f32.mrb[0].mxu0
  %v1591 = vadd.f32 0.0, %v1590
  %1592 = vmatprep.mubr.bf16.mxu0 0
  %1593 = vmatmul.mubr.bf16.gmra.mrb[0].mxu0 %v404
  %v1594 = vpop.f32.mrb[0].mxu0
  %v1595 = vadd.f32 0.0, %v1594
  %v1596 = vpop.f32.mrb[0].mxu0
  %v1597 = vadd.f32 0.0, %v1596
  %v1598 = vpop.f32.mrb[0].mxu0
  %v1599 = vadd.f32 0.0, %v1598
  %v1600 = vpop.f32.mrb[0].mxu0
  %v1601 = vadd.f32 0.0, %v1600
  %1602 = vdwg.mxu0
  %v1603 = vunpack.c.l.bf16 %v57
  %v1604 = vunpack.c.h.bf16 %v57
  %v1605 = vunpack.c.l.bf16 %v58
  %v1606 = vunpack.c.h.bf16 %v58
  %v1607 = vunpack.c.l.bf16 %v59
  %v1608 = vunpack.c.h.bf16 %v59
  %v1609 = vunpack.c.l.bf16 %v60
  %v1610 = vunpack.c.h.bf16 %v60
  %v1611 = vlaneseq
  %v1612 = vshrl.u32 %v1611, 7
  %v1613 = vsub.s32 0, %v1612
  %v1614 = vrot.slane %v1603, %v1613
  %v1615 = vlaneseq
  %v1616 = vshrl.u32 %v1615, 7
  %v1617 = vsub.s32 0, %v1616
  %v1618 = vrot.slane %v1604, %v1617
  %v1619 = vlaneseq
  %v1620 = vshrl.u32 %v1619, 7
  %v1621 = vsub.s32 0, %v1620
  %v1622 = vrot.slane %v1605, %v1621
  %v1623 = vlaneseq
  %v1624 = vshrl.u32 %v1623, 7
  %v1625 = vsub.s32 0, %v1624
  %v1626 = vrot.slane %v1606, %v1625
  %v1627 = vlaneseq
  %v1628 = vshrl.u32 %v1627, 7
  %v1629 = vsub.s32 0, %v1628
  %v1630 = vrot.slane %v1607, %v1629
  %v1631 = vlaneseq
  %v1632 = vshrl.u32 %v1631, 7
  %v1633 = vsub.s32 0, %v1632
  %v1634 = vrot.slane %v1608, %v1633
  %v1635 = vlaneseq
  %v1636 = vshrl.u32 %v1635, 7
  %v1637 = vsub.s32 0, %v1636
  %v1638 = vrot.slane %v1609, %v1637
  %v1639 = vlaneseq
  %v1640 = vshrl.u32 %v1639, 7
  %v1641 = vsub.s32 0, %v1640
  %v1642 = vrot.slane %v1610, %v1641
  %v1643 = vmul.f32 %v466, %v1614
  %v1644 = vmul.f32 %v468, %v1618
  %v1645 = vmul.f32 %v759, %v1622
  %v1646 = vmul.f32 %v761, %v1626
  %v1647 = vmul.f32 %v1052, %v1630
  %v1648 = vmul.f32 %v1054, %v1634
  %v1649 = vmul.f32 %v1345, %v1638
  %v1650 = vmul.f32 %v1347, %v1642
  %v1651 = vmul.f32 %v470, %v1614
  %v1652 = vmul.f32 %v472, %v1618
  %v1653 = vmul.f32 %v763, %v1622
  %v1654 = vmul.f32 %v765, %v1626
  %v1655 = vmul.f32 %v1056, %v1630
  %v1656 = vmul.f32 %v1058, %v1634
  %v1657 = vmul.f32 %v1349, %v1638
  %v1658 = vmul.f32 %v1351, %v1642
  %v1659 = vlaneseq
  %v1660 = vshrl.u32 %v1659, 7
  %v1661 = vsub.s32 1, %v1660
  %v1662 = vrot.slane %v1603, %v1661
  %v1663 = vlaneseq
  %v1664 = vshrl.u32 %v1663, 7
  %v1665 = vsub.s32 1, %v1664
  %v1666 = vrot.slane %v1604, %v1665
  %v1667 = vlaneseq
  %v1668 = vshrl.u32 %v1667, 7
  %v1669 = vsub.s32 1, %v1668
  %v1670 = vrot.slane %v1605, %v1669
  %v1671 = vlaneseq
  %v1672 = vshrl.u32 %v1671, 7
  %v1673 = vsub.s32 1, %v1672
  %v1674 = vrot.slane %v1606, %v1673
  %v1675 = vlaneseq
  %v1676 = vshrl.u32 %v1675, 7
  %v1677 = vsub.s32 1, %v1676
  %v1678 = vrot.slane %v1607, %v1677
  %v1679 = vlaneseq
  %v1680 = vshrl.u32 %v1679, 7
  %v1681 = vsub.s32 1, %v1680
  %v1682 = vrot.slane %v1608, %v1681
  %v1683 = vlaneseq
  %v1684 = vshrl.u32 %v1683, 7
  %v1685 = vsub.s32 1, %v1684
  %v1686 = vrot.slane %v1609, %v1685
  %v1687 = vlaneseq
  %v1688 = vshrl.u32 %v1687, 7
  %v1689 = vsub.s32 1, %v1688
  %v1690 = vrot.slane %v1610, %v1689
  %v1691 = vmul.f32 %v476, %v1662
  %v1692 = vmul.f32 %v478, %v1666
  %v1693 = vmul.f32 %v769, %v1670
  %v1694 = vmul.f32 %v771, %v1674
  %v1695 = vmul.f32 %v1062, %v1678
  %v1696 = vmul.f32 %v1064, %v1682
  %v1697 = vmul.f32 %v1355, %v1686
  %v1698 = vmul.f32 %v1357, %v1690
  %v1699 = vmul.f32 %v480, %v1662
  %v1700 = vmul.f32 %v482, %v1666
  %v1701 = vmul.f32 %v773, %v1670
  %v1702 = vmul.f32 %v775, %v1674
  %v1703 = vmul.f32 %v1066, %v1678
  %v1704 = vmul.f32 %v1068, %v1682
  %v1705 = vmul.f32 %v1359, %v1686
  %v1706 = vmul.f32 %v1361, %v1690
  %v1707 = vadd.f32 %v1643, %v1691
  %v1708 = vadd.f32 %v1644, %v1692
  %v1709 = vadd.f32 %v1645, %v1693
  %v1710 = vadd.f32 %v1646, %v1694
  %v1711 = vadd.f32 %v1647, %v1695
  %v1712 = vadd.f32 %v1648, %v1696
  %v1713 = vadd.f32 %v1649, %v1697
  %v1714 = vadd.f32 %v1650, %v1698
  %v1715 = vadd.f32 %v1651, %v1699
  %v1716 = vadd.f32 %v1652, %v1700
  %v1717 = vadd.f32 %v1653, %v1701
  %v1718 = vadd.f32 %v1654, %v1702
  %v1719 = vadd.f32 %v1655, %v1703
  %v1720 = vadd.f32 %v1656, %v1704
  %v1721 = vadd.f32 %v1657, %v1705
  %v1722 = vadd.f32 %v1658, %v1706
  %v1723 = vlaneseq
  %v1724 = vshrl.u32 %v1723, 7
  %v1725 = vsub.s32 2, %v1724
  %v1726 = vrot.slane %v1603, %v1725
  %v1727 = vlaneseq
  %v1728 = vshrl.u32 %v1727, 7
  %v1729 = vsub.s32 2, %v1728
  %v1730 = vrot.slane %v1604, %v1729
  %v1731 = vlaneseq
  %v1732 = vshrl.u32 %v1731, 7
  %v1733 = vsub.s32 2, %v1732
  %v1734 = vrot.slane %v1605, %v1733
  %v1735 = vlaneseq
  %v1736 = vshrl.u32 %v1735, 7
  %v1737 = vsub.s32 2, %v1736
  %v1738 = vrot.slane %v1606, %v1737
  %v1739 = vlaneseq
  %v1740 = vshrl.u32 %v1739, 7
  %v1741 = vsub.s32 2, %v1740
  %v1742 = vrot.slane %v1607, %v1741
  %v1743 = vlaneseq
  %v1744 = vshrl.u32 %v1743, 7
  %v1745 = vsub.s32 2, %v1744
  %v1746 = vrot.slane %v1608, %v1745
  %v1747 = vlaneseq
  %v1748 = vshrl.u32 %v1747, 7
  %v1749 = vsub.s32 2, %v1748
  %v1750 = vrot.slane %v1609, %v1749
  %v1751 = vlaneseq
  %v1752 = vshrl.u32 %v1751, 7
  %v1753 = vsub.s32 2, %v1752
  %v1754 = vrot.slane %v1610, %v1753
  %v1755 = vmul.f32 %v486, %v1726
  %v1756 = vmul.f32 %v488, %v1730
  %v1757 = vmul.f32 %v779, %v1734
  %v1758 = vmul.f32 %v781, %v1738
  %v1759 = vmul.f32 %v1072, %v1742
  %v1760 = vmul.f32 %v1074, %v1746
  %v1761 = vmul.f32 %v1365, %v1750
  %v1762 = vmul.f32 %v1367, %v1754
  %v1763 = vmul.f32 %v490, %v1726
  %v1764 = vmul.f32 %v492, %v1730
  %v1765 = vmul.f32 %v783, %v1734
  %v1766 = vmul.f32 %v785, %v1738
  %v1767 = vmul.f32 %v1076, %v1742
  %v1768 = vmul.f32 %v1078, %v1746
  %v1769 = vmul.f32 %v1369, %v1750
  %v1770 = vmul.f32 %v1371, %v1754
  %v1771 = vadd.f32 %v1707, %v1755
  %v1772 = vadd.f32 %v1708, %v1756
  %v1773 = vadd.f32 %v1709, %v1757
  %v1774 = vadd.f32 %v1710, %v1758
  %v1775 = vadd.f32 %v1711, %v1759
  %v1776 = vadd.f32 %v1712, %v1760
  %v1777 = vadd.f32 %v1713, %v1761
  %v1778 = vadd.f32 %v1714, %v1762
  %v1779 = vadd.f32 %v1715, %v1763
  %v1780 = vadd.f32 %v1716, %v1764
  %v1781 = vadd.f32 %v1717, %v1765
  %v1782 = vadd.f32 %v1718, %v1766
  %v1783 = vadd.f32 %v1719, %v1767
  %v1784 = vadd.f32 %v1720, %v1768
  %v1785 = vadd.f32 %v1721, %v1769
  %v1786 = vadd.f32 %v1722, %v1770
  %v1787 = vlaneseq
  %v1788 = vshrl.u32 %v1787, 7
  %v1789 = vsub.s32 3, %v1788
  %v1790 = vrot.slane %v1603, %v1789
  %v1791 = vlaneseq
  %v1792 = vshrl.u32 %v1791, 7
  %v1793 = vsub.s32 3, %v1792
  %v1794 = vrot.slane %v1604, %v1793
  %v1795 = vlaneseq
  %v1796 = vshrl.u32 %v1795, 7
  %v1797 = vsub.s32 3, %v1796
  %v1798 = vrot.slane %v1605, %v1797
  %v1799 = vlaneseq
  %v1800 = vshrl.u32 %v1799, 7
  %v1801 = vsub.s32 3, %v1800
  %v1802 = vrot.slane %v1606, %v1801
  %v1803 = vlaneseq
  %v1804 = vshrl.u32 %v1803, 7
  %v1805 = vsub.s32 3, %v1804
  %v1806 = vrot.slane %v1607, %v1805
  %v1807 = vlaneseq
  %v1808 = vshrl.u32 %v1807, 7
  %v1809 = vsub.s32 3, %v1808
  %v1810 = vrot.slane %v1608, %v1809
  %v1811 = vlaneseq
  %v1812 = vshrl.u32 %v1811, 7
  %v1813 = vsub.s32 3, %v1812
  %v1814 = vrot.slane %v1609, %v1813
  %v1815 = vlaneseq
  %v1816 = vshrl.u32 %v1815, 7
  %v1817 = vsub.s32 3, %v1816
  %v1818 = vrot.slane %v1610, %v1817
  %v1819 = vmul.f32 %v496, %v1790
  %v1820 = vmul.f32 %v498, %v1794
  %v1821 = vmul.f32 %v789, %v1798
  %v1822 = vmul.f32 %v791, %v1802
  %v1823 = vmul.f32 %v1082, %v1806
  %v1824 = vmul.f32 %v1084, %v1810
  %v1825 = vmul.f32 %v1375, %v1814
  %v1826 = vmul.f32 %v1377, %v1818
  %v1827 = vmul.f32 %v500, %v1790
  %v1828 = vmul.f32 %v502, %v1794
  %v1829 = vmul.f32 %v793, %v1798
  %v1830 = vmul.f32 %v795, %v1802
  %v1831 = vmul.f32 %v1086, %v1806
  %v1832 = vmul.f32 %v1088, %v1810
  %v1833 = vmul.f32 %v1379, %v1814
  %v1834 = vmul.f32 %v1381, %v1818
  %v1835 = vadd.f32 %v1771, %v1819
  %v1836 = vadd.f32 %v1772, %v1820
  %v1837 = vadd.f32 %v1773, %v1821
  %v1838 = vadd.f32 %v1774, %v1822
  %v1839 = vadd.f32 %v1775, %v1823
  %v1840 = vadd.f32 %v1776, %v1824
  %v1841 = vadd.f32 %v1777, %v1825
  %v1842 = vadd.f32 %v1778, %v1826
  %v1843 = vadd.f32 %v1779, %v1827
  %v1844 = vadd.f32 %v1780, %v1828
  %v1845 = vadd.f32 %v1781, %v1829
  %v1846 = vadd.f32 %v1782, %v1830
  %v1847 = vadd.f32 %v1783, %v1831
  %v1848 = vadd.f32 %v1784, %v1832
  %v1849 = vadd.f32 %v1785, %v1833
  %v1850 = vadd.f32 %v1786, %v1834
  %v1851 = vlaneseq
  %v1852 = vshrl.u32 %v1851, 7
  %v1853 = vsub.s32 4, %v1852
  %v1854 = vrot.slane %v1603, %v1853
  %v1855 = vlaneseq
  %v1856 = vshrl.u32 %v1855, 7
  %v1857 = vsub.s32 4, %v1856
  %v1858 = vrot.slane %v1604, %v1857
  %v1859 = vlaneseq
  %v1860 = vshrl.u32 %v1859, 7
  %v1861 = vsub.s32 4, %v1860
  %v1862 = vrot.slane %v1605, %v1861
  %v1863 = vlaneseq
  %v1864 = vshrl.u32 %v1863, 7
  %v1865 = vsub.s32 4, %v1864
  %v1866 = vrot.slane %v1606, %v1865
  %v1867 = vlaneseq
  %v1868 = vshrl.u32 %v1867, 7
  %v1869 = vsub.s32 4, %v1868
  %v1870 = vrot.slane %v1607, %v1869
  %v1871 = vlaneseq
  %v1872 = vshrl.u32 %v1871, 7
  %v1873 = vsub.s32 4, %v1872
  %v1874 = vrot.slane %v1608, %v1873
  %v1875 = vlaneseq
  %v1876 = vshrl.u32 %v1875, 7
  %v1877 = vsub.s32 4, %v1876
  %v1878 = vrot.slane %v1609, %v1877
  %v1879 = vlaneseq
  %v1880 = vshrl.u32 %v1879, 7
  %v1881 = vsub.s32 4, %v1880
  %v1882 = vrot.slane %v1610, %v1881
  %v1883 = vmul.f32 %v506, %v1854
  %v1884 = vmul.f32 %v508, %v1858
  %v1885 = vmul.f32 %v799, %v1862
  %v1886 = vmul.f32 %v801, %v1866
  %v1887 = vmul.f32 %v1092, %v1870
  %v1888 = vmul.f32 %v1094, %v1874
  %v1889 = vmul.f32 %v1385, %v1878
  %v1890 = vmul.f32 %v1387, %v1882
  %v1891 = vmul.f32 %v510, %v1854
  %v1892 = vmul.f32 %v512, %v1858
  %v1893 = vmul.f32 %v803, %v1862
  %v1894 = vmul.f32 %v805, %v1866
  %v1895 = vmul.f32 %v1096, %v1870
  %v1896 = vmul.f32 %v1098, %v1874
  %v1897 = vmul.f32 %v1389, %v1878
  %v1898 = vmul.f32 %v1391, %v1882
  %v1899 = vadd.f32 %v1835, %v1883
  %v1900 = vadd.f32 %v1836, %v1884
  %v1901 = vadd.f32 %v1837, %v1885
  %v1902 = vadd.f32 %v1838, %v1886
  %v1903 = vadd.f32 %v1839, %v1887
  %v1904 = vadd.f32 %v1840, %v1888
  %v1905 = vadd.f32 %v1841, %v1889
  %v1906 = vadd.f32 %v1842, %v1890
  %v1907 = vadd.f32 %v1843, %v1891
  %v1908 = vadd.f32 %v1844, %v1892
  %v1909 = vadd.f32 %v1845, %v1893
  %v1910 = vadd.f32 %v1846, %v1894
  %v1911 = vadd.f32 %v1847, %v1895
  %v1912 = vadd.f32 %v1848, %v1896
  %v1913 = vadd.f32 %v1849, %v1897
  %v1914 = vadd.f32 %v1850, %v1898
  %v1915 = vlaneseq
  %v1916 = vshrl.u32 %v1915, 7
  %v1917 = vsub.s32 5, %v1916
  %v1918 = vrot.slane %v1603, %v1917
  %v1919 = vlaneseq
  %v1920 = vshrl.u32 %v1919, 7
  %v1921 = vsub.s32 5, %v1920
  %v1922 = vrot.slane %v1604, %v1921
  %v1923 = vlaneseq
  %v1924 = vshrl.u32 %v1923, 7
  %v1925 = vsub.s32 5, %v1924
  %v1926 = vrot.slane %v1605, %v1925
  %v1927 = vlaneseq
  %v1928 = vshrl.u32 %v1927, 7
  %v1929 = vsub.s32 5, %v1928
  %v1930 = vrot.slane %v1606, %v1929
  %v1931 = vlaneseq
  %v1932 = vshrl.u32 %v1931, 7
  %v1933 = vsub.s32 5, %v1932
  %v1934 = vrot.slane %v1607, %v1933
  %v1935 = vlaneseq
  %v1936 = vshrl.u32 %v1935, 7
  %v1937 = vsub.s32 5, %v1936
  %v1938 = vrot.slane %v1608, %v1937
  %v1939 = vlaneseq
  %v1940 = vshrl.u32 %v1939, 7
  %v1941 = vsub.s32 5, %v1940
  %v1942 = vrot.slane %v1609, %v1941
  %v1943 = vlaneseq
  %v1944 = vshrl.u32 %v1943, 7
  %v1945 = vsub.s32 5, %v1944
  %v1946 = vrot.slane %v1610, %v1945
  %v1947 = vmul.f32 %v516, %v1918
  %v1948 = vmul.f32 %v518, %v1922
  %v1949 = vmul.f32 %v809, %v1926
  %v1950 = vmul.f32 %v811, %v1930
  %v1951 = vmul.f32 %v1102, %v1934
  %v1952 = vmul.f32 %v1104, %v1938
  %v1953 = vmul.f32 %v1395, %v1942
  %v1954 = vmul.f32 %v1397, %v1946
  %v1955 = vmul.f32 %v520, %v1918
  %v1956 = vmul.f32 %v522, %v1922
  %v1957 = vmul.f32 %v813, %v1926
  %v1958 = vmul.f32 %v815, %v1930
  %v1959 = vmul.f32 %v1106, %v1934
  %v1960 = vmul.f32 %v1108, %v1938
  %v1961 = vmul.f32 %v1399, %v1942
  %v1962 = vmul.f32 %v1401, %v1946
  %v1963 = vadd.f32 %v1899, %v1947
  %v1964 = vadd.f32 %v1900, %v1948
  %v1965 = vadd.f32 %v1901, %v1949
  %v1966 = vadd.f32 %v1902, %v1950
  %v1967 = vadd.f32 %v1903, %v1951
  %v1968 = vadd.f32 %v1904, %v1952
  %v1969 = vadd.f32 %v1905, %v1953
  %v1970 = vadd.f32 %v1906, %v1954
  %v1971 = vadd.f32 %v1907, %v1955
  %v1972 = vadd.f32 %v1908, %v1956
  %v1973 = vadd.f32 %v1909, %v1957
  %v1974 = vadd.f32 %v1910, %v1958
  %v1975 = vadd.f32 %v1911, %v1959
  %v1976 = vadd.f32 %v1912, %v1960
  %v1977 = vadd.f32 %v1913, %v1961
  %v1978 = vadd.f32 %v1914, %v1962
  %v1979 = vlaneseq
  %v1980 = vshrl.u32 %v1979, 7
  %v1981 = vsub.s32 6, %v1980
  %v1982 = vrot.slane %v1603, %v1981
  %v1983 = vlaneseq
  %v1984 = vshrl.u32 %v1983, 7
  %v1985 = vsub.s32 6, %v1984
  %v1986 = vrot.slane %v1604, %v1985
  %v1987 = vlaneseq
  %v1988 = vshrl.u32 %v1987, 7
  %v1989 = vsub.s32 6, %v1988
  %v1990 = vrot.slane %v1605, %v1989
  %v1991 = vlaneseq
  %v1992 = vshrl.u32 %v1991, 7
  %v1993 = vsub.s32 6, %v1992
  %v1994 = vrot.slane %v1606, %v1993
  %v1995 = vlaneseq
  %v1996 = vshrl.u32 %v1995, 7
  %v1997 = vsub.s32 6, %v1996
  %v1998 = vrot.slane %v1607, %v1997
  %v1999 = vlaneseq
  %v2000 = vshrl.u32 %v1999, 7
  %v2001 = vsub.s32 6, %v2000
  %v2002 = vrot.slane %v1608, %v2001
  %v2003 = vlaneseq
  %v2004 = vshrl.u32 %v2003, 7
  %v2005 = vsub.s32 6, %v2004
  %v2006 = vrot.slane %v1609, %v2005
  %v2007 = vlaneseq
  %v2008 = vshrl.u32 %v2007, 7
  %v2009 = vsub.s32 6, %v2008
  %v2010 = vrot.slane %v1610, %v2009
  %v2011 = vmul.f32 %v526, %v1982
  %v2012 = vmul.f32 %v528, %v1986
  %v2013 = vmul.f32 %v819, %v1990
  %v2014 = vmul.f32 %v821, %v1994
  %v2015 = vmul.f32 %v1112, %v1998
  %v2016 = vmul.f32 %v1114, %v2002
  %v2017 = vmul.f32 %v1405, %v2006
  %v2018 = vmul.f32 %v1407, %v2010
  %v2019 = vmul.f32 %v530, %v1982
  %v2020 = vmul.f32 %v532, %v1986
  %v2021 = vmul.f32 %v823, %v1990
  %v2022 = vmul.f32 %v825, %v1994
  %v2023 = vmul.f32 %v1116, %v1998
  %v2024 = vmul.f32 %v1118, %v2002
  %v2025 = vmul.f32 %v1409, %v2006
  %v2026 = vmul.f32 %v1411, %v2010
  %v2027 = vadd.f32 %v1963, %v2011
  %v2028 = vadd.f32 %v1964, %v2012
  %v2029 = vadd.f32 %v1965, %v2013
  %v2030 = vadd.f32 %v1966, %v2014
  %v2031 = vadd.f32 %v1967, %v2015
  %v2032 = vadd.f32 %v1968, %v2016
  %v2033 = vadd.f32 %v1969, %v2017
  %v2034 = vadd.f32 %v1970, %v2018
  %v2035 = vadd.f32 %v1971, %v2019
  %v2036 = vadd.f32 %v1972, %v2020
  %v2037 = vadd.f32 %v1973, %v2021
  %v2038 = vadd.f32 %v1974, %v2022
  %v2039 = vadd.f32 %v1975, %v2023
  %v2040 = vadd.f32 %v1976, %v2024
  %v2041 = vadd.f32 %v1977, %v2025
  %v2042 = vadd.f32 %v1978, %v2026
  %v2043 = vlaneseq
  %v2044 = vshrl.u32 %v2043, 7
  %v2045 = vsub.s32 7, %v2044
  %v2046 = vrot.slane %v1603, %v2045
  %v2047 = vlaneseq
  %v2048 = vshrl.u32 %v2047, 7
  %v2049 = vsub.s32 7, %v2048
  %v2050 = vrot.slane %v1604, %v2049
  %v2051 = vlaneseq
  %v2052 = vshrl.u32 %v2051, 7
  %v2053 = vsub.s32 7, %v2052
  %v2054 = vrot.slane %v1605, %v2053
  %v2055 = vlaneseq
  %v2056 = vshrl.u32 %v2055, 7
  %v2057 = vsub.s32 7, %v2056
  %v2058 = vrot.slane %v1606, %v2057
  %v2059 = vlaneseq
  %v2060 = vshrl.u32 %v2059, 7
  %v2061 = vsub.s32 7, %v2060
  %v2062 = vrot.slane %v1607, %v2061
  %v2063 = vlaneseq
  %v2064 = vshrl.u32 %v2063, 7
  %v2065 = vsub.s32 7, %v2064
  %v2066 = vrot.slane %v1608, %v2065
  %v2067 = vlaneseq
  %v2068 = vshrl.u32 %v2067, 7
  %v2069 = vsub.s32 7, %v2068
  %v2070 = vrot.slane %v1609, %v2069
  %v2071 = vlaneseq
  %v2072 = vshrl.u32 %v2071, 7
  %v2073 = vsub.s32 7, %v2072
  %v2074 = vrot.slane %v1610, %v2073
  %v2075 = vmul.f32 %v536, %v2046
  %v2076 = vmul.f32 %v538, %v2050
  %v2077 = vmul.f32 %v829, %v2054
  %v2078 = vmul.f32 %v831, %v2058
  %v2079 = vmul.f32 %v1122, %v2062
  %v2080 = vmul.f32 %v1124, %v2066
  %v2081 = vmul.f32 %v1415, %v2070
  %v2082 = vmul.f32 %v1417, %v2074
  %v2083 = vmul.f32 %v540, %v2046
  %v2084 = vmul.f32 %v542, %v2050
  %v2085 = vmul.f32 %v833, %v2054
  %v2086 = vmul.f32 %v835, %v2058
  %v2087 = vmul.f32 %v1126, %v2062
  %v2088 = vmul.f32 %v1128, %v2066
  %v2089 = vmul.f32 %v1419, %v2070
  %v2090 = vmul.f32 %v1421, %v2074
  %v2091 = vadd.f32 %v2027, %v2075
  %v2092 = vadd.f32 %v2028, %v2076
  %v2093 = vadd.f32 %v2029, %v2077
  %v2094 = vadd.f32 %v2030, %v2078
  %v2095 = vadd.f32 %v2031, %v2079
  %v2096 = vadd.f32 %v2032, %v2080
  %v2097 = vadd.f32 %v2033, %v2081
  %v2098 = vadd.f32 %v2034, %v2082
  %v2099 = vadd.f32 %v2035, %v2083
  %v2100 = vadd.f32 %v2036, %v2084
  %v2101 = vadd.f32 %v2037, %v2085
  %v2102 = vadd.f32 %v2038, %v2086
  %v2103 = vadd.f32 %v2039, %v2087
  %v2104 = vadd.f32 %v2040, %v2088
  %v2105 = vadd.f32 %v2041, %v2089
  %v2106 = vadd.f32 %v2042, %v2090
  %v2107 = vunpack.c.l.bf16 %v61
  %v2108 = vunpack.c.h.bf16 %v61
  %v2109 = vunpack.c.l.bf16 %v62
  %v2110 = vunpack.c.h.bf16 %v62
  %v2111 = vunpack.c.l.bf16 %v63
  %v2112 = vunpack.c.h.bf16 %v63
  %v2113 = vunpack.c.l.bf16 %v64
  %v2114 = vunpack.c.h.bf16 %v64
  %v2115 = vlaneseq
  %v2116 = vshrl.u32 %v2115, 7
  %v2117 = vsub.s32 0, %v2116
  %v2118 = vrot.slane %v2107, %v2117
  %v2119 = vlaneseq
  %v2120 = vshrl.u32 %v2119, 7
  %v2121 = vsub.s32 0, %v2120
  %v2122 = vrot.slane %v2108, %v2121
  %v2123 = vlaneseq
  %v2124 = vshrl.u32 %v2123, 7
  %v2125 = vsub.s32 0, %v2124
  %v2126 = vrot.slane %v2109, %v2125
  %v2127 = vlaneseq
  %v2128 = vshrl.u32 %v2127, 7
  %v2129 = vsub.s32 0, %v2128
  %v2130 = vrot.slane %v2110, %v2129
  %v2131 = vlaneseq
  %v2132 = vshrl.u32 %v2131, 7
  %v2133 = vsub.s32 0, %v2132
  %v2134 = vrot.slane %v2111, %v2133
  %v2135 = vlaneseq
  %v2136 = vshrl.u32 %v2135, 7
  %v2137 = vsub.s32 0, %v2136
  %v2138 = vrot.slane %v2112, %v2137
  %v2139 = vlaneseq
  %v2140 = vshrl.u32 %v2139, 7
  %v2141 = vsub.s32 0, %v2140
  %v2142 = vrot.slane %v2113, %v2141
  %v2143 = vlaneseq
  %v2144 = vshrl.u32 %v2143, 7
  %v2145 = vsub.s32 0, %v2144
  %v2146 = vrot.slane %v2114, %v2145
  %v2147 = vmul.f32 %v546, %v2118
  %v2148 = vmul.f32 %v548, %v2122
  %v2149 = vmul.f32 %v839, %v2126
  %v2150 = vmul.f32 %v841, %v2130
  %v2151 = vmul.f32 %v1132, %v2134
  %v2152 = vmul.f32 %v1134, %v2138
  %v2153 = vmul.f32 %v1425, %v2142
  %v2154 = vmul.f32 %v1427, %v2146
  %v2155 = vmul.f32 %v550, %v2118
  %v2156 = vmul.f32 %v552, %v2122
  %v2157 = vmul.f32 %v843, %v2126
  %v2158 = vmul.f32 %v845, %v2130
  %v2159 = vmul.f32 %v1136, %v2134
  %v2160 = vmul.f32 %v1138, %v2138
  %v2161 = vmul.f32 %v1429, %v2142
  %v2162 = vmul.f32 %v1431, %v2146
  %v2163 = vadd.f32 %v2091, %v2147
  %v2164 = vadd.f32 %v2092, %v2148
  %v2165 = vadd.f32 %v2093, %v2149
  %v2166 = vadd.f32 %v2094, %v2150
  %v2167 = vadd.f32 %v2095, %v2151
  %v2168 = vadd.f32 %v2096, %v2152
  %v2169 = vadd.f32 %v2097, %v2153
  %v2170 = vadd.f32 %v2098, %v2154
  %v2171 = vadd.f32 %v2099, %v2155
  %v2172 = vadd.f32 %v2100, %v2156
  %v2173 = vadd.f32 %v2101, %v2157
  %v2174 = vadd.f32 %v2102, %v2158
  %v2175 = vadd.f32 %v2103, %v2159
  %v2176 = vadd.f32 %v2104, %v2160
  %v2177 = vadd.f32 %v2105, %v2161
  %v2178 = vadd.f32 %v2106, %v2162
  %v2179 = vlaneseq
  %v2180 = vshrl.u32 %v2179, 7
  %v2181 = vsub.s32 1, %v2180
  %v2182 = vrot.slane %v2107, %v2181
  %v2183 = vlaneseq
  %v2184 = vshrl.u32 %v2183, 7
  %v2185 = vsub.s32 1, %v2184
  %v2186 = vrot.slane %v2108, %v2185
  %v2187 = vlaneseq
  %v2188 = vshrl.u32 %v2187, 7
  %v2189 = vsub.s32 1, %v2188
  %v2190 = vrot.slane %v2109, %v2189
  %v2191 = vlaneseq
  %v2192 = vshrl.u32 %v2191, 7
  %v2193 = vsub.s32 1, %v2192
  %v2194 = vrot.slane %v2110, %v2193
  %v2195 = vlaneseq
  %v2196 = vshrl.u32 %v2195, 7
  %v2197 = vsub.s32 1, %v2196
  %v2198 = vrot.slane %v2111, %v2197
  %v2199 = vlaneseq
  %v2200 = vshrl.u32 %v2199, 7
  %v2201 = vsub.s32 1, %v2200
  %v2202 = vrot.slane %v2112, %v2201
  %v2203 = vlaneseq
  %v2204 = vshrl.u32 %v2203, 7
  %v2205 = vsub.s32 1, %v2204
  %v2206 = vrot.slane %v2113, %v2205
  %v2207 = vlaneseq
  %v2208 = vshrl.u32 %v2207, 7
  %v2209 = vsub.s32 1, %v2208
  %v2210 = vrot.slane %v2114, %v2209
  %v2211 = vmul.f32 %v556, %v2182
  %v2212 = vmul.f32 %v558, %v2186
  %v2213 = vmul.f32 %v849, %v2190
  %v2214 = vmul.f32 %v851, %v2194
  %v2215 = vmul.f32 %v1142, %v2198
  %v2216 = vmul.f32 %v1144, %v2202
  %v2217 = vmul.f32 %v1435, %v2206
  %v2218 = vmul.f32 %v1437, %v2210
  %v2219 = vmul.f32 %v560, %v2182
  %v2220 = vmul.f32 %v562, %v2186
  %v2221 = vmul.f32 %v853, %v2190
  %v2222 = vmul.f32 %v855, %v2194
  %v2223 = vmul.f32 %v1146, %v2198
  %v2224 = vmul.f32 %v1148, %v2202
  %v2225 = vmul.f32 %v1439, %v2206
  %v2226 = vmul.f32 %v1441, %v2210
  %v2227 = vadd.f32 %v2163, %v2211
  %v2228 = vadd.f32 %v2164, %v2212
  %v2229 = vadd.f32 %v2165, %v2213
  %v2230 = vadd.f32 %v2166, %v2214
  %v2231 = vadd.f32 %v2167, %v2215
  %v2232 = vadd.f32 %v2168, %v2216
  %v2233 = vadd.f32 %v2169, %v2217
  %v2234 = vadd.f32 %v2170, %v2218
  %v2235 = vadd.f32 %v2171, %v2219
  %v2236 = vadd.f32 %v2172, %v2220
  %v2237 = vadd.f32 %v2173, %v2221
  %v2238 = vadd.f32 %v2174, %v2222
  %v2239 = vadd.f32 %v2175, %v2223
  %v2240 = vadd.f32 %v2176, %v2224
  %v2241 = vadd.f32 %v2177, %v2225
  %v2242 = vadd.f32 %v2178, %v2226
  %v2243 = vlaneseq
  %v2244 = vshrl.u32 %v2243, 7
  %v2245 = vsub.s32 2, %v2244
  %v2246 = vrot.slane %v2107, %v2245
  %v2247 = vlaneseq
  %v2248 = vshrl.u32 %v2247, 7
  %v2249 = vsub.s32 2, %v2248
  %v2250 = vrot.slane %v2108, %v2249
  %v2251 = vlaneseq
  %v2252 = vshrl.u32 %v2251, 7
  %v2253 = vsub.s32 2, %v2252
  %v2254 = vrot.slane %v2109, %v2253
  %v2255 = vlaneseq
  %v2256 = vshrl.u32 %v2255, 7
  %v2257 = vsub.s32 2, %v2256
  %v2258 = vrot.slane %v2110, %v2257
  %v2259 = vlaneseq
  %v2260 = vshrl.u32 %v2259, 7
  %v2261 = vsub.s32 2, %v2260
  %v2262 = vrot.slane %v2111, %v2261
  %v2263 = vlaneseq
  %v2264 = vshrl.u32 %v2263, 7
  %v2265 = vsub.s32 2, %v2264
  %v2266 = vrot.slane %v2112, %v2265
  %v2267 = vlaneseq
  %v2268 = vshrl.u32 %v2267, 7
  %v2269 = vsub.s32 2, %v2268
  %v2270 = vrot.slane %v2113, %v2269
  %v2271 = vlaneseq
  %v2272 = vshrl.u32 %v2271, 7
  %v2273 = vsub.s32 2, %v2272
  %v2274 = vrot.slane %v2114, %v2273
  %v2275 = vmul.f32 %v566, %v2246
  %v2276 = vmul.f32 %v568, %v2250
  %v2277 = vmul.f32 %v859, %v2254
  %v2278 = vmul.f32 %v861, %v2258
  %v2279 = vmul.f32 %v1152, %v2262
  %v2280 = vmul.f32 %v1154, %v2266
  %v2281 = vmul.f32 %v1445, %v2270
  %v2282 = vmul.f32 %v1447, %v2274
  %v2283 = vmul.f32 %v570, %v2246
  %v2284 = vmul.f32 %v572, %v2250
  %v2285 = vmul.f32 %v863, %v2254
  %v2286 = vmul.f32 %v865, %v2258
  %v2287 = vmul.f32 %v1156, %v2262
  %v2288 = vmul.f32 %v1158, %v2266
  %v2289 = vmul.f32 %v1449, %v2270
  %v2290 = vmul.f32 %v1451, %v2274
  %v2291 = vadd.f32 %v2227, %v2275
  %v2292 = vadd.f32 %v2228, %v2276
  %v2293 = vadd.f32 %v2229, %v2277
  %v2294 = vadd.f32 %v2230, %v2278
  %v2295 = vadd.f32 %v2231, %v2279
  %v2296 = vadd.f32 %v2232, %v2280
  %v2297 = vadd.f32 %v2233, %v2281
  %v2298 = vadd.f32 %v2234, %v2282
  %v2299 = vadd.f32 %v2235, %v2283
  %v2300 = vadd.f32 %v2236, %v2284
  %v2301 = vadd.f32 %v2237, %v2285
  %v2302 = vadd.f32 %v2238, %v2286
  %v2303 = vadd.f32 %v2239, %v2287
  %v2304 = vadd.f32 %v2240, %v2288
  %v2305 = vadd.f32 %v2241, %v2289
  %v2306 = vadd.f32 %v2242, %v2290
  %v2307 = vlaneseq
  %v2308 = vshrl.u32 %v2307, 7
  %v2309 = vsub.s32 3, %v2308
  %v2310 = vrot.slane %v2107, %v2309
  %v2311 = vlaneseq
  %v2312 = vshrl.u32 %v2311, 7
  %v2313 = vsub.s32 3, %v2312
  %v2314 = vrot.slane %v2108, %v2313
  %v2315 = vlaneseq
  %v2316 = vshrl.u32 %v2315, 7
  %v2317 = vsub.s32 3, %v2316
  %v2318 = vrot.slane %v2109, %v2317
  %v2319 = vlaneseq
  %v2320 = vshrl.u32 %v2319, 7
  %v2321 = vsub.s32 3, %v2320
  %v2322 = vrot.slane %v2110, %v2321
  %v2323 = vlaneseq
  %v2324 = vshrl.u32 %v2323, 7
  %v2325 = vsub.s32 3, %v2324
  %v2326 = vrot.slane %v2111, %v2325
  %v2327 = vlaneseq
  %v2328 = vshrl.u32 %v2327, 7
  %v2329 = vsub.s32 3, %v2328
  %v2330 = vrot.slane %v2112, %v2329
  %v2331 = vlaneseq
  %v2332 = vshrl.u32 %v2331, 7
  %v2333 = vsub.s32 3, %v2332
  %v2334 = vrot.slane %v2113, %v2333
  %v2335 = vlaneseq
  %v2336 = vshrl.u32 %v2335, 7
  %v2337 = vsub.s32 3, %v2336
  %v2338 = vrot.slane %v2114, %v2337
  %v2339 = vmul.f32 %v576, %v2310
  %v2340 = vmul.f32 %v578, %v2314
  %v2341 = vmul.f32 %v869, %v2318
  %v2342 = vmul.f32 %v871, %v2322
  %v2343 = vmul.f32 %v1162, %v2326
  %v2344 = vmul.f32 %v1164, %v2330
  %v2345 = vmul.f32 %v1455, %v2334
  %v2346 = vmul.f32 %v1457, %v2338
  %v2347 = vmul.f32 %v580, %v2310
  %v2348 = vmul.f32 %v582, %v2314
  %v2349 = vmul.f32 %v873, %v2318
  %v2350 = vmul.f32 %v875, %v2322
  %v2351 = vmul.f32 %v1166, %v2326
  %v2352 = vmul.f32 %v1168, %v2330
  %v2353 = vmul.f32 %v1459, %v2334
  %v2354 = vmul.f32 %v1461, %v2338
  %v2355 = vadd.f32 %v2291, %v2339
  %v2356 = vadd.f32 %v2292, %v2340
  %v2357 = vadd.f32 %v2293, %v2341
  %v2358 = vadd.f32 %v2294, %v2342
  %v2359 = vadd.f32 %v2295, %v2343
  %v2360 = vadd.f32 %v2296, %v2344
  %v2361 = vadd.f32 %v2297, %v2345
  %v2362 = vadd.f32 %v2298, %v2346
  %v2363 = vadd.f32 %v2299, %v2347
  %v2364 = vadd.f32 %v2300, %v2348
  %v2365 = vadd.f32 %v2301, %v2349
  %v2366 = vadd.f32 %v2302, %v2350
  %v2367 = vadd.f32 %v2303, %v2351
  %v2368 = vadd.f32 %v2304, %v2352
  %v2369 = vadd.f32 %v2305, %v2353
  %v2370 = vadd.f32 %v2306, %v2354
  %v2371 = vlaneseq
  %v2372 = vshrl.u32 %v2371, 7
  %v2373 = vsub.s32 4, %v2372
  %v2374 = vrot.slane %v2107, %v2373
  %v2375 = vlaneseq
  %v2376 = vshrl.u32 %v2375, 7
  %v2377 = vsub.s32 4, %v2376
  %v2378 = vrot.slane %v2108, %v2377
  %v2379 = vlaneseq
  %v2380 = vshrl.u32 %v2379, 7
  %v2381 = vsub.s32 4, %v2380
  %v2382 = vrot.slane %v2109, %v2381
  %v2383 = vlaneseq
  %v2384 = vshrl.u32 %v2383, 7
  %v2385 = vsub.s32 4, %v2384
  %v2386 = vrot.slane %v2110, %v2385
  %v2387 = vlaneseq
  %v2388 = vshrl.u32 %v2387, 7
  %v2389 = vsub.s32 4, %v2388
  %v2390 = vrot.slane %v2111, %v2389
  %v2391 = vlaneseq
  %v2392 = vshrl.u32 %v2391, 7
  %v2393 = vsub.s32 4, %v2392
  %v2394 = vrot.slane %v2112, %v2393
  %v2395 = vlaneseq
  %v2396 = vshrl.u32 %v2395, 7
  %v2397 = vsub.s32 4, %v2396
  %v2398 = vrot.slane %v2113, %v2397
  %v2399 = vlaneseq
  %v2400 = vshrl.u32 %v2399, 7
  %v2401 = vsub.s32 4, %v2400
  %v2402 = vrot.slane %v2114, %v2401
  %v2403 = vmul.f32 %v586, %v2374
  %v2404 = vmul.f32 %v588, %v2378
  %v2405 = vmul.f32 %v879, %v2382
  %v2406 = vmul.f32 %v881, %v2386
  %v2407 = vmul.f32 %v1172, %v2390
  %v2408 = vmul.f32 %v1174, %v2394
  %v2409 = vmul.f32 %v1465, %v2398
  %v2410 = vmul.f32 %v1467, %v2402
  %v2411 = vmul.f32 %v590, %v2374
  %v2412 = vmul.f32 %v592, %v2378
  %v2413 = vmul.f32 %v883, %v2382
  %v2414 = vmul.f32 %v885, %v2386
  %v2415 = vmul.f32 %v1176, %v2390
  %v2416 = vmul.f32 %v1178, %v2394
  %v2417 = vmul.f32 %v1469, %v2398
  %v2418 = vmul.f32 %v1471, %v2402
  %v2419 = vadd.f32 %v2355, %v2403
  %v2420 = vadd.f32 %v2356, %v2404
  %v2421 = vadd.f32 %v2357, %v2405
  %v2422 = vadd.f32 %v2358, %v2406
  %v2423 = vadd.f32 %v2359, %v2407
  %v2424 = vadd.f32 %v2360, %v2408
  %v2425 = vadd.f32 %v2361, %v2409
  %v2426 = vadd.f32 %v2362, %v2410
  %v2427 = vadd.f32 %v2363, %v2411
  %v2428 = vadd.f32 %v2364, %v2412
  %v2429 = vadd.f32 %v2365, %v2413
  %v2430 = vadd.f32 %v2366, %v2414
  %v2431 = vadd.f32 %v2367, %v2415
  %v2432 = vadd.f32 %v2368, %v2416
  %v2433 = vadd.f32 %v2369, %v2417
  %v2434 = vadd.f32 %v2370, %v2418
  %v2435 = vlaneseq
  %v2436 = vshrl.u32 %v2435, 7
  %v2437 = vsub.s32 5, %v2436
  %v2438 = vrot.slane %v2107, %v2437
  %v2439 = vlaneseq
  %v2440 = vshrl.u32 %v2439, 7
  %v2441 = vsub.s32 5, %v2440
  %v2442 = vrot.slane %v2108, %v2441
  %v2443 = vlaneseq
  %v2444 = vshrl.u32 %v2443, 7
  %v2445 = vsub.s32 5, %v2444
  %v2446 = vrot.slane %v2109, %v2445
  %v2447 = vlaneseq
  %v2448 = vshrl.u32 %v2447, 7
  %v2449 = vsub.s32 5, %v2448
  %v2450 = vrot.slane %v2110, %v2449
  %v2451 = vlaneseq
  %v2452 = vshrl.u32 %v2451, 7
  %v2453 = vsub.s32 5, %v2452
  %v2454 = vrot.slane %v2111, %v2453
  %v2455 = vlaneseq
  %v2456 = vshrl.u32 %v2455, 7
  %v2457 = vsub.s32 5, %v2456
  %v2458 = vrot.slane %v2112, %v2457
  %v2459 = vlaneseq
  %v2460 = vshrl.u32 %v2459, 7
  %v2461 = vsub.s32 5, %v2460
  %v2462 = vrot.slane %v2113, %v2461
  %v2463 = vlaneseq
  %v2464 = vshrl.u32 %v2463, 7
  %v2465 = vsub.s32 5, %v2464
  %v2466 = vrot.slane %v2114, %v2465
  %v2467 = vmul.f32 %v596, %v2438
  %v2468 = vmul.f32 %v598, %v2442
  %v2469 = vmul.f32 %v889, %v2446
  %v2470 = vmul.f32 %v891, %v2450
  %v2471 = vmul.f32 %v1182, %v2454
  %v2472 = vmul.f32 %v1184, %v2458
  %v2473 = vmul.f32 %v1475, %v2462
  %v2474 = vmul.f32 %v1477, %v2466
  %v2475 = vmul.f32 %v600, %v2438
  %v2476 = vmul.f32 %v602, %v2442
  %v2477 = vmul.f32 %v893, %v2446
  %v2478 = vmul.f32 %v895, %v2450
  %v2479 = vmul.f32 %v1186, %v2454
  %v2480 = vmul.f32 %v1188, %v2458
  %v2481 = vmul.f32 %v1479, %v2462
  %v2482 = vmul.f32 %v1481, %v2466
  %v2483 = vadd.f32 %v2419, %v2467
  %v2484 = vadd.f32 %v2420, %v2468
  %v2485 = vadd.f32 %v2421, %v2469
  %v2486 = vadd.f32 %v2422, %v2470
  %v2487 = vadd.f32 %v2423, %v2471
  %v2488 = vadd.f32 %v2424, %v2472
  %v2489 = vadd.f32 %v2425, %v2473
  %v2490 = vadd.f32 %v2426, %v2474
  %v2491 = vadd.f32 %v2427, %v2475
  %v2492 = vadd.f32 %v2428, %v2476
  %v2493 = vadd.f32 %v2429, %v2477
  %v2494 = vadd.f32 %v2430, %v2478
  %v2495 = vadd.f32 %v2431, %v2479
  %v2496 = vadd.f32 %v2432, %v2480
  %v2497 = vadd.f32 %v2433, %v2481
  %v2498 = vadd.f32 %v2434, %v2482
  %v2499 = vlaneseq
  %v2500 = vshrl.u32 %v2499, 7
  %v2501 = vsub.s32 6, %v2500
  %v2502 = vrot.slane %v2107, %v2501
  %v2503 = vlaneseq
  %v2504 = vshrl.u32 %v2503, 7
  %v2505 = vsub.s32 6, %v2504
  %v2506 = vrot.slane %v2108, %v2505
  %v2507 = vlaneseq
  %v2508 = vshrl.u32 %v2507, 7
  %v2509 = vsub.s32 6, %v2508
  %v2510 = vrot.slane %v2109, %v2509
  %v2511 = vlaneseq
  %v2512 = vshrl.u32 %v2511, 7
  %v2513 = vsub.s32 6, %v2512
  %v2514 = vrot.slane %v2110, %v2513
  %v2515 = vlaneseq
  %v2516 = vshrl.u32 %v2515, 7
  %v2517 = vsub.s32 6, %v2516
  %v2518 = vrot.slane %v2111, %v2517
  %v2519 = vlaneseq
  %v2520 = vshrl.u32 %v2519, 7
  %v2521 = vsub.s32 6, %v2520
  %v2522 = vrot.slane %v2112, %v2521
  %v2523 = vlaneseq
  %v2524 = vshrl.u32 %v2523, 7
  %v2525 = vsub.s32 6, %v2524
  %v2526 = vrot.slane %v2113, %v2525
  %v2527 = vlaneseq
  %v2528 = vshrl.u32 %v2527, 7
  %v2529 = vsub.s32 6, %v2528
  %v2530 = vrot.slane %v2114, %v2529
  %v2531 = vmul.f32 %v606, %v2502
  %v2532 = vmul.f32 %v608, %v2506
  %v2533 = vmul.f32 %v899, %v2510
  %v2534 = vmul.f32 %v901, %v2514
  %v2535 = vmul.f32 %v1192, %v2518
  %v2536 = vmul.f32 %v1194, %v2522
  %v2537 = vmul.f32 %v1485, %v2526
  %v2538 = vmul.f32 %v1487, %v2530
  %v2539 = vmul.f32 %v610, %v2502
  %v2540 = vmul.f32 %v612, %v2506
  %v2541 = vmul.f32 %v903, %v2510
  %v2542 = vmul.f32 %v905, %v2514
  %v2543 = vmul.f32 %v1196, %v2518
  %v2544 = vmul.f32 %v1198, %v2522
  %v2545 = vmul.f32 %v1489, %v2526
  %v2546 = vmul.f32 %v1491, %v2530
  %v2547 = vadd.f32 %v2483, %v2531
  %v2548 = vadd.f32 %v2484, %v2532
  %v2549 = vadd.f32 %v2485, %v2533
  %v2550 = vadd.f32 %v2486, %v2534
  %v2551 = vadd.f32 %v2487, %v2535
  %v2552 = vadd.f32 %v2488, %v2536
  %v2553 = vadd.f32 %v2489, %v2537
  %v2554 = vadd.f32 %v2490, %v2538
  %v2555 = vadd.f32 %v2491, %v2539
  %v2556 = vadd.f32 %v2492, %v2540
  %v2557 = vadd.f32 %v2493, %v2541
  %v2558 = vadd.f32 %v2494, %v2542
  %v2559 = vadd.f32 %v2495, %v2543
  %v2560 = vadd.f32 %v2496, %v2544
  %v2561 = vadd.f32 %v2497, %v2545
  %v2562 = vadd.f32 %v2498, %v2546
  %v2563 = vlaneseq
  %v2564 = vshrl.u32 %v2563, 7
  %v2565 = vsub.s32 7, %v2564
  %v2566 = vrot.slane %v2107, %v2565
  %v2567 = vlaneseq
  %v2568 = vshrl.u32 %v2567, 7
  %v2569 = vsub.s32 7, %v2568
  %v2570 = vrot.slane %v2108, %v2569
  %v2571 = vlaneseq
  %v2572 = vshrl.u32 %v2571, 7
  %v2573 = vsub.s32 7, %v2572
  %v2574 = vrot.slane %v2109, %v2573
  %v2575 = vlaneseq
  %v2576 = vshrl.u32 %v2575, 7
  %v2577 = vsub.s32 7, %v2576
  %v2578 = vrot.slane %v2110, %v2577
  %v2579 = vlaneseq
  %v2580 = vshrl.u32 %v2579, 7
  %v2581 = vsub.s32 7, %v2580
  %v2582 = vrot.slane %v2111, %v2581
  %v2583 = vlaneseq
  %v2584 = vshrl.u32 %v2583, 7
  %v2585 = vsub.s32 7, %v2584
  %v2586 = vrot.slane %v2112, %v2585
  %v2587 = vlaneseq
  %v2588 = vshrl.u32 %v2587, 7
  %v2589 = vsub.s32 7, %v2588
  %v2590 = vrot.slane %v2113, %v2589
  %v2591 = vlaneseq
  %v2592 = vshrl.u32 %v2591, 7
  %v2593 = vsub.s32 7, %v2592
  %v2594 = vrot.slane %v2114, %v2593
  %v2595 = vmul.f32 %v616, %v2566
  %v2596 = vmul.f32 %v618, %v2570
  %v2597 = vmul.f32 %v909, %v2574
  %v2598 = vmul.f32 %v911, %v2578
  %v2599 = vmul.f32 %v1202, %v2582
  %v2600 = vmul.f32 %v1204, %v2586
  %v2601 = vmul.f32 %v1495, %v2590
  %v2602 = vmul.f32 %v1497, %v2594
  %v2603 = vmul.f32 %v620, %v2566
  %v2604 = vmul.f32 %v622, %v2570
  %v2605 = vmul.f32 %v913, %v2574
  %v2606 = vmul.f32 %v915, %v2578
  %v2607 = vmul.f32 %v1206, %v2582
  %v2608 = vmul.f32 %v1208, %v2586
  %v2609 = vmul.f32 %v1499, %v2590
  %v2610 = vmul.f32 %v1501, %v2594
  %v2611 = vadd.f32 %v2547, %v2595
  %v2612 = vadd.f32 %v2548, %v2596
  %v2613 = vadd.f32 %v2549, %v2597
  %v2614 = vadd.f32 %v2550, %v2598
  %v2615 = vadd.f32 %v2551, %v2599
  %v2616 = vadd.f32 %v2552, %v2600
  %v2617 = vadd.f32 %v2553, %v2601
  %v2618 = vadd.f32 %v2554, %v2602
  %v2619 = vadd.f32 %v2555, %v2603
  %v2620 = vadd.f32 %v2556, %v2604
  %v2621 = vadd.f32 %v2557, %v2605
  %v2622 = vadd.f32 %v2558, %v2606
  %v2623 = vadd.f32 %v2559, %v2607
  %v2624 = vadd.f32 %v2560, %v2608
  %v2625 = vadd.f32 %v2561, %v2609
  %v2626 = vadd.f32 %v2562, %v2610
  %v2627 = vunpack.c.l.bf16 %v65
  %v2628 = vunpack.c.h.bf16 %v65
  %v2629 = vunpack.c.l.bf16 %v66
  %v2630 = vunpack.c.h.bf16 %v66
  %v2631 = vunpack.c.l.bf16 %v67
  %v2632 = vunpack.c.h.bf16 %v67
  %v2633 = vunpack.c.l.bf16 %v68
  %v2634 = vunpack.c.h.bf16 %v68
  %v2635 = vlaneseq
  %v2636 = vshrl.u32 %v2635, 7
  %v2637 = vsub.s32 0, %v2636
  %v2638 = vrot.slane %v2627, %v2637
  %v2639 = vlaneseq
  %v2640 = vshrl.u32 %v2639, 7
  %v2641 = vsub.s32 0, %v2640
  %v2642 = vrot.slane %v2628, %v2641
  %v2643 = vlaneseq
  %v2644 = vshrl.u32 %v2643, 7
  %v2645 = vsub.s32 0, %v2644
  %v2646 = vrot.slane %v2629, %v2645
  %v2647 = vlaneseq
  %v2648 = vshrl.u32 %v2647, 7
  %v2649 = vsub.s32 0, %v2648
  %v2650 = vrot.slane %v2630, %v2649
  %v2651 = vlaneseq
  %v2652 = vshrl.u32 %v2651, 7
  %v2653 = vsub.s32 0, %v2652
  %v2654 = vrot.slane %v2631, %v2653
  %v2655 = vlaneseq
  %v2656 = vshrl.u32 %v2655, 7
  %v2657 = vsub.s32 0, %v2656
  %v2658 = vrot.slane %v2632, %v2657
  %v2659 = vlaneseq
  %v2660 = vshrl.u32 %v2659, 7
  %v2661 = vsub.s32 0, %v2660
  %v2662 = vrot.slane %v2633, %v2661
  %v2663 = vlaneseq
  %v2664 = vshrl.u32 %v2663, 7
  %v2665 = vsub.s32 0, %v2664
  %v2666 = vrot.slane %v2634, %v2665
  %v2667 = vmul.f32 %v626, %v2638
  %v2668 = vmul.f32 %v628, %v2642
  %v2669 = vmul.f32 %v919, %v2646
  %v2670 = vmul.f32 %v921, %v2650
  %v2671 = vmul.f32 %v1212, %v2654
  %v2672 = vmul.f32 %v1214, %v2658
  %v2673 = vmul.f32 %v1505, %v2662
  %v2674 = vmul.f32 %v1507, %v2666
  %v2675 = vmul.f32 %v630, %v2638
  %v2676 = vmul.f32 %v632, %v2642
  %v2677 = vmul.f32 %v923, %v2646
  %v2678 = vmul.f32 %v925, %v2650
  %v2679 = vmul.f32 %v1216, %v2654
  %v2680 = vmul.f32 %v1218, %v2658
  %v2681 = vmul.f32 %v1509, %v2662
  %v2682 = vmul.f32 %v1511, %v2666
  %v2683 = vadd.f32 %v2611, %v2667
  %v2684 = vadd.f32 %v2612, %v2668
  %v2685 = vadd.f32 %v2613, %v2669
  %v2686 = vadd.f32 %v2614, %v2670
  %v2687 = vadd.f32 %v2615, %v2671
  %v2688 = vadd.f32 %v2616, %v2672
  %v2689 = vadd.f32 %v2617, %v2673
  %v2690 = vadd.f32 %v2618, %v2674
  %v2691 = vadd.f32 %v2619, %v2675
  %v2692 = vadd.f32 %v2620, %v2676
  %v2693 = vadd.f32 %v2621, %v2677
  %v2694 = vadd.f32 %v2622, %v2678
  %v2695 = vadd.f32 %v2623, %v2679
  %v2696 = vadd.f32 %v2624, %v2680
  %v2697 = vadd.f32 %v2625, %v2681
  %v2698 = vadd.f32 %v2626, %v2682
  %v2699 = vlaneseq
  %v2700 = vshrl.u32 %v2699, 7
  %v2701 = vsub.s32 1, %v2700
  %v2702 = vrot.slane %v2627, %v2701
  %v2703 = vlaneseq
  %v2704 = vshrl.u32 %v2703, 7
  %v2705 = vsub.s32 1, %v2704
  %v2706 = vrot.slane %v2628, %v2705
  %v2707 = vlaneseq
  %v2708 = vshrl.u32 %v2707, 7
  %v2709 = vsub.s32 1, %v2708
  %v2710 = vrot.slane %v2629, %v2709
  %v2711 = vlaneseq
  %v2712 = vshrl.u32 %v2711, 7
  %v2713 = vsub.s32 1, %v2712
  %v2714 = vrot.slane %v2630, %v2713
  %v2715 = vlaneseq
  %v2716 = vshrl.u32 %v2715, 7
  %v2717 = vsub.s32 1, %v2716
  %v2718 = vrot.slane %v2631, %v2717
  %v2719 = vlaneseq
  %v2720 = vshrl.u32 %v2719, 7
  %v2721 = vsub.s32 1, %v2720
  %v2722 = vrot.slane %v2632, %v2721
  %v2723 = vlaneseq
  %v2724 = vshrl.u32 %v2723, 7
  %v2725 = vsub.s32 1, %v2724
  %v2726 = vrot.slane %v2633, %v2725
  %v2727 = vlaneseq
  %v2728 = vshrl.u32 %v2727, 7
  %v2729 = vsub.s32 1, %v2728
  %v2730 = vrot.slane %v2634, %v2729
  %v2731 = vmul.f32 %v636, %v2702
  %v2732 = vmul.f32 %v638, %v2706
  %v2733 = vmul.f32 %v929, %v2710
  %v2734 = vmul.f32 %v931, %v2714
  %v2735 = vmul.f32 %v1222, %v2718
  %v2736 = vmul.f32 %v1224, %v2722
  %v2737 = vmul.f32 %v1515, %v2726
  %v2738 = vmul.f32 %v1517, %v2730
  %v2739 = vmul.f32 %v640, %v2702
  %v2740 = vmul.f32 %v642, %v2706
  %v2741 = vmul.f32 %v933, %v2710
  %v2742 = vmul.f32 %v935, %v2714
  %v2743 = vmul.f32 %v1226, %v2718
  %v2744 = vmul.f32 %v1228, %v2722
  %v2745 = vmul.f32 %v1519, %v2726
  %v2746 = vmul.f32 %v1521, %v2730
  %v2747 = vadd.f32 %v2683, %v2731
  %v2748 = vadd.f32 %v2684, %v2732
  %v2749 = vadd.f32 %v2685, %v2733
  %v2750 = vadd.f32 %v2686, %v2734
  %v2751 = vadd.f32 %v2687, %v2735
  %v2752 = vadd.f32 %v2688, %v2736
  %v2753 = vadd.f32 %v2689, %v2737
  %v2754 = vadd.f32 %v2690, %v2738
  %v2755 = vadd.f32 %v2691, %v2739
  %v2756 = vadd.f32 %v2692, %v2740
  %v2757 = vadd.f32 %v2693, %v2741
  %v2758 = vadd.f32 %v2694, %v2742
  %v2759 = vadd.f32 %v2695, %v2743
  %v2760 = vadd.f32 %v2696, %v2744
  %v2761 = vadd.f32 %v2697, %v2745
  %v2762 = vadd.f32 %v2698, %v2746
  %v2763 = vlaneseq
  %v2764 = vshrl.u32 %v2763, 7
  %v2765 = vsub.s32 2, %v2764
  %v2766 = vrot.slane %v2627, %v2765
  %v2767 = vlaneseq
  %v2768 = vshrl.u32 %v2767, 7
  %v2769 = vsub.s32 2, %v2768
  %v2770 = vrot.slane %v2628, %v2769
  %v2771 = vlaneseq
  %v2772 = vshrl.u32 %v2771, 7
  %v2773 = vsub.s32 2, %v2772
  %v2774 = vrot.slane %v2629, %v2773
  %v2775 = vlaneseq
  %v2776 = vshrl.u32 %v2775, 7
  %v2777 = vsub.s32 2, %v2776
  %v2778 = vrot.slane %v2630, %v2777
  %v2779 = vlaneseq
  %v2780 = vshrl.u32 %v2779, 7
  %v2781 = vsub.s32 2, %v2780
  %v2782 = vrot.slane %v2631, %v2781
  %v2783 = vlaneseq
  %v2784 = vshrl.u32 %v2783, 7
  %v2785 = vsub.s32 2, %v2784
  %v2786 = vrot.slane %v2632, %v2785
  %v2787 = vlaneseq
  %v2788 = vshrl.u32 %v2787, 7
  %v2789 = vsub.s32 2, %v2788
  %v2790 = vrot.slane %v2633, %v2789
  %v2791 = vlaneseq
  %v2792 = vshrl.u32 %v2791, 7
  %v2793 = vsub.s32 2, %v2792
  %v2794 = vrot.slane %v2634, %v2793
  %v2795 = vmul.f32 %v646, %v2766
  %v2796 = vmul.f32 %v648, %v2770
  %v2797 = vmul.f32 %v939, %v2774
  %v2798 = vmul.f32 %v941, %v2778
  %v2799 = vmul.f32 %v1232, %v2782
  %v2800 = vmul.f32 %v1234, %v2786
  %v2801 = vmul.f32 %v1525, %v2790
  %v2802 = vmul.f32 %v1527, %v2794
  %v2803 = vmul.f32 %v650, %v2766
  %v2804 = vmul.f32 %v652, %v2770
  %v2805 = vmul.f32 %v943, %v2774
  %v2806 = vmul.f32 %v945, %v2778
  %v2807 = vmul.f32 %v1236, %v2782
  %v2808 = vmul.f32 %v1238, %v2786
  %v2809 = vmul.f32 %v1529, %v2790
  %v2810 = vmul.f32 %v1531, %v2794
  %v2811 = vadd.f32 %v2747, %v2795
  %v2812 = vadd.f32 %v2748, %v2796
  %v2813 = vadd.f32 %v2749, %v2797
  %v2814 = vadd.f32 %v2750, %v2798
  %v2815 = vadd.f32 %v2751, %v2799
  %v2816 = vadd.f32 %v2752, %v2800
  %v2817 = vadd.f32 %v2753, %v2801
  %v2818 = vadd.f32 %v2754, %v2802
  %v2819 = vadd.f32 %v2755, %v2803
  %v2820 = vadd.f32 %v2756, %v2804
  %v2821 = vadd.f32 %v2757, %v2805
  %v2822 = vadd.f32 %v2758, %v2806
  %v2823 = vadd.f32 %v2759, %v2807
  %v2824 = vadd.f32 %v2760, %v2808
  %v2825 = vadd.f32 %v2761, %v2809
  %v2826 = vadd.f32 %v2762, %v2810
  %v2827 = vlaneseq
  %v2828 = vshrl.u32 %v2827, 7
  %v2829 = vsub.s32 3, %v2828
  %v2830 = vrot.slane %v2627, %v2829
  %v2831 = vlaneseq
  %v2832 = vshrl.u32 %v2831, 7
  %v2833 = vsub.s32 3, %v2832
  %v2834 = vrot.slane %v2628, %v2833
  %v2835 = vlaneseq
  %v2836 = vshrl.u32 %v2835, 7
  %v2837 = vsub.s32 3, %v2836
  %v2838 = vrot.slane %v2629, %v2837
  %v2839 = vlaneseq
  %v2840 = vshrl.u32 %v2839, 7
  %v2841 = vsub.s32 3, %v2840
  %v2842 = vrot.slane %v2630, %v2841
  %v2843 = vlaneseq
  %v2844 = vshrl.u32 %v2843, 7
  %v2845 = vsub.s32 3, %v2844
  %v2846 = vrot.slane %v2631, %v2845
  %v2847 = vlaneseq
  %v2848 = vshrl.u32 %v2847, 7
  %v2849 = vsub.s32 3, %v2848
  %v2850 = vrot.slane %v2632, %v2849
  %v2851 = vlaneseq
  %v2852 = vshrl.u32 %v2851, 7
  %v2853 = vsub.s32 3, %v2852
  %v2854 = vrot.slane %v2633, %v2853
  %v2855 = vlaneseq
  %v2856 = vshrl.u32 %v2855, 7
  %v2857 = vsub.s32 3, %v2856
  %v2858 = vrot.slane %v2634, %v2857
  %v2859 = vmul.f32 %v656, %v2830
  %v2860 = vmul.f32 %v658, %v2834
  %v2861 = vmul.f32 %v949, %v2838
  %v2862 = vmul.f32 %v951, %v2842
  %v2863 = vmul.f32 %v1242, %v2846
  %v2864 = vmul.f32 %v1244, %v2850
  %v2865 = vmul.f32 %v1535, %v2854
  %v2866 = vmul.f32 %v1537, %v2858
  %v2867 = vmul.f32 %v660, %v2830
  %v2868 = vmul.f32 %v662, %v2834
  %v2869 = vmul.f32 %v953, %v2838
  %v2870 = vmul.f32 %v955, %v2842
  %v2871 = vmul.f32 %v1246, %v2846
  %v2872 = vmul.f32 %v1248, %v2850
  %v2873 = vmul.f32 %v1539, %v2854
  %v2874 = vmul.f32 %v1541, %v2858
  %v2875 = vadd.f32 %v2811, %v2859
  %v2876 = vadd.f32 %v2812, %v2860
  %v2877 = vadd.f32 %v2813, %v2861
  %v2878 = vadd.f32 %v2814, %v2862
  %v2879 = vadd.f32 %v2815, %v2863
  %v2880 = vadd.f32 %v2816, %v2864
  %v2881 = vadd.f32 %v2817, %v2865
  %v2882 = vadd.f32 %v2818, %v2866
  %v2883 = vadd.f32 %v2819, %v2867
  %v2884 = vadd.f32 %v2820, %v2868
  %v2885 = vadd.f32 %v2821, %v2869
  %v2886 = vadd.f32 %v2822, %v2870
  %v2887 = vadd.f32 %v2823, %v2871
  %v2888 = vadd.f32 %v2824, %v2872
  %v2889 = vadd.f32 %v2825, %v2873
  %v2890 = vadd.f32 %v2826, %v2874
  %v2891 = vlaneseq
  %v2892 = vshrl.u32 %v2891, 7
  %v2893 = vsub.s32 4, %v2892
  %v2894 = vrot.slane %v2627, %v2893
  %v2895 = vlaneseq
  %v2896 = vshrl.u32 %v2895, 7
  %v2897 = vsub.s32 4, %v2896
  %v2898 = vrot.slane %v2628, %v2897
  %v2899 = vlaneseq
  %v2900 = vshrl.u32 %v2899, 7
  %v2901 = vsub.s32 4, %v2900
  %v2902 = vrot.slane %v2629, %v2901
  %v2903 = vlaneseq
  %v2904 = vshrl.u32 %v2903, 7
  %v2905 = vsub.s32 4, %v2904
  %v2906 = vrot.slane %v2630, %v2905
  %v2907 = vlaneseq
  %v2908 = vshrl.u32 %v2907, 7
  %v2909 = vsub.s32 4, %v2908
  %v2910 = vrot.slane %v2631, %v2909
  %v2911 = vlaneseq
  %v2912 = vshrl.u32 %v2911, 7
  %v2913 = vsub.s32 4, %v2912
  %v2914 = vrot.slane %v2632, %v2913
  %v2915 = vlaneseq
  %v2916 = vshrl.u32 %v2915, 7
  %v2917 = vsub.s32 4, %v2916
  %v2918 = vrot.slane %v2633, %v2917
  %v2919 = vlaneseq
  %v2920 = vshrl.u32 %v2919, 7
  %v2921 = vsub.s32 4, %v2920
  %v2922 = vrot.slane %v2634, %v2921
  %v2923 = vmul.f32 %v666, %v2894
  %v2924 = vmul.f32 %v668, %v2898
  %v2925 = vmul.f32 %v959, %v2902
  %v2926 = vmul.f32 %v961, %v2906
  %v2927 = vmul.f32 %v1252, %v2910
  %v2928 = vmul.f32 %v1254, %v2914
  %v2929 = vmul.f32 %v1545, %v2918
  %v2930 = vmul.f32 %v1547, %v2922
  %v2931 = vmul.f32 %v670, %v2894
  %v2932 = vmul.f32 %v672, %v2898
  %v2933 = vmul.f32 %v963, %v2902
  %v2934 = vmul.f32 %v965, %v2906
  %v2935 = vmul.f32 %v1256, %v2910
  %v2936 = vmul.f32 %v1258, %v2914
  %v2937 = vmul.f32 %v1549, %v2918
  %v2938 = vmul.f32 %v1551, %v2922
  %v2939 = vadd.f32 %v2875, %v2923
  %v2940 = vadd.f32 %v2876, %v2924
  %v2941 = vadd.f32 %v2877, %v2925
  %v2942 = vadd.f32 %v2878, %v2926
  %v2943 = vadd.f32 %v2879, %v2927
  %v2944 = vadd.f32 %v2880, %v2928
  %v2945 = vadd.f32 %v2881, %v2929
  %v2946 = vadd.f32 %v2882, %v2930
  %v2947 = vadd.f32 %v2883, %v2931
  %v2948 = vadd.f32 %v2884, %v2932
  %v2949 = vadd.f32 %v2885, %v2933
  %v2950 = vadd.f32 %v2886, %v2934
  %v2951 = vadd.f32 %v2887, %v2935
  %v2952 = vadd.f32 %v2888, %v2936
  %v2953 = vadd.f32 %v2889, %v2937
  %v2954 = vadd.f32 %v2890, %v2938
  %v2955 = vlaneseq
  %v2956 = vshrl.u32 %v2955, 7
  %v2957 = vsub.s32 5, %v2956
  %v2958 = vrot.slane %v2627, %v2957
  %v2959 = vlaneseq
  %v2960 = vshrl.u32 %v2959, 7
  %v2961 = vsub.s32 5, %v2960
  %v2962 = vrot.slane %v2628, %v2961
  %v2963 = vlaneseq
  %v2964 = vshrl.u32 %v2963, 7
  %v2965 = vsub.s32 5, %v2964
  %v2966 = vrot.slane %v2629, %v2965
  %v2967 = vlaneseq
  %v2968 = vshrl.u32 %v2967, 7
  %v2969 = vsub.s32 5, %v2968
  %v2970 = vrot.slane %v2630, %v2969
  %v2971 = vlaneseq
  %v2972 = vshrl.u32 %v2971, 7
  %v2973 = vsub.s32 5, %v2972
  %v2974 = vrot.slane %v2631, %v2973
  %v2975 = vlaneseq
  %v2976 = vshrl.u32 %v2975, 7
  %v2977 = vsub.s32 5, %v2976
  %v2978 = vrot.slane %v2632, %v2977
  %v2979 = vlaneseq
  %v2980 = vshrl.u32 %v2979, 7
  %v2981 = vsub.s32 5, %v2980
  %v2982 = vrot.slane %v2633, %v2981
  %v2983 = vlaneseq
  %v2984 = vshrl.u32 %v2983, 7
  %v2985 = vsub.s32 5, %v2984
  %v2986 = vrot.slane %v2634, %v2985
  %v2987 = vmul.f32 %v676, %v2958
  %v2988 = vmul.f32 %v678, %v2962
  %v2989 = vmul.f32 %v969, %v2966
  %v2990 = vmul.f32 %v971, %v2970
  %v2991 = vmul.f32 %v1262, %v2974
  %v2992 = vmul.f32 %v1264, %v2978
  %v2993 = vmul.f32 %v1555, %v2982
  %v2994 = vmul.f32 %v1557, %v2986
  %v2995 = vmul.f32 %v680, %v2958
  %v2996 = vmul.f32 %v682, %v2962
  %v2997 = vmul.f32 %v973, %v2966
  %v2998 = vmul.f32 %v975, %v2970
  %v2999 = vmul.f32 %v1266, %v2974
  %v3000 = vmul.f32 %v1268, %v2978
  %v3001 = vmul.f32 %v1559, %v2982
  %v3002 = vmul.f32 %v1561, %v2986
  %v3003 = vadd.f32 %v2939, %v2987
  %v3004 = vadd.f32 %v2940, %v2988
  %v3005 = vadd.f32 %v2941, %v2989
  %v3006 = vadd.f32 %v2942, %v2990
  %v3007 = vadd.f32 %v2943, %v2991
  %v3008 = vadd.f32 %v2944, %v2992
  %v3009 = vadd.f32 %v2945, %v2993
  %v3010 = vadd.f32 %v2946, %v2994
  %v3011 = vadd.f32 %v2947, %v2995
  %v3012 = vadd.f32 %v2948, %v2996
  %v3013 = vadd.f32 %v2949, %v2997
  %v3014 = vadd.f32 %v2950, %v2998
  %v3015 = vadd.f32 %v2951, %v2999
  %v3016 = vadd.f32 %v2952, %v3000
  %v3017 = vadd.f32 %v2953, %v3001
  %v3018 = vadd.f32 %v2954, %v3002
  %v3019 = vlaneseq
  %v3020 = vshrl.u32 %v3019, 7
  %v3021 = vsub.s32 6, %v3020
  %v3022 = vrot.slane %v2627, %v3021
  %v3023 = vlaneseq
  %v3024 = vshrl.u32 %v3023, 7
  %v3025 = vsub.s32 6, %v3024
  %v3026 = vrot.slane %v2628, %v3025
  %v3027 = vlaneseq
  %v3028 = vshrl.u32 %v3027, 7
  %v3029 = vsub.s32 6, %v3028
  %v3030 = vrot.slane %v2629, %v3029
  %v3031 = vlaneseq
  %v3032 = vshrl.u32 %v3031, 7
  %v3033 = vsub.s32 6, %v3032
  %v3034 = vrot.slane %v2630, %v3033
  %v3035 = vlaneseq
  %v3036 = vshrl.u32 %v3035, 7
  %v3037 = vsub.s32 6, %v3036
  %v3038 = vrot.slane %v2631, %v3037
  %v3039 = vlaneseq
  %v3040 = vshrl.u32 %v3039, 7
  %v3041 = vsub.s32 6, %v3040
  %v3042 = vrot.slane %v2632, %v3041
  %v3043 = vlaneseq
  %v3044 = vshrl.u32 %v3043, 7
  %v3045 = vsub.s32 6, %v3044
  %v3046 = vrot.slane %v2633, %v3045
  %v3047 = vlaneseq
  %v3048 = vshrl.u32 %v3047, 7
  %v3049 = vsub.s32 6, %v3048
  %v3050 = vrot.slane %v2634, %v3049
  %v3051 = vmul.f32 %v686, %v3022
  %v3052 = vmul.f32 %v688, %v3026
  %v3053 = vmul.f32 %v979, %v3030
  %v3054 = vmul.f32 %v981, %v3034
  %v3055 = vmul.f32 %v1272, %v3038
  %v3056 = vmul.f32 %v1274, %v3042
  %v3057 = vmul.f32 %v1565, %v3046
  %v3058 = vmul.f32 %v1567, %v3050
  %v3059 = vmul.f32 %v690, %v3022
  %v3060 = vmul.f32 %v692, %v3026
  %v3061 = vmul.f32 %v983, %v3030
  %v3062 = vmul.f32 %v985, %v3034
  %v3063 = vmul.f32 %v1276, %v3038
  %v3064 = vmul.f32 %v1278, %v3042
  %v3065 = vmul.f32 %v1569, %v3046
  %v3066 = vmul.f32 %v1571, %v3050
  %v3067 = vadd.f32 %v3003, %v3051
  %v3068 = vadd.f32 %v3004, %v3052
  %v3069 = vadd.f32 %v3005, %v3053
  %v3070 = vadd.f32 %v3006, %v3054
  %v3071 = vadd.f32 %v3007, %v3055
  %v3072 = vadd.f32 %v3008, %v3056
  %v3073 = vadd.f32 %v3009, %v3057
  %v3074 = vadd.f32 %v3010, %v3058
  %v3075 = vadd.f32 %v3011, %v3059
  %v3076 = vadd.f32 %v3012, %v3060
  %v3077 = vadd.f32 %v3013, %v3061
  %v3078 = vadd.f32 %v3014, %v3062
  %v3079 = vadd.f32 %v3015, %v3063
  %v3080 = vadd.f32 %v3016, %v3064
  %v3081 = vadd.f32 %v3017, %v3065
  %v3082 = vadd.f32 %v3018, %v3066
  %v3083 = vlaneseq
  %v3084 = vshrl.u32 %v3083, 7
  %v3085 = vsub.s32 7, %v3084
  %v3086 = vrot.slane %v2627, %v3085
  %v3087 = vlaneseq
  %v3088 = vshrl.u32 %v3087, 7
  %v3089 = vsub.s32 7, %v3088
  %v3090 = vrot.slane %v2628, %v3089
  %v3091 = vlaneseq
  %v3092 = vshrl.u32 %v3091, 7
  %v3093 = vsub.s32 7, %v3092
  %v3094 = vrot.slane %v2629, %v3093
  %v3095 = vlaneseq
  %v3096 = vshrl.u32 %v3095, 7
  %v3097 = vsub.s32 7, %v3096
  %v3098 = vrot.slane %v2630, %v3097
  %v3099 = vlaneseq
  %v3100 = vshrl.u32 %v3099, 7
  %v3101 = vsub.s32 7, %v3100
  %v3102 = vrot.slane %v2631, %v3101
  %v3103 = vlaneseq
  %v3104 = vshrl.u32 %v3103, 7
  %v3105 = vsub.s32 7, %v3104
  %v3106 = vrot.slane %v2632, %v3105
  %v3107 = vlaneseq
  %v3108 = vshrl.u32 %v3107, 7
  %v3109 = vsub.s32 7, %v3108
  %v3110 = vrot.slane %v2633, %v3109
  %v3111 = vlaneseq
  %v3112 = vshrl.u32 %v3111, 7
  %v3113 = vsub.s32 7, %v3112
  %v3114 = vrot.slane %v2634, %v3113
  %v3115 = vmul.f32 %v696, %v3086
  %v3116 = vmul.f32 %v698, %v3090
  %v3117 = vmul.f32 %v989, %v3094
  %v3118 = vmul.f32 %v991, %v3098
  %v3119 = vmul.f32 %v1282, %v3102
  %v3120 = vmul.f32 %v1284, %v3106
  %v3121 = vmul.f32 %v1575, %v3110
  %v3122 = vmul.f32 %v1577, %v3114
  %v3123 = vmul.f32 %v700, %v3086
  %v3124 = vmul.f32 %v702, %v3090
  %v3125 = vmul.f32 %v993, %v3094
  %v3126 = vmul.f32 %v995, %v3098
  %v3127 = vmul.f32 %v1286, %v3102
  %v3128 = vmul.f32 %v1288, %v3106
  %v3129 = vmul.f32 %v1579, %v3110
  %v3130 = vmul.f32 %v1581, %v3114
  %v3131 = vadd.f32 %v3067, %v3115
  %v3132 = vadd.f32 %v3068, %v3116
  %v3133 = vadd.f32 %v3069, %v3117
  %v3134 = vadd.f32 %v3070, %v3118
  %v3135 = vadd.f32 %v3071, %v3119
  %v3136 = vadd.f32 %v3072, %v3120
  %v3137 = vadd.f32 %v3073, %v3121
  %v3138 = vadd.f32 %v3074, %v3122
  %v3139 = vadd.f32 %v3075, %v3123
  %v3140 = vadd.f32 %v3076, %v3124
  %v3141 = vadd.f32 %v3077, %v3125
  %v3142 = vadd.f32 %v3078, %v3126
  %v3143 = vadd.f32 %v3079, %v3127
  %v3144 = vadd.f32 %v3080, %v3128
  %v3145 = vadd.f32 %v3081, %v3129
  %v3146 = vadd.f32 %v3082, %v3130
  %v3147 = vunpack.c.l.bf16 %v69
  %v3148 = vunpack.c.h.bf16 %v69
  %v3149 = vunpack.c.l.bf16 %v70
  %v3150 = vunpack.c.h.bf16 %v70
  %v3151 = vunpack.c.l.bf16 %v71
  %v3152 = vunpack.c.h.bf16 %v71
  %v3153 = vunpack.c.l.bf16 %v72
  %v3154 = vunpack.c.h.bf16 %v72
  %v3155 = vlaneseq
  %v3156 = vshrl.u32 %v3155, 7
  %v3157 = vsub.s32 0, %v3156
  %v3158 = vrot.slane %v3147, %v3157
  %v3159 = vlaneseq
  %v3160 = vshrl.u32 %v3159, 7
  %v3161 = vsub.s32 0, %v3160
  %v3162 = vrot.slane %v3148, %v3161
  %v3163 = vlaneseq
  %v3164 = vshrl.u32 %v3163, 7
  %v3165 = vsub.s32 0, %v3164
  %v3166 = vrot.slane %v3149, %v3165
  %v3167 = vlaneseq
  %v3168 = vshrl.u32 %v3167, 7
  %v3169 = vsub.s32 0, %v3168
  %v3170 = vrot.slane %v3150, %v3169
  %v3171 = vlaneseq
  %v3172 = vshrl.u32 %v3171, 7
  %v3173 = vsub.s32 0, %v3172
  %v3174 = vrot.slane %v3151, %v3173
  %v3175 = vlaneseq
  %v3176 = vshrl.u32 %v3175, 7
  %v3177 = vsub.s32 0, %v3176
  %v3178 = vrot.slane %v3152, %v3177
  %v3179 = vlaneseq
  %v3180 = vshrl.u32 %v3179, 7
  %v3181 = vsub.s32 0, %v3180
  %v3182 = vrot.slane %v3153, %v3181
  %v3183 = vlaneseq
  %v3184 = vshrl.u32 %v3183, 7
  %v3185 = vsub.s32 0, %v3184
  %v3186 = vrot.slane %v3154, %v3185
  %v3187 = vmul.f32 %v706, %v3158
  %v3188 = vmul.f32 %v708, %v3162
  %v3189 = vmul.f32 %v999, %v3166
  %v3190 = vmul.f32 %v1001, %v3170
  %v3191 = vmul.f32 %v1292, %v3174
  %v3192 = vmul.f32 %v1294, %v3178
  %v3193 = vmul.f32 %v1585, %v3182
  %v3194 = vmul.f32 %v1587, %v3186
  %v3195 = vmul.f32 %v710, %v3158
  %v3196 = vmul.f32 %v712, %v3162
  %v3197 = vmul.f32 %v1003, %v3166
  %v3198 = vmul.f32 %v1005, %v3170
  %v3199 = vmul.f32 %v1296, %v3174
  %v3200 = vmul.f32 %v1298, %v3178
  %v3201 = vmul.f32 %v1589, %v3182
  %v3202 = vmul.f32 %v1591, %v3186
  %v3203 = vadd.f32 %v3131, %v3187
  %v3204 = vadd.f32 %v3132, %v3188
  %v3205 = vadd.f32 %v3133, %v3189
  %v3206 = vadd.f32 %v3134, %v3190
  %v3207 = vadd.f32 %v3135, %v3191
  %v3208 = vadd.f32 %v3136, %v3192
  %v3209 = vadd.f32 %v3137, %v3193
  %v3210 = vadd.f32 %v3138, %v3194
  %v3211 = vadd.f32 %v3139, %v3195
  %v3212 = vadd.f32 %v3140, %v3196
  %v3213 = vadd.f32 %v3141, %v3197
  %v3214 = vadd.f32 %v3142, %v3198
  %v3215 = vadd.f32 %v3143, %v3199
  %v3216 = vadd.f32 %v3144, %v3200
  %v3217 = vadd.f32 %v3145, %v3201
  %v3218 = vadd.f32 %v3146, %v3202
  %v3219 = vlaneseq
  %v3220 = vshrl.u32 %v3219, 7
  %v3221 = vsub.s32 1, %v3220
  %v3222 = vrot.slane %v3147, %v3221
  %v3223 = vlaneseq
  %v3224 = vshrl.u32 %v3223, 7
  %v3225 = vsub.s32 1, %v3224
  %v3226 = vrot.slane %v3148, %v3225
  %v3227 = vlaneseq
  %v3228 = vshrl.u32 %v3227, 7
  %v3229 = vsub.s32 1, %v3228
  %v3230 = vrot.slane %v3149, %v3229
  %v3231 = vlaneseq
  %v3232 = vshrl.u32 %v3231, 7
  %v3233 = vsub.s32 1, %v3232
  %v3234 = vrot.slane %v3150, %v3233
  %v3235 = vlaneseq
  %v3236 = vshrl.u32 %v3235, 7
  %v3237 = vsub.s32 1, %v3236
  %v3238 = vrot.slane %v3151, %v3237
  %v3239 = vlaneseq
  %v3240 = vshrl.u32 %v3239, 7
  %v3241 = vsub.s32 1, %v3240
  %v3242 = vrot.slane %v3152, %v3241
  %v3243 = vlaneseq
  %v3244 = vshrl.u32 %v3243, 7
  %v3245 = vsub.s32 1, %v3244
  %v3246 = vrot.slane %v3153, %v3245
  %v3247 = vlaneseq
  %v3248 = vshrl.u32 %v3247, 7
  %v3249 = vsub.s32 1, %v3248
  %v3250 = vrot.slane %v3154, %v3249
  %v3251 = vmul.f32 %v716, %v3222
  %v3252 = vmul.f32 %v718, %v3226
  %v3253 = vmul.f32 %v1009, %v3230
  %v3254 = vmul.f32 %v1011, %v3234
  %v3255 = vmul.f32 %v1302, %v3238
  %v3256 = vmul.f32 %v1304, %v3242
  %v3257 = vmul.f32 %v1595, %v3246
  %v3258 = vmul.f32 %v1597, %v3250
  %v3259 = vmul.f32 %v720, %v3222
  %v3260 = vmul.f32 %v722, %v3226
  %v3261 = vmul.f32 %v1013, %v3230
  %v3262 = vmul.f32 %v1015, %v3234
  %v3263 = vmul.f32 %v1306, %v3238
  %v3264 = vmul.f32 %v1308, %v3242
  %v3265 = vmul.f32 %v1599, %v3246
  %v3266 = vmul.f32 %v1601, %v3250
  %v3267 = vadd.f32 %v3203, %v3251
  %v3268 = vadd.f32 %v3204, %v3252
  %v3269 = vadd.f32 %v3205, %v3253
  %v3270 = vadd.f32 %v3206, %v3254
  %v3271 = vadd.f32 %v3207, %v3255
  %v3272 = vadd.f32 %v3208, %v3256
  %v3273 = vadd.f32 %v3209, %v3257
  %v3274 = vadd.f32 %v3210, %v3258
  %v3275 = vadd.f32 %v3211, %v3259
  %v3276 = vadd.f32 %v3212, %v3260
  %v3277 = vadd.f32 %v3213, %v3261
  %v3278 = vadd.f32 %v3214, %v3262
  %v3279 = vadd.f32 %v3215, %v3263
  %v3280 = vadd.f32 %v3216, %v3264
  %v3281 = vadd.f32 %v3217, %v3265
  %v3282 = vadd.f32 %v3218, %v3266
  %v3283 = vld [vmem:[%s4] sm:$0xff]
  %v3284 = vld [vmem:[%s4 + $0x8] sm:$0xff]
  %3286 = vset.pattern.permute.xlu0 0
  %3287 = vperm.xlu0 %3286, %v3283
  %v3288 = vpop.permute.xlu0 %3287
  %3291 = vset.pattern.permute.xlu0 0
  %3292 = vperm.xlu0 %3291, %v3284
  %v3293 = vpop.permute.xlu0 %3292
  %v3295 = vadd.f32 %v3267, %v3288
  %v3296 = vadd.f32 %v3268, %v3288
  %v3297 = vadd.f32 %v3269, %v3288
  %v3298 = vadd.f32 %v3270, %v3288
  %v3299 = vadd.f32 %v3271, %v3288
  %v3300 = vadd.f32 %v3272, %v3288
  %v3301 = vadd.f32 %v3273, %v3288
  %v3302 = vadd.f32 %v3274, %v3288
  %v3303 = vadd.f32 %v3275, %v3293
  %v3304 = vadd.f32 %v3276, %v3293
  %v3305 = vadd.f32 %v3277, %v3293
  %v3306 = vadd.f32 %v3278, %v3293
  %v3307 = vadd.f32 %v3279, %v3293
  %v3308 = vadd.f32 %v3280, %v3293
  %v3309 = vadd.f32 %v3281, %v3293
  %v3310 = vadd.f32 %v3282, %v3293
  %v3311 = vld [vmem:[%s5] sm:$0xf]
  %v3312 = vld [vmem:[%s5 + $0x4] sm:$0xf]
  %v3313 = vld [vmem:[%s5 + $0x8] sm:$0xf]
  %v3314 = vld [vmem:[%s5 + $0xc] sm:$0xf]
  %v3315 = vld [vmem:[%s5 + $0x10] sm:$0xf]
  %v3316 = vld [vmem:[%s5 + $0x14] sm:$0xf]
  %v3317 = vld [vmem:[%s5 + $0x18] sm:$0xf]
  %v3318 = vld [vmem:[%s5 + $0x1c] sm:$0xf]
  %v3319 = vld [vmem:[%s5 + $0x20] sm:$0xf]
  %v3320 = vld [vmem:[%s5 + $0x24] sm:$0xf]
  %v3321 = vld [vmem:[%s5 + $0x28] sm:$0xf]
  %v3322 = vld [vmem:[%s5 + $0x2c] sm:$0xf]
  %v3323 = vld [vmem:[%s5 + $0x30] sm:$0xf]
  %v3324 = vld [vmem:[%s5 + $0x34] sm:$0xf]
  %v3325 = vld [vmem:[%s5 + $0x38] sm:$0xf]
  %v3326 = vld [vmem:[%s5 + $0x3c] sm:$0xf]
  %v3327 = vld [vmem:[%s5 + $0x40] sm:$0xf]
  %v3328 = vld [vmem:[%s5 + $0x44] sm:$0xf]
  %v3329 = vld [vmem:[%s5 + $0x48] sm:$0xf]
  %v3330 = vld [vmem:[%s5 + $0x4c] sm:$0xf]
  %v3331 = vld [vmem:[%s5 + $0x50] sm:$0xf]
  %v3332 = vld [vmem:[%s5 + $0x54] sm:$0xf]
  %v3333 = vld [vmem:[%s5 + $0x58] sm:$0xf]
  %v3334 = vld [vmem:[%s5 + $0x5c] sm:$0xf]
  %v3359 = vunpack.c.l.b16 %v3311
  %v3360 = vunpack.c.l.b16 %v3312
  %v3361 = vunpack.c.l.b16 %v3313
  %v3362 = vunpack.c.l.b16 %v3314
  %v3363 = vunpack.c.l.b16 %v3315
  %v3364 = vunpack.c.l.b16 %v3316
  %v3365 = vunpack.c.l.b16 %v3317
  %v3366 = vunpack.c.l.b16 %v3318
  %v3367 = vunpack.c.l.b16 %v3319
  %v3368 = vunpack.c.l.b16 %v3320
  %v3369 = vunpack.c.l.b16 %v3321
  %v3370 = vunpack.c.l.b16 %v3322
  %v3371 = vunpack.c.l.b16 %v3323
  %v3372 = vunpack.c.l.b16 %v3324
  %v3373 = vunpack.c.l.b16 %v3325
  %v3374 = vunpack.c.l.b16 %v3326
  %v3375 = vunpack.c.l.b16 %v3327
  %v3376 = vunpack.c.l.b16 %v3328
  %v3377 = vunpack.c.l.b16 %v3329
  %v3378 = vunpack.c.l.b16 %v3330
  %v3379 = vunpack.c.l.b16 %v3331
  %v3380 = vunpack.c.l.b16 %v3332
  %v3381 = vunpack.c.l.b16 %v3333
  %v3382 = vunpack.c.l.b16 %v3334
  %v3383 = vpack.c.b16 %v3360, %v3359
  %v3384 = vpack.c.b16 %v3362, %v3361
  %v3385 = vpack.c.b16 %v3364, %v3363
  %v3386 = vpack.c.b16 %v3366, %v3365
  %v3387 = vpack.c.b16 %v3368, %v3367
  %v3388 = vpack.c.b16 %v3370, %v3369
  %v3389 = vpack.c.b16 %v3372, %v3371
  %v3390 = vpack.c.b16 %v3374, %v3373
  %v3391 = vpack.c.b16 %v3376, %v3375
  %v3392 = vpack.c.b16 %v3378, %v3377
  %v3393 = vpack.c.b16 %v3380, %v3379
  %v3394 = vpack.c.b16 %v3382, %v3381
  %v3396 = vsel %vm327, %v3383, 0
  %v3399 = vsel %vm327, %v3384, 0
  %v3402 = vsel %vm327, %v3385, 0
  %v3405 = vsel %vm327, %v3386, 0
  %v3408 = vsel %vm327, %v3387, 0
  %v3411 = vsel %vm327, %v3388, 0
  %v3414 = vsel %vm327, %v3389, 0
  %v3417 = vsel %vm327, %v3390, 0
  %v3420 = vsel %vm327, %v3391, 0
  %v3423 = vsel %vm327, %v3392, 0
  %v3426 = vsel %vm327, %v3393, 0
  %v3429 = vsel %vm327, %v3394, 0
  %3431 = vmatprep.subr.bf16.mxu0 %v304
  %3432 = vmatpush1.bf16.msra.mxu0 %v303
  %3433 = vmatprep.subr.bf16.mxu0 %v411
  %3434 = vmatpush1.bf16.msra.mxu0 %v408
  %3435 = vmatprep.subr.bf16.mxu0 0
  %3436 = vmatpush1.bf16.msra.mxu0 0
  %3437 = vmatprep.subr.bf16.mxu0 0
  %3438 = vmatpush1.bf16.msra.mxu0 0
  %3439 = vmatprep.subr.bf16.mxu0 0
  %3440 = vmatpush1.bf16.msra.mxu0 0
  %3441 = vmatprep.subr.bf16.mxu0 0
  %3442 = vmatpush1.bf16.msra.mxu0 0
  %3443 = vmatprep.subr.bf16.mxu0 0
  %3444 = vmatpush1.bf16.msra.mxu0 0
  %3445 = vmatprep.subr.bf16.mxu0 0
  %3446 = vmatpush1.bf16.msra.mxu0 0
  %3447 = vmatprep.subr.bf16.mxu0 0
  %3448 = vmatpush1.bf16.msra.mxu0 0
  %3449 = vmatprep.subr.bf16.mxu0 0
  %3450 = vmatpush1.bf16.msra.mxu0 0
  %3451 = vmatprep.subr.bf16.mxu0 0
  %3452 = vmatpush1.bf16.msra.mxu0 0
  %3453 = vmatprep.subr.bf16.mxu0 0
  %3454 = vmatpush1.bf16.msra.mxu0 0
  %3455 = vmatprep.subr.bf16.mxu0 0
  %3456 = vmatpush1.bf16.msra.mxu0 0
  %3457 = vmatprep.subr.bf16.mxu0 0
  %3458 = vmatpush1.bf16.msra.mxu0 0
  %3459 = vmatprep.subr.bf16.mxu0 0
  %3460 = vmatpush1.bf16.msra.mxu0 0
  %3461 = vmatprep.subr.bf16.mxu0 0
  %3462 = vmatpush1.bf16.msra.mxu0 0
  %3463 = vmatprep.mubr.bf16.mxu0 0
  %3464 = vmatmul.mubr.bf16.gmra.mrb[0].mxu0 %v3396
  %v3465 = vpop.f32.mrb[0].mxu0
  %v3466 = vadd.f32 0.0, %v3465
  %v3467 = vpop.f32.mrb[0].mxu0
  %v3468 = vadd.f32 0.0, %v3467
  %v3469 = vpop.f32.mrb[0].mxu0
  %v3470 = vadd.f32 0.0, %v3469
  %v3471 = vpop.f32.mrb[0].mxu0
  %v3472 = vadd.f32 0.0, %v3471
  %3473 = vmatprep.mubr.bf16.mxu0 0
  %3474 = vmatmul.mubr.bf16.gmra.mrb[0].mxu0 %v3399
  %v3475 = vpop.f32.mrb[0].mxu0
  %v3476 = vadd.f32 0.0, %v3475
  %v3477 = vpop.f32.mrb[0].mxu0
  %v3478 = vadd.f32 0.0, %v3477
  %v3479 = vpop.f32.mrb[0].mxu0
  %v3480 = vadd.f32 0.0, %v3479
  %v3481 = vpop.f32.mrb[0].mxu0
  %v3482 = vadd.f32 0.0, %v3481
  %3483 = vmatprep.mubr.bf16.mxu0 0
  %3484 = vmatmul.mubr.bf16.gmra.mrb[0].mxu0 %v3402
  %v3485 = vpop.f32.mrb[0].mxu0
  %v3486 = vadd.f32 0.0, %v3485
  %v3487 = vpop.f32.mrb[0].mxu0
  %v3488 = vadd.f32 0.0, %v3487
  %v3489 = vpop.f32.mrb[0].mxu0
  %v3490 = vadd.f32 0.0, %v3489
  %v3491 = vpop.f32.mrb[0].mxu0
  %v3492 = vadd.f32 0.0, %v3491
  %3493 = vmatprep.mubr.bf16.mxu0 0
  %3494 = vmatmul.mubr.bf16.gmra.mrb[0].mxu0 %v3405
  %v3495 = vpop.f32.mrb[0].mxu0
  %v3496 = vadd.f32 0.0, %v3495
  %v3497 = vpop.f32.mrb[0].mxu0
  %v3498 = vadd.f32 0.0, %v3497
  %v3499 = vpop.f32.mrb[0].mxu0
  %v3500 = vadd.f32 0.0, %v3499
  %v3501 = vpop.f32.mrb[0].mxu0
  %v3502 = vadd.f32 0.0, %v3501
  %3503 = vmatprep.mubr.bf16.mxu0 0
  %3504 = vmatmul.mubr.bf16.gmra.mrb[0].mxu0 %v3408
  %v3505 = vpop.f32.mrb[0].mxu0
  %v3506 = vadd.f32 0.0, %v3505
  %v3507 = vpop.f32.mrb[0].mxu0
  %v3508 = vadd.f32 0.0, %v3507
  %v3509 = vpop.f32.mrb[0].mxu0
  %v3510 = vadd.f32 0.0, %v3509
  %v3511 = vpop.f32.mrb[0].mxu0
  %v3512 = vadd.f32 0.0, %v3511
  %3513 = vmatprep.mubr.bf16.mxu0 0
  %3514 = vmatmul.mubr.bf16.gmra.mrb[0].mxu0 %v3411
  %v3515 = vpop.f32.mrb[0].mxu0
  %v3516 = vadd.f32 0.0, %v3515
  %v3517 = vpop.f32.mrb[0].mxu0
  %v3518 = vadd.f32 0.0, %v3517
  %v3519 = vpop.f32.mrb[0].mxu0
  %v3520 = vadd.f32 0.0, %v3519
  %v3521 = vpop.f32.mrb[0].mxu0
  %v3522 = vadd.f32 0.0, %v3521
  %3523 = vmatprep.mubr.bf16.mxu0 0
  %3524 = vmatmul.mubr.bf16.gmra.mrb[0].mxu0 %v3414
  %v3525 = vpop.f32.mrb[0].mxu0
  %v3526 = vadd.f32 0.0, %v3525
  %v3527 = vpop.f32.mrb[0].mxu0
  %v3528 = vadd.f32 0.0, %v3527
  %v3529 = vpop.f32.mrb[0].mxu0
  %v3530 = vadd.f32 0.0, %v3529
  %v3531 = vpop.f32.mrb[0].mxu0
  %v3532 = vadd.f32 0.0, %v3531
  %3533 = vmatprep.mubr.bf16.mxu0 0
  %3534 = vmatmul.mubr.bf16.gmra.mrb[0].mxu0 %v3417
  %v3535 = vpop.f32.mrb[0].mxu0
  %v3536 = vadd.f32 0.0, %v3535
  %v3537 = vpop.f32.mrb[0].mxu0
  %v3538 = vadd.f32 0.0, %v3537
  %v3539 = vpop.f32.mrb[0].mxu0
  %v3540 = vadd.f32 0.0, %v3539
  %v3541 = vpop.f32.mrb[0].mxu0
  %v3542 = vadd.f32 0.0, %v3541
  %3543 = vmatprep.mubr.bf16.mxu0 0
  %3544 = vmatmul.mubr.bf16.gmra.mrb[0].mxu0 %v3420
  %v3545 = vpop.f32.mrb[0].mxu0
  %v3546 = vadd.f32 0.0, %v3545
  %v3547 = vpop.f32.mrb[0].mxu0
  %v3548 = vadd.f32 0.0, %v3547
  %v3549 = vpop.f32.mrb[0].mxu0
  %v3550 = vadd.f32 0.0, %v3549
  %v3551 = vpop.f32.mrb[0].mxu0
  %v3552 = vadd.f32 0.0, %v3551
  %3553 = vmatprep.mubr.bf16.mxu0 0
  %3554 = vmatmul.mubr.bf16.gmra.mrb[0].mxu0 %v3423
  %v3555 = vpop.f32.mrb[0].mxu0
  %v3556 = vadd.f32 0.0, %v3555
  %v3557 = vpop.f32.mrb[0].mxu0
  %v3558 = vadd.f32 0.0, %v3557
  %v3559 = vpop.f32.mrb[0].mxu0
  %v3560 = vadd.f32 0.0, %v3559
  %v3561 = vpop.f32.mrb[0].mxu0
  %v3562 = vadd.f32 0.0, %v3561
  %3563 = vmatprep.mubr.bf16.mxu0 0
  %3564 = vmatmul.mubr.bf16.gmra.mrb[0].mxu0 %v3426
  %v3565 = vpop.f32.mrb[0].mxu0
  %v3566 = vadd.f32 0.0, %v3565
  %v3567 = vpop.f32.mrb[0].mxu0
  %v3568 = vadd.f32 0.0, %v3567
  %v3569 = vpop.f32.mrb[0].mxu0
  %v3570 = vadd.f32 0.0, %v3569
  %v3571 = vpop.f32.mrb[0].mxu0
  %v3572 = vadd.f32 0.0, %v3571
  %3573 = vmatprep.mubr.bf16.mxu0 0
  %3574 = vmatmul.mubr.bf16.gmra.mrb[0].mxu0 %v3429
  %v3575 = vpop.f32.mrb[0].mxu0
  %v3576 = vadd.f32 0.0, %v3575
  %v3577 = vpop.f32.mrb[0].mxu0
  %v3578 = vadd.f32 0.0, %v3577
  %v3579 = vpop.f32.mrb[0].mxu0
  %v3580 = vadd.f32 0.0, %v3579
  %v3581 = vpop.f32.mrb[0].mxu0
  %v3582 = vadd.f32 0.0, %v3581
  %3583 = vdwg.mxu0
  %3584 = vmatprep.subr.bf16.mxu0 %v306
  %3585 = vmatpush1.bf16.msra.mxu0 %v305
  %3586 = vmatprep.subr.bf16.mxu0 %v417
  %3587 = vmatpush1.bf16.msra.mxu0 %v414
  %3588 = vmatprep.subr.bf16.mxu0 0
  %3589 = vmatpush1.bf16.msra.mxu0 0
  %3590 = vmatprep.subr.bf16.mxu0 0
  %3591 = vmatpush1.bf16.msra.mxu0 0
  %3592 = vmatprep.subr.bf16.mxu0 0
  %3593 = vmatpush1.bf16.msra.mxu0 0
  %3594 = vmatprep.subr.bf16.mxu0 0
  %3595 = vmatpush1.bf16.msra.mxu0 0
  %3596 = vmatprep.subr.bf16.mxu0 0
  %3597 = vmatpush1.bf16.msra.mxu0 0
  %3598 = vmatprep.subr.bf16.mxu0 0
  %3599 = vmatpush1.bf16.msra.mxu0 0
  %3600 = vmatprep.subr.bf16.mxu0 0
  %3601 = vmatpush1.bf16.msra.mxu0 0
  %3602 = vmatprep.subr.bf16.mxu0 0
  %3603 = vmatpush1.bf16.msra.mxu0 0
  %3604 = vmatprep.subr.bf16.mxu0 0
  %3605 = vmatpush1.bf16.msra.mxu0 0
  %3606 = vmatprep.subr.bf16.mxu0 0
  %3607 = vmatpush1.bf16.msra.mxu0 0
  %3608 = vmatprep.subr.bf16.mxu0 0
  %3609 = vmatpush1.bf16.msra.mxu0 0
  %3610 = vmatprep.subr.bf16.mxu0 0
  %3611 = vmatpush1.bf16.msra.mxu0 0
  %3612 = vmatprep.subr.bf16.mxu0 0
  %3613 = vmatpush1.bf16.msra.mxu0 0
  %3614 = vmatprep.subr.bf16.mxu0 0
  %3615 = vmatpush1.bf16.msra.mxu0 0
  %3616 = vmatprep.mubr.bf16.mxu0 0
  %3617 = vmatmul.mubr.bf16.gmra.mrb[0].mxu0 %v3396
  %v3618 = vpop.f32.mrb[0].mxu0
  %v3619 = vadd.f32 0.0, %v3618
  %v3620 = vpop.f32.mrb[0].mxu0
  %v3621 = vadd.f32 0.0, %v3620
  %v3622 = vpop.f32.mrb[0].mxu0
  %v3623 = vadd.f32 0.0, %v3622
  %v3624 = vpop.f32.mrb[0].mxu0
  %v3625 = vadd.f32 0.0, %v3624
  %3626 = vmatprep.mubr.bf16.mxu0 0
  %3627 = vmatmul.mubr.bf16.gmra.mrb[0].mxu0 %v3399
  %v3628 = vpop.f32.mrb[0].mxu0
  %v3629 = vadd.f32 0.0, %v3628
  %v3630 = vpop.f32.mrb[0].mxu0
  %v3631 = vadd.f32 0.0, %v3630
  %v3632 = vpop.f32.mrb[0].mxu0
  %v3633 = vadd.f32 0.0, %v3632
  %v3634 = vpop.f32.mrb[0].mxu0
  %v3635 = vadd.f32 0.0, %v3634
  %3636 = vmatprep.mubr.bf16.mxu0 0
  %3637 = vmatmul.mubr.bf16.gmra.mrb[0].mxu0 %v3402
  %v3638 = vpop.f32.mrb[0].mxu0
  %v3639 = vadd.f32 0.0, %v3638
  %v3640 = vpop.f32.mrb[0].mxu0
  %v3641 = vadd.f32 0.0, %v3640
  %v3642 = vpop.f32.mrb[0].mxu0
  %v3643 = vadd.f32 0.0, %v3642
  %v3644 = vpop.f32.mrb[0].mxu0
  %v3645 = vadd.f32 0.0, %v3644
  %3646 = vmatprep.mubr.bf16.mxu0 0
  %3647 = vmatmul.mubr.bf16.gmra.mrb[0].mxu0 %v3405
  %v3648 = vpop.f32.mrb[0].mxu0
  %v3649 = vadd.f32 0.0, %v3648
  %v3650 = vpop.f32.mrb[0].mxu0
  %v3651 = vadd.f32 0.0, %v3650
  %v3652 = vpop.f32.mrb[0].mxu0
  %v3653 = vadd.f32 0.0, %v3652
  %v3654 = vpop.f32.mrb[0].mxu0
  %v3655 = vadd.f32 0.0, %v3654
  %3656 = vmatprep.mubr.bf16.mxu0 0
  %3657 = vmatmul.mubr.bf16.gmra.mrb[0].mxu0 %v3408
  %v3658 = vpop.f32.mrb[0].mxu0
  %v3659 = vadd.f32 0.0, %v3658
  %v3660 = vpop.f32.mrb[0].mxu0
  %v3661 = vadd.f32 0.0, %v3660
  %v3662 = vpop.f32.mrb[0].mxu0
  %v3663 = vadd.f32 0.0, %v3662
  %v3664 = vpop.f32.mrb[0].mxu0
  %v3665 = vadd.f32 0.0, %v3664
  %3666 = vmatprep.mubr.bf16.mxu0 0
  %3667 = vmatmul.mubr.bf16.gmra.mrb[0].mxu0 %v3411
  %v3668 = vpop.f32.mrb[0].mxu0
  %v3669 = vadd.f32 0.0, %v3668
  %v3670 = vpop.f32.mrb[0].mxu0
  %v3671 = vadd.f32 0.0, %v3670
  %v3672 = vpop.f32.mrb[0].mxu0
  %v3673 = vadd.f32 0.0, %v3672
  %v3674 = vpop.f32.mrb[0].mxu0
  %v3675 = vadd.f32 0.0, %v3674
  %3676 = vmatprep.mubr.bf16.mxu0 0
  %3677 = vmatmul.mubr.bf16.gmra.mrb[0].mxu0 %v3414
  %v3678 = vpop.f32.mrb[0].mxu0
  %v3679 = vadd.f32 0.0, %v3678
  %v3680 = vpop.f32.mrb[0].mxu0
  %v3681 = vadd.f32 0.0, %v3680
  %v3682 = vpop.f32.mrb[0].mxu0
  %v3683 = vadd.f32 0.0, %v3682
  %v3684 = vpop.f32.mrb[0].mxu0
  %v3685 = vadd.f32 0.0, %v3684
  %3686 = vmatprep.mubr.bf16.mxu0 0
  %3687 = vmatmul.mubr.bf16.gmra.mrb[0].mxu0 %v3417
  %v3688 = vpop.f32.mrb[0].mxu0
  %v3689 = vadd.f32 0.0, %v3688
  %v3690 = vpop.f32.mrb[0].mxu0
  %v3691 = vadd.f32 0.0, %v3690
  %v3692 = vpop.f32.mrb[0].mxu0
  %v3693 = vadd.f32 0.0, %v3692
  %v3694 = vpop.f32.mrb[0].mxu0
  %v3695 = vadd.f32 0.0, %v3694
  %3696 = vmatprep.mubr.bf16.mxu0 0
  %3697 = vmatmul.mubr.bf16.gmra.mrb[0].mxu0 %v3420
  %v3698 = vpop.f32.mrb[0].mxu0
  %v3699 = vadd.f32 0.0, %v3698
  %v3700 = vpop.f32.mrb[0].mxu0
  %v3701 = vadd.f32 0.0, %v3700
  %v3702 = vpop.f32.mrb[0].mxu0
  %v3703 = vadd.f32 0.0, %v3702
  %v3704 = vpop.f32.mrb[0].mxu0
  %v3705 = vadd.f32 0.0, %v3704
  %3706 = vmatprep.mubr.bf16.mxu0 0
  %3707 = vmatmul.mubr.bf16.gmra.mrb[0].mxu0 %v3423
  %v3708 = vpop.f32.mrb[0].mxu0
  %v3709 = vadd.f32 0.0, %v3708
  %v3710 = vpop.f32.mrb[0].mxu0
  %v3711 = vadd.f32 0.0, %v3710
  %v3712 = vpop.f32.mrb[0].mxu0
  %v3713 = vadd.f32 0.0, %v3712
  %v3714 = vpop.f32.mrb[0].mxu0
  %v3715 = vadd.f32 0.0, %v3714
  %3716 = vmatprep.mubr.bf16.mxu0 0
  %3717 = vmatmul.mubr.bf16.gmra.mrb[0].mxu0 %v3426
  %v3718 = vpop.f32.mrb[0].mxu0
  %v3719 = vadd.f32 0.0, %v3718
  %v3720 = vpop.f32.mrb[0].mxu0
  %v3721 = vadd.f32 0.0, %v3720
  %v3722 = vpop.f32.mrb[0].mxu0
  %v3723 = vadd.f32 0.0, %v3722
  %v3724 = vpop.f32.mrb[0].mxu0
  %v3725 = vadd.f32 0.0, %v3724
  %3726 = vmatprep.mubr.bf16.mxu0 0
  %3727 = vmatmul.mubr.bf16.gmra.mrb[0].mxu0 %v3429
  %v3728 = vpop.f32.mrb[0].mxu0
  %v3729 = vadd.f32 0.0, %v3728
  %v3730 = vpop.f32.mrb[0].mxu0
  %v3731 = vadd.f32 0.0, %v3730
  %v3732 = vpop.f32.mrb[0].mxu0
  %v3733 = vadd.f32 0.0, %v3732
  %v3734 = vpop.f32.mrb[0].mxu0
  %v3735 = vadd.f32 0.0, %v3734
  %3736 = vdwg.mxu0
  %3737 = vmatprep.subr.bf16.mxu0 %v308
  %3738 = vmatpush1.bf16.msra.mxu0 %v307
  %3739 = vmatprep.subr.bf16.mxu0 %v423
  %3740 = vmatpush1.bf16.msra.mxu0 %v420
  %3741 = vmatprep.subr.bf16.mxu0 0
  %3742 = vmatpush1.bf16.msra.mxu0 0
  %3743 = vmatprep.subr.bf16.mxu0 0
  %3744 = vmatpush1.bf16.msra.mxu0 0
  %3745 = vmatprep.subr.bf16.mxu0 0
  %3746 = vmatpush1.bf16.msra.mxu0 0
  %3747 = vmatprep.subr.bf16.mxu0 0
  %3748 = vmatpush1.bf16.msra.mxu0 0
  %3749 = vmatprep.subr.bf16.mxu0 0
  %3750 = vmatpush1.bf16.msra.mxu0 0
  %3751 = vmatprep.subr.bf16.mxu0 0
  %3752 = vmatpush1.bf16.msra.mxu0 0
  %3753 = vmatprep.subr.bf16.mxu0 0
  %3754 = vmatpush1.bf16.msra.mxu0 0
  %3755 = vmatprep.subr.bf16.mxu0 0
  %3756 = vmatpush1.bf16.msra.mxu0 0
  %3757 = vmatprep.subr.bf16.mxu0 0
  %3758 = vmatpush1.bf16.msra.mxu0 0
  %3759 = vmatprep.subr.bf16.mxu0 0
  %3760 = vmatpush1.bf16.msra.mxu0 0
  %3761 = vmatprep.subr.bf16.mxu0 0
  %3762 = vmatpush1.bf16.msra.mxu0 0
  %3763 = vmatprep.subr.bf16.mxu0 0
  %3764 = vmatpush1.bf16.msra.mxu0 0
  %3765 = vmatprep.subr.bf16.mxu0 0
  %3766 = vmatpush1.bf16.msra.mxu0 0
  %3767 = vmatprep.subr.bf16.mxu0 0
  %3768 = vmatpush1.bf16.msra.mxu0 0
  %3769 = vmatprep.mubr.bf16.mxu0 0
  %3770 = vmatmul.mubr.bf16.gmra.mrb[0].mxu0 %v3396
  %v3771 = vpop.f32.mrb[0].mxu0
  %v3772 = vadd.f32 0.0, %v3771
  %v3773 = vpop.f32.mrb[0].mxu0
  %v3774 = vadd.f32 0.0, %v3773
  %v3775 = vpop.f32.mrb[0].mxu0
  %v3776 = vadd.f32 0.0, %v3775
  %v3777 = vpop.f32.mrb[0].mxu0
  %v3778 = vadd.f32 0.0, %v3777
  %3779 = vmatprep.mubr.bf16.mxu0 0
  %3780 = vmatmul.mubr.bf16.gmra.mrb[0].mxu0 %v3399
  %v3781 = vpop.f32.mrb[0].mxu0
  %v3782 = vadd.f32 0.0, %v3781
  %v3783 = vpop.f32.mrb[0].mxu0
  %v3784 = vadd.f32 0.0, %v3783
  %v3785 = vpop.f32.mrb[0].mxu0
  %v3786 = vadd.f32 0.0, %v3785
  %v3787 = vpop.f32.mrb[0].mxu0
  %v3788 = vadd.f32 0.0, %v3787
  %3789 = vmatprep.mubr.bf16.mxu0 0
  %3790 = vmatmul.mubr.bf16.gmra.mrb[0].mxu0 %v3402
  %v3791 = vpop.f32.mrb[0].mxu0
  %v3792 = vadd.f32 0.0, %v3791
  %v3793 = vpop.f32.mrb[0].mxu0
  %v3794 = vadd.f32 0.0, %v3793
  %v3795 = vpop.f32.mrb[0].mxu0
  %v3796 = vadd.f32 0.0, %v3795
  %v3797 = vpop.f32.mrb[0].mxu0
  %v3798 = vadd.f32 0.0, %v3797
  %3799 = vmatprep.mubr.bf16.mxu0 0
  %3800 = vmatmul.mubr.bf16.gmra.mrb[0].mxu0 %v3405
  %v3801 = vpop.f32.mrb[0].mxu0
  %v3802 = vadd.f32 0.0, %v3801
  %v3803 = vpop.f32.mrb[0].mxu0
  %v3804 = vadd.f32 0.0, %v3803
  %v3805 = vpop.f32.mrb[0].mxu0
  %v3806 = vadd.f32 0.0, %v3805
  %v3807 = vpop.f32.mrb[0].mxu0
  %v3808 = vadd.f32 0.0, %v3807
  %3809 = vmatprep.mubr.bf16.mxu0 0
  %3810 = vmatmul.mubr.bf16.gmra.mrb[0].mxu0 %v3408
  %v3811 = vpop.f32.mrb[0].mxu0
  %v3812 = vadd.f32 0.0, %v3811
  %v3813 = vpop.f32.mrb[0].mxu0
  %v3814 = vadd.f32 0.0, %v3813
  %v3815 = vpop.f32.mrb[0].mxu0
  %v3816 = vadd.f32 0.0, %v3815
  %v3817 = vpop.f32.mrb[0].mxu0
  %v3818 = vadd.f32 0.0, %v3817
  %3819 = vmatprep.mubr.bf16.mxu0 0
  %3820 = vmatmul.mubr.bf16.gmra.mrb[0].mxu0 %v3411
  %v3821 = vpop.f32.mrb[0].mxu0
  %v3822 = vadd.f32 0.0, %v3821
  %v3823 = vpop.f32.mrb[0].mxu0
  %v3824 = vadd.f32 0.0, %v3823
  %v3825 = vpop.f32.mrb[0].mxu0
  %v3826 = vadd.f32 0.0, %v3825
  %v3827 = vpop.f32.mrb[0].mxu0
  %v3828 = vadd.f32 0.0, %v3827
  %3829 = vmatprep.mubr.bf16.mxu0 0
  %3830 = vmatmul.mubr.bf16.gmra.mrb[0].mxu0 %v3414
  %v3831 = vpop.f32.mrb[0].mxu0
  %v3832 = vadd.f32 0.0, %v3831
  %v3833 = vpop.f32.mrb[0].mxu0
  %v3834 = vadd.f32 0.0, %v3833
  %v3835 = vpop.f32.mrb[0].mxu0
  %v3836 = vadd.f32 0.0, %v3835
  %v3837 = vpop.f32.mrb[0].mxu0
  %v3838 = vadd.f32 0.0, %v3837
  %3839 = vmatprep.mubr.bf16.mxu0 0
  %3840 = vmatmul.mubr.bf16.gmra.mrb[0].mxu0 %v3417
  %v3841 = vpop.f32.mrb[0].mxu0
  %v3842 = vadd.f32 0.0, %v3841
  %v3843 = vpop.f32.mrb[0].mxu0
  %v3844 = vadd.f32 0.0, %v3843
  %v3845 = vpop.f32.mrb[0].mxu0
  %v3846 = vadd.f32 0.0, %v3845
  %v3847 = vpop.f32.mrb[0].mxu0
  %v3848 = vadd.f32 0.0, %v3847
  %3849 = vmatprep.mubr.bf16.mxu0 0
  %3850 = vmatmul.mubr.bf16.gmra.mrb[0].mxu0 %v3420
  %v3851 = vpop.f32.mrb[0].mxu0
  %v3852 = vadd.f32 0.0, %v3851
  %v3853 = vpop.f32.mrb[0].mxu0
  %v3854 = vadd.f32 0.0, %v3853
  %v3855 = vpop.f32.mrb[0].mxu0
  %v3856 = vadd.f32 0.0, %v3855
  %v3857 = vpop.f32.mrb[0].mxu0
  %v3858 = vadd.f32 0.0, %v3857
  %3859 = vmatprep.mubr.bf16.mxu0 0
  %3860 = vmatmul.mubr.bf16.gmra.mrb[0].mxu0 %v3423
  %v3861 = vpop.f32.mrb[0].mxu0
  %v3862 = vadd.f32 0.0, %v3861
  %v3863 = vpop.f32.mrb[0].mxu0
  %v3864 = vadd.f32 0.0, %v3863
  %v3865 = vpop.f32.mrb[0].mxu0
  %v3866 = vadd.f32 0.0, %v3865
  %v3867 = vpop.f32.mrb[0].mxu0
  %v3868 = vadd.f32 0.0, %v3867
  %3869 = vmatprep.mubr.bf16.mxu0 0
  %3870 = vmatmul.mubr.bf16.gmra.mrb[0].mxu0 %v3426
  %v3871 = vpop.f32.mrb[0].mxu0
  %v3872 = vadd.f32 0.0, %v3871
  %v3873 = vpop.f32.mrb[0].mxu0
  %v3874 = vadd.f32 0.0, %v3873
  %v3875 = vpop.f32.mrb[0].mxu0
  %v3876 = vadd.f32 0.0, %v3875
  %v3877 = vpop.f32.mrb[0].mxu0
  %v3878 = vadd.f32 0.0, %v3877
  %3879 = vmatprep.mubr.bf16.mxu0 0
  %3880 = vmatmul.mubr.bf16.gmra.mrb[0].mxu0 %v3429
  %v3881 = vpop.f32.mrb[0].mxu0
  %v3882 = vadd.f32 0.0, %v3881
  %v3883 = vpop.f32.mrb[0].mxu0
  %v3884 = vadd.f32 0.0, %v3883
  %v3885 = vpop.f32.mrb[0].mxu0
  %v3886 = vadd.f32 0.0, %v3885
  %v3887 = vpop.f32.mrb[0].mxu0
  %v3888 = vadd.f32 0.0, %v3887
  %3889 = vdwg.mxu0
  %3890 = vmatprep.subr.bf16.mxu0 %v310
  %3891 = vmatpush1.bf16.msra.mxu0 %v309
  %3892 = vmatprep.subr.bf16.mxu0 %v429
  %3893 = vmatpush1.bf16.msra.mxu0 %v426
  %3894 = vmatprep.subr.bf16.mxu0 0
  %3895 = vmatpush1.bf16.msra.mxu0 0
  %3896 = vmatprep.subr.bf16.mxu0 0
  %3897 = vmatpush1.bf16.msra.mxu0 0
  %3898 = vmatprep.subr.bf16.mxu0 0
  %3899 = vmatpush1.bf16.msra.mxu0 0
  %3900 = vmatprep.subr.bf16.mxu0 0
  %3901 = vmatpush1.bf16.msra.mxu0 0
  %3902 = vmatprep.subr.bf16.mxu0 0
  %3903 = vmatpush1.bf16.msra.mxu0 0
  %3904 = vmatprep.subr.bf16.mxu0 0
  %3905 = vmatpush1.bf16.msra.mxu0 0
  %3906 = vmatprep.subr.bf16.mxu0 0
  %3907 = vmatpush1.bf16.msra.mxu0 0
  %3908 = vmatprep.subr.bf16.mxu0 0
  %3909 = vmatpush1.bf16.msra.mxu0 0
  %3910 = vmatprep.subr.bf16.mxu0 0
  %3911 = vmatpush1.bf16.msra.mxu0 0
  %3912 = vmatprep.subr.bf16.mxu0 0
  %3913 = vmatpush1.bf16.msra.mxu0 0
  %3914 = vmatprep.subr.bf16.mxu0 0
  %3915 = vmatpush1.bf16.msra.mxu0 0
  %3916 = vmatprep.subr.bf16.mxu0 0
  %3917 = vmatpush1.bf16.msra.mxu0 0
  %3918 = vmatprep.subr.bf16.mxu0 0
  %3919 = vmatpush1.bf16.msra.mxu0 0
  %3920 = vmatprep.subr.bf16.mxu0 0
  %3921 = vmatpush1.bf16.msra.mxu0 0
  %3922 = vmatprep.mubr.bf16.mxu0 0
  %3923 = vmatmul.mubr.bf16.gmra.mrb[0].mxu0 %v3396
  %v3924 = vpop.f32.mrb[0].mxu0
  %v3925 = vadd.f32 0.0, %v3924
  %v3926 = vpop.f32.mrb[0].mxu0
  %v3927 = vadd.f32 0.0, %v3926
  %v3928 = vpop.f32.mrb[0].mxu0
  %v3929 = vadd.f32 0.0, %v3928
  %v3930 = vpop.f32.mrb[0].mxu0
  %v3931 = vadd.f32 0.0, %v3930
  %3932 = vmatprep.mubr.bf16.mxu0 0
  %3933 = vmatmul.mubr.bf16.gmra.mrb[0].mxu0 %v3399
  %v3934 = vpop.f32.mrb[0].mxu0
  %v3935 = vadd.f32 0.0, %v3934
  %v3936 = vpop.f32.mrb[0].mxu0
  %v3937 = vadd.f32 0.0, %v3936
  %v3938 = vpop.f32.mrb[0].mxu0
  %v3939 = vadd.f32 0.0, %v3938
  %v3940 = vpop.f32.mrb[0].mxu0
  %v3941 = vadd.f32 0.0, %v3940
  %3942 = vmatprep.mubr.bf16.mxu0 0
  %3943 = vmatmul.mubr.bf16.gmra.mrb[0].mxu0 %v3402
  %v3944 = vpop.f32.mrb[0].mxu0
  %v3945 = vadd.f32 0.0, %v3944
  %v3946 = vpop.f32.mrb[0].mxu0
  %v3947 = vadd.f32 0.0, %v3946
  %v3948 = vpop.f32.mrb[0].mxu0
  %v3949 = vadd.f32 0.0, %v3948
  %v3950 = vpop.f32.mrb[0].mxu0
  %v3951 = vadd.f32 0.0, %v3950
  %3952 = vmatprep.mubr.bf16.mxu0 0
  %3953 = vmatmul.mubr.bf16.gmra.mrb[0].mxu0 %v3405
  %v3954 = vpop.f32.mrb[0].mxu0
  %v3955 = vadd.f32 0.0, %v3954
  %v3956 = vpop.f32.mrb[0].mxu0
  %v3957 = vadd.f32 0.0, %v3956
  %v3958 = vpop.f32.mrb[0].mxu0
  %v3959 = vadd.f32 0.0, %v3958
  %v3960 = vpop.f32.mrb[0].mxu0
  %v3961 = vadd.f32 0.0, %v3960
  %3962 = vmatprep.mubr.bf16.mxu0 0
  %3963 = vmatmul.mubr.bf16.gmra.mrb[0].mxu0 %v3408
  %v3964 = vpop.f32.mrb[0].mxu0
  %v3965 = vadd.f32 0.0, %v3964
  %v3966 = vpop.f32.mrb[0].mxu0
  %v3967 = vadd.f32 0.0, %v3966
  %v3968 = vpop.f32.mrb[0].mxu0
  %v3969 = vadd.f32 0.0, %v3968
  %v3970 = vpop.f32.mrb[0].mxu0
  %v3971 = vadd.f32 0.0, %v3970
  %3972 = vmatprep.mubr.bf16.mxu0 0
  %3973 = vmatmul.mubr.bf16.gmra.mrb[0].mxu0 %v3411
  %v3974 = vpop.f32.mrb[0].mxu0
  %v3975 = vadd.f32 0.0, %v3974
  %v3976 = vpop.f32.mrb[0].mxu0
  %v3977 = vadd.f32 0.0, %v3976
  %v3978 = vpop.f32.mrb[0].mxu0
  %v3979 = vadd.f32 0.0, %v3978
  %v3980 = vpop.f32.mrb[0].mxu0
  %v3981 = vadd.f32 0.0, %v3980
  %3982 = vmatprep.mubr.bf16.mxu0 0
  %3983 = vmatmul.mubr.bf16.gmra.mrb[0].mxu0 %v3414
  %v3984 = vpop.f32.mrb[0].mxu0
  %v3985 = vadd.f32 0.0, %v3984
  %v3986 = vpop.f32.mrb[0].mxu0
  %v3987 = vadd.f32 0.0, %v3986
  %v3988 = vpop.f32.mrb[0].mxu0
  %v3989 = vadd.f32 0.0, %v3988
  %v3990 = vpop.f32.mrb[0].mxu0
  %v3991 = vadd.f32 0.0, %v3990
  %3992 = vmatprep.mubr.bf16.mxu0 0
  %3993 = vmatmul.mubr.bf16.gmra.mrb[0].mxu0 %v3417
  %v3994 = vpop.f32.mrb[0].mxu0
  %v3995 = vadd.f32 0.0, %v3994
  %v3996 = vpop.f32.mrb[0].mxu0
  %v3997 = vadd.f32 0.0, %v3996
  %v3998 = vpop.f32.mrb[0].mxu0
  %v3999 = vadd.f32 0.0, %v3998
  %v4000 = vpop.f32.mrb[0].mxu0
  %v4001 = vadd.f32 0.0, %v4000
  %4002 = vmatprep.mubr.bf16.mxu0 0
  %4003 = vmatmul.mubr.bf16.gmra.mrb[0].mxu0 %v3420
  %v4004 = vpop.f32.mrb[0].mxu0
  %v4005 = vadd.f32 0.0, %v4004
  %v4006 = vpop.f32.mrb[0].mxu0
  %v4007 = vadd.f32 0.0, %v4006
  %v4008 = vpop.f32.mrb[0].mxu0
  %v4009 = vadd.f32 0.0, %v4008
  %v4010 = vpop.f32.mrb[0].mxu0
  %v4011 = vadd.f32 0.0, %v4010
  %4012 = vmatprep.mubr.bf16.mxu0 0
  %4013 = vmatmul.mubr.bf16.gmra.mrb[0].mxu0 %v3423
  %v4014 = vpop.f32.mrb[0].mxu0
  %v4015 = vadd.f32 0.0, %v4014
  %v4016 = vpop.f32.mrb[0].mxu0
  %v4017 = vadd.f32 0.0, %v4016
  %v4018 = vpop.f32.mrb[0].mxu0
  %v4019 = vadd.f32 0.0, %v4018
  %v4020 = vpop.f32.mrb[0].mxu0
  %v4021 = vadd.f32 0.0, %v4020
  %4022 = vmatprep.mubr.bf16.mxu0 0
  %4023 = vmatmul.mubr.bf16.gmra.mrb[0].mxu0 %v3426
  %v4024 = vpop.f32.mrb[0].mxu0
  %v4025 = vadd.f32 0.0, %v4024
  %v4026 = vpop.f32.mrb[0].mxu0
  %v4027 = vadd.f32 0.0, %v4026
  %v4028 = vpop.f32.mrb[0].mxu0
  %v4029 = vadd.f32 0.0, %v4028
  %v4030 = vpop.f32.mrb[0].mxu0
  %v4031 = vadd.f32 0.0, %v4030
  %4032 = vmatprep.mubr.bf16.mxu0 0
  %4033 = vmatmul.mubr.bf16.gmra.mrb[0].mxu0 %v3429
  %v4034 = vpop.f32.mrb[0].mxu0
  %v4035 = vadd.f32 0.0, %v4034
  %v4036 = vpop.f32.mrb[0].mxu0
  %v4037 = vadd.f32 0.0, %v4036
  %v4038 = vpop.f32.mrb[0].mxu0
  %v4039 = vadd.f32 0.0, %v4038
  %v4040 = vpop.f32.mrb[0].mxu0
  %v4041 = vadd.f32 0.0, %v4040
  %4042 = vdwg.mxu0
  %v4043 = vlaneseq
  %v4044 = vshrl.u32 %v4043, 7
  %v4045 = vsub.s32 0, %v4044
  %v4046 = vrot.slane %v3295, %v4045
  %v4047 = vlaneseq
  %v4048 = vshrl.u32 %v4047, 7
  %v4049 = vsub.s32 0, %v4048
  %v4050 = vrot.slane %v3296, %v4049
  %v4051 = vlaneseq
  %v4052 = vshrl.u32 %v4051, 7
  %v4053 = vsub.s32 0, %v4052
  %v4054 = vrot.slane %v3297, %v4053
  %v4055 = vlaneseq
  %v4056 = vshrl.u32 %v4055, 7
  %v4057 = vsub.s32 0, %v4056
  %v4058 = vrot.slane %v3298, %v4057
  %v4059 = vlaneseq
  %v4060 = vshrl.u32 %v4059, 7
  %v4061 = vsub.s32 0, %v4060
  %v4062 = vrot.slane %v3299, %v4061
  %v4063 = vlaneseq
  %v4064 = vshrl.u32 %v4063, 7
  %v4065 = vsub.s32 0, %v4064
  %v4066 = vrot.slane %v3300, %v4065
  %v4067 = vlaneseq
  %v4068 = vshrl.u32 %v4067, 7
  %v4069 = vsub.s32 0, %v4068
  %v4070 = vrot.slane %v3301, %v4069
  %v4071 = vlaneseq
  %v4072 = vshrl.u32 %v4071, 7
  %v4073 = vsub.s32 0, %v4072
  %v4074 = vrot.slane %v3302, %v4073
  %v4075 = vmul.f32 %v3466, %v4046
  %v4076 = vmul.f32 %v3468, %v4050
  %v4077 = vmul.f32 %v3619, %v4054
  %v4078 = vmul.f32 %v3621, %v4058
  %v4079 = vmul.f32 %v3772, %v4062
  %v4080 = vmul.f32 %v3774, %v4066
  %v4081 = vmul.f32 %v3925, %v4070
  %v4082 = vmul.f32 %v3927, %v4074
  %v4083 = vmul.f32 %v3470, %v4046
  %v4084 = vmul.f32 %v3472, %v4050
  %v4085 = vmul.f32 %v3623, %v4054
  %v4086 = vmul.f32 %v3625, %v4058
  %v4087 = vmul.f32 %v3776, %v4062
  %v4088 = vmul.f32 %v3778, %v4066
  %v4089 = vmul.f32 %v3929, %v4070
  %v4090 = vmul.f32 %v3931, %v4074
  %v4091 = vlaneseq
  %v4092 = vshrl.u32 %v4091, 7
  %v4093 = vsub.s32 1, %v4092
  %v4094 = vrot.slane %v3295, %v4093
  %v4095 = vlaneseq
  %v4096 = vshrl.u32 %v4095, 7
  %v4097 = vsub.s32 1, %v4096
  %v4098 = vrot.slane %v3296, %v4097
  %v4099 = vlaneseq
  %v4100 = vshrl.u32 %v4099, 7
  %v4101 = vsub.s32 1, %v4100
  %v4102 = vrot.slane %v3297, %v4101
  %v4103 = vlaneseq
  %v4104 = vshrl.u32 %v4103, 7
  %v4105 = vsub.s32 1, %v4104
  %v4106 = vrot.slane %v3298, %v4105
  %v4107 = vlaneseq
  %v4108 = vshrl.u32 %v4107, 7
  %v4109 = vsub.s32 1, %v4108
  %v4110 = vrot.slane %v3299, %v4109
  %v4111 = vlaneseq
  %v4112 = vshrl.u32 %v4111, 7
  %v4113 = vsub.s32 1, %v4112
  %v4114 = vrot.slane %v3300, %v4113
  %v4115 = vlaneseq
  %v4116 = vshrl.u32 %v4115, 7
  %v4117 = vsub.s32 1, %v4116
  %v4118 = vrot.slane %v3301, %v4117
  %v4119 = vlaneseq
  %v4120 = vshrl.u32 %v4119, 7
  %v4121 = vsub.s32 1, %v4120
  %v4122 = vrot.slane %v3302, %v4121
  %v4123 = vmul.f32 %v3476, %v4094
  %v4124 = vmul.f32 %v3478, %v4098
  %v4125 = vmul.f32 %v3629, %v4102
  %v4126 = vmul.f32 %v3631, %v4106
  %v4127 = vmul.f32 %v3782, %v4110
  %v4128 = vmul.f32 %v3784, %v4114
  %v4129 = vmul.f32 %v3935, %v4118
  %v4130 = vmul.f32 %v3937, %v4122
  %v4131 = vmul.f32 %v3480, %v4094
  %v4132 = vmul.f32 %v3482, %v4098
  %v4133 = vmul.f32 %v3633, %v4102
  %v4134 = vmul.f32 %v3635, %v4106
  %v4135 = vmul.f32 %v3786, %v4110
  %v4136 = vmul.f32 %v3788, %v4114
  %v4137 = vmul.f32 %v3939, %v4118
  %v4138 = vmul.f32 %v3941, %v4122
  %v4139 = vadd.f32 %v4075, %v4123
  %v4140 = vadd.f32 %v4076, %v4124
  %v4141 = vadd.f32 %v4077, %v4125
  %v4142 = vadd.f32 %v4078, %v4126
  %v4143 = vadd.f32 %v4079, %v4127
  %v4144 = vadd.f32 %v4080, %v4128
  %v4145 = vadd.f32 %v4081, %v4129
  %v4146 = vadd.f32 %v4082, %v4130
  %v4147 = vadd.f32 %v4083, %v4131
  %v4148 = vadd.f32 %v4084, %v4132
  %v4149 = vadd.f32 %v4085, %v4133
  %v4150 = vadd.f32 %v4086, %v4134
  %v4151 = vadd.f32 %v4087, %v4135
  %v4152 = vadd.f32 %v4088, %v4136
  %v4153 = vadd.f32 %v4089, %v4137
  %v4154 = vadd.f32 %v4090, %v4138
  %v4155 = vlaneseq
  %v4156 = vshrl.u32 %v4155, 7
  %v4157 = vsub.s32 2, %v4156
  %v4158 = vrot.slane %v3295, %v4157
  %v4159 = vlaneseq
  %v4160 = vshrl.u32 %v4159, 7
  %v4161 = vsub.s32 2, %v4160
  %v4162 = vrot.slane %v3296, %v4161
  %v4163 = vlaneseq
  %v4164 = vshrl.u32 %v4163, 7
  %v4165 = vsub.s32 2, %v4164
  %v4166 = vrot.slane %v3297, %v4165
  %v4167 = vlaneseq
  %v4168 = vshrl.u32 %v4167, 7
  %v4169 = vsub.s32 2, %v4168
  %v4170 = vrot.slane %v3298, %v4169
  %v4171 = vlaneseq
  %v4172 = vshrl.u32 %v4171, 7
  %v4173 = vsub.s32 2, %v4172
  %v4174 = vrot.slane %v3299, %v4173
  %v4175 = vlaneseq
  %v4176 = vshrl.u32 %v4175, 7
  %v4177 = vsub.s32 2, %v4176
  %v4178 = vrot.slane %v3300, %v4177
  %v4179 = vlaneseq
  %v4180 = vshrl.u32 %v4179, 7
  %v4181 = vsub.s32 2, %v4180
  %v4182 = vrot.slane %v3301, %v4181
  %v4183 = vlaneseq
  %v4184 = vshrl.u32 %v4183, 7
  %v4185 = vsub.s32 2, %v4184
  %v4186 = vrot.slane %v3302, %v4185
  %v4187 = vmul.f32 %v3486, %v4158
  %v4188 = vmul.f32 %v3488, %v4162
  %v4189 = vmul.f32 %v3639, %v4166
  %v4190 = vmul.f32 %v3641, %v4170
  %v4191 = vmul.f32 %v3792, %v4174
  %v4192 = vmul.f32 %v3794, %v4178
  %v4193 = vmul.f32 %v3945, %v4182
  %v4194 = vmul.f32 %v3947, %v4186
  %v4195 = vmul.f32 %v3490, %v4158
  %v4196 = vmul.f32 %v3492, %v4162
  %v4197 = vmul.f32 %v3643, %v4166
  %v4198 = vmul.f32 %v3645, %v4170
  %v4199 = vmul.f32 %v3796, %v4174
  %v4200 = vmul.f32 %v3798, %v4178
  %v4201 = vmul.f32 %v3949, %v4182
  %v4202 = vmul.f32 %v3951, %v4186
  %v4203 = vadd.f32 %v4139, %v4187
  %v4204 = vadd.f32 %v4140, %v4188
  %v4205 = vadd.f32 %v4141, %v4189
  %v4206 = vadd.f32 %v4142, %v4190
  %v4207 = vadd.f32 %v4143, %v4191
  %v4208 = vadd.f32 %v4144, %v4192
  %v4209 = vadd.f32 %v4145, %v4193
  %v4210 = vadd.f32 %v4146, %v4194
  %v4211 = vadd.f32 %v4147, %v4195
  %v4212 = vadd.f32 %v4148, %v4196
  %v4213 = vadd.f32 %v4149, %v4197
  %v4214 = vadd.f32 %v4150, %v4198
  %v4215 = vadd.f32 %v4151, %v4199
  %v4216 = vadd.f32 %v4152, %v4200
  %v4217 = vadd.f32 %v4153, %v4201
  %v4218 = vadd.f32 %v4154, %v4202
  %v4219 = vlaneseq
  %v4220 = vshrl.u32 %v4219, 7
  %v4221 = vsub.s32 3, %v4220
  %v4222 = vrot.slane %v3295, %v4221
  %v4223 = vlaneseq
  %v4224 = vshrl.u32 %v4223, 7
  %v4225 = vsub.s32 3, %v4224
  %v4226 = vrot.slane %v3296, %v4225
  %v4227 = vlaneseq
  %v4228 = vshrl.u32 %v4227, 7
  %v4229 = vsub.s32 3, %v4228
  %v4230 = vrot.slane %v3297, %v4229
  %v4231 = vlaneseq
  %v4232 = vshrl.u32 %v4231, 7
  %v4233 = vsub.s32 3, %v4232
  %v4234 = vrot.slane %v3298, %v4233
  %v4235 = vlaneseq
  %v4236 = vshrl.u32 %v4235, 7
  %v4237 = vsub.s32 3, %v4236
  %v4238 = vrot.slane %v3299, %v4237
  %v4239 = vlaneseq
  %v4240 = vshrl.u32 %v4239, 7
  %v4241 = vsub.s32 3, %v4240
  %v4242 = vrot.slane %v3300, %v4241
  %v4243 = vlaneseq
  %v4244 = vshrl.u32 %v4243, 7
  %v4245 = vsub.s32 3, %v4244
  %v4246 = vrot.slane %v3301, %v4245
  %v4247 = vlaneseq
  %v4248 = vshrl.u32 %v4247, 7
  %v4249 = vsub.s32 3, %v4248
  %v4250 = vrot.slane %v3302, %v4249
  %v4251 = vmul.f32 %v3496, %v4222
  %v4252 = vmul.f32 %v3498, %v4226
  %v4253 = vmul.f32 %v3649, %v4230
  %v4254 = vmul.f32 %v3651, %v4234
  %v4255 = vmul.f32 %v3802, %v4238
  %v4256 = vmul.f32 %v3804, %v4242
  %v4257 = vmul.f32 %v3955, %v4246
  %v4258 = vmul.f32 %v3957, %v4250
  %v4259 = vmul.f32 %v3500, %v4222
  %v4260 = vmul.f32 %v3502, %v4226
  %v4261 = vmul.f32 %v3653, %v4230
  %v4262 = vmul.f32 %v3655, %v4234
  %v4263 = vmul.f32 %v3806, %v4238
  %v4264 = vmul.f32 %v3808, %v4242
  %v4265 = vmul.f32 %v3959, %v4246
  %v4266 = vmul.f32 %v3961, %v4250
  %v4267 = vadd.f32 %v4203, %v4251
  %v4268 = vadd.f32 %v4204, %v4252
  %v4269 = vadd.f32 %v4205, %v4253
  %v4270 = vadd.f32 %v4206, %v4254
  %v4271 = vadd.f32 %v4207, %v4255
  %v4272 = vadd.f32 %v4208, %v4256
  %v4273 = vadd.f32 %v4209, %v4257
  %v4274 = vadd.f32 %v4210, %v4258
  %v4275 = vadd.f32 %v4211, %v4259
  %v4276 = vadd.f32 %v4212, %v4260
  %v4277 = vadd.f32 %v4213, %v4261
  %v4278 = vadd.f32 %v4214, %v4262
  %v4279 = vadd.f32 %v4215, %v4263
  %v4280 = vadd.f32 %v4216, %v4264
  %v4281 = vadd.f32 %v4217, %v4265
  %v4282 = vadd.f32 %v4218, %v4266
  %v4283 = vlaneseq
  %v4284 = vshrl.u32 %v4283, 7
  %v4285 = vsub.s32 4, %v4284
  %v4286 = vrot.slane %v3295, %v4285
  %v4287 = vlaneseq
  %v4288 = vshrl.u32 %v4287, 7
  %v4289 = vsub.s32 4, %v4288
  %v4290 = vrot.slane %v3296, %v4289
  %v4291 = vlaneseq
  %v4292 = vshrl.u32 %v4291, 7
  %v4293 = vsub.s32 4, %v4292
  %v4294 = vrot.slane %v3297, %v4293
  %v4295 = vlaneseq
  %v4296 = vshrl.u32 %v4295, 7
  %v4297 = vsub.s32 4, %v4296
  %v4298 = vrot.slane %v3298, %v4297
  %v4299 = vlaneseq
  %v4300 = vshrl.u32 %v4299, 7
  %v4301 = vsub.s32 4, %v4300
  %v4302 = vrot.slane %v3299, %v4301
  %v4303 = vlaneseq
  %v4304 = vshrl.u32 %v4303, 7
  %v4305 = vsub.s32 4, %v4304
  %v4306 = vrot.slane %v3300, %v4305
  %v4307 = vlaneseq
  %v4308 = vshrl.u32 %v4307, 7
  %v4309 = vsub.s32 4, %v4308
  %v4310 = vrot.slane %v3301, %v4309
  %v4311 = vlaneseq
  %v4312 = vshrl.u32 %v4311, 7
  %v4313 = vsub.s32 4, %v4312
  %v4314 = vrot.slane %v3302, %v4313
  %v4315 = vmul.f32 %v3506, %v4286
  %v4316 = vmul.f32 %v3508, %v4290
  %v4317 = vmul.f32 %v3659, %v4294
  %v4318 = vmul.f32 %v3661, %v4298
  %v4319 = vmul.f32 %v3812, %v4302
  %v4320 = vmul.f32 %v3814, %v4306
  %v4321 = vmul.f32 %v3965, %v4310
  %v4322 = vmul.f32 %v3967, %v4314
  %v4323 = vmul.f32 %v3510, %v4286
  %v4324 = vmul.f32 %v3512, %v4290
  %v4325 = vmul.f32 %v3663, %v4294
  %v4326 = vmul.f32 %v3665, %v4298
  %v4327 = vmul.f32 %v3816, %v4302
  %v4328 = vmul.f32 %v3818, %v4306
  %v4329 = vmul.f32 %v3969, %v4310
  %v4330 = vmul.f32 %v3971, %v4314
  %v4331 = vadd.f32 %v4267, %v4315
  %v4332 = vadd.f32 %v4268, %v4316
  %v4333 = vadd.f32 %v4269, %v4317
  %v4334 = vadd.f32 %v4270, %v4318
  %v4335 = vadd.f32 %v4271, %v4319
  %v4336 = vadd.f32 %v4272, %v4320
  %v4337 = vadd.f32 %v4273, %v4321
  %v4338 = vadd.f32 %v4274, %v4322
  %v4339 = vadd.f32 %v4275, %v4323
  %v4340 = vadd.f32 %v4276, %v4324
  %v4341 = vadd.f32 %v4277, %v4325
  %v4342 = vadd.f32 %v4278, %v4326
  %v4343 = vadd.f32 %v4279, %v4327
  %v4344 = vadd.f32 %v4280, %v4328
  %v4345 = vadd.f32 %v4281, %v4329
  %v4346 = vadd.f32 %v4282, %v4330
  %v4347 = vlaneseq
  %v4348 = vshrl.u32 %v4347, 7
  %v4349 = vsub.s32 5, %v4348
  %v4350 = vrot.slane %v3295, %v4349
  %v4351 = vlaneseq
  %v4352 = vshrl.u32 %v4351, 7
  %v4353 = vsub.s32 5, %v4352
  %v4354 = vrot.slane %v3296, %v4353
  %v4355 = vlaneseq
  %v4356 = vshrl.u32 %v4355, 7
  %v4357 = vsub.s32 5, %v4356
  %v4358 = vrot.slane %v3297, %v4357
  %v4359 = vlaneseq
  %v4360 = vshrl.u32 %v4359, 7
  %v4361 = vsub.s32 5, %v4360
  %v4362 = vrot.slane %v3298, %v4361
  %v4363 = vlaneseq
  %v4364 = vshrl.u32 %v4363, 7
  %v4365 = vsub.s32 5, %v4364
  %v4366 = vrot.slane %v3299, %v4365
  %v4367 = vlaneseq
  %v4368 = vshrl.u32 %v4367, 7
  %v4369 = vsub.s32 5, %v4368
  %v4370 = vrot.slane %v3300, %v4369
  %v4371 = vlaneseq
  %v4372 = vshrl.u32 %v4371, 7
  %v4373 = vsub.s32 5, %v4372
  %v4374 = vrot.slane %v3301, %v4373
  %v4375 = vlaneseq
  %v4376 = vshrl.u32 %v4375, 7
  %v4377 = vsub.s32 5, %v4376
  %v4378 = vrot.slane %v3302, %v4377
  %v4379 = vmul.f32 %v3516, %v4350
  %v4380 = vmul.f32 %v3518, %v4354
  %v4381 = vmul.f32 %v3669, %v4358
  %v4382 = vmul.f32 %v3671, %v4362
  %v4383 = vmul.f32 %v3822, %v4366
  %v4384 = vmul.f32 %v3824, %v4370
  %v4385 = vmul.f32 %v3975, %v4374
  %v4386 = vmul.f32 %v3977, %v4378
  %v4387 = vmul.f32 %v3520, %v4350
  %v4388 = vmul.f32 %v3522, %v4354
  %v4389 = vmul.f32 %v3673, %v4358
  %v4390 = vmul.f32 %v3675, %v4362
  %v4391 = vmul.f32 %v3826, %v4366
  %v4392 = vmul.f32 %v3828, %v4370
  %v4393 = vmul.f32 %v3979, %v4374
  %v4394 = vmul.f32 %v3981, %v4378
  %v4395 = vadd.f32 %v4331, %v4379
  %v4396 = vadd.f32 %v4332, %v4380
  %v4397 = vadd.f32 %v4333, %v4381
  %v4398 = vadd.f32 %v4334, %v4382
  %v4399 = vadd.f32 %v4335, %v4383
  %v4400 = vadd.f32 %v4336, %v4384
  %v4401 = vadd.f32 %v4337, %v4385
  %v4402 = vadd.f32 %v4338, %v4386
  %v4403 = vadd.f32 %v4339, %v4387
  %v4404 = vadd.f32 %v4340, %v4388
  %v4405 = vadd.f32 %v4341, %v4389
  %v4406 = vadd.f32 %v4342, %v4390
  %v4407 = vadd.f32 %v4343, %v4391
  %v4408 = vadd.f32 %v4344, %v4392
  %v4409 = vadd.f32 %v4345, %v4393
  %v4410 = vadd.f32 %v4346, %v4394
  %v4411 = vlaneseq
  %v4412 = vshrl.u32 %v4411, 7
  %v4413 = vsub.s32 6, %v4412
  %v4414 = vrot.slane %v3295, %v4413
  %v4415 = vlaneseq
  %v4416 = vshrl.u32 %v4415, 7
  %v4417 = vsub.s32 6, %v4416
  %v4418 = vrot.slane %v3296, %v4417
  %v4419 = vlaneseq
  %v4420 = vshrl.u32 %v4419, 7
  %v4421 = vsub.s32 6, %v4420
  %v4422 = vrot.slane %v3297, %v4421
  %v4423 = vlaneseq
  %v4424 = vshrl.u32 %v4423, 7
  %v4425 = vsub.s32 6, %v4424
  %v4426 = vrot.slane %v3298, %v4425
  %v4427 = vlaneseq
  %v4428 = vshrl.u32 %v4427, 7
  %v4429 = vsub.s32 6, %v4428
  %v4430 = vrot.slane %v3299, %v4429
  %v4431 = vlaneseq
  %v4432 = vshrl.u32 %v4431, 7
  %v4433 = vsub.s32 6, %v4432
  %v4434 = vrot.slane %v3300, %v4433
  %v4435 = vlaneseq
  %v4436 = vshrl.u32 %v4435, 7
  %v4437 = vsub.s32 6, %v4436
  %v4438 = vrot.slane %v3301, %v4437
  %v4439 = vlaneseq
  %v4440 = vshrl.u32 %v4439, 7
  %v4441 = vsub.s32 6, %v4440
  %v4442 = vrot.slane %v3302, %v4441
  %v4443 = vmul.f32 %v3526, %v4414
  %v4444 = vmul.f32 %v3528, %v4418
  %v4445 = vmul.f32 %v3679, %v4422
  %v4446 = vmul.f32 %v3681, %v4426
  %v4447 = vmul.f32 %v3832, %v4430
  %v4448 = vmul.f32 %v3834, %v4434
  %v4449 = vmul.f32 %v3985, %v4438
  %v4450 = vmul.f32 %v3987, %v4442
  %v4451 = vmul.f32 %v3530, %v4414
  %v4452 = vmul.f32 %v3532, %v4418
  %v4453 = vmul.f32 %v3683, %v4422
  %v4454 = vmul.f32 %v3685, %v4426
  %v4455 = vmul.f32 %v3836, %v4430
  %v4456 = vmul.f32 %v3838, %v4434
  %v4457 = vmul.f32 %v3989, %v4438
  %v4458 = vmul.f32 %v3991, %v4442
  %v4459 = vadd.f32 %v4395, %v4443
  %v4460 = vadd.f32 %v4396, %v4444
  %v4461 = vadd.f32 %v4397, %v4445
  %v4462 = vadd.f32 %v4398, %v4446
  %v4463 = vadd.f32 %v4399, %v4447
  %v4464 = vadd.f32 %v4400, %v4448
  %v4465 = vadd.f32 %v4401, %v4449
  %v4466 = vadd.f32 %v4402, %v4450
  %v4467 = vadd.f32 %v4403, %v4451
  %v4468 = vadd.f32 %v4404, %v4452
  %v4469 = vadd.f32 %v4405, %v4453
  %v4470 = vadd.f32 %v4406, %v4454
  %v4471 = vadd.f32 %v4407, %v4455
  %v4472 = vadd.f32 %v4408, %v4456
  %v4473 = vadd.f32 %v4409, %v4457
  %v4474 = vadd.f32 %v4410, %v4458
  %v4475 = vlaneseq
  %v4476 = vshrl.u32 %v4475, 7
  %v4477 = vsub.s32 7, %v4476
  %v4478 = vrot.slane %v3295, %v4477
  %v4479 = vlaneseq
  %v4480 = vshrl.u32 %v4479, 7
  %v4481 = vsub.s32 7, %v4480
  %v4482 = vrot.slane %v3296, %v4481
  %v4483 = vlaneseq
  %v4484 = vshrl.u32 %v4483, 7
  %v4485 = vsub.s32 7, %v4484
  %v4486 = vrot.slane %v3297, %v4485
  %v4487 = vlaneseq
  %v4488 = vshrl.u32 %v4487, 7
  %v4489 = vsub.s32 7, %v4488
  %v4490 = vrot.slane %v3298, %v4489
  %v4491 = vlaneseq
  %v4492 = vshrl.u32 %v4491, 7
  %v4493 = vsub.s32 7, %v4492
  %v4494 = vrot.slane %v3299, %v4493
  %v4495 = vlaneseq
  %v4496 = vshrl.u32 %v4495, 7
  %v4497 = vsub.s32 7, %v4496
  %v4498 = vrot.slane %v3300, %v4497
  %v4499 = vlaneseq
  %v4500 = vshrl.u32 %v4499, 7
  %v4501 = vsub.s32 7, %v4500
  %v4502 = vrot.slane %v3301, %v4501
  %v4503 = vlaneseq
  %v4504 = vshrl.u32 %v4503, 7
  %v4505 = vsub.s32 7, %v4504
  %v4506 = vrot.slane %v3302, %v4505
  %v4507 = vmul.f32 %v3536, %v4478
  %v4508 = vmul.f32 %v3538, %v4482
  %v4509 = vmul.f32 %v3689, %v4486
  %v4510 = vmul.f32 %v3691, %v4490
  %v4511 = vmul.f32 %v3842, %v4494
  %v4512 = vmul.f32 %v3844, %v4498
  %v4513 = vmul.f32 %v3995, %v4502
  %v4514 = vmul.f32 %v3997, %v4506
  %v4515 = vmul.f32 %v3540, %v4478
  %v4516 = vmul.f32 %v3542, %v4482
  %v4517 = vmul.f32 %v3693, %v4486
  %v4518 = vmul.f32 %v3695, %v4490
  %v4519 = vmul.f32 %v3846, %v4494
  %v4520 = vmul.f32 %v3848, %v4498
  %v4521 = vmul.f32 %v3999, %v4502
  %v4522 = vmul.f32 %v4001, %v4506
  %v4523 = vadd.f32 %v4459, %v4507
  %v4524 = vadd.f32 %v4460, %v4508
  %v4525 = vadd.f32 %v4461, %v4509
  %v4526 = vadd.f32 %v4462, %v4510
  %v4527 = vadd.f32 %v4463, %v4511
  %v4528 = vadd.f32 %v4464, %v4512
  %v4529 = vadd.f32 %v4465, %v4513
  %v4530 = vadd.f32 %v4466, %v4514
  %v4531 = vadd.f32 %v4467, %v4515
  %v4532 = vadd.f32 %v4468, %v4516
  %v4533 = vadd.f32 %v4469, %v4517
  %v4534 = vadd.f32 %v4470, %v4518
  %v4535 = vadd.f32 %v4471, %v4519
  %v4536 = vadd.f32 %v4472, %v4520
  %v4537 = vadd.f32 %v4473, %v4521
  %v4538 = vadd.f32 %v4474, %v4522
  %v4539 = vlaneseq
  %v4540 = vshrl.u32 %v4539, 7
  %v4541 = vsub.s32 0, %v4540
  %v4542 = vrot.slane %v3303, %v4541
  %v4543 = vlaneseq
  %v4544 = vshrl.u32 %v4543, 7
  %v4545 = vsub.s32 0, %v4544
  %v4546 = vrot.slane %v3304, %v4545
  %v4547 = vlaneseq
  %v4548 = vshrl.u32 %v4547, 7
  %v4549 = vsub.s32 0, %v4548
  %v4550 = vrot.slane %v3305, %v4549
  %v4551 = vlaneseq
  %v4552 = vshrl.u32 %v4551, 7
  %v4553 = vsub.s32 0, %v4552
  %v4554 = vrot.slane %v3306, %v4553
  %v4555 = vlaneseq
  %v4556 = vshrl.u32 %v4555, 7
  %v4557 = vsub.s32 0, %v4556
  %v4558 = vrot.slane %v3307, %v4557
  %v4559 = vlaneseq
  %v4560 = vshrl.u32 %v4559, 7
  %v4561 = vsub.s32 0, %v4560
  %v4562 = vrot.slane %v3308, %v4561
  %v4563 = vlaneseq
  %v4564 = vshrl.u32 %v4563, 7
  %v4565 = vsub.s32 0, %v4564
  %v4566 = vrot.slane %v3309, %v4565
  %v4567 = vlaneseq
  %v4568 = vshrl.u32 %v4567, 7
  %v4569 = vsub.s32 0, %v4568
  %v4570 = vrot.slane %v3310, %v4569
  %v4571 = vmul.f32 %v3546, %v4542
  %v4572 = vmul.f32 %v3548, %v4546
  %v4573 = vmul.f32 %v3699, %v4550
  %v4574 = vmul.f32 %v3701, %v4554
  %v4575 = vmul.f32 %v3852, %v4558
  %v4576 = vmul.f32 %v3854, %v4562
  %v4577 = vmul.f32 %v4005, %v4566
  %v4578 = vmul.f32 %v4007, %v4570
  %v4579 = vmul.f32 %v3550, %v4542
  %v4580 = vmul.f32 %v3552, %v4546
  %v4581 = vmul.f32 %v3703, %v4550
  %v4582 = vmul.f32 %v3705, %v4554
  %v4583 = vmul.f32 %v3856, %v4558
  %v4584 = vmul.f32 %v3858, %v4562
  %v4585 = vmul.f32 %v4009, %v4566
  %v4586 = vmul.f32 %v4011, %v4570
  %v4587 = vadd.f32 %v4523, %v4571
  %v4588 = vadd.f32 %v4524, %v4572
  %v4589 = vadd.f32 %v4525, %v4573
  %v4590 = vadd.f32 %v4526, %v4574
  %v4591 = vadd.f32 %v4527, %v4575
  %v4592 = vadd.f32 %v4528, %v4576
  %v4593 = vadd.f32 %v4529, %v4577
  %v4594 = vadd.f32 %v4530, %v4578
  %v4595 = vadd.f32 %v4531, %v4579
  %v4596 = vadd.f32 %v4532, %v4580
  %v4597 = vadd.f32 %v4533, %v4581
  %v4598 = vadd.f32 %v4534, %v4582
  %v4599 = vadd.f32 %v4535, %v4583
  %v4600 = vadd.f32 %v4536, %v4584
  %v4601 = vadd.f32 %v4537, %v4585
  %v4602 = vadd.f32 %v4538, %v4586
  %v4603 = vlaneseq
  %v4604 = vshrl.u32 %v4603, 7
  %v4605 = vsub.s32 1, %v4604
  %v4606 = vrot.slane %v3303, %v4605
  %v4607 = vlaneseq
  %v4608 = vshrl.u32 %v4607, 7
  %v4609 = vsub.s32 1, %v4608
  %v4610 = vrot.slane %v3304, %v4609
  %v4611 = vlaneseq
  %v4612 = vshrl.u32 %v4611, 7
  %v4613 = vsub.s32 1, %v4612
  %v4614 = vrot.slane %v3305, %v4613
  %v4615 = vlaneseq
  %v4616 = vshrl.u32 %v4615, 7
  %v4617 = vsub.s32 1, %v4616
  %v4618 = vrot.slane %v3306, %v4617
  %v4619 = vlaneseq
  %v4620 = vshrl.u32 %v4619, 7
  %v4621 = vsub.s32 1, %v4620
  %v4622 = vrot.slane %v3307, %v4621
  %v4623 = vlaneseq
  %v4624 = vshrl.u32 %v4623, 7
  %v4625 = vsub.s32 1, %v4624
  %v4626 = vrot.slane %v3308, %v4625
  %v4627 = vlaneseq
  %v4628 = vshrl.u32 %v4627, 7
  %v4629 = vsub.s32 1, %v4628
  %v4630 = vrot.slane %v3309, %v4629
  %v4631 = vlaneseq
  %v4632 = vshrl.u32 %v4631, 7
  %v4633 = vsub.s32 1, %v4632
  %v4634 = vrot.slane %v3310, %v4633
  %v4635 = vmul.f32 %v3556, %v4606
  %v4636 = vmul.f32 %v3558, %v4610
  %v4637 = vmul.f32 %v3709, %v4614
  %v4638 = vmul.f32 %v3711, %v4618
  %v4639 = vmul.f32 %v3862, %v4622
  %v4640 = vmul.f32 %v3864, %v4626
  %v4641 = vmul.f32 %v4015, %v4630
  %v4642 = vmul.f32 %v4017, %v4634
  %v4643 = vmul.f32 %v3560, %v4606
  %v4644 = vmul.f32 %v3562, %v4610
  %v4645 = vmul.f32 %v3713, %v4614
  %v4646 = vmul.f32 %v3715, %v4618
  %v4647 = vmul.f32 %v3866, %v4622
  %v4648 = vmul.f32 %v3868, %v4626
  %v4649 = vmul.f32 %v4019, %v4630
  %v4650 = vmul.f32 %v4021, %v4634
  %v4651 = vadd.f32 %v4587, %v4635
  %v4652 = vadd.f32 %v4588, %v4636
  %v4653 = vadd.f32 %v4589, %v4637
  %v4654 = vadd.f32 %v4590, %v4638
  %v4655 = vadd.f32 %v4591, %v4639
  %v4656 = vadd.f32 %v4592, %v4640
  %v4657 = vadd.f32 %v4593, %v4641
  %v4658 = vadd.f32 %v4594, %v4642
  %v4659 = vadd.f32 %v4595, %v4643
  %v4660 = vadd.f32 %v4596, %v4644
  %v4661 = vadd.f32 %v4597, %v4645
  %v4662 = vadd.f32 %v4598, %v4646
  %v4663 = vadd.f32 %v4599, %v4647
  %v4664 = vadd.f32 %v4600, %v4648
  %v4665 = vadd.f32 %v4601, %v4649
  %v4666 = vadd.f32 %v4602, %v4650
  %v4667 = vlaneseq
  %v4668 = vshrl.u32 %v4667, 7
  %v4669 = vsub.s32 2, %v4668
  %v4670 = vrot.slane %v3303, %v4669
  %v4671 = vlaneseq
  %v4672 = vshrl.u32 %v4671, 7
  %v4673 = vsub.s32 2, %v4672
  %v4674 = vrot.slane %v3304, %v4673
  %v4675 = vlaneseq
  %v4676 = vshrl.u32 %v4675, 7
  %v4677 = vsub.s32 2, %v4676
  %v4678 = vrot.slane %v3305, %v4677
  %v4679 = vlaneseq
  %v4680 = vshrl.u32 %v4679, 7
  %v4681 = vsub.s32 2, %v4680
  %v4682 = vrot.slane %v3306, %v4681
  %v4683 = vlaneseq
  %v4684 = vshrl.u32 %v4683, 7
  %v4685 = vsub.s32 2, %v4684
  %v4686 = vrot.slane %v3307, %v4685
  %v4687 = vlaneseq
  %v4688 = vshrl.u32 %v4687, 7
  %v4689 = vsub.s32 2, %v4688
  %v4690 = vrot.slane %v3308, %v4689
  %v4691 = vlaneseq
  %v4692 = vshrl.u32 %v4691, 7
  %v4693 = vsub.s32 2, %v4692
  %v4694 = vrot.slane %v3309, %v4693
  %v4695 = vlaneseq
  %v4696 = vshrl.u32 %v4695, 7
  %v4697 = vsub.s32 2, %v4696
  %v4698 = vrot.slane %v3310, %v4697
  %v4699 = vmul.f32 %v3566, %v4670
  %v4700 = vmul.f32 %v3568, %v4674
  %v4701 = vmul.f32 %v3719, %v4678
  %v4702 = vmul.f32 %v3721, %v4682
  %v4703 = vmul.f32 %v3872, %v4686
  %v4704 = vmul.f32 %v3874, %v4690
  %v4705 = vmul.f32 %v4025, %v4694
  %v4706 = vmul.f32 %v4027, %v4698
  %v4707 = vmul.f32 %v3570, %v4670
  %v4708 = vmul.f32 %v3572, %v4674
  %v4709 = vmul.f32 %v3723, %v4678
  %v4710 = vmul.f32 %v3725, %v4682
  %v4711 = vmul.f32 %v3876, %v4686
  %v4712 = vmul.f32 %v3878, %v4690
  %v4713 = vmul.f32 %v4029, %v4694
  %v4714 = vmul.f32 %v4031, %v4698
  %v4715 = vadd.f32 %v4651, %v4699
  %v4716 = vadd.f32 %v4652, %v4700
  %v4717 = vadd.f32 %v4653, %v4701
  %v4718 = vadd.f32 %v4654, %v4702
  %v4719 = vadd.f32 %v4655, %v4703
  %v4720 = vadd.f32 %v4656, %v4704
  %v4721 = vadd.f32 %v4657, %v4705
  %v4722 = vadd.f32 %v4658, %v4706
  %v4723 = vadd.f32 %v4659, %v4707
  %v4724 = vadd.f32 %v4660, %v4708
  %v4725 = vadd.f32 %v4661, %v4709
  %v4726 = vadd.f32 %v4662, %v4710
  %v4727 = vadd.f32 %v4663, %v4711
  %v4728 = vadd.f32 %v4664, %v4712
  %v4729 = vadd.f32 %v4665, %v4713
  %v4730 = vadd.f32 %v4666, %v4714
  %v4731 = vlaneseq
  %v4732 = vshrl.u32 %v4731, 7
  %v4733 = vsub.s32 3, %v4732
  %v4734 = vrot.slane %v3303, %v4733
  %v4735 = vlaneseq
  %v4736 = vshrl.u32 %v4735, 7
  %v4737 = vsub.s32 3, %v4736
  %v4738 = vrot.slane %v3304, %v4737
  %v4739 = vlaneseq
  %v4740 = vshrl.u32 %v4739, 7
  %v4741 = vsub.s32 3, %v4740
  %v4742 = vrot.slane %v3305, %v4741
  %v4743 = vlaneseq
  %v4744 = vshrl.u32 %v4743, 7
  %v4745 = vsub.s32 3, %v4744
  %v4746 = vrot.slane %v3306, %v4745
  %v4747 = vlaneseq
  %v4748 = vshrl.u32 %v4747, 7
  %v4749 = vsub.s32 3, %v4748
  %v4750 = vrot.slane %v3307, %v4749
  %v4751 = vlaneseq
  %v4752 = vshrl.u32 %v4751, 7
  %v4753 = vsub.s32 3, %v4752
  %v4754 = vrot.slane %v3308, %v4753
  %v4755 = vlaneseq
  %v4756 = vshrl.u32 %v4755, 7
  %v4757 = vsub.s32 3, %v4756
  %v4758 = vrot.slane %v3309, %v4757
  %v4759 = vlaneseq
  %v4760 = vshrl.u32 %v4759, 7
  %v4761 = vsub.s32 3, %v4760
  %v4762 = vrot.slane %v3310, %v4761
  %v4763 = vmul.f32 %v3576, %v4734
  %v4764 = vmul.f32 %v3578, %v4738
  %v4765 = vmul.f32 %v3729, %v4742
  %v4766 = vmul.f32 %v3731, %v4746
  %v4767 = vmul.f32 %v3882, %v4750
  %v4768 = vmul.f32 %v3884, %v4754
  %v4769 = vmul.f32 %v4035, %v4758
  %v4770 = vmul.f32 %v4037, %v4762
  %v4771 = vmul.f32 %v3580, %v4734
  %v4772 = vmul.f32 %v3582, %v4738
  %v4773 = vmul.f32 %v3733, %v4742
  %v4774 = vmul.f32 %v3735, %v4746
  %v4775 = vmul.f32 %v3886, %v4750
  %v4776 = vmul.f32 %v3888, %v4754
  %v4777 = vmul.f32 %v4039, %v4758
  %v4778 = vmul.f32 %v4041, %v4762
  %v4779 = vadd.f32 %v4715, %v4763
  %v4780 = vadd.f32 %v4716, %v4764
  %v4781 = vadd.f32 %v4717, %v4765
  %v4782 = vadd.f32 %v4718, %v4766
  %v4783 = vadd.f32 %v4719, %v4767
  %v4784 = vadd.f32 %v4720, %v4768
  %v4785 = vadd.f32 %v4721, %v4769
  %v4786 = vadd.f32 %v4722, %v4770
  %v4787 = vadd.f32 %v4723, %v4771
  %v4788 = vadd.f32 %v4724, %v4772
  %v4789 = vadd.f32 %v4725, %v4773
  %v4790 = vadd.f32 %v4726, %v4774
  %v4791 = vadd.f32 %v4727, %v4775
  %v4792 = vadd.f32 %v4728, %v4776
  %v4793 = vadd.f32 %v4729, %v4777
  %v4794 = vadd.f32 %v4730, %v4778
  %v4795 = vld [vmem:[%s6] sm:$0xff]
  %v4796 = vld [vmem:[%s6 + $0x8] sm:$0xff]
  %4798 = vset.pattern.permute.xlu0 0
  %4799 = vperm.xlu0 %4798, %v4795
  %v4800 = vpop.permute.xlu0 %4799
  %4803 = vset.pattern.permute.xlu0 0
  %4804 = vperm.xlu0 %4803, %v4796
  %v4805 = vpop.permute.xlu0 %4804
  %v4807 = vadd.f32 %v4779, %v4800
  %v4808 = vadd.f32 %v4780, %v4800
  %v4809 = vadd.f32 %v4781, %v4800
  %v4810 = vadd.f32 %v4782, %v4800
  %v4811 = vadd.f32 %v4783, %v4800
  %v4812 = vadd.f32 %v4784, %v4800
  %v4813 = vadd.f32 %v4785, %v4800
  %v4814 = vadd.f32 %v4786, %v4800
  %v4815 = vadd.f32 %v4787, %v4805
  %v4816 = vadd.f32 %v4788, %v4805
  %v4817 = vadd.f32 %v4789, %v4805
  %v4818 = vadd.f32 %v4790, %v4805
  %v4819 = vadd.f32 %v4791, %v4805
  %v4820 = vadd.f32 %v4792, %v4805
  %v4821 = vadd.f32 %v4793, %v4805
  %v4822 = vadd.f32 %v4794, %v4805
  %v4823 = vld [vmem:[%s7] sm:$0xf]
  %v4824 = vld [vmem:[%s7 + $0x4] sm:$0xf]
  %v4825 = vld [vmem:[%s7 + $0x8] sm:$0xf]
  %v4826 = vld [vmem:[%s7 + $0xc] sm:$0xf]
  %v4827 = vld [vmem:[%s7 + $0x10] sm:$0xf]
  %v4828 = vld [vmem:[%s7 + $0x14] sm:$0xf]
  %v4829 = vld [vmem:[%s7 + $0x18] sm:$0xf]
  %v4830 = vld [vmem:[%s7 + $0x1c] sm:$0xf]
  %v4831 = vld [vmem:[%s7 + $0x20] sm:$0xf]
  %v4832 = vld [vmem:[%s7 + $0x24] sm:$0xf]
  %v4833 = vld [vmem:[%s7 + $0x28] sm:$0xf]
  %v4834 = vld [vmem:[%s7 + $0x2c] sm:$0xf]
  %v4835 = vld [vmem:[%s7 + $0x30] sm:$0xf]
  %v4836 = vld [vmem:[%s7 + $0x34] sm:$0xf]
  %v4837 = vld [vmem:[%s7 + $0x38] sm:$0xf]
  %v4838 = vld [vmem:[%s7 + $0x3c] sm:$0xf]
  %v4839 = vld [vmem:[%s7 + $0x40] sm:$0xf]
  %v4840 = vld [vmem:[%s7 + $0x44] sm:$0xf]
  %v4841 = vld [vmem:[%s7 + $0x48] sm:$0xf]
  %v4842 = vld [vmem:[%s7 + $0x4c] sm:$0xf]
  %v4843 = vld [vmem:[%s7 + $0x50] sm:$0xf]
  %v4844 = vld [vmem:[%s7 + $0x54] sm:$0xf]
  %v4845 = vld [vmem:[%s7 + $0x58] sm:$0xf]
  %v4846 = vld [vmem:[%s7 + $0x5c] sm:$0xf]
  %v4871 = vunpack.c.l.b16 %v4823
  %v4872 = vunpack.c.l.b16 %v4824
  %v4873 = vunpack.c.l.b16 %v4825
  %v4874 = vunpack.c.l.b16 %v4826
  %v4875 = vunpack.c.l.b16 %v4827
  %v4876 = vunpack.c.l.b16 %v4828
  %v4877 = vunpack.c.l.b16 %v4829
  %v4878 = vunpack.c.l.b16 %v4830
  %v4879 = vunpack.c.l.b16 %v4831
  %v4880 = vunpack.c.l.b16 %v4832
  %v4881 = vunpack.c.l.b16 %v4833
  %v4882 = vunpack.c.l.b16 %v4834
  %v4883 = vunpack.c.l.b16 %v4835
  %v4884 = vunpack.c.l.b16 %v4836
  %v4885 = vunpack.c.l.b16 %v4837
  %v4886 = vunpack.c.l.b16 %v4838
  %v4887 = vunpack.c.l.b16 %v4839
  %v4888 = vunpack.c.l.b16 %v4840
  %v4889 = vunpack.c.l.b16 %v4841
  %v4890 = vunpack.c.l.b16 %v4842
  %v4891 = vunpack.c.l.b16 %v4843
  %v4892 = vunpack.c.l.b16 %v4844
  %v4893 = vunpack.c.l.b16 %v4845
  %v4894 = vunpack.c.l.b16 %v4846
  %v4895 = vpack.c.b16 %v4872, %v4871
  %v4896 = vpack.c.b16 %v4874, %v4873
  %v4897 = vpack.c.b16 %v4876, %v4875
  %v4898 = vpack.c.b16 %v4878, %v4877
  %v4899 = vpack.c.b16 %v4880, %v4879
  %v4900 = vpack.c.b16 %v4882, %v4881
  %v4901 = vpack.c.b16 %v4884, %v4883
  %v4902 = vpack.c.b16 %v4886, %v4885
  %v4903 = vpack.c.b16 %v4888, %v4887
  %v4904 = vpack.c.b16 %v4890, %v4889
  %v4905 = vpack.c.b16 %v4892, %v4891
  %v4906 = vpack.c.b16 %v4894, %v4893
  %v4908 = vsel %vm327, %v4895, 0
  %v4911 = vsel %vm327, %v4896, 0
  %v4914 = vsel %vm327, %v4897, 0
  %v4917 = vsel %vm327, %v4898, 0
  %v4920 = vsel %vm327, %v4899, 0
  %v4923 = vsel %vm327, %v4900, 0
  %v4926 = vsel %vm327, %v4901, 0
  %v4929 = vsel %vm327, %v4902, 0
  %v4932 = vsel %vm327, %v4903, 0
  %v4935 = vsel %vm327, %v4904, 0
  %v4938 = vsel %vm327, %v4905, 0
  %v4941 = vsel %vm327, %v4906, 0
  %4943 = vmatprep.subr.bf16.mxu0 %v304
  %4944 = vmatpush1.bf16.msra.mxu0 %v303
  %4945 = vmatprep.subr.bf16.mxu0 %v411
  %4946 = vmatpush1.bf16.msra.mxu0 %v408
  %4947 = vmatprep.subr.bf16.mxu0 0
  %4948 = vmatpush1.bf16.msra.mxu0 0
  %4949 = vmatprep.subr.bf16.mxu0 0
  %4950 = vmatpush1.bf16.msra.mxu0 0
  %4951 = vmatprep.subr.bf16.mxu0 0
  %4952 = vmatpush1.bf16.msra.mxu0 0
  %4953 = vmatprep.subr.bf16.mxu0 0
  %4954 = vmatpush1.bf16.msra.mxu0 0
  %4955 = vmatprep.subr.bf16.mxu0 0
  %4956 = vmatpush1.bf16.msra.mxu0 0
  %4957 = vmatprep.subr.bf16.mxu0 0
  %4958 = vmatpush1.bf16.msra.mxu0 0
  %4959 = vmatprep.subr.bf16.mxu0 0
  %4960 = vmatpush1.bf16.msra.mxu0 0
  %4961 = vmatprep.subr.bf16.mxu0 0
  %4962 = vmatpush1.bf16.msra.mxu0 0
  %4963 = vmatprep.subr.bf16.mxu0 0
  %4964 = vmatpush1.bf16.msra.mxu0 0
  %4965 = vmatprep.subr.bf16.mxu0 0
  %4966 = vmatpush1.bf16.msra.mxu0 0
  %4967 = vmatprep.subr.bf16.mxu0 0
  %4968 = vmatpush1.bf16.msra.mxu0 0
  %4969 = vmatprep.subr.bf16.mxu0 0
  %4970 = vmatpush1.bf16.msra.mxu0 0
  %4971 = vmatprep.subr.bf16.mxu0 0
  %4972 = vmatpush1.bf16.msra.mxu0 0
  %4973 = vmatprep.subr.bf16.mxu0 0
  %4974 = vmatpush1.bf16.msra.mxu0 0
  %4975 = vmatprep.mubr.bf16.mxu0 0
  %4976 = vmatmul.mubr.bf16.gmra.mrb[0].mxu0 %v4908
  %v4977 = vpop.f32.mrb[0].mxu0
  %v4978 = vadd.f32 0.0, %v4977
  %v4979 = vpop.f32.mrb[0].mxu0
  %v4980 = vadd.f32 0.0, %v4979
  %v4981 = vpop.f32.mrb[0].mxu0
  %v4982 = vadd.f32 0.0, %v4981
  %v4983 = vpop.f32.mrb[0].mxu0
  %v4984 = vadd.f32 0.0, %v4983
  %4985 = vmatprep.mubr.bf16.mxu0 0
  %4986 = vmatmul.mubr.bf16.gmra.mrb[0].mxu0 %v4911
  %v4987 = vpop.f32.mrb[0].mxu0
  %v4988 = vadd.f32 0.0, %v4987
  %v4989 = vpop.f32.mrb[0].mxu0
  %v4990 = vadd.f32 0.0, %v4989
  %v4991 = vpop.f32.mrb[0].mxu0
  %v4992 = vadd.f32 0.0, %v4991
  %v4993 = vpop.f32.mrb[0].mxu0
  %v4994 = vadd.f32 0.0, %v4993
  %4995 = vmatprep.mubr.bf16.mxu0 0
  %4996 = vmatmul.mubr.bf16.gmra.mrb[0].mxu0 %v4914
  %v4997 = vpop.f32.mrb[0].mxu0
  %v4998 = vadd.f32 0.0, %v4997
  %v4999 = vpop.f32.mrb[0].mxu0
  %v5000 = vadd.f32 0.0, %v4999
  %v5001 = vpop.f32.mrb[0].mxu0
  %v5002 = vadd.f32 0.0, %v5001
  %v5003 = vpop.f32.mrb[0].mxu0
  %v5004 = vadd.f32 0.0, %v5003
  %5005 = vmatprep.mubr.bf16.mxu0 0
  %5006 = vmatmul.mubr.bf16.gmra.mrb[0].mxu0 %v4917
  %v5007 = vpop.f32.mrb[0].mxu0
  %v5008 = vadd.f32 0.0, %v5007
  %v5009 = vpop.f32.mrb[0].mxu0
  %v5010 = vadd.f32 0.0, %v5009
  %v5011 = vpop.f32.mrb[0].mxu0
  %v5012 = vadd.f32 0.0, %v5011
  %v5013 = vpop.f32.mrb[0].mxu0
  %v5014 = vadd.f32 0.0, %v5013
  %5015 = vmatprep.mubr.bf16.mxu0 0
  %5016 = vmatmul.mubr.bf16.gmra.mrb[0].mxu0 %v4920
  %v5017 = vpop.f32.mrb[0].mxu0
  %v5018 = vadd.f32 0.0, %v5017
  %v5019 = vpop.f32.mrb[0].mxu0
  %v5020 = vadd.f32 0.0, %v5019
  %v5021 = vpop.f32.mrb[0].mxu0
  %v5022 = vadd.f32 0.0, %v5021
  %v5023 = vpop.f32.mrb[0].mxu0
  %v5024 = vadd.f32 0.0, %v5023
  %5025 = vmatprep.mubr.bf16.mxu0 0
  %5026 = vmatmul.mubr.bf16.gmra.mrb[0].mxu0 %v4923
  %v5027 = vpop.f32.mrb[0].mxu0
  %v5028 = vadd.f32 0.0, %v5027
  %v5029 = vpop.f32.mrb[0].mxu0
  %v5030 = vadd.f32 0.0, %v5029
  %v5031 = vpop.f32.mrb[0].mxu0
  %v5032 = vadd.f32 0.0, %v5031
  %v5033 = vpop.f32.mrb[0].mxu0
  %v5034 = vadd.f32 0.0, %v5033
  %5035 = vmatprep.mubr.bf16.mxu0 0
  %5036 = vmatmul.mubr.bf16.gmra.mrb[0].mxu0 %v4926
  %v5037 = vpop.f32.mrb[0].mxu0
  %v5038 = vadd.f32 0.0, %v5037
  %v5039 = vpop.f32.mrb[0].mxu0
  %v5040 = vadd.f32 0.0, %v5039
  %v5041 = vpop.f32.mrb[0].mxu0
  %v5042 = vadd.f32 0.0, %v5041
  %v5043 = vpop.f32.mrb[0].mxu0
  %v5044 = vadd.f32 0.0, %v5043
  %5045 = vmatprep.mubr.bf16.mxu0 0
  %5046 = vmatmul.mubr.bf16.gmra.mrb[0].mxu0 %v4929
  %v5047 = vpop.f32.mrb[0].mxu0
  %v5048 = vadd.f32 0.0, %v5047
  %v5049 = vpop.f32.mrb[0].mxu0
  %v5050 = vadd.f32 0.0, %v5049
  %v5051 = vpop.f32.mrb[0].mxu0
  %v5052 = vadd.f32 0.0, %v5051
  %v5053 = vpop.f32.mrb[0].mxu0
  %v5054 = vadd.f32 0.0, %v5053
  %5055 = vmatprep.mubr.bf16.mxu0 0
  %5056 = vmatmul.mubr.bf16.gmra.mrb[0].mxu0 %v4932
  %v5057 = vpop.f32.mrb[0].mxu0
  %v5058 = vadd.f32 0.0, %v5057
  %v5059 = vpop.f32.mrb[0].mxu0
  %v5060 = vadd.f32 0.0, %v5059
  %v5061 = vpop.f32.mrb[0].mxu0
  %v5062 = vadd.f32 0.0, %v5061
  %v5063 = vpop.f32.mrb[0].mxu0
  %v5064 = vadd.f32 0.0, %v5063
  %5065 = vmatprep.mubr.bf16.mxu0 0
  %5066 = vmatmul.mubr.bf16.gmra.mrb[0].mxu0 %v4935
  %v5067 = vpop.f32.mrb[0].mxu0
  %v5068 = vadd.f32 0.0, %v5067
  %v5069 = vpop.f32.mrb[0].mxu0
  %v5070 = vadd.f32 0.0, %v5069
  %v5071 = vpop.f32.mrb[0].mxu0
  %v5072 = vadd.f32 0.0, %v5071
  %v5073 = vpop.f32.mrb[0].mxu0
  %v5074 = vadd.f32 0.0, %v5073
  %5075 = vmatprep.mubr.bf16.mxu0 0
  %5076 = vmatmul.mubr.bf16.gmra.mrb[0].mxu0 %v4938
  %v5077 = vpop.f32.mrb[0].mxu0
  %v5078 = vadd.f32 0.0, %v5077
  %v5079 = vpop.f32.mrb[0].mxu0
  %v5080 = vadd.f32 0.0, %v5079
  %v5081 = vpop.f32.mrb[0].mxu0
  %v5082 = vadd.f32 0.0, %v5081
  %v5083 = vpop.f32.mrb[0].mxu0
  %v5084 = vadd.f32 0.0, %v5083
  %5085 = vmatprep.mubr.bf16.mxu0 0
  %5086 = vmatmul.mubr.bf16.gmra.mrb[0].mxu0 %v4941
  %v5087 = vpop.f32.mrb[0].mxu0
  %v5088 = vadd.f32 0.0, %v5087
  %v5089 = vpop.f32.mrb[0].mxu0
  %v5090 = vadd.f32 0.0, %v5089
  %v5091 = vpop.f32.mrb[0].mxu0
  %v5092 = vadd.f32 0.0, %v5091
  %v5093 = vpop.f32.mrb[0].mxu0
  %v5094 = vadd.f32 0.0, %v5093
  %5095 = vdwg.mxu0
  %5096 = vmatprep.subr.bf16.mxu0 %v306
  %5097 = vmatpush1.bf16.msra.mxu0 %v305
  %5098 = vmatprep.subr.bf16.mxu0 %v417
  %5099 = vmatpush1.bf16.msra.mxu0 %v414
  %5100 = vmatprep.subr.bf16.mxu0 0
  %5101 = vmatpush1.bf16.msra.mxu0 0
  %5102 = vmatprep.subr.bf16.mxu0 0
  %5103 = vmatpush1.bf16.msra.mxu0 0
  %5104 = vmatprep.subr.bf16.mxu0 0
  %5105 = vmatpush1.bf16.msra.mxu0 0
  %5106 = vmatprep.subr.bf16.mxu0 0
  %5107 = vmatpush1.bf16.msra.mxu0 0
  %5108 = vmatprep.subr.bf16.mxu0 0
  %5109 = vmatpush1.bf16.msra.mxu0 0
  %5110 = vmatprep.subr.bf16.mxu0 0
  %5111 = vmatpush1.bf16.msra.mxu0 0
  %5112 = vmatprep.subr.bf16.mxu0 0
  %5113 = vmatpush1.bf16.msra.mxu0 0
  %5114 = vmatprep.subr.bf16.mxu0 0
  %5115 = vmatpush1.bf16.msra.mxu0 0
  %5116 = vmatprep.subr.bf16.mxu0 0
  %5117 = vmatpush1.bf16.msra.mxu0 0
  %5118 = vmatprep.subr.bf16.mxu0 0
  %5119 = vmatpush1.bf16.msra.mxu0 0
  %5120 = vmatprep.subr.bf16.mxu0 0
  %5121 = vmatpush1.bf16.msra.mxu0 0
  %5122 = vmatprep.subr.bf16.mxu0 0
  %5123 = vmatpush1.bf16.msra.mxu0 0
  %5124 = vmatprep.subr.bf16.mxu0 0
  %5125 = vmatpush1.bf16.msra.mxu0 0
  %5126 = vmatprep.subr.bf16.mxu0 0
  %5127 = vmatpush1.bf16.msra.mxu0 0
  %5128 = vmatprep.mubr.bf16.mxu0 0
  %5129 = vmatmul.mubr.bf16.gmra.mrb[0].mxu0 %v4908
  %v5130 = vpop.f32.mrb[0].mxu0
  %v5131 = vadd.f32 0.0, %v5130
  %v5132 = vpop.f32.mrb[0].mxu0
  %v5133 = vadd.f32 0.0, %v5132
  %v5134 = vpop.f32.mrb[0].mxu0
  %v5135 = vadd.f32 0.0, %v5134
  %v5136 = vpop.f32.mrb[0].mxu0
  %v5137 = vadd.f32 0.0, %v5136
  %5138 = vmatprep.mubr.bf16.mxu0 0
  %5139 = vmatmul.mubr.bf16.gmra.mrb[0].mxu0 %v4911
  %v5140 = vpop.f32.mrb[0].mxu0
  %v5141 = vadd.f32 0.0, %v5140
  %v5142 = vpop.f32.mrb[0].mxu0
  %v5143 = vadd.f32 0.0, %v5142
  %v5144 = vpop.f32.mrb[0].mxu0
  %v5145 = vadd.f32 0.0, %v5144
  %v5146 = vpop.f32.mrb[0].mxu0
  %v5147 = vadd.f32 0.0, %v5146
  %5148 = vmatprep.mubr.bf16.mxu0 0
  %5149 = vmatmul.mubr.bf16.gmra.mrb[0].mxu0 %v4914
  %v5150 = vpop.f32.mrb[0].mxu0
  %v5151 = vadd.f32 0.0, %v5150
  %v5152 = vpop.f32.mrb[0].mxu0
  %v5153 = vadd.f32 0.0, %v5152
  %v5154 = vpop.f32.mrb[0].mxu0
  %v5155 = vadd.f32 0.0, %v5154
  %v5156 = vpop.f32.mrb[0].mxu0
  %v5157 = vadd.f32 0.0, %v5156
  %5158 = vmatprep.mubr.bf16.mxu0 0
  %5159 = vmatmul.mubr.bf16.gmra.mrb[0].mxu0 %v4917
  %v5160 = vpop.f32.mrb[0].mxu0
  %v5161 = vadd.f32 0.0, %v5160
  %v5162 = vpop.f32.mrb[0].mxu0
  %v5163 = vadd.f32 0.0, %v5162
  %v5164 = vpop.f32.mrb[0].mxu0
  %v5165 = vadd.f32 0.0, %v5164
  %v5166 = vpop.f32.mrb[0].mxu0
  %v5167 = vadd.f32 0.0, %v5166
  %5168 = vmatprep.mubr.bf16.mxu0 0
  %5169 = vmatmul.mubr.bf16.gmra.mrb[0].mxu0 %v4920
  %v5170 = vpop.f32.mrb[0].mxu0
  %v5171 = vadd.f32 0.0, %v5170
  %v5172 = vpop.f32.mrb[0].mxu0
  %v5173 = vadd.f32 0.0, %v5172
  %v5174 = vpop.f32.mrb[0].mxu0
  %v5175 = vadd.f32 0.0, %v5174
  %v5176 = vpop.f32.mrb[0].mxu0
  %v5177 = vadd.f32 0.0, %v5176
  %5178 = vmatprep.mubr.bf16.mxu0 0
  %5179 = vmatmul.mubr.bf16.gmra.mrb[0].mxu0 %v4923
  %v5180 = vpop.f32.mrb[0].mxu0
  %v5181 = vadd.f32 0.0, %v5180
  %v5182 = vpop.f32.mrb[0].mxu0
  %v5183 = vadd.f32 0.0, %v5182
  %v5184 = vpop.f32.mrb[0].mxu0
  %v5185 = vadd.f32 0.0, %v5184
  %v5186 = vpop.f32.mrb[0].mxu0
  %v5187 = vadd.f32 0.0, %v5186
  %5188 = vmatprep.mubr.bf16.mxu0 0
  %5189 = vmatmul.mubr.bf16.gmra.mrb[0].mxu0 %v4926
  %v5190 = vpop.f32.mrb[0].mxu0
  %v5191 = vadd.f32 0.0, %v5190
  %v5192 = vpop.f32.mrb[0].mxu0
  %v5193 = vadd.f32 0.0, %v5192
  %v5194 = vpop.f32.mrb[0].mxu0
  %v5195 = vadd.f32 0.0, %v5194
  %v5196 = vpop.f32.mrb[0].mxu0
  %v5197 = vadd.f32 0.0, %v5196
  %5198 = vmatprep.mubr.bf16.mxu0 0
  %5199 = vmatmul.mubr.bf16.gmra.mrb[0].mxu0 %v4929
  %v5200 = vpop.f32.mrb[0].mxu0
  %v5201 = vadd.f32 0.0, %v5200
  %v5202 = vpop.f32.mrb[0].mxu0
  %v5203 = vadd.f32 0.0, %v5202
  %v5204 = vpop.f32.mrb[0].mxu0
  %v5205 = vadd.f32 0.0, %v5204
  %v5206 = vpop.f32.mrb[0].mxu0
  %v5207 = vadd.f32 0.0, %v5206
  %5208 = vmatprep.mubr.bf16.mxu0 0
  %5209 = vmatmul.mubr.bf16.gmra.mrb[0].mxu0 %v4932
  %v5210 = vpop.f32.mrb[0].mxu0
  %v5211 = vadd.f32 0.0, %v5210
  %v5212 = vpop.f32.mrb[0].mxu0
  %v5213 = vadd.f32 0.0, %v5212
  %v5214 = vpop.f32.mrb[0].mxu0
  %v5215 = vadd.f32 0.0, %v5214
  %v5216 = vpop.f32.mrb[0].mxu0
  %v5217 = vadd.f32 0.0, %v5216
  %5218 = vmatprep.mubr.bf16.mxu0 0
  %5219 = vmatmul.mubr.bf16.gmra.mrb[0].mxu0 %v4935
  %v5220 = vpop.f32.mrb[0].mxu0
  %v5221 = vadd.f32 0.0, %v5220
  %v5222 = vpop.f32.mrb[0].mxu0
  %v5223 = vadd.f32 0.0, %v5222
  %v5224 = vpop.f32.mrb[0].mxu0
  %v5225 = vadd.f32 0.0, %v5224
  %v5226 = vpop.f32.mrb[0].mxu0
  %v5227 = vadd.f32 0.0, %v5226
  %5228 = vmatprep.mubr.bf16.mxu0 0
  %5229 = vmatmul.mubr.bf16.gmra.mrb[0].mxu0 %v4938
  %v5230 = vpop.f32.mrb[0].mxu0
  %v5231 = vadd.f32 0.0, %v5230
  %v5232 = vpop.f32.mrb[0].mxu0
  %v5233 = vadd.f32 0.0, %v5232
  %v5234 = vpop.f32.mrb[0].mxu0
  %v5235 = vadd.f32 0.0, %v5234
  %v5236 = vpop.f32.mrb[0].mxu0
  %v5237 = vadd.f32 0.0, %v5236
  %5238 = vmatprep.mubr.bf16.mxu0 0
  %5239 = vmatmul.mubr.bf16.gmra.mrb[0].mxu0 %v4941
  %v5240 = vpop.f32.mrb[0].mxu0
  %v5241 = vadd.f32 0.0, %v5240
  %v5242 = vpop.f32.mrb[0].mxu0
  %v5243 = vadd.f32 0.0, %v5242
  %v5244 = vpop.f32.mrb[0].mxu0
  %v5245 = vadd.f32 0.0, %v5244
  %v5246 = vpop.f32.mrb[0].mxu0
  %v5247 = vadd.f32 0.0, %v5246
  %5248 = vdwg.mxu0
  %5249 = vmatprep.subr.bf16.mxu0 %v308
  %5250 = vmatpush1.bf16.msra.mxu0 %v307
  %5251 = vmatprep.subr.bf16.mxu0 %v423
  %5252 = vmatpush1.bf16.msra.mxu0 %v420
  %5253 = vmatprep.subr.bf16.mxu0 0
  %5254 = vmatpush1.bf16.msra.mxu0 0
  %5255 = vmatprep.subr.bf16.mxu0 0
  %5256 = vmatpush1.bf16.msra.mxu0 0
  %5257 = vmatprep.subr.bf16.mxu0 0
  %5258 = vmatpush1.bf16.msra.mxu0 0
  %5259 = vmatprep.subr.bf16.mxu0 0
  %5260 = vmatpush1.bf16.msra.mxu0 0
  %5261 = vmatprep.subr.bf16.mxu0 0
  %5262 = vmatpush1.bf16.msra.mxu0 0
  %5263 = vmatprep.subr.bf16.mxu0 0
  %5264 = vmatpush1.bf16.msra.mxu0 0
  %5265 = vmatprep.subr.bf16.mxu0 0
  %5266 = vmatpush1.bf16.msra.mxu0 0
  %5267 = vmatprep.subr.bf16.mxu0 0
  %5268 = vmatpush1.bf16.msra.mxu0 0
  %5269 = vmatprep.subr.bf16.mxu0 0
  %5270 = vmatpush1.bf16.msra.mxu0 0
  %5271 = vmatprep.subr.bf16.mxu0 0
  %5272 = vmatpush1.bf16.msra.mxu0 0
  %5273 = vmatprep.subr.bf16.mxu0 0
  %5274 = vmatpush1.bf16.msra.mxu0 0
  %5275 = vmatprep.subr.bf16.mxu0 0
  %5276 = vmatpush1.bf16.msra.mxu0 0
  %5277 = vmatprep.subr.bf16.mxu0 0
  %5278 = vmatpush1.bf16.msra.mxu0 0
  %5279 = vmatprep.subr.bf16.mxu0 0
  %5280 = vmatpush1.bf16.msra.mxu0 0
  %5281 = vmatprep.mubr.bf16.mxu0 0
  %5282 = vmatmul.mubr.bf16.gmra.mrb[0].mxu0 %v4908
  %v5283 = vpop.f32.mrb[0].mxu0
  %v5284 = vadd.f32 0.0, %v5283
  %v5285 = vpop.f32.mrb[0].mxu0
  %v5286 = vadd.f32 0.0, %v5285
  %v5287 = vpop.f32.mrb[0].mxu0
  %v5288 = vadd.f32 0.0, %v5287
  %v5289 = vpop.f32.mrb[0].mxu0
  %v5290 = vadd.f32 0.0, %v5289
  %5291 = vmatprep.mubr.bf16.mxu0 0
  %5292 = vmatmul.mubr.bf16.gmra.mrb[0].mxu0 %v4911
  %v5293 = vpop.f32.mrb[0].mxu0
  %v5294 = vadd.f32 0.0, %v5293
  %v5295 = vpop.f32.mrb[0].mxu0
  %v5296 = vadd.f32 0.0, %v5295
  %v5297 = vpop.f32.mrb[0].mxu0
  %v5298 = vadd.f32 0.0, %v5297
  %v5299 = vpop.f32.mrb[0].mxu0
  %v5300 = vadd.f32 0.0, %v5299
  %5301 = vmatprep.mubr.bf16.mxu0 0
  %5302 = vmatmul.mubr.bf16.gmra.mrb[0].mxu0 %v4914
  %v5303 = vpop.f32.mrb[0].mxu0
  %v5304 = vadd.f32 0.0, %v5303
  %v5305 = vpop.f32.mrb[0].mxu0
  %v5306 = vadd.f32 0.0, %v5305
  %v5307 = vpop.f32.mrb[0].mxu0
  %v5308 = vadd.f32 0.0, %v5307
  %v5309 = vpop.f32.mrb[0].mxu0
  %v5310 = vadd.f32 0.0, %v5309
  %5311 = vmatprep.mubr.bf16.mxu0 0
  %5312 = vmatmul.mubr.bf16.gmra.mrb[0].mxu0 %v4917
  %v5313 = vpop.f32.mrb[0].mxu0
  %v5314 = vadd.f32 0.0, %v5313
  %v5315 = vpop.f32.mrb[0].mxu0
  %v5316 = vadd.f32 0.0, %v5315
  %v5317 = vpop.f32.mrb[0].mxu0
  %v5318 = vadd.f32 0.0, %v5317
  %v5319 = vpop.f32.mrb[0].mxu0
  %v5320 = vadd.f32 0.0, %v5319
  %5321 = vmatprep.mubr.bf16.mxu0 0
  %5322 = vmatmul.mubr.bf16.gmra.mrb[0].mxu0 %v4920
  %v5323 = vpop.f32.mrb[0].mxu0
  %v5324 = vadd.f32 0.0, %v5323
  %v5325 = vpop.f32.mrb[0].mxu0
  %v5326 = vadd.f32 0.0, %v5325
  %v5327 = vpop.f32.mrb[0].mxu0
  %v5328 = vadd.f32 0.0, %v5327
  %v5329 = vpop.f32.mrb[0].mxu0
  %v5330 = vadd.f32 0.0, %v5329
  %5331 = vmatprep.mubr.bf16.mxu0 0
  %5332 = vmatmul.mubr.bf16.gmra.mrb[0].mxu0 %v4923
  %v5333 = vpop.f32.mrb[0].mxu0
  %v5334 = vadd.f32 0.0, %v5333
  %v5335 = vpop.f32.mrb[0].mxu0
  %v5336 = vadd.f32 0.0, %v5335
  %v5337 = vpop.f32.mrb[0].mxu0
  %v5338 = vadd.f32 0.0, %v5337
  %v5339 = vpop.f32.mrb[0].mxu0
  %v5340 = vadd.f32 0.0, %v5339
  %5341 = vmatprep.mubr.bf16.mxu0 0
  %5342 = vmatmul.mubr.bf16.gmra.mrb[0].mxu0 %v4926
  %v5343 = vpop.f32.mrb[0].mxu0
  %v5344 = vadd.f32 0.0, %v5343
  %v5345 = vpop.f32.mrb[0].mxu0
  %v5346 = vadd.f32 0.0, %v5345
  %v5347 = vpop.f32.mrb[0].mxu0
  %v5348 = vadd.f32 0.0, %v5347
  %v5349 = vpop.f32.mrb[0].mxu0
  %v5350 = vadd.f32 0.0, %v5349
  %5351 = vmatprep.mubr.bf16.mxu0 0
  %5352 = vmatmul.mubr.bf16.gmra.mrb[0].mxu0 %v4929
  %v5353 = vpop.f32.mrb[0].mxu0
  %v5354 = vadd.f32 0.0, %v5353
  %v5355 = vpop.f32.mrb[0].mxu0
  %v5356 = vadd.f32 0.0, %v5355
  %v5357 = vpop.f32.mrb[0].mxu0
  %v5358 = vadd.f32 0.0, %v5357
  %v5359 = vpop.f32.mrb[0].mxu0
  %v5360 = vadd.f32 0.0, %v5359
  %5361 = vmatprep.mubr.bf16.mxu0 0
  %5362 = vmatmul.mubr.bf16.gmra.mrb[0].mxu0 %v4932
  %v5363 = vpop.f32.mrb[0].mxu0
  %v5364 = vadd.f32 0.0, %v5363
  %v5365 = vpop.f32.mrb[0].mxu0
  %v5366 = vadd.f32 0.0, %v5365
  %v5367 = vpop.f32.mrb[0].mxu0
  %v5368 = vadd.f32 0.0, %v5367
  %v5369 = vpop.f32.mrb[0].mxu0
  %v5370 = vadd.f32 0.0, %v5369
  %5371 = vmatprep.mubr.bf16.mxu0 0
  %5372 = vmatmul.mubr.bf16.gmra.mrb[0].mxu0 %v4935
  %v5373 = vpop.f32.mrb[0].mxu0
  %v5374 = vadd.f32 0.0, %v5373
  %v5375 = vpop.f32.mrb[0].mxu0
  %v5376 = vadd.f32 0.0, %v5375
  %v5377 = vpop.f32.mrb[0].mxu0
  %v5378 = vadd.f32 0.0, %v5377
  %v5379 = vpop.f32.mrb[0].mxu0
  %v5380 = vadd.f32 0.0, %v5379
  %5381 = vmatprep.mubr.bf16.mxu0 0
  %5382 = vmatmul.mubr.bf16.gmra.mrb[0].mxu0 %v4938
  %v5383 = vpop.f32.mrb[0].mxu0
  %v5384 = vadd.f32 0.0, %v5383
  %v5385 = vpop.f32.mrb[0].mxu0
  %v5386 = vadd.f32 0.0, %v5385
  %v5387 = vpop.f32.mrb[0].mxu0
  %v5388 = vadd.f32 0.0, %v5387
  %v5389 = vpop.f32.mrb[0].mxu0
  %v5390 = vadd.f32 0.0, %v5389
  %5391 = vmatprep.mubr.bf16.mxu0 0
  %5392 = vmatmul.mubr.bf16.gmra.mrb[0].mxu0 %v4941
  %v5393 = vpop.f32.mrb[0].mxu0
  %v5394 = vadd.f32 0.0, %v5393
  %v5395 = vpop.f32.mrb[0].mxu0
  %v5396 = vadd.f32 0.0, %v5395
  %v5397 = vpop.f32.mrb[0].mxu0
  %v5398 = vadd.f32 0.0, %v5397
  %v5399 = vpop.f32.mrb[0].mxu0
  %v5400 = vadd.f32 0.0, %v5399
  %5401 = vdwg.mxu0
  %5402 = vmatprep.subr.bf16.mxu0 %v310
  %5403 = vmatpush1.bf16.msra.mxu0 %v309
  %5404 = vmatprep.subr.bf16.mxu0 %v429
  %5405 = vmatpush1.bf16.msra.mxu0 %v426
  %5406 = vmatprep.subr.bf16.mxu0 0
  %5407 = vmatpush1.bf16.msra.mxu0 0
  %5408 = vmatprep.subr.bf16.mxu0 0
  %5409 = vmatpush1.bf16.msra.mxu0 0
  %5410 = vmatprep.subr.bf16.mxu0 0
  %5411 = vmatpush1.bf16.msra.mxu0 0
  %5412 = vmatprep.subr.bf16.mxu0 0
  %5413 = vmatpush1.bf16.msra.mxu0 0
  %5414 = vmatprep.subr.bf16.mxu0 0
  %5415 = vmatpush1.bf16.msra.mxu0 0
  %5416 = vmatprep.subr.bf16.mxu0 0
  %5417 = vmatpush1.bf16.msra.mxu0 0
  %5418 = vmatprep.subr.bf16.mxu0 0
  %5419 = vmatpush1.bf16.msra.mxu0 0
  %5420 = vmatprep.subr.bf16.mxu0 0
  %5421 = vmatpush1.bf16.msra.mxu0 0
  %5422 = vmatprep.subr.bf16.mxu0 0
  %5423 = vmatpush1.bf16.msra.mxu0 0
  %5424 = vmatprep.subr.bf16.mxu0 0
  %5425 = vmatpush1.bf16.msra.mxu0 0
  %5426 = vmatprep.subr.bf16.mxu0 0
  %5427 = vmatpush1.bf16.msra.mxu0 0
  %5428 = vmatprep.subr.bf16.mxu0 0
  %5429 = vmatpush1.bf16.msra.mxu0 0
  %5430 = vmatprep.subr.bf16.mxu0 0
  %5431 = vmatpush1.bf16.msra.mxu0 0
  %5432 = vmatprep.subr.bf16.mxu0 0
  %5433 = vmatpush1.bf16.msra.mxu0 0
  %5434 = vmatprep.mubr.bf16.mxu0 0
  %5435 = vmatmul.mubr.bf16.gmra.mrb[0].mxu0 %v4908
  %v5436 = vpop.f32.mrb[0].mxu0
  %v5437 = vadd.f32 0.0, %v5436
  %v5438 = vpop.f32.mrb[0].mxu0
  %v5439 = vadd.f32 0.0, %v5438
  %v5440 = vpop.f32.mrb[0].mxu0
  %v5441 = vadd.f32 0.0, %v5440
  %v5442 = vpop.f32.mrb[0].mxu0
  %v5443 = vadd.f32 0.0, %v5442
  %5444 = vmatprep.mubr.bf16.mxu0 0
  %5445 = vmatmul.mubr.bf16.gmra.mrb[0].mxu0 %v4911
  %v5446 = vpop.f32.mrb[0].mxu0
  %v5447 = vadd.f32 0.0, %v5446
  %v5448 = vpop.f32.mrb[0].mxu0
  %v5449 = vadd.f32 0.0, %v5448
  %v5450 = vpop.f32.mrb[0].mxu0
  %v5451 = vadd.f32 0.0, %v5450
  %v5452 = vpop.f32.mrb[0].mxu0
  %v5453 = vadd.f32 0.0, %v5452
  %5454 = vmatprep.mubr.bf16.mxu0 0
  %5455 = vmatmul.mubr.bf16.gmra.mrb[0].mxu0 %v4914
  %v5456 = vpop.f32.mrb[0].mxu0
  %v5457 = vadd.f32 0.0, %v5456
  %v5458 = vpop.f32.mrb[0].mxu0
  %v5459 = vadd.f32 0.0, %v5458
  %v5460 = vpop.f32.mrb[0].mxu0
  %v5461 = vadd.f32 0.0, %v5460
  %v5462 = vpop.f32.mrb[0].mxu0
  %v5463 = vadd.f32 0.0, %v5462
  %5464 = vmatprep.mubr.bf16.mxu0 0
  %5465 = vmatmul.mubr.bf16.gmra.mrb[0].mxu0 %v4917
  %v5466 = vpop.f32.mrb[0].mxu0
  %v5467 = vadd.f32 0.0, %v5466
  %v5468 = vpop.f32.mrb[0].mxu0
  %v5469 = vadd.f32 0.0, %v5468
  %v5470 = vpop.f32.mrb[0].mxu0
  %v5471 = vadd.f32 0.0, %v5470
  %v5472 = vpop.f32.mrb[0].mxu0
  %v5473 = vadd.f32 0.0, %v5472
  %5474 = vmatprep.mubr.bf16.mxu0 0
  %5475 = vmatmul.mubr.bf16.gmra.mrb[0].mxu0 %v4920
  %v5476 = vpop.f32.mrb[0].mxu0
  %v5477 = vadd.f32 0.0, %v5476
  %v5478 = vpop.f32.mrb[0].mxu0
  %v5479 = vadd.f32 0.0, %v5478
  %v5480 = vpop.f32.mrb[0].mxu0
  %v5481 = vadd.f32 0.0, %v5480
  %v5482 = vpop.f32.mrb[0].mxu0
  %v5483 = vadd.f32 0.0, %v5482
  %5484 = vmatprep.mubr.bf16.mxu0 0
  %5485 = vmatmul.mubr.bf16.gmra.mrb[0].mxu0 %v4923
  %v5486 = vpop.f32.mrb[0].mxu0
  %v5487 = vadd.f32 0.0, %v5486
  %v5488 = vpop.f32.mrb[0].mxu0
  %v5489 = vadd.f32 0.0, %v5488
  %v5490 = vpop.f32.mrb[0].mxu0
  %v5491 = vadd.f32 0.0, %v5490
  %v5492 = vpop.f32.mrb[0].mxu0
  %v5493 = vadd.f32 0.0, %v5492
  %5494 = vmatprep.mubr.bf16.mxu0 0
  %5495 = vmatmul.mubr.bf16.gmra.mrb[0].mxu0 %v4926
  %v5496 = vpop.f32.mrb[0].mxu0
  %v5497 = vadd.f32 0.0, %v5496
  %v5498 = vpop.f32.mrb[0].mxu0
  %v5499 = vadd.f32 0.0, %v5498
  %v5500 = vpop.f32.mrb[0].mxu0
  %v5501 = vadd.f32 0.0, %v5500
  %v5502 = vpop.f32.mrb[0].mxu0
  %v5503 = vadd.f32 0.0, %v5502
  %5504 = vmatprep.mubr.bf16.mxu0 0
  %5505 = vmatmul.mubr.bf16.gmra.mrb[0].mxu0 %v4929
  %v5506 = vpop.f32.mrb[0].mxu0
  %v5507 = vadd.f32 0.0, %v5506
  %v5508 = vpop.f32.mrb[0].mxu0
  %v5509 = vadd.f32 0.0, %v5508
  %v5510 = vpop.f32.mrb[0].mxu0
  %v5511 = vadd.f32 0.0, %v5510
  %v5512 = vpop.f32.mrb[0].mxu0
  %v5513 = vadd.f32 0.0, %v5512
  %5514 = vmatprep.mubr.bf16.mxu0 0
  %5515 = vmatmul.mubr.bf16.gmra.mrb[0].mxu0 %v4932
  %v5516 = vpop.f32.mrb[0].mxu0
  %v5517 = vadd.f32 0.0, %v5516
  %v5518 = vpop.f32.mrb[0].mxu0
  %v5519 = vadd.f32 0.0, %v5518
  %v5520 = vpop.f32.mrb[0].mxu0
  %v5521 = vadd.f32 0.0, %v5520
  %v5522 = vpop.f32.mrb[0].mxu0
  %v5523 = vadd.f32 0.0, %v5522
  %5524 = vmatprep.mubr.bf16.mxu0 0
  %5525 = vmatmul.mubr.bf16.gmra.mrb[0].mxu0 %v4935
  %v5526 = vpop.f32.mrb[0].mxu0
  %v5527 = vadd.f32 0.0, %v5526
  %v5528 = vpop.f32.mrb[0].mxu0
  %v5529 = vadd.f32 0.0, %v5528
  %v5530 = vpop.f32.mrb[0].mxu0
  %v5531 = vadd.f32 0.0, %v5530
  %v5532 = vpop.f32.mrb[0].mxu0
  %v5533 = vadd.f32 0.0, %v5532
  %5534 = vmatprep.mubr.bf16.mxu0 0
  %5535 = vmatmul.mubr.bf16.gmra.mrb[0].mxu0 %v4938
  %v5536 = vpop.f32.mrb[0].mxu0
  %v5537 = vadd.f32 0.0, %v5536
  %v5538 = vpop.f32.mrb[0].mxu0
  %v5539 = vadd.f32 0.0, %v5538
  %v5540 = vpop.f32.mrb[0].mxu0
  %v5541 = vadd.f32 0.0, %v5540
  %v5542 = vpop.f32.mrb[0].mxu0
  %v5543 = vadd.f32 0.0, %v5542
  %5544 = vmatprep.mubr.bf16.mxu0 0
  %5545 = vmatmul.mubr.bf16.gmra.mrb[0].mxu0 %v4941
  %v5546 = vpop.f32.mrb[0].mxu0
  %v5547 = vadd.f32 0.0, %v5546
  %v5548 = vpop.f32.mrb[0].mxu0
  %v5549 = vadd.f32 0.0, %v5548
  %v5550 = vpop.f32.mrb[0].mxu0
  %v5551 = vadd.f32 0.0, %v5550
  %v5552 = vpop.f32.mrb[0].mxu0
  %v5553 = vadd.f32 0.0, %v5552
  %5554 = vdwg.mxu0
  %v5555 = vlaneseq
  %v5556 = vshrl.u32 %v5555, 7
  %v5557 = vsub.s32 0, %v5556
  %v5558 = vrot.slane %v4807, %v5557
  %v5559 = vlaneseq
  %v5560 = vshrl.u32 %v5559, 7
  %v5561 = vsub.s32 0, %v5560
  %v5562 = vrot.slane %v4808, %v5561
  %v5563 = vlaneseq
  %v5564 = vshrl.u32 %v5563, 7
  %v5565 = vsub.s32 0, %v5564
  %v5566 = vrot.slane %v4809, %v5565
  %v5567 = vlaneseq
  %v5568 = vshrl.u32 %v5567, 7
  %v5569 = vsub.s32 0, %v5568
  %v5570 = vrot.slane %v4810, %v5569
  %v5571 = vlaneseq
  %v5572 = vshrl.u32 %v5571, 7
  %v5573 = vsub.s32 0, %v5572
  %v5574 = vrot.slane %v4811, %v5573
  %v5575 = vlaneseq
  %v5576 = vshrl.u32 %v5575, 7
  %v5577 = vsub.s32 0, %v5576
  %v5578 = vrot.slane %v4812, %v5577
  %v5579 = vlaneseq
  %v5580 = vshrl.u32 %v5579, 7
  %v5581 = vsub.s32 0, %v5580
  %v5582 = vrot.slane %v4813, %v5581
  %v5583 = vlaneseq
  %v5584 = vshrl.u32 %v5583, 7
  %v5585 = vsub.s32 0, %v5584
  %v5586 = vrot.slane %v4814, %v5585
  %v5587 = vmul.f32 %v4978, %v5558
  %v5588 = vmul.f32 %v4980, %v5562
  %v5589 = vmul.f32 %v5131, %v5566
  %v5590 = vmul.f32 %v5133, %v5570
  %v5591 = vmul.f32 %v5284, %v5574
  %v5592 = vmul.f32 %v5286, %v5578
  %v5593 = vmul.f32 %v5437, %v5582
  %v5594 = vmul.f32 %v5439, %v5586
  %v5595 = vmul.f32 %v4982, %v5558
  %v5596 = vmul.f32 %v4984, %v5562
  %v5597 = vmul.f32 %v5135, %v5566
  %v5598 = vmul.f32 %v5137, %v5570
  %v5599 = vmul.f32 %v5288, %v5574
  %v5600 = vmul.f32 %v5290, %v5578
  %v5601 = vmul.f32 %v5441, %v5582
  %v5602 = vmul.f32 %v5443, %v5586
  %v5603 = vlaneseq
  %v5604 = vshrl.u32 %v5603, 7
  %v5605 = vsub.s32 1, %v5604
  %v5606 = vrot.slane %v4807, %v5605
  %v5607 = vlaneseq
  %v5608 = vshrl.u32 %v5607, 7
  %v5609 = vsub.s32 1, %v5608
  %v5610 = vrot.slane %v4808, %v5609
  %v5611 = vlaneseq
  %v5612 = vshrl.u32 %v5611, 7
  %v5613 = vsub.s32 1, %v5612
  %v5614 = vrot.slane %v4809, %v5613
  %v5615 = vlaneseq
  %v5616 = vshrl.u32 %v5615, 7
  %v5617 = vsub.s32 1, %v5616
  %v5618 = vrot.slane %v4810, %v5617
  %v5619 = vlaneseq
  %v5620 = vshrl.u32 %v5619, 7
  %v5621 = vsub.s32 1, %v5620
  %v5622 = vrot.slane %v4811, %v5621
  %v5623 = vlaneseq
  %v5624 = vshrl.u32 %v5623, 7
  %v5625 = vsub.s32 1, %v5624
  %v5626 = vrot.slane %v4812, %v5625
  %v5627 = vlaneseq
  %v5628 = vshrl.u32 %v5627, 7
  %v5629 = vsub.s32 1, %v5628
  %v5630 = vrot.slane %v4813, %v5629
  %v5631 = vlaneseq
  %v5632 = vshrl.u32 %v5631, 7
  %v5633 = vsub.s32 1, %v5632
  %v5634 = vrot.slane %v4814, %v5633
  %v5635 = vmul.f32 %v4988, %v5606
  %v5636 = vmul.f32 %v4990, %v5610
  %v5637 = vmul.f32 %v5141, %v5614
  %v5638 = vmul.f32 %v5143, %v5618
  %v5639 = vmul.f32 %v5294, %v5622
  %v5640 = vmul.f32 %v5296, %v5626
  %v5641 = vmul.f32 %v5447, %v5630
  %v5642 = vmul.f32 %v5449, %v5634
  %v5643 = vmul.f32 %v4992, %v5606
  %v5644 = vmul.f32 %v4994, %v5610
  %v5645 = vmul.f32 %v5145, %v5614
  %v5646 = vmul.f32 %v5147, %v5618
  %v5647 = vmul.f32 %v5298, %v5622
  %v5648 = vmul.f32 %v5300, %v5626
  %v5649 = vmul.f32 %v5451, %v5630
  %v5650 = vmul.f32 %v5453, %v5634
  %v5651 = vadd.f32 %v5587, %v5635
  %v5652 = vadd.f32 %v5588, %v5636
  %v5653 = vadd.f32 %v5589, %v5637
  %v5654 = vadd.f32 %v5590, %v5638
  %v5655 = vadd.f32 %v5591, %v5639
  %v5656 = vadd.f32 %v5592, %v5640
  %v5657 = vadd.f32 %v5593, %v5641
  %v5658 = vadd.f32 %v5594, %v5642
  %v5659 = vadd.f32 %v5595, %v5643
  %v5660 = vadd.f32 %v5596, %v5644
  %v5661 = vadd.f32 %v5597, %v5645
  %v5662 = vadd.f32 %v5598, %v5646
  %v5663 = vadd.f32 %v5599, %v5647
  %v5664 = vadd.f32 %v5600, %v5648
  %v5665 = vadd.f32 %v5601, %v5649
  %v5666 = vadd.f32 %v5602, %v5650
  %v5667 = vlaneseq
  %v5668 = vshrl.u32 %v5667, 7
  %v5669 = vsub.s32 2, %v5668
  %v5670 = vrot.slane %v4807, %v5669
  %v5671 = vlaneseq
  %v5672 = vshrl.u32 %v5671, 7
  %v5673 = vsub.s32 2, %v5672
  %v5674 = vrot.slane %v4808, %v5673
  %v5675 = vlaneseq
  %v5676 = vshrl.u32 %v5675, 7
  %v5677 = vsub.s32 2, %v5676
  %v5678 = vrot.slane %v4809, %v5677
  %v5679 = vlaneseq
  %v5680 = vshrl.u32 %v5679, 7
  %v5681 = vsub.s32 2, %v5680
  %v5682 = vrot.slane %v4810, %v5681
  %v5683 = vlaneseq
  %v5684 = vshrl.u32 %v5683, 7
  %v5685 = vsub.s32 2, %v5684
  %v5686 = vrot.slane %v4811, %v5685
  %v5687 = vlaneseq
  %v5688 = vshrl.u32 %v5687, 7
  %v5689 = vsub.s32 2, %v5688
  %v5690 = vrot.slane %v4812, %v5689
  %v5691 = vlaneseq
  %v5692 = vshrl.u32 %v5691, 7
  %v5693 = vsub.s32 2, %v5692
  %v5694 = vrot.slane %v4813, %v5693
  %v5695 = vlaneseq
  %v5696 = vshrl.u32 %v5695, 7
  %v5697 = vsub.s32 2, %v5696
  %v5698 = vrot.slane %v4814, %v5697
  %v5699 = vmul.f32 %v4998, %v5670
  %v5700 = vmul.f32 %v5000, %v5674
  %v5701 = vmul.f32 %v5151, %v5678
  %v5702 = vmul.f32 %v5153, %v5682
  %v5703 = vmul.f32 %v5304, %v5686
  %v5704 = vmul.f32 %v5306, %v5690
  %v5705 = vmul.f32 %v5457, %v5694
  %v5706 = vmul.f32 %v5459, %v5698
  %v5707 = vmul.f32 %v5002, %v5670
  %v5708 = vmul.f32 %v5004, %v5674
  %v5709 = vmul.f32 %v5155, %v5678
  %v5710 = vmul.f32 %v5157, %v5682
  %v5711 = vmul.f32 %v5308, %v5686
  %v5712 = vmul.f32 %v5310, %v5690
  %v5713 = vmul.f32 %v5461, %v5694
  %v5714 = vmul.f32 %v5463, %v5698
  %v5715 = vadd.f32 %v5651, %v5699
  %v5716 = vadd.f32 %v5652, %v5700
  %v5717 = vadd.f32 %v5653, %v5701
  %v5718 = vadd.f32 %v5654, %v5702
  %v5719 = vadd.f32 %v5655, %v5703
  %v5720 = vadd.f32 %v5656, %v5704
  %v5721 = vadd.f32 %v5657, %v5705
  %v5722 = vadd.f32 %v5658, %v5706
  %v5723 = vadd.f32 %v5659, %v5707
  %v5724 = vadd.f32 %v5660, %v5708
  %v5725 = vadd.f32 %v5661, %v5709
  %v5726 = vadd.f32 %v5662, %v5710
  %v5727 = vadd.f32 %v5663, %v5711
  %v5728 = vadd.f32 %v5664, %v5712
  %v5729 = vadd.f32 %v5665, %v5713
  %v5730 = vadd.f32 %v5666, %v5714
  %v5731 = vlaneseq
  %v5732 = vshrl.u32 %v5731, 7
  %v5733 = vsub.s32 3, %v5732
  %v5734 = vrot.slane %v4807, %v5733
  %v5735 = vlaneseq
  %v5736 = vshrl.u32 %v5735, 7
  %v5737 = vsub.s32 3, %v5736
  %v5738 = vrot.slane %v4808, %v5737
  %v5739 = vlaneseq
  %v5740 = vshrl.u32 %v5739, 7
  %v5741 = vsub.s32 3, %v5740
  %v5742 = vrot.slane %v4809, %v5741
  %v5743 = vlaneseq
  %v5744 = vshrl.u32 %v5743, 7
  %v5745 = vsub.s32 3, %v5744
  %v5746 = vrot.slane %v4810, %v5745
  %v5747 = vlaneseq
  %v5748 = vshrl.u32 %v5747, 7
  %v5749 = vsub.s32 3, %v5748
  %v5750 = vrot.slane %v4811, %v5749
  %v5751 = vlaneseq
  %v5752 = vshrl.u32 %v5751, 7
  %v5753 = vsub.s32 3, %v5752
  %v5754 = vrot.slane %v4812, %v5753
  %v5755 = vlaneseq
  %v5756 = vshrl.u32 %v5755, 7
  %v5757 = vsub.s32 3, %v5756
  %v5758 = vrot.slane %v4813, %v5757
  %v5759 = vlaneseq
  %v5760 = vshrl.u32 %v5759, 7
  %v5761 = vsub.s32 3, %v5760
  %v5762 = vrot.slane %v4814, %v5761
  %v5763 = vmul.f32 %v5008, %v5734
  %v5764 = vmul.f32 %v5010, %v5738
  %v5765 = vmul.f32 %v5161, %v5742
  %v5766 = vmul.f32 %v5163, %v5746
  %v5767 = vmul.f32 %v5314, %v5750
  %v5768 = vmul.f32 %v5316, %v5754
  %v5769 = vmul.f32 %v5467, %v5758
  %v5770 = vmul.f32 %v5469, %v5762
  %v5771 = vmul.f32 %v5012, %v5734
  %v5772 = vmul.f32 %v5014, %v5738
  %v5773 = vmul.f32 %v5165, %v5742
  %v5774 = vmul.f32 %v5167, %v5746
  %v5775 = vmul.f32 %v5318, %v5750
  %v5776 = vmul.f32 %v5320, %v5754
  %v5777 = vmul.f32 %v5471, %v5758
  %v5778 = vmul.f32 %v5473, %v5762
  %v5779 = vadd.f32 %v5715, %v5763
  %v5780 = vadd.f32 %v5716, %v5764
  %v5781 = vadd.f32 %v5717, %v5765
  %v5782 = vadd.f32 %v5718, %v5766
  %v5783 = vadd.f32 %v5719, %v5767
  %v5784 = vadd.f32 %v5720, %v5768
  %v5785 = vadd.f32 %v5721, %v5769
  %v5786 = vadd.f32 %v5722, %v5770
  %v5787 = vadd.f32 %v5723, %v5771
  %v5788 = vadd.f32 %v5724, %v5772
  %v5789 = vadd.f32 %v5725, %v5773
  %v5790 = vadd.f32 %v5726, %v5774
  %v5791 = vadd.f32 %v5727, %v5775
  %v5792 = vadd.f32 %v5728, %v5776
  %v5793 = vadd.f32 %v5729, %v5777
  %v5794 = vadd.f32 %v5730, %v5778
  %v5795 = vlaneseq
  %v5796 = vshrl.u32 %v5795, 7
  %v5797 = vsub.s32 4, %v5796
  %v5798 = vrot.slane %v4807, %v5797
  %v5799 = vlaneseq
  %v5800 = vshrl.u32 %v5799, 7
  %v5801 = vsub.s32 4, %v5800
  %v5802 = vrot.slane %v4808, %v5801
  %v5803 = vlaneseq
  %v5804 = vshrl.u32 %v5803, 7
  %v5805 = vsub.s32 4, %v5804
  %v5806 = vrot.slane %v4809, %v5805
  %v5807 = vlaneseq
  %v5808 = vshrl.u32 %v5807, 7
  %v5809 = vsub.s32 4, %v5808
  %v5810 = vrot.slane %v4810, %v5809
  %v5811 = vlaneseq
  %v5812 = vshrl.u32 %v5811, 7
  %v5813 = vsub.s32 4, %v5812
  %v5814 = vrot.slane %v4811, %v5813
  %v5815 = vlaneseq
  %v5816 = vshrl.u32 %v5815, 7
  %v5817 = vsub.s32 4, %v5816
  %v5818 = vrot.slane %v4812, %v5817
  %v5819 = vlaneseq
  %v5820 = vshrl.u32 %v5819, 7
  %v5821 = vsub.s32 4, %v5820
  %v5822 = vrot.slane %v4813, %v5821
  %v5823 = vlaneseq
  %v5824 = vshrl.u32 %v5823, 7
  %v5825 = vsub.s32 4, %v5824
  %v5826 = vrot.slane %v4814, %v5825
  %v5827 = vmul.f32 %v5018, %v5798
  %v5828 = vmul.f32 %v5020, %v5802
  %v5829 = vmul.f32 %v5171, %v5806
  %v5830 = vmul.f32 %v5173, %v5810
  %v5831 = vmul.f32 %v5324, %v5814
  %v5832 = vmul.f32 %v5326, %v5818
  %v5833 = vmul.f32 %v5477, %v5822
  %v5834 = vmul.f32 %v5479, %v5826
  %v5835 = vmul.f32 %v5022, %v5798
  %v5836 = vmul.f32 %v5024, %v5802
  %v5837 = vmul.f32 %v5175, %v5806
  %v5838 = vmul.f32 %v5177, %v5810
  %v5839 = vmul.f32 %v5328, %v5814
  %v5840 = vmul.f32 %v5330, %v5818
  %v5841 = vmul.f32 %v5481, %v5822
  %v5842 = vmul.f32 %v5483, %v5826
  %v5843 = vadd.f32 %v5779, %v5827
  %v5844 = vadd.f32 %v5780, %v5828
  %v5845 = vadd.f32 %v5781, %v5829
  %v5846 = vadd.f32 %v5782, %v5830
  %v5847 = vadd.f32 %v5783, %v5831
  %v5848 = vadd.f32 %v5784, %v5832
  %v5849 = vadd.f32 %v5785, %v5833
  %v5850 = vadd.f32 %v5786, %v5834
  %v5851 = vadd.f32 %v5787, %v5835
  %v5852 = vadd.f32 %v5788, %v5836
  %v5853 = vadd.f32 %v5789, %v5837
  %v5854 = vadd.f32 %v5790, %v5838
  %v5855 = vadd.f32 %v5791, %v5839
  %v5856 = vadd.f32 %v5792, %v5840
  %v5857 = vadd.f32 %v5793, %v5841
  %v5858 = vadd.f32 %v5794, %v5842
  %v5859 = vlaneseq
  %v5860 = vshrl.u32 %v5859, 7
  %v5861 = vsub.s32 5, %v5860
  %v5862 = vrot.slane %v4807, %v5861
  %v5863 = vlaneseq
  %v5864 = vshrl.u32 %v5863, 7
  %v5865 = vsub.s32 5, %v5864
  %v5866 = vrot.slane %v4808, %v5865
  %v5867 = vlaneseq
  %v5868 = vshrl.u32 %v5867, 7
  %v5869 = vsub.s32 5, %v5868
  %v5870 = vrot.slane %v4809, %v5869
  %v5871 = vlaneseq
  %v5872 = vshrl.u32 %v5871, 7
  %v5873 = vsub.s32 5, %v5872
  %v5874 = vrot.slane %v4810, %v5873
  %v5875 = vlaneseq
  %v5876 = vshrl.u32 %v5875, 7
  %v5877 = vsub.s32 5, %v5876
  %v5878 = vrot.slane %v4811, %v5877
  %v5879 = vlaneseq
  %v5880 = vshrl.u32 %v5879, 7
  %v5881 = vsub.s32 5, %v5880
  %v5882 = vrot.slane %v4812, %v5881
  %v5883 = vlaneseq
  %v5884 = vshrl.u32 %v5883, 7
  %v5885 = vsub.s32 5, %v5884
  %v5886 = vrot.slane %v4813, %v5885
  %v5887 = vlaneseq
  %v5888 = vshrl.u32 %v5887, 7
  %v5889 = vsub.s32 5, %v5888
  %v5890 = vrot.slane %v4814, %v5889
  %v5891 = vmul.f32 %v5028, %v5862
  %v5892 = vmul.f32 %v5030, %v5866
  %v5893 = vmul.f32 %v5181, %v5870
  %v5894 = vmul.f32 %v5183, %v5874
  %v5895 = vmul.f32 %v5334, %v5878
  %v5896 = vmul.f32 %v5336, %v5882
  %v5897 = vmul.f32 %v5487, %v5886
  %v5898 = vmul.f32 %v5489, %v5890
  %v5899 = vmul.f32 %v5032, %v5862
  %v5900 = vmul.f32 %v5034, %v5866
  %v5901 = vmul.f32 %v5185, %v5870
  %v5902 = vmul.f32 %v5187, %v5874
  %v5903 = vmul.f32 %v5338, %v5878
  %v5904 = vmul.f32 %v5340, %v5882
  %v5905 = vmul.f32 %v5491, %v5886
  %v5906 = vmul.f32 %v5493, %v5890
  %v5907 = vadd.f32 %v5843, %v5891
  %v5908 = vadd.f32 %v5844, %v5892
  %v5909 = vadd.f32 %v5845, %v5893
  %v5910 = vadd.f32 %v5846, %v5894
  %v5911 = vadd.f32 %v5847, %v5895
  %v5912 = vadd.f32 %v5848, %v5896
  %v5913 = vadd.f32 %v5849, %v5897
  %v5914 = vadd.f32 %v5850, %v5898
  %v5915 = vadd.f32 %v5851, %v5899
  %v5916 = vadd.f32 %v5852, %v5900
  %v5917 = vadd.f32 %v5853, %v5901
  %v5918 = vadd.f32 %v5854, %v5902
  %v5919 = vadd.f32 %v5855, %v5903
  %v5920 = vadd.f32 %v5856, %v5904
  %v5921 = vadd.f32 %v5857, %v5905
  %v5922 = vadd.f32 %v5858, %v5906
  %v5923 = vlaneseq
  %v5924 = vshrl.u32 %v5923, 7
  %v5925 = vsub.s32 6, %v5924
  %v5926 = vrot.slane %v4807, %v5925
  %v5927 = vlaneseq
  %v5928 = vshrl.u32 %v5927, 7
  %v5929 = vsub.s32 6, %v5928
  %v5930 = vrot.slane %v4808, %v5929
  %v5931 = vlaneseq
  %v5932 = vshrl.u32 %v5931, 7
  %v5933 = vsub.s32 6, %v5932
  %v5934 = vrot.slane %v4809, %v5933
  %v5935 = vlaneseq
  %v5936 = vshrl.u32 %v5935, 7
  %v5937 = vsub.s32 6, %v5936
  %v5938 = vrot.slane %v4810, %v5937
  %v5939 = vlaneseq
  %v5940 = vshrl.u32 %v5939, 7
  %v5941 = vsub.s32 6, %v5940
  %v5942 = vrot.slane %v4811, %v5941
  %v5943 = vlaneseq
  %v5944 = vshrl.u32 %v5943, 7
  %v5945 = vsub.s32 6, %v5944
  %v5946 = vrot.slane %v4812, %v5945
  %v5947 = vlaneseq
  %v5948 = vshrl.u32 %v5947, 7
  %v5949 = vsub.s32 6, %v5948
  %v5950 = vrot.slane %v4813, %v5949
  %v5951 = vlaneseq
  %v5952 = vshrl.u32 %v5951, 7
  %v5953 = vsub.s32 6, %v5952
  %v5954 = vrot.slane %v4814, %v5953
  %v5955 = vmul.f32 %v5038, %v5926
  %v5956 = vmul.f32 %v5040, %v5930
  %v5957 = vmul.f32 %v5191, %v5934
  %v5958 = vmul.f32 %v5193, %v5938
  %v5959 = vmul.f32 %v5344, %v5942
  %v5960 = vmul.f32 %v5346, %v5946
  %v5961 = vmul.f32 %v5497, %v5950
  %v5962 = vmul.f32 %v5499, %v5954
  %v5963 = vmul.f32 %v5042, %v5926
  %v5964 = vmul.f32 %v5044, %v5930
  %v5965 = vmul.f32 %v5195, %v5934
  %v5966 = vmul.f32 %v5197, %v5938
  %v5967 = vmul.f32 %v5348, %v5942
  %v5968 = vmul.f32 %v5350, %v5946
  %v5969 = vmul.f32 %v5501, %v5950
  %v5970 = vmul.f32 %v5503, %v5954
  %v5971 = vadd.f32 %v5907, %v5955
  %v5972 = vadd.f32 %v5908, %v5956
  %v5973 = vadd.f32 %v5909, %v5957
  %v5974 = vadd.f32 %v5910, %v5958
  %v5975 = vadd.f32 %v5911, %v5959
  %v5976 = vadd.f32 %v5912, %v5960
  %v5977 = vadd.f32 %v5913, %v5961
  %v5978 = vadd.f32 %v5914, %v5962
  %v5979 = vadd.f32 %v5915, %v5963
  %v5980 = vadd.f32 %v5916, %v5964
  %v5981 = vadd.f32 %v5917, %v5965
  %v5982 = vadd.f32 %v5918, %v5966
  %v5983 = vadd.f32 %v5919, %v5967
  %v5984 = vadd.f32 %v5920, %v5968
  %v5985 = vadd.f32 %v5921, %v5969
  %v5986 = vadd.f32 %v5922, %v5970
  %v5987 = vlaneseq
  %v5988 = vshrl.u32 %v5987, 7
  %v5989 = vsub.s32 7, %v5988
  %v5990 = vrot.slane %v4807, %v5989
  %v5991 = vlaneseq
  %v5992 = vshrl.u32 %v5991, 7
  %v5993 = vsub.s32 7, %v5992
  %v5994 = vrot.slane %v4808, %v5993
  %v5995 = vlaneseq
  %v5996 = vshrl.u32 %v5995, 7
  %v5997 = vsub.s32 7, %v5996
  %v5998 = vrot.slane %v4809, %v5997
  %v5999 = vlaneseq
  %v6000 = vshrl.u32 %v5999, 7
  %v6001 = vsub.s32 7, %v6000
  %v6002 = vrot.slane %v4810, %v6001
  %v6003 = vlaneseq
  %v6004 = vshrl.u32 %v6003, 7
  %v6005 = vsub.s32 7, %v6004
  %v6006 = vrot.slane %v4811, %v6005
  %v6007 = vlaneseq
  %v6008 = vshrl.u32 %v6007, 7
  %v6009 = vsub.s32 7, %v6008
  %v6010 = vrot.slane %v4812, %v6009
  %v6011 = vlaneseq
  %v6012 = vshrl.u32 %v6011, 7
  %v6013 = vsub.s32 7, %v6012
  %v6014 = vrot.slane %v4813, %v6013
  %v6015 = vlaneseq
  %v6016 = vshrl.u32 %v6015, 7
  %v6017 = vsub.s32 7, %v6016
  %v6018 = vrot.slane %v4814, %v6017
  %v6019 = vmul.f32 %v5048, %v5990
  %v6020 = vmul.f32 %v5050, %v5994
  %v6021 = vmul.f32 %v5201, %v5998
  %v6022 = vmul.f32 %v5203, %v6002
  %v6023 = vmul.f32 %v5354, %v6006
  %v6024 = vmul.f32 %v5356, %v6010
  %v6025 = vmul.f32 %v5507, %v6014
  %v6026 = vmul.f32 %v5509, %v6018
  %v6027 = vmul.f32 %v5052, %v5990
  %v6028 = vmul.f32 %v5054, %v5994
  %v6029 = vmul.f32 %v5205, %v5998
  %v6030 = vmul.f32 %v5207, %v6002
  %v6031 = vmul.f32 %v5358, %v6006
  %v6032 = vmul.f32 %v5360, %v6010
  %v6033 = vmul.f32 %v5511, %v6014
  %v6034 = vmul.f32 %v5513, %v6018
  %v6035 = vadd.f32 %v5971, %v6019
  %v6036 = vadd.f32 %v5972, %v6020
  %v6037 = vadd.f32 %v5973, %v6021
  %v6038 = vadd.f32 %v5974, %v6022
  %v6039 = vadd.f32 %v5975, %v6023
  %v6040 = vadd.f32 %v5976, %v6024
  %v6041 = vadd.f32 %v5977, %v6025
  %v6042 = vadd.f32 %v5978, %v6026
  %v6043 = vadd.f32 %v5979, %v6027
  %v6044 = vadd.f32 %v5980, %v6028
  %v6045 = vadd.f32 %v5981, %v6029
  %v6046 = vadd.f32 %v5982, %v6030
  %v6047 = vadd.f32 %v5983, %v6031
  %v6048 = vadd.f32 %v5984, %v6032
  %v6049 = vadd.f32 %v5985, %v6033
  %v6050 = vadd.f32 %v5986, %v6034
  %v6051 = vlaneseq
  %v6052 = vshrl.u32 %v6051, 7
  %v6053 = vsub.s32 0, %v6052
  %v6054 = vrot.slane %v4815, %v6053
  %v6055 = vlaneseq
  %v6056 = vshrl.u32 %v6055, 7
  %v6057 = vsub.s32 0, %v6056
  %v6058 = vrot.slane %v4816, %v6057
  %v6059 = vlaneseq
  %v6060 = vshrl.u32 %v6059, 7
  %v6061 = vsub.s32 0, %v6060
  %v6062 = vrot.slane %v4817, %v6061
  %v6063 = vlaneseq
  %v6064 = vshrl.u32 %v6063, 7
  %v6065 = vsub.s32 0, %v6064
  %v6066 = vrot.slane %v4818, %v6065
  %v6067 = vlaneseq
  %v6068 = vshrl.u32 %v6067, 7
  %v6069 = vsub.s32 0, %v6068
  %v6070 = vrot.slane %v4819, %v6069
  %v6071 = vlaneseq
  %v6072 = vshrl.u32 %v6071, 7
  %v6073 = vsub.s32 0, %v6072
  %v6074 = vrot.slane %v4820, %v6073
  %v6075 = vlaneseq
  %v6076 = vshrl.u32 %v6075, 7
  %v6077 = vsub.s32 0, %v6076
  %v6078 = vrot.slane %v4821, %v6077
  %v6079 = vlaneseq
  %v6080 = vshrl.u32 %v6079, 7
  %v6081 = vsub.s32 0, %v6080
  %v6082 = vrot.slane %v4822, %v6081
  %v6083 = vmul.f32 %v5058, %v6054
  %v6084 = vmul.f32 %v5060, %v6058
  %v6085 = vmul.f32 %v5211, %v6062
  %v6086 = vmul.f32 %v5213, %v6066
  %v6087 = vmul.f32 %v5364, %v6070
  %v6088 = vmul.f32 %v5366, %v6074
  %v6089 = vmul.f32 %v5517, %v6078
  %v6090 = vmul.f32 %v5519, %v6082
  %v6091 = vmul.f32 %v5062, %v6054
  %v6092 = vmul.f32 %v5064, %v6058
  %v6093 = vmul.f32 %v5215, %v6062
  %v6094 = vmul.f32 %v5217, %v6066
  %v6095 = vmul.f32 %v5368, %v6070
  %v6096 = vmul.f32 %v5370, %v6074
  %v6097 = vmul.f32 %v5521, %v6078
  %v6098 = vmul.f32 %v5523, %v6082
  %v6099 = vadd.f32 %v6035, %v6083
  %v6100 = vadd.f32 %v6036, %v6084
  %v6101 = vadd.f32 %v6037, %v6085
  %v6102 = vadd.f32 %v6038, %v6086
  %v6103 = vadd.f32 %v6039, %v6087
  %v6104 = vadd.f32 %v6040, %v6088
  %v6105 = vadd.f32 %v6041, %v6089
  %v6106 = vadd.f32 %v6042, %v6090
  %v6107 = vadd.f32 %v6043, %v6091
  %v6108 = vadd.f32 %v6044, %v6092
  %v6109 = vadd.f32 %v6045, %v6093
  %v6110 = vadd.f32 %v6046, %v6094
  %v6111 = vadd.f32 %v6047, %v6095
  %v6112 = vadd.f32 %v6048, %v6096
  %v6113 = vadd.f32 %v6049, %v6097
  %v6114 = vadd.f32 %v6050, %v6098
  %v6115 = vlaneseq
  %v6116 = vshrl.u32 %v6115, 7
  %v6117 = vsub.s32 1, %v6116
  %v6118 = vrot.slane %v4815, %v6117
  %v6119 = vlaneseq
  %v6120 = vshrl.u32 %v6119, 7
  %v6121 = vsub.s32 1, %v6120
  %v6122 = vrot.slane %v4816, %v6121
  %v6123 = vlaneseq
  %v6124 = vshrl.u32 %v6123, 7
  %v6125 = vsub.s32 1, %v6124
  %v6126 = vrot.slane %v4817, %v6125
  %v6127 = vlaneseq
  %v6128 = vshrl.u32 %v6127, 7
  %v6129 = vsub.s32 1, %v6128
  %v6130 = vrot.slane %v4818, %v6129
  %v6131 = vlaneseq
  %v6132 = vshrl.u32 %v6131, 7
  %v6133 = vsub.s32 1, %v6132
  %v6134 = vrot.slane %v4819, %v6133
  %v6135 = vlaneseq
  %v6136 = vshrl.u32 %v6135, 7
  %v6137 = vsub.s32 1, %v6136
  %v6138 = vrot.slane %v4820, %v6137
  %v6139 = vlaneseq
  %v6140 = vshrl.u32 %v6139, 7
  %v6141 = vsub.s32 1, %v6140
  %v6142 = vrot.slane %v4821, %v6141
  %v6143 = vlaneseq
  %v6144 = vshrl.u32 %v6143, 7
  %v6145 = vsub.s32 1, %v6144
  %v6146 = vrot.slane %v4822, %v6145
  %v6147 = vmul.f32 %v5068, %v6118
  %v6148 = vmul.f32 %v5070, %v6122
  %v6149 = vmul.f32 %v5221, %v6126
  %v6150 = vmul.f32 %v5223, %v6130
  %v6151 = vmul.f32 %v5374, %v6134
  %v6152 = vmul.f32 %v5376, %v6138
  %v6153 = vmul.f32 %v5527, %v6142
  %v6154 = vmul.f32 %v5529, %v6146
  %v6155 = vmul.f32 %v5072, %v6118
  %v6156 = vmul.f32 %v5074, %v6122
  %v6157 = vmul.f32 %v5225, %v6126
  %v6158 = vmul.f32 %v5227, %v6130
  %v6159 = vmul.f32 %v5378, %v6134
  %v6160 = vmul.f32 %v5380, %v6138
  %v6161 = vmul.f32 %v5531, %v6142
  %v6162 = vmul.f32 %v5533, %v6146
  %v6163 = vadd.f32 %v6099, %v6147
  %v6164 = vadd.f32 %v6100, %v6148
  %v6165 = vadd.f32 %v6101, %v6149
  %v6166 = vadd.f32 %v6102, %v6150
  %v6167 = vadd.f32 %v6103, %v6151
  %v6168 = vadd.f32 %v6104, %v6152
  %v6169 = vadd.f32 %v6105, %v6153
  %v6170 = vadd.f32 %v6106, %v6154
  %v6171 = vadd.f32 %v6107, %v6155
  %v6172 = vadd.f32 %v6108, %v6156
  %v6173 = vadd.f32 %v6109, %v6157
  %v6174 = vadd.f32 %v6110, %v6158
  %v6175 = vadd.f32 %v6111, %v6159
  %v6176 = vadd.f32 %v6112, %v6160
  %v6177 = vadd.f32 %v6113, %v6161
  %v6178 = vadd.f32 %v6114, %v6162
  %v6179 = vlaneseq
  %v6180 = vshrl.u32 %v6179, 7
  %v6181 = vsub.s32 2, %v6180
  %v6182 = vrot.slane %v4815, %v6181
  %v6183 = vlaneseq
  %v6184 = vshrl.u32 %v6183, 7
  %v6185 = vsub.s32 2, %v6184
  %v6186 = vrot.slane %v4816, %v6185
  %v6187 = vlaneseq
  %v6188 = vshrl.u32 %v6187, 7
  %v6189 = vsub.s32 2, %v6188
  %v6190 = vrot.slane %v4817, %v6189
  %v6191 = vlaneseq
  %v6192 = vshrl.u32 %v6191, 7
  %v6193 = vsub.s32 2, %v6192
  %v6194 = vrot.slane %v4818, %v6193
  %v6195 = vlaneseq
  %v6196 = vshrl.u32 %v6195, 7
  %v6197 = vsub.s32 2, %v6196
  %v6198 = vrot.slane %v4819, %v6197
  %v6199 = vlaneseq
  %v6200 = vshrl.u32 %v6199, 7
  %v6201 = vsub.s32 2, %v6200
  %v6202 = vrot.slane %v4820, %v6201
  %v6203 = vlaneseq
  %v6204 = vshrl.u32 %v6203, 7
  %v6205 = vsub.s32 2, %v6204
  %v6206 = vrot.slane %v4821, %v6205
  %v6207 = vlaneseq
  %v6208 = vshrl.u32 %v6207, 7
  %v6209 = vsub.s32 2, %v6208
  %v6210 = vrot.slane %v4822, %v6209
  %v6211 = vmul.f32 %v5078, %v6182
  %v6212 = vmul.f32 %v5080, %v6186
  %v6213 = vmul.f32 %v5231, %v6190
  %v6214 = vmul.f32 %v5233, %v6194
  %v6215 = vmul.f32 %v5384, %v6198
  %v6216 = vmul.f32 %v5386, %v6202
  %v6217 = vmul.f32 %v5537, %v6206
  %v6218 = vmul.f32 %v5539, %v6210
  %v6219 = vmul.f32 %v5082, %v6182
  %v6220 = vmul.f32 %v5084, %v6186
  %v6221 = vmul.f32 %v5235, %v6190
  %v6222 = vmul.f32 %v5237, %v6194
  %v6223 = vmul.f32 %v5388, %v6198
  %v6224 = vmul.f32 %v5390, %v6202
  %v6225 = vmul.f32 %v5541, %v6206
  %v6226 = vmul.f32 %v5543, %v6210
  %v6227 = vadd.f32 %v6163, %v6211
  %v6228 = vadd.f32 %v6164, %v6212
  %v6229 = vadd.f32 %v6165, %v6213
  %v6230 = vadd.f32 %v6166, %v6214
  %v6231 = vadd.f32 %v6167, %v6215
  %v6232 = vadd.f32 %v6168, %v6216
  %v6233 = vadd.f32 %v6169, %v6217
  %v6234 = vadd.f32 %v6170, %v6218
  %v6235 = vadd.f32 %v6171, %v6219
  %v6236 = vadd.f32 %v6172, %v6220
  %v6237 = vadd.f32 %v6173, %v6221
  %v6238 = vadd.f32 %v6174, %v6222
  %v6239 = vadd.f32 %v6175, %v6223
  %v6240 = vadd.f32 %v6176, %v6224
  %v6241 = vadd.f32 %v6177, %v6225
  %v6242 = vadd.f32 %v6178, %v6226
  %v6243 = vlaneseq
  %v6244 = vshrl.u32 %v6243, 7
  %v6245 = vsub.s32 3, %v6244
  %v6246 = vrot.slane %v4815, %v6245
  %v6247 = vlaneseq
  %v6248 = vshrl.u32 %v6247, 7
  %v6249 = vsub.s32 3, %v6248
  %v6250 = vrot.slane %v4816, %v6249
  %v6251 = vlaneseq
  %v6252 = vshrl.u32 %v6251, 7
  %v6253 = vsub.s32 3, %v6252
  %v6254 = vrot.slane %v4817, %v6253
  %v6255 = vlaneseq
  %v6256 = vshrl.u32 %v6255, 7
  %v6257 = vsub.s32 3, %v6256
  %v6258 = vrot.slane %v4818, %v6257
  %v6259 = vlaneseq
  %v6260 = vshrl.u32 %v6259, 7
  %v6261 = vsub.s32 3, %v6260
  %v6262 = vrot.slane %v4819, %v6261
  %v6263 = vlaneseq
  %v6264 = vshrl.u32 %v6263, 7
  %v6265 = vsub.s32 3, %v6264
  %v6266 = vrot.slane %v4820, %v6265
  %v6267 = vlaneseq
  %v6268 = vshrl.u32 %v6267, 7
  %v6269 = vsub.s32 3, %v6268
  %v6270 = vrot.slane %v4821, %v6269
  %v6271 = vlaneseq
  %v6272 = vshrl.u32 %v6271, 7
  %v6273 = vsub.s32 3, %v6272
  %v6274 = vrot.slane %v4822, %v6273
  %v6275 = vmul.f32 %v5088, %v6246
  %v6276 = vmul.f32 %v5090, %v6250
  %v6277 = vmul.f32 %v5241, %v6254
  %v6278 = vmul.f32 %v5243, %v6258
  %v6279 = vmul.f32 %v5394, %v6262
  %v6280 = vmul.f32 %v5396, %v6266
  %v6281 = vmul.f32 %v5547, %v6270
  %v6282 = vmul.f32 %v5549, %v6274
  %v6283 = vmul.f32 %v5092, %v6246
  %v6284 = vmul.f32 %v5094, %v6250
  %v6285 = vmul.f32 %v5245, %v6254
  %v6286 = vmul.f32 %v5247, %v6258
  %v6287 = vmul.f32 %v5398, %v6262
  %v6288 = vmul.f32 %v5400, %v6266
  %v6289 = vmul.f32 %v5551, %v6270
  %v6290 = vmul.f32 %v5553, %v6274
  %v6291 = vadd.f32 %v6227, %v6275
  %v6292 = vadd.f32 %v6228, %v6276
  %v6293 = vadd.f32 %v6229, %v6277
  %v6294 = vadd.f32 %v6230, %v6278
  %v6295 = vadd.f32 %v6231, %v6279
  %v6296 = vadd.f32 %v6232, %v6280
  %v6297 = vadd.f32 %v6233, %v6281
  %v6298 = vadd.f32 %v6234, %v6282
  %v6299 = vadd.f32 %v6235, %v6283
  %v6300 = vadd.f32 %v6236, %v6284
  %v6301 = vadd.f32 %v6237, %v6285
  %v6302 = vadd.f32 %v6238, %v6286
  %v6303 = vadd.f32 %v6239, %v6287
  %v6304 = vadd.f32 %v6240, %v6288
  %v6305 = vadd.f32 %v6241, %v6289
  %v6306 = vadd.f32 %v6242, %v6290
  %v6307 = vld [vmem:[%s8] sm:$0xff]
  %v6308 = vld [vmem:[%s8 + $0x8] sm:$0xff]
  %6310 = vset.pattern.permute.xlu0 0
  %6311 = vperm.xlu0 %6310, %v6307
  %v6312 = vpop.permute.xlu0 %6311
  %6315 = vset.pattern.permute.xlu0 0
  %6316 = vperm.xlu0 %6315, %v6308
  %v6317 = vpop.permute.xlu0 %6316
  %v6319 = vadd.f32 %v6291, %v6312
  %v6320 = vadd.f32 %v6292, %v6312
  %v6321 = vadd.f32 %v6293, %v6312
  %v6322 = vadd.f32 %v6294, %v6312
  %v6323 = vadd.f32 %v6295, %v6312
  %v6324 = vadd.f32 %v6296, %v6312
  %v6325 = vadd.f32 %v6297, %v6312
  %v6326 = vadd.f32 %v6298, %v6312
  %v6327 = vadd.f32 %v6299, %v6317
  %v6328 = vadd.f32 %v6300, %v6317
  %v6329 = vadd.f32 %v6301, %v6317
  %v6330 = vadd.f32 %v6302, %v6317
  %v6331 = vadd.f32 %v6303, %v6317
  %v6332 = vadd.f32 %v6304, %v6317
  %v6333 = vadd.f32 %v6305, %v6317
  %v6334 = vadd.f32 %v6306, %v6317
  %v6335 = vld [vmem:[%s9] sm:$0xff]
  %v6336 = vld [vmem:[%s9 + $0x8] sm:$0xff]
  %6338 = vset.pattern.permute.xlu0 0
  %6339 = vperm.xlu0 %6338, %v6335
  %v6340 = vpop.permute.xlu0 %6339
  %6343 = vset.pattern.permute.xlu0 0
  %6344 = vperm.xlu0 %6343, %v6336
  %v6345 = vpop.permute.xlu0 %6344
  %v6347 = vmul.f32 %v3295, %v6340
  %v6348 = vmul.f32 %v3296, %v6340
  %v6349 = vmul.f32 %v3297, %v6340
  %v6350 = vmul.f32 %v3298, %v6340
  %v6351 = vmul.f32 %v3299, %v6340
  %v6352 = vmul.f32 %v3300, %v6340
  %v6353 = vmul.f32 %v3301, %v6340
  %v6354 = vmul.f32 %v3302, %v6340
  %v6355 = vmul.f32 %v3303, %v6345
  %v6356 = vmul.f32 %v3304, %v6345
  %v6357 = vmul.f32 %v3305, %v6345
  %v6358 = vmul.f32 %v3306, %v6345
  %v6359 = vmul.f32 %v3307, %v6345
  %v6360 = vmul.f32 %v3308, %v6345
  %v6361 = vmul.f32 %v3309, %v6345
  %v6362 = vmul.f32 %v3310, %v6345
  %v6363 = vadd.f32 %v6347, %v6355
  %v6364 = vrot.slane %v6363, 4
  %v6365 = vadd.f32 %v6363, %v6364
  %v6366 = vrot.slane %v6365, 2
  %v6367 = vadd.f32 %v6365, %v6366
  %v6368 = vrot.slane %v6367, 1
  %v6369 = vadd.f32 %v6367, %v6368
  %v6370 = vadd.f32 %v6348, %v6356
  %v6371 = vrot.slane %v6370, 4
  %v6372 = vadd.f32 %v6370, %v6371
  %v6373 = vrot.slane %v6372, 2
  %v6374 = vadd.f32 %v6372, %v6373
  %v6375 = vrot.slane %v6374, 1
  %v6376 = vadd.f32 %v6374, %v6375
  %v6377 = vadd.f32 %v6349, %v6357
  %v6378 = vrot.slane %v6377, 4
  %v6379 = vadd.f32 %v6377, %v6378
  %v6380 = vrot.slane %v6379, 2
  %v6381 = vadd.f32 %v6379, %v6380
  %v6382 = vrot.slane %v6381, 1
  %v6383 = vadd.f32 %v6381, %v6382
  %v6384 = vadd.f32 %v6350, %v6358
  %v6385 = vrot.slane %v6384, 4
  %v6386 = vadd.f32 %v6384, %v6385
  %v6387 = vrot.slane %v6386, 2
  %v6388 = vadd.f32 %v6386, %v6387
  %v6389 = vrot.slane %v6388, 1
  %v6390 = vadd.f32 %v6388, %v6389
  %v6391 = vadd.f32 %v6351, %v6359
  %v6392 = vrot.slane %v6391, 4
  %v6393 = vadd.f32 %v6391, %v6392
  %v6394 = vrot.slane %v6393, 2
  %v6395 = vadd.f32 %v6393, %v6394
  %v6396 = vrot.slane %v6395, 1
  %v6397 = vadd.f32 %v6395, %v6396
  %v6398 = vadd.f32 %v6352, %v6360
  %v6399 = vrot.slane %v6398, 4
  %v6400 = vadd.f32 %v6398, %v6399
  %v6401 = vrot.slane %v6400, 2
  %v6402 = vadd.f32 %v6400, %v6401
  %v6403 = vrot.slane %v6402, 1
  %v6404 = vadd.f32 %v6402, %v6403
  %v6405 = vadd.f32 %v6353, %v6361
  %v6406 = vrot.slane %v6405, 4
  %v6407 = vadd.f32 %v6405, %v6406
  %v6408 = vrot.slane %v6407, 2
  %v6409 = vadd.f32 %v6407, %v6408
  %v6410 = vrot.slane %v6409, 1
  %v6411 = vadd.f32 %v6409, %v6410
  %v6412 = vadd.f32 %v6354, %v6362
  %v6413 = vrot.slane %v6412, 4
  %v6414 = vadd.f32 %v6412, %v6413
  %v6415 = vrot.slane %v6414, 2
  %v6416 = vadd.f32 %v6414, %v6415
  %v6417 = vrot.slane %v6416, 1
  %v6418 = vadd.f32 %v6416, %v6417
  %v6419 = vld [vmem:[%s10] sm:$0xff]
  %v6420 = vld [vmem:[%s10 + $0x8] sm:$0xff]
  %6422 = vset.pattern.permute.xlu0 0
  %6423 = vperm.xlu0 %6422, %v6419
  %v6424 = vpop.permute.xlu0 %6423
  %6427 = vset.pattern.permute.xlu0 0
  %6428 = vperm.xlu0 %6427, %v6420
  %v6429 = vpop.permute.xlu0 %6428
  %v6431 = vmul.f32 %v4807, %v6424
  %v6432 = vmul.f32 %v4808, %v6424
  %v6433 = vmul.f32 %v4809, %v6424
  %v6434 = vmul.f32 %v4810, %v6424
  %v6435 = vmul.f32 %v4811, %v6424
  %v6436 = vmul.f32 %v4812, %v6424
  %v6437 = vmul.f32 %v4813, %v6424
  %v6438 = vmul.f32 %v4814, %v6424
  %v6439 = vmul.f32 %v4815, %v6429
  %v6440 = vmul.f32 %v4816, %v6429
  %v6441 = vmul.f32 %v4817, %v6429
  %v6442 = vmul.f32 %v4818, %v6429
  %v6443 = vmul.f32 %v4819, %v6429
  %v6444 = vmul.f32 %v4820, %v6429
  %v6445 = vmul.f32 %v4821, %v6429
  %v6446 = vmul.f32 %v4822, %v6429
  %v6447 = vadd.f32 %v6431, %v6439
  %v6448 = vrot.slane %v6447, 4
  %v6449 = vadd.f32 %v6447, %v6448
  %v6450 = vrot.slane %v6449, 2
  %v6451 = vadd.f32 %v6449, %v6450
  %v6452 = vrot.slane %v6451, 1
  %v6453 = vadd.f32 %v6451, %v6452
  %v6454 = vadd.f32 %v6432, %v6440
  %v6455 = vrot.slane %v6454, 4
  %v6456 = vadd.f32 %v6454, %v6455
  %v6457 = vrot.slane %v6456, 2
  %v6458 = vadd.f32 %v6456, %v6457
  %v6459 = vrot.slane %v6458, 1
  %v6460 = vadd.f32 %v6458, %v6459
  %v6461 = vadd.f32 %v6433, %v6441
  %v6462 = vrot.slane %v6461, 4
  %v6463 = vadd.f32 %v6461, %v6462
  %v6464 = vrot.slane %v6463, 2
  %v6465 = vadd.f32 %v6463, %v6464
  %v6466 = vrot.slane %v6465, 1
  %v6467 = vadd.f32 %v6465, %v6466
  %v6468 = vadd.f32 %v6434, %v6442
  %v6469 = vrot.slane %v6468, 4
  %v6470 = vadd.f32 %v6468, %v6469
  %v6471 = vrot.slane %v6470, 2
  %v6472 = vadd.f32 %v6470, %v6471
  %v6473 = vrot.slane %v6472, 1
  %v6474 = vadd.f32 %v6472, %v6473
  %v6475 = vadd.f32 %v6435, %v6443
  %v6476 = vrot.slane %v6475, 4
  %v6477 = vadd.f32 %v6475, %v6476
  %v6478 = vrot.slane %v6477, 2
  %v6479 = vadd.f32 %v6477, %v6478
  %v6480 = vrot.slane %v6479, 1
  %v6481 = vadd.f32 %v6479, %v6480
  %v6482 = vadd.f32 %v6436, %v6444
  %v6483 = vrot.slane %v6482, 4
  %v6484 = vadd.f32 %v6482, %v6483
  %v6485 = vrot.slane %v6484, 2
  %v6486 = vadd.f32 %v6484, %v6485
  %v6487 = vrot.slane %v6486, 1
  %v6488 = vadd.f32 %v6486, %v6487
  %v6489 = vadd.f32 %v6437, %v6445
  %v6490 = vrot.slane %v6489, 4
  %v6491 = vadd.f32 %v6489, %v6490
  %v6492 = vrot.slane %v6491, 2
  %v6493 = vadd.f32 %v6491, %v6492
  %v6494 = vrot.slane %v6493, 1
  %v6495 = vadd.f32 %v6493, %v6494
  %v6496 = vadd.f32 %v6438, %v6446
  %v6497 = vrot.slane %v6496, 4
  %v6498 = vadd.f32 %v6496, %v6497
  %v6499 = vrot.slane %v6498, 2
  %v6500 = vadd.f32 %v6498, %v6499
  %v6501 = vrot.slane %v6500, 1
  %v6502 = vadd.f32 %v6500, %v6501
  %v6503 = vadd.f32 %v6369, %v6453
  %v6504 = vadd.f32 %v6376, %v6460
  %v6505 = vadd.f32 %v6383, %v6467
  %v6506 = vadd.f32 %v6390, %v6474
  %v6507 = vadd.f32 %v6397, %v6481
  %v6508 = vadd.f32 %v6404, %v6488
  %v6509 = vadd.f32 %v6411, %v6495
  %v6510 = vadd.f32 %v6418, %v6502
  %v6511 = vld [vmem:[%s11] sm:$0xff]
  %v6512 = vld [vmem:[%s11 + $0x8] sm:$0xff]
  %6514 = vset.pattern.permute.xlu0 0
  %6515 = vperm.xlu0 %6514, %v6511
  %v6516 = vpop.permute.xlu0 %6515
  %6519 = vset.pattern.permute.xlu0 0
  %6520 = vperm.xlu0 %6519, %v6512
  %v6521 = vpop.permute.xlu0 %6520
  %v6523 = vmul.f32 %v6319, %v6516
  %v6524 = vmul.f32 %v6320, %v6516
  %v6525 = vmul.f32 %v6321, %v6516
  %v6526 = vmul.f32 %v6322, %v6516
  %v6527 = vmul.f32 %v6323, %v6516
  %v6528 = vmul.f32 %v6324, %v6516
  %v6529 = vmul.f32 %v6325, %v6516
  %v6530 = vmul.f32 %v6326, %v6516
  %v6531 = vmul.f32 %v6327, %v6521
  %v6532 = vmul.f32 %v6328, %v6521
  %v6533 = vmul.f32 %v6329, %v6521
  %v6534 = vmul.f32 %v6330, %v6521
  %v6535 = vmul.f32 %v6331, %v6521
  %v6536 = vmul.f32 %v6332, %v6521
  %v6537 = vmul.f32 %v6333, %v6521
  %v6538 = vmul.f32 %v6334, %v6521
  %v6539 = vadd.f32 %v6523, %v6531
  %v6540 = vrot.slane %v6539, 4
  %v6541 = vadd.f32 %v6539, %v6540
  %v6542 = vrot.slane %v6541, 2
  %v6543 = vadd.f32 %v6541, %v6542
  %v6544 = vrot.slane %v6543, 1
  %v6545 = vadd.f32 %v6543, %v6544
  %v6546 = vadd.f32 %v6524, %v6532
  %v6547 = vrot.slane %v6546, 4
  %v6548 = vadd.f32 %v6546, %v6547
  %v6549 = vrot.slane %v6548, 2
  %v6550 = vadd.f32 %v6548, %v6549
  %v6551 = vrot.slane %v6550, 1
  %v6552 = vadd.f32 %v6550, %v6551
  %v6553 = vadd.f32 %v6525, %v6533
  %v6554 = vrot.slane %v6553, 4
  %v6555 = vadd.f32 %v6553, %v6554
  %v6556 = vrot.slane %v6555, 2
  %v6557 = vadd.f32 %v6555, %v6556
  %v6558 = vrot.slane %v6557, 1
  %v6559 = vadd.f32 %v6557, %v6558
  %v6560 = vadd.f32 %v6526, %v6534
  %v6561 = vrot.slane %v6560, 4
  %v6562 = vadd.f32 %v6560, %v6561
  %v6563 = vrot.slane %v6562, 2
  %v6564 = vadd.f32 %v6562, %v6563
  %v6565 = vrot.slane %v6564, 1
  %v6566 = vadd.f32 %v6564, %v6565
  %v6567 = vadd.f32 %v6527, %v6535
  %v6568 = vrot.slane %v6567, 4
  %v6569 = vadd.f32 %v6567, %v6568
  %v6570 = vrot.slane %v6569, 2
  %v6571 = vadd.f32 %v6569, %v6570
  %v6572 = vrot.slane %v6571, 1
  %v6573 = vadd.f32 %v6571, %v6572
  %v6574 = vadd.f32 %v6528, %v6536
  %v6575 = vrot.slane %v6574, 4
  %v6576 = vadd.f32 %v6574, %v6575
  %v6577 = vrot.slane %v6576, 2
  %v6578 = vadd.f32 %v6576, %v6577
  %v6579 = vrot.slane %v6578, 1
  %v6580 = vadd.f32 %v6578, %v6579
  %v6581 = vadd.f32 %v6529, %v6537
  %v6582 = vrot.slane %v6581, 4
  %v6583 = vadd.f32 %v6581, %v6582
  %v6584 = vrot.slane %v6583, 2
  %v6585 = vadd.f32 %v6583, %v6584
  %v6586 = vrot.slane %v6585, 1
  %v6587 = vadd.f32 %v6585, %v6586
  %v6588 = vadd.f32 %v6530, %v6538
  %v6589 = vrot.slane %v6588, 4
  %v6590 = vadd.f32 %v6588, %v6589
  %v6591 = vrot.slane %v6590, 2
  %v6592 = vadd.f32 %v6590, %v6591
  %v6593 = vrot.slane %v6592, 1
  %v6594 = vadd.f32 %v6592, %v6593
  %v6595 = vadd.f32 %v6503, %v6545
  %v6596 = vadd.f32 %v6504, %v6552
  %v6597 = vadd.f32 %v6505, %v6559
  %v6598 = vadd.f32 %v6506, %v6566
  %v6599 = vadd.f32 %v6507, %v6573
  %v6600 = vadd.f32 %v6508, %v6580
  %v6601 = vadd.f32 %v6509, %v6587
  %v6602 = vadd.f32 %v6510, %v6594
  %v6603 = vadd.f32 %v6595, %v6596
  %v6604 = vadd.f32 %v6603, %v6597
  %v6605 = vadd.f32 %v6604, %v6598
  %v6606 = vadd.f32 %v6605, %v6599
  %v6607 = vadd.f32 %v6606, %v6600
  %v6608 = vadd.f32 %v6607, %v6601
  %v6609 = vadd.f32 %v6608, %v6602
  %v6610 = vld [vmem:[%s12] sm:$0xff]
  %v6611 = vld [vmem:[%s12 + $0x8] sm:$0xff]
  %v6612 = vld [vmem:[%s12 + $0x10] sm:$0xff]
  %v6613 = vld [vmem:[%s12 + $0x18] sm:$0xff]
  %v6614 = vld [vmem:[%s12 + $0x20] sm:$0xff]
  %v6615 = vld [vmem:[%s12 + $0x28] sm:$0xff]
  %v6616 = vld [vmem:[%s12 + $0x30] sm:$0xff]
  %v6617 = vld [vmem:[%s12 + $0x38] sm:$0xff]
  %v6618 = vld [vmem:[%s12 + $0x40] sm:$0xff]
  %v6619 = vld [vmem:[%s12 + $0x48] sm:$0xff]
  %v6620 = vld [vmem:[%s12 + $0x50] sm:$0xff]
  %v6621 = vld [vmem:[%s12 + $0x58] sm:$0xff]
  %v6622 = vld [vmem:[%s12 + $0x60] sm:$0xff]
  %v6623 = vld [vmem:[%s12 + $0x68] sm:$0xff]
  %v6624 = vld [vmem:[%s12 + $0x70] sm:$0xff]
  %v6625 = vld [vmem:[%s12 + $0x78] sm:$0xff]
  %v6626 = vld [vmem:[%s12 + $0x80] sm:$0xff]
  %v6627 = vld [vmem:[%s12 + $0x88] sm:$0xff]
  %v6628 = vld [vmem:[%s12 + $0x90] sm:$0xff]
  %v6629 = vld [vmem:[%s12 + $0x98] sm:$0xff]
  %v6630 = vld [vmem:[%s12 + $0xa0] sm:$0xff]
  %v6631 = vld [vmem:[%s12 + $0xa8] sm:$0xff]
  %v6632 = vld [vmem:[%s12 + $0xb0] sm:$0xff]
  %v6633 = vld [vmem:[%s12 + $0xb8] sm:$0xff]
  %v6634 = vld [vmem:[%s12 + $0xc0] sm:$0xff]
  %v6635 = vld [vmem:[%s12 + $0xc8] sm:$0xff]
  %v6636 = vld [vmem:[%s12 + $0xd0] sm:$0xff]
  %v6637 = vld [vmem:[%s12 + $0xd8] sm:$0xff]
  %v6638 = vld [vmem:[%s12 + $0xe0] sm:$0xff]
  %v6639 = vld [vmem:[%s12 + $0xe8] sm:$0xff]
  %v6640 = vld [vmem:[%s12 + $0xf0] sm:$0xff]
  %v6641 = vld [vmem:[%s12 + $0xf8] sm:$0xff]
  %v6642 = vld [vmem:[%s1] sm:$0xf]
  %v6643 = vld [vmem:[%s1 + $0x4] sm:$0xf]
  %v6644 = vld [vmem:[%s1 + $0x8] sm:$0xf]
  %v6645 = vld [vmem:[%s1 + $0xc] sm:$0xf]
  %v6646 = vld [vmem:[%s1 + $0x10] sm:$0xf]
  %v6647 = vld [vmem:[%s1 + $0x14] sm:$0xf]
  %v6648 = vld [vmem:[%s1 + $0x18] sm:$0xf]
  %v6649 = vld [vmem:[%s1 + $0x1c] sm:$0xf]
  %v6650 = vld [vmem:[%s1 + $0x20] sm:$0xf]
  %v6651 = vld [vmem:[%s1 + $0x24] sm:$0xf]
  %v6652 = vld [vmem:[%s1 + $0x28] sm:$0xf]
  %v6653 = vld [vmem:[%s1 + $0x2c] sm:$0xf]
  %v6654 = vld [vmem:[%s1 + $0x30] sm:$0xf]
  %v6655 = vld [vmem:[%s1 + $0x34] sm:$0xf]
  %v6656 = vld [vmem:[%s1 + $0x38] sm:$0xf]
  %v6657 = vld [vmem:[%s1 + $0x3c] sm:$0xf]
  %v6658 = vld [vmem:[%s1 + $0x40] sm:$0xf]
  %v6659 = vld [vmem:[%s1 + $0x44] sm:$0xf]
  %v6660 = vld [vmem:[%s1 + $0x48] sm:$0xf]
  %v6661 = vld [vmem:[%s1 + $0x4c] sm:$0xf]
  %v6662 = vld [vmem:[%s1 + $0x50] sm:$0xf]
  %v6663 = vld [vmem:[%s1 + $0x54] sm:$0xf]
  %v6664 = vld [vmem:[%s1 + $0x58] sm:$0xf]
  %v6665 = vld [vmem:[%s1 + $0x5c] sm:$0xf]
  %v6666 = vld [vmem:[%s1 + $0x60] sm:$0xf]
  %v6667 = vld [vmem:[%s1 + $0x64] sm:$0xf]
  %v6668 = vld [vmem:[%s13] sm:$0xff]
  %v6669 = vld [vmem:[%s13 + $0x8] sm:$0xff]
  %v6670 = vld [vmem:[%s13 + $0x10] sm:$0xff]
  %v6671 = vld [vmem:[%s13 + $0x18] sm:$0xff]
  %v6672 = vld [vmem:[%s13 + $0x20] sm:$0xff]
  %v6673 = vld [vmem:[%s13 + $0x28] sm:$0xff]
  %v6674 = vld [vmem:[%s13 + $0x30] sm:$0xff]
  %v6675 = vld [vmem:[%s13 + $0x38] sm:$0xff]
  %v6676 = vld [vmem:[%s13 + $0x40] sm:$0xff]
  %v6677 = vld [vmem:[%s13 + $0x48] sm:$0xff]
  %v6678 = vld [vmem:[%s13 + $0x50] sm:$0xff]
  %v6679 = vld [vmem:[%s13 + $0x58] sm:$0xff]
  %v6680 = vld [vmem:[%s13 + $0x60] sm:$0xff]
  %v6681 = vld [vmem:[%s13 + $0x68] sm:$0xff]
  %v6682 = vld [vmem:[%s13 + $0x70] sm:$0xff]
  %v6683 = vld [vmem:[%s13 + $0x78] sm:$0xff]
  %v6684 = vld [vmem:[%s13 + $0x80] sm:$0xff]
  %v6685 = vld [vmem:[%s13 + $0x88] sm:$0xff]
  %v6686 = vld [vmem:[%s13 + $0x90] sm:$0xff]
  %v6687 = vld [vmem:[%s13 + $0x98] sm:$0xff]
  %v6688 = vld [vmem:[%s13 + $0xa0] sm:$0xff]
  %v6689 = vld [vmem:[%s13 + $0xa8] sm:$0xff]
  %v6690 = vld [vmem:[%s13 + $0xb0] sm:$0xff]
  %v6691 = vld [vmem:[%s13 + $0xb8] sm:$0xff]
  %v6692 = vld [vmem:[%s13 + $0xc0] sm:$0xff]
  %v6693 = vld [vmem:[%s13 + $0xc8] sm:$0xff]
  %v6694 = vld [vmem:[%s13 + $0xd0] sm:$0xff]
  %v6695 = vld [vmem:[%s13 + $0xd8] sm:$0xff]
  %v6696 = vld [vmem:[%s13 + $0xe0] sm:$0xff]
  %v6697 = vld [vmem:[%s13 + $0xe8] sm:$0xff]
  %v6698 = vld [vmem:[%s13 + $0xf0] sm:$0xff]
  %v6699 = vld [vmem:[%s13 + $0xf8] sm:$0xff]
  %6701 = vset.pattern.permute.xlu0 0
  %6702 = vperm.xlu0 %6701, %v6668
  %v6703 = vpop.permute.xlu0 %6702
  %6706 = vset.pattern.permute.xlu0 0
  %6707 = vperm.xlu0 %6706, %v6669
  %v6708 = vpop.permute.xlu0 %6707
  %6711 = vset.pattern.permute.xlu0 0
  %6712 = vperm.xlu0 %6711, %v6670
  %v6713 = vpop.permute.xlu0 %6712
  %6716 = vset.pattern.permute.xlu0 0
  %6717 = vperm.xlu0 %6716, %v6671
  %v6718 = vpop.permute.xlu0 %6717
  %6721 = vset.pattern.permute.xlu0 0
  %6722 = vperm.xlu0 %6721, %v6672
  %v6723 = vpop.permute.xlu0 %6722
  %6726 = vset.pattern.permute.xlu0 0
  %6727 = vperm.xlu0 %6726, %v6673
  %v6728 = vpop.permute.xlu0 %6727
  %6731 = vset.pattern.permute.xlu0 0
  %6732 = vperm.xlu0 %6731, %v6674
  %v6733 = vpop.permute.xlu0 %6732
  %6736 = vset.pattern.permute.xlu0 0
  %6737 = vperm.xlu0 %6736, %v6675
  %v6738 = vpop.permute.xlu0 %6737
  %6741 = vset.pattern.permute.xlu0 0
  %6742 = vperm.xlu0 %6741, %v6676
  %v6743 = vpop.permute.xlu0 %6742
  %6746 = vset.pattern.permute.xlu0 0
  %6747 = vperm.xlu0 %6746, %v6677
  %v6748 = vpop.permute.xlu0 %6747
  %6751 = vset.pattern.permute.xlu0 0
  %6752 = vperm.xlu0 %6751, %v6678
  %v6753 = vpop.permute.xlu0 %6752
  %6756 = vset.pattern.permute.xlu0 0
  %6757 = vperm.xlu0 %6756, %v6679
  %v6758 = vpop.permute.xlu0 %6757
  %6761 = vset.pattern.permute.xlu0 0
  %6762 = vperm.xlu0 %6761, %v6680
  %v6763 = vpop.permute.xlu0 %6762
  %6766 = vset.pattern.permute.xlu0 0
  %6767 = vperm.xlu0 %6766, %v6681
  %v6768 = vpop.permute.xlu0 %6767
  %6771 = vset.pattern.permute.xlu0 0
  %6772 = vperm.xlu0 %6771, %v6682
  %v6773 = vpop.permute.xlu0 %6772
  %6776 = vset.pattern.permute.xlu0 0
  %6777 = vperm.xlu0 %6776, %v6683
  %v6778 = vpop.permute.xlu0 %6777
  %6781 = vset.pattern.permute.xlu0 0
  %6782 = vperm.xlu0 %6781, %v6684
  %v6783 = vpop.permute.xlu0 %6782
  %6786 = vset.pattern.permute.xlu0 0
  %6787 = vperm.xlu0 %6786, %v6685
  %v6788 = vpop.permute.xlu0 %6787
  %6791 = vset.pattern.permute.xlu0 0
  %6792 = vperm.xlu0 %6791, %v6686
  %v6793 = vpop.permute.xlu0 %6792
  %6796 = vset.pattern.permute.xlu0 0
  %6797 = vperm.xlu0 %6796, %v6687
  %v6798 = vpop.permute.xlu0 %6797
  %6801 = vset.pattern.permute.xlu0 0
  %6802 = vperm.xlu0 %6801, %v6688
  %v6803 = vpop.permute.xlu0 %6802
  %6806 = vset.pattern.permute.xlu0 0
  %6807 = vperm.xlu0 %6806, %v6689
  %v6808 = vpop.permute.xlu0 %6807
  %6811 = vset.pattern.permute.xlu0 0
  %6812 = vperm.xlu0 %6811, %v6690
  %v6813 = vpop.permute.xlu0 %6812
  %6816 = vset.pattern.permute.xlu0 0
  %6817 = vperm.xlu0 %6816, %v6691
  %v6818 = vpop.permute.xlu0 %6817
  %6821 = vset.pattern.permute.xlu0 0
  %6822 = vperm.xlu0 %6821, %v6692
  %v6823 = vpop.permute.xlu0 %6822
  %6826 = vset.pattern.permute.xlu0 0
  %6827 = vperm.xlu0 %6826, %v6693
  %v6828 = vpop.permute.xlu0 %6827
  %6831 = vset.pattern.permute.xlu0 0
  %6832 = vperm.xlu0 %6831, %v6694
  %v6833 = vpop.permute.xlu0 %6832
  %6836 = vset.pattern.permute.xlu0 0
  %6837 = vperm.xlu0 %6836, %v6695
  %v6838 = vpop.permute.xlu0 %6837
  %6841 = vset.pattern.permute.xlu0 0
  %6842 = vperm.xlu0 %6841, %v6696
  %v6843 = vpop.permute.xlu0 %6842
  %6846 = vset.pattern.permute.xlu0 0
  %6847 = vperm.xlu0 %6846, %v6697
  %v6848 = vpop.permute.xlu0 %6847
  %6851 = vset.pattern.permute.xlu0 0
  %6852 = vperm.xlu0 %6851, %v6698
  %v6853 = vpop.permute.xlu0 %6852
  %6856 = vset.pattern.permute.xlu0 0
  %6857 = vperm.xlu0 %6856, %v6699
  %v6858 = vpop.permute.xlu0 %6857
  %v6892 = vunpack.c.l.b16 %v6610
  %v6893 = vunpack.c.h.b16 %v6610
  %v6894 = vunpack.c.l.b16 %v6611
  %v6895 = vunpack.c.h.b16 %v6611
  %v6896 = vunpack.c.l.b16 %v6612
  %v6897 = vunpack.c.h.b16 %v6612
  %v6898 = vunpack.c.l.b16 %v6613
  %v6899 = vunpack.c.h.b16 %v6613
  %v6900 = vunpack.c.l.b16 %v6614
  %v6901 = vunpack.c.h.b16 %v6614
  %v6902 = vunpack.c.l.b16 %v6615
  %v6903 = vunpack.c.h.b16 %v6615
  %v6904 = vunpack.c.l.b16 %v6616
  %v6905 = vunpack.c.h.b16 %v6616
  %v6906 = vunpack.c.l.b16 %v6617
  %v6907 = vunpack.c.h.b16 %v6617
  %v6908 = vunpack.c.l.b16 %v6618
  %v6909 = vunpack.c.h.b16 %v6618
  %v6910 = vunpack.c.l.b16 %v6619
  %v6911 = vunpack.c.h.b16 %v6619
  %v6912 = vunpack.c.l.b16 %v6620
  %v6913 = vunpack.c.h.b16 %v6620
  %v6914 = vunpack.c.l.b16 %v6621
  %v6915 = vunpack.c.h.b16 %v6621
  %v6916 = vunpack.c.l.b16 %v6622
  %v6917 = vunpack.c.h.b16 %v6622
  %v6918 = vunpack.c.l.b16 %v6623
  %v6919 = vunpack.c.h.b16 %v6623
  %v6920 = vunpack.c.l.b16 %v6624
  %v6921 = vunpack.c.h.b16 %v6624
  %v6922 = vunpack.c.l.b16 %v6625
  %v6923 = vunpack.c.h.b16 %v6625
  %v6924 = vunpack.c.l.b16 %v6626
  %v6925 = vunpack.c.h.b16 %v6626
  %v6926 = vunpack.c.l.b16 %v6627
  %v6927 = vunpack.c.h.b16 %v6627
  %v6928 = vunpack.c.l.b16 %v6628
  %v6929 = vunpack.c.h.b16 %v6628
  %v6930 = vunpack.c.l.b16 %v6629
  %v6931 = vunpack.c.h.b16 %v6629
  %v6932 = vunpack.c.l.b16 %v6630
  %v6933 = vunpack.c.h.b16 %v6630
  %v6934 = vunpack.c.l.b16 %v6631
  %v6935 = vunpack.c.h.b16 %v6631
  %v6936 = vunpack.c.l.b16 %v6632
  %v6937 = vunpack.c.h.b16 %v6632
  %v6938 = vunpack.c.l.b16 %v6633
  %v6939 = vunpack.c.h.b16 %v6633
  %v6940 = vunpack.c.l.b16 %v6634
  %v6941 = vunpack.c.h.b16 %v6634
  %v6942 = vunpack.c.l.b16 %v6635
  %v6943 = vunpack.c.h.b16 %v6635
  %v6944 = vunpack.c.l.b16 %v6636
  %v6945 = vunpack.c.h.b16 %v6636
  %v6946 = vunpack.c.l.b16 %v6637
  %v6947 = vunpack.c.h.b16 %v6637
  %v6948 = vunpack.c.l.b16 %v6638
  %v6949 = vunpack.c.h.b16 %v6638
  %v6950 = vunpack.c.l.b16 %v6639
  %v6951 = vunpack.c.h.b16 %v6639
  %v6952 = vunpack.c.l.b16 %v6640
  %v6953 = vunpack.c.h.b16 %v6640
  %v6954 = vunpack.c.l.b16 %v6641
  %v6955 = vunpack.c.h.b16 %v6641
  %v6956 = vpack.c.b16 %v6894, %v6892
  %v6957 = vpack.c.b16 %v6895, %v6893
  %v6958 = vpack.c.b16 %v6898, %v6896
  %v6959 = vpack.c.b16 %v6899, %v6897
  %v6960 = vpack.c.b16 %v6902, %v6900
  %v6961 = vpack.c.b16 %v6903, %v6901
  %v6962 = vpack.c.b16 %v6906, %v6904
  %v6963 = vpack.c.b16 %v6907, %v6905
  %v6964 = vpack.c.b16 %v6910, %v6908
  %v6965 = vpack.c.b16 %v6911, %v6909
  %v6966 = vpack.c.b16 %v6914, %v6912
  %v6967 = vpack.c.b16 %v6915, %v6913
  %v6968 = vpack.c.b16 %v6918, %v6916
  %v6969 = vpack.c.b16 %v6919, %v6917
  %v6970 = vpack.c.b16 %v6922, %v6920
  %v6971 = vpack.c.b16 %v6923, %v6921
  %v6972 = vpack.c.b16 %v6926, %v6924
  %v6973 = vpack.c.b16 %v6927, %v6925
  %v6974 = vpack.c.b16 %v6930, %v6928
  %v6975 = vpack.c.b16 %v6931, %v6929
  %v6976 = vpack.c.b16 %v6934, %v6932
  %v6977 = vpack.c.b16 %v6935, %v6933
  %v6978 = vpack.c.b16 %v6938, %v6936
  %v6979 = vpack.c.b16 %v6939, %v6937
  %v6980 = vpack.c.b16 %v6942, %v6940
  %v6981 = vpack.c.b16 %v6943, %v6941
  %v6982 = vpack.c.b16 %v6946, %v6944
  %v6983 = vpack.c.b16 %v6947, %v6945
  %v6984 = vpack.c.b16 %v6950, %v6948
  %v6985 = vpack.c.b16 %v6951, %v6949
  %v6986 = vpack.c.b16 %v6954, %v6952
  %v6987 = vpack.c.b16 %v6955, %v6953
  %v7030 = vunpack.c.l.b16 %v6642
  %v7031 = vunpack.c.l.b16 %v6643
  %v7032 = vunpack.c.l.b16 %v6644
  %v7033 = vunpack.c.l.b16 %v6645
  %v7034 = vunpack.c.l.b16 %v6646
  %v7035 = vunpack.c.l.b16 %v6647
  %v7036 = vunpack.c.l.b16 %v6648
  %v7037 = vunpack.c.l.b16 %v6649
  %v7038 = vunpack.c.l.b16 %v6650
  %v7039 = vunpack.c.l.b16 %v6651
  %v7040 = vunpack.c.l.b16 %v6652
  %v7041 = vunpack.c.l.b16 %v6653
  %v7042 = vunpack.c.l.b16 %v6654
  %v7043 = vunpack.c.l.b16 %v6655
  %v7044 = vunpack.c.l.b16 %v6656
  %v7045 = vunpack.c.l.b16 %v6657
  %v7046 = vunpack.c.l.b16 %v6658
  %v7047 = vunpack.c.l.b16 %v6659
  %v7048 = vunpack.c.l.b16 %v6660
  %v7049 = vunpack.c.l.b16 %v6661
  %v7050 = vunpack.c.l.b16 %v6662
  %v7051 = vunpack.c.l.b16 %v6663
  %v7052 = vunpack.c.l.b16 %v6664
  %v7053 = vunpack.c.l.b16 %v6665
  %v7054 = vunpack.c.l.b16 %v6666
  %v7055 = vunpack.c.l.b16 %v6667
  %v7056 = vpack.c.b16 %v7031, %v7030
  %v7057 = vpack.c.b16 %v7033, %v7032
  %v7058 = vpack.c.b16 %v7035, %v7034
  %v7059 = vpack.c.b16 %v7037, %v7036
  %v7060 = vpack.c.b16 %v7039, %v7038
  %v7061 = vpack.c.b16 %v7041, %v7040
  %v7062 = vpack.c.b16 %v7043, %v7042
  %v7063 = vpack.c.b16 %v7045, %v7044
  %v7064 = vpack.c.b16 %v7047, %v7046
  %v7065 = vpack.c.b16 %v7049, %v7048
  %v7066 = vpack.c.b16 %v7051, %v7050
  %v7067 = vpack.c.b16 %v7053, %v7052
  %v7068 = vpack.c.b16 %v7055, %v7054
  %vm7082 = vcmask 654336
  %v7084 = vsel %vm7082, %v6957, 0
  %v7087 = vsel %vm7082, %v6959, 0
  %v7090 = vsel %vm7082, %v6961, 0
  %v7093 = vsel %vm7082, %v6963, 0
  %v7096 = vsel %vm7082, %v6965, 0
  %v7099 = vsel %vm7082, %v6967, 0
  %v7102 = vsel %vm7082, %v6969, 0
  %v7105 = vsel %vm7082, %v6971, 0
  %v7108 = vsel %vm7082, %v6973, 0
  %v7111 = vsel %vm7082, %v6975, 0
  %v7114 = vsel %vm7082, %v6977, 0
  %v7117 = vsel %vm7082, %v6979, 0
  %v7120 = vsel %vm7082, %v6981, 0
  %v7123 = vsel %vm7082, %v6983, 0
  %v7126 = vsel %vm7082, %v6985, 0
  %v7129 = vsel %vm7082, %v6987, 0
  %7131 = vmatprep.subr.bf16.mxu0 0
  %7132 = vmatpush1.bf16.msra.mxu0 %v7056
  %7133 = vmatprep.subr.bf16.mxu0 0
  %7134 = vmatpush1.bf16.msra.mxu0 %v7057
  %7135 = vmatprep.subr.bf16.mxu0 0
  %7136 = vmatpush1.bf16.msra.mxu0 %v7058
  %7137 = vmatprep.subr.bf16.mxu0 0
  %7138 = vmatpush1.bf16.msra.mxu0 %v7059
  %7139 = vmatprep.subr.bf16.mxu0 0
  %7140 = vmatpush1.bf16.msra.mxu0 %v7060
  %7141 = vmatprep.subr.bf16.mxu0 0
  %7142 = vmatpush1.bf16.msra.mxu0 %v7061
  %7143 = vmatprep.subr.bf16.mxu0 0
  %7144 = vmatpush1.bf16.msra.mxu0 %v7062
  %7145 = vmatprep.subr.bf16.mxu0 0
  %7146 = vmatpush1.bf16.msra.mxu0 %v7063
  %7147 = vmatprep.subr.bf16.mxu0 0
  %7148 = vmatpush1.bf16.msra.mxu0 %v7064
  %7149 = vmatprep.subr.bf16.mxu0 0
  %7150 = vmatpush1.bf16.msra.mxu0 %v7065
  %7151 = vmatprep.subr.bf16.mxu0 0
  %7152 = vmatpush1.bf16.msra.mxu0 %v7066
  %7153 = vmatprep.subr.bf16.mxu0 0
  %7154 = vmatpush1.bf16.msra.mxu0 %v7067
  %7155 = vmatprep.subr.bf16.mxu0 0
  %7156 = vmatpush1.bf16.msra.mxu0 %v7068
  %7157 = vmatprep.subr.bf16.mxu0 0
  %7158 = vmatpush1.bf16.msra.mxu0 0
  %7159 = vmatprep.subr.bf16.mxu0 0
  %7160 = vmatpush1.bf16.msra.mxu0 0
  %7161 = vmatprep.subr.bf16.mxu0 0
  %7162 = vmatpush1.bf16.msra.mxu0 0
  %7163 = vmatprep.mubr.bf16.mxu0 %v7084
  %7164 = vmatmul.mubr.bf16.gmra.mrb[0].mxu0 %v6956
  %v7165 = vpop.f32.mrb[0].mxu0
  %v7166 = vadd.f32 %v6703, %v7165
  %v7167 = vpop.f32.mrb[0].mxu0
  %v7168 = vpop.f32.mrb[0].mxu0
  %v7169 = vadd.f32 %v6708, %v7168
  %v7170 = vpop.f32.mrb[0].mxu0
  %7171 = vmatprep.mubr.bf16.mxu0 %v7087
  %7172 = vmatmul.mubr.bf16.gmra.mrb[0].mxu0 %v6958
  %v7173 = vpop.f32.mrb[0].mxu0
  %v7174 = vadd.f32 %v6713, %v7173
  %v7175 = vpop.f32.mrb[0].mxu0
  %v7176 = vpop.f32.mrb[0].mxu0
  %v7177 = vadd.f32 %v6718, %v7176
  %v7178 = vpop.f32.mrb[0].mxu0
  %7179 = vmatprep.mubr.bf16.mxu0 %v7090
  %7180 = vmatmul.mubr.bf16.gmra.mrb[0].mxu0 %v6960
  %v7181 = vpop.f32.mrb[0].mxu0
  %v7182 = vadd.f32 %v6723, %v7181
  %v7183 = vpop.f32.mrb[0].mxu0
  %v7184 = vpop.f32.mrb[0].mxu0
  %v7185 = vadd.f32 %v6728, %v7184
  %v7186 = vpop.f32.mrb[0].mxu0
  %7187 = vmatprep.mubr.bf16.mxu0 %v7093
  %7188 = vmatmul.mubr.bf16.gmra.mrb[0].mxu0 %v6962
  %v7189 = vpop.f32.mrb[0].mxu0
  %v7190 = vadd.f32 %v6733, %v7189
  %v7191 = vpop.f32.mrb[0].mxu0
  %v7192 = vpop.f32.mrb[0].mxu0
  %v7193 = vadd.f32 %v6738, %v7192
  %v7194 = vpop.f32.mrb[0].mxu0
  %7195 = vmatprep.mubr.bf16.mxu0 %v7096
  %7196 = vmatmul.mubr.bf16.gmra.mrb[0].mxu0 %v6964
  %v7197 = vpop.f32.mrb[0].mxu0
  %v7198 = vadd.f32 %v6743, %v7197
  %v7199 = vpop.f32.mrb[0].mxu0
  %v7200 = vpop.f32.mrb[0].mxu0
  %v7201 = vadd.f32 %v6748, %v7200
  %v7202 = vpop.f32.mrb[0].mxu0
  %7203 = vmatprep.mubr.bf16.mxu0 %v7099
  %7204 = vmatmul.mubr.bf16.gmra.mrb[0].mxu0 %v6966
  %v7205 = vpop.f32.mrb[0].mxu0
  %v7206 = vadd.f32 %v6753, %v7205
  %v7207 = vpop.f32.mrb[0].mxu0
  %v7208 = vpop.f32.mrb[0].mxu0
  %v7209 = vadd.f32 %v6758, %v7208
  %v7210 = vpop.f32.mrb[0].mxu0
  %7211 = vmatprep.mubr.bf16.mxu0 %v7102
  %7212 = vmatmul.mubr.bf16.gmra.mrb[0].mxu0 %v6968
  %v7213 = vpop.f32.mrb[0].mxu0
  %v7214 = vadd.f32 %v6763, %v7213
  %v7215 = vpop.f32.mrb[0].mxu0
  %v7216 = vpop.f32.mrb[0].mxu0
  %v7217 = vadd.f32 %v6768, %v7216
  %v7218 = vpop.f32.mrb[0].mxu0
  %7219 = vmatprep.mubr.bf16.mxu0 %v7105
  %7220 = vmatmul.mubr.bf16.gmra.mrb[0].mxu0 %v6970
  %v7221 = vpop.f32.mrb[0].mxu0
  %v7222 = vadd.f32 %v6773, %v7221
  %v7223 = vpop.f32.mrb[0].mxu0
  %v7224 = vpop.f32.mrb[0].mxu0
  %v7225 = vadd.f32 %v6778, %v7224
  %v7226 = vpop.f32.mrb[0].mxu0
  %7227 = vmatprep.mubr.bf16.mxu0 %v7108
  %7228 = vmatmul.mubr.bf16.gmra.mrb[0].mxu0 %v6972
  %v7229 = vpop.f32.mrb[0].mxu0
  %v7230 = vadd.f32 %v6783, %v7229
  %v7231 = vpop.f32.mrb[0].mxu0
  %v7232 = vpop.f32.mrb[0].mxu0
  %v7233 = vadd.f32 %v6788, %v7232
  %v7234 = vpop.f32.mrb[0].mxu0
  %7235 = vmatprep.mubr.bf16.mxu0 %v7111
  %7236 = vmatmul.mubr.bf16.gmra.mrb[0].mxu0 %v6974
  %v7237 = vpop.f32.mrb[0].mxu0
  %v7238 = vadd.f32 %v6793, %v7237
  %v7239 = vpop.f32.mrb[0].mxu0
  %v7240 = vpop.f32.mrb[0].mxu0
  %v7241 = vadd.f32 %v6798, %v7240
  %v7242 = vpop.f32.mrb[0].mxu0
  %7243 = vmatprep.mubr.bf16.mxu0 %v7114
  %7244 = vmatmul.mubr.bf16.gmra.mrb[0].mxu0 %v6976
  %v7245 = vpop.f32.mrb[0].mxu0
  %v7246 = vadd.f32 %v6803, %v7245
  %v7247 = vpop.f32.mrb[0].mxu0
  %v7248 = vpop.f32.mrb[0].mxu0
  %v7249 = vadd.f32 %v6808, %v7248
  %v7250 = vpop.f32.mrb[0].mxu0
  %7251 = vmatprep.mubr.bf16.mxu0 %v7117
  %7252 = vmatmul.mubr.bf16.gmra.mrb[0].mxu0 %v6978
  %v7253 = vpop.f32.mrb[0].mxu0
  %v7254 = vadd.f32 %v6813, %v7253
  %v7255 = vpop.f32.mrb[0].mxu0
  %v7256 = vpop.f32.mrb[0].mxu0
  %v7257 = vadd.f32 %v6818, %v7256
  %v7258 = vpop.f32.mrb[0].mxu0
  %7259 = vmatprep.mubr.bf16.mxu0 %v7120
  %7260 = vmatmul.mubr.bf16.gmra.mrb[0].mxu0 %v6980
  %v7261 = vpop.f32.mrb[0].mxu0
  %v7262 = vadd.f32 %v6823, %v7261
  %v7263 = vpop.f32.mrb[0].mxu0
  %v7264 = vpop.f32.mrb[0].mxu0
  %v7265 = vadd.f32 %v6828, %v7264
  %v7266 = vpop.f32.mrb[0].mxu0
  %7267 = vmatprep.mubr.bf16.mxu0 %v7123
  %7268 = vmatmul.mubr.bf16.gmra.mrb[0].mxu0 %v6982
  %v7269 = vpop.f32.mrb[0].mxu0
  %v7270 = vadd.f32 %v6833, %v7269
  %v7271 = vpop.f32.mrb[0].mxu0
  %v7272 = vpop.f32.mrb[0].mxu0
  %v7273 = vadd.f32 %v6838, %v7272
  %v7274 = vpop.f32.mrb[0].mxu0
  %7275 = vmatprep.mubr.bf16.mxu0 %v7126
  %7276 = vmatmul.mubr.bf16.gmra.mrb[0].mxu0 %v6984
  %v7277 = vpop.f32.mrb[0].mxu0
  %v7278 = vadd.f32 %v6843, %v7277
  %v7279 = vpop.f32.mrb[0].mxu0
  %v7280 = vpop.f32.mrb[0].mxu0
  %v7281 = vadd.f32 %v6848, %v7280
  %v7282 = vpop.f32.mrb[0].mxu0
  %7283 = vmatprep.mubr.bf16.mxu0 %v7129
  %7284 = vmatmul.mubr.bf16.gmra.mrb[0].mxu0 %v6986
  %v7285 = vpop.f32.mrb[0].mxu0
  %v7286 = vadd.f32 %v6853, %v7285
  %v7287 = vpop.f32.mrb[0].mxu0
  %v7288 = vpop.f32.mrb[0].mxu0
  %v7289 = vadd.f32 %v6858, %v7288
  %v7290 = vpop.f32.mrb[0].mxu0
  %7291 = vdwg.mxu0
  %v7292 = vmax.f32 %v7166, 0.0
  %v7293 = vmax.f32 %v7169, 0.0
  %v7294 = vmax.f32 %v7174, 0.0
  %v7295 = vmax.f32 %v7177, 0.0
  %v7296 = vmax.f32 %v7182, 0.0
  %v7297 = vmax.f32 %v7185, 0.0
  %v7298 = vmax.f32 %v7190, 0.0
  %v7299 = vmax.f32 %v7193, 0.0
  %v7300 = vmax.f32 %v7198, 0.0
  %v7301 = vmax.f32 %v7201, 0.0
  %v7302 = vmax.f32 %v7206, 0.0
  %v7303 = vmax.f32 %v7209, 0.0
  %v7304 = vmax.f32 %v7214, 0.0
  %v7305 = vmax.f32 %v7217, 0.0
  %v7306 = vmax.f32 %v7222, 0.0
  %v7307 = vmax.f32 %v7225, 0.0
  %v7308 = vmax.f32 %v7230, 0.0
  %v7309 = vmax.f32 %v7233, 0.0
  %v7310 = vmax.f32 %v7238, 0.0
  %v7311 = vmax.f32 %v7241, 0.0
  %v7312 = vmax.f32 %v7246, 0.0
  %v7313 = vmax.f32 %v7249, 0.0
  %v7314 = vmax.f32 %v7254, 0.0
  %v7315 = vmax.f32 %v7257, 0.0
  %v7316 = vmax.f32 %v7262, 0.0
  %v7317 = vmax.f32 %v7265, 0.0
  %v7318 = vmax.f32 %v7270, 0.0
  %v7319 = vmax.f32 %v7273, 0.0
  %v7320 = vmax.f32 %v7278, 0.0
  %v7321 = vmax.f32 %v7281, 0.0
  %v7322 = vmax.f32 %v7286, 0.0
  %v7323 = vmax.f32 %v7289, 0.0
  %v7324 = vld [vmem:[%s14] sm:$0xff]
  %v7325 = vld [vmem:[%s14 + $0x8] sm:$0xff]
  %v7326 = vld [vmem:[%s14 + $0x10] sm:$0xff]
  %v7327 = vld [vmem:[%s14 + $0x18] sm:$0xff]
  %v7328 = vld [vmem:[%s14 + $0x20] sm:$0xff]
  %v7329 = vld [vmem:[%s14 + $0x28] sm:$0xff]
  %v7330 = vld [vmem:[%s14 + $0x30] sm:$0xff]
  %v7331 = vld [vmem:[%s14 + $0x38] sm:$0xff]
  %v7332 = vld [vmem:[%s14 + $0x40] sm:$0xff]
  %v7333 = vld [vmem:[%s14 + $0x48] sm:$0xff]
  %v7334 = vld [vmem:[%s14 + $0x50] sm:$0xff]
  %v7335 = vld [vmem:[%s14 + $0x58] sm:$0xff]
  %v7336 = vld [vmem:[%s14 + $0x60] sm:$0xff]
  %v7337 = vld [vmem:[%s14 + $0x68] sm:$0xff]
  %v7338 = vld [vmem:[%s14 + $0x70] sm:$0xff]
  %v7339 = vld [vmem:[%s14 + $0x78] sm:$0xff]
  %v7340 = vpack.c.bf16 %v7293, %v7292
  %v7341 = vpack.c.bf16 %v7295, %v7294
  %v7342 = vpack.c.bf16 %v7297, %v7296
  %v7343 = vpack.c.bf16 %v7299, %v7298
  %v7344 = vpack.c.bf16 %v7301, %v7300
  %v7345 = vpack.c.bf16 %v7303, %v7302
  %v7346 = vpack.c.bf16 %v7305, %v7304
  %v7347 = vpack.c.bf16 %v7307, %v7306
  %v7348 = vpack.c.bf16 %v7309, %v7308
  %v7349 = vpack.c.bf16 %v7311, %v7310
  %v7350 = vpack.c.bf16 %v7313, %v7312
  %v7351 = vpack.c.bf16 %v7315, %v7314
  %v7352 = vpack.c.bf16 %v7317, %v7316
  %v7353 = vpack.c.bf16 %v7319, %v7318
  %v7354 = vpack.c.bf16 %v7321, %v7320
  %v7355 = vpack.c.bf16 %v7323, %v7322
  %v7356 = vld [vmem:[%s15] sm:$0xff]
  %v7357 = vld [vmem:[%s15 + $0x8] sm:$0xff]
  %v7358 = vld [vmem:[%s15 + $0x10] sm:$0xff]
  %v7359 = vld [vmem:[%s15 + $0x18] sm:$0xff]
  %v7360 = vld [vmem:[%s15 + $0x20] sm:$0xff]
  %v7361 = vld [vmem:[%s15 + $0x28] sm:$0xff]
  %v7362 = vld [vmem:[%s15 + $0x30] sm:$0xff]
  %v7363 = vld [vmem:[%s15 + $0x38] sm:$0xff]
  %v7364 = vld [vmem:[%s15 + $0x40] sm:$0xff]
  %v7365 = vld [vmem:[%s15 + $0x48] sm:$0xff]
  %v7366 = vld [vmem:[%s15 + $0x50] sm:$0xff]
  %v7367 = vld [vmem:[%s15 + $0x58] sm:$0xff]
  %v7368 = vld [vmem:[%s15 + $0x60] sm:$0xff]
  %v7369 = vld [vmem:[%s15 + $0x68] sm:$0xff]
  %v7370 = vld [vmem:[%s15 + $0x70] sm:$0xff]
  %v7371 = vld [vmem:[%s15 + $0x78] sm:$0xff]
  %7373 = vset.pattern.permute.xlu0 0
  %7374 = vperm.xlu0 %7373, %v7356
  %v7375 = vpop.permute.xlu0 %7374
  %7378 = vset.pattern.permute.xlu0 0
  %7379 = vperm.xlu0 %7378, %v7357
  %v7380 = vpop.permute.xlu0 %7379
  %7383 = vset.pattern.permute.xlu0 0
  %7384 = vperm.xlu0 %7383, %v7358
  %v7385 = vpop.permute.xlu0 %7384
  %7388 = vset.pattern.permute.xlu0 0
  %7389 = vperm.xlu0 %7388, %v7359
  %v7390 = vpop.permute.xlu0 %7389
  %7393 = vset.pattern.permute.xlu0 0
  %7394 = vperm.xlu0 %7393, %v7360
  %v7395 = vpop.permute.xlu0 %7394
  %7398 = vset.pattern.permute.xlu0 0
  %7399 = vperm.xlu0 %7398, %v7361
  %v7400 = vpop.permute.xlu0 %7399
  %7403 = vset.pattern.permute.xlu0 0
  %7404 = vperm.xlu0 %7403, %v7362
  %v7405 = vpop.permute.xlu0 %7404
  %7408 = vset.pattern.permute.xlu0 0
  %7409 = vperm.xlu0 %7408, %v7363
  %v7410 = vpop.permute.xlu0 %7409
  %7413 = vset.pattern.permute.xlu0 0
  %7414 = vperm.xlu0 %7413, %v7364
  %v7415 = vpop.permute.xlu0 %7414
  %7418 = vset.pattern.permute.xlu0 0
  %7419 = vperm.xlu0 %7418, %v7365
  %v7420 = vpop.permute.xlu0 %7419
  %7423 = vset.pattern.permute.xlu0 0
  %7424 = vperm.xlu0 %7423, %v7366
  %v7425 = vpop.permute.xlu0 %7424
  %7428 = vset.pattern.permute.xlu0 0
  %7429 = vperm.xlu0 %7428, %v7367
  %v7430 = vpop.permute.xlu0 %7429
  %7433 = vset.pattern.permute.xlu0 0
  %7434 = vperm.xlu0 %7433, %v7368
  %v7435 = vpop.permute.xlu0 %7434
  %7438 = vset.pattern.permute.xlu0 0
  %7439 = vperm.xlu0 %7438, %v7369
  %v7440 = vpop.permute.xlu0 %7439
  %7443 = vset.pattern.permute.xlu0 0
  %7444 = vperm.xlu0 %7443, %v7370
  %v7445 = vpop.permute.xlu0 %7444
  %7448 = vset.pattern.permute.xlu0 0
  %7449 = vperm.xlu0 %7448, %v7371
  %v7450 = vpop.permute.xlu0 %7449
  %v7468 = vunpack.c.l.b16 %v7324
  %v7469 = vunpack.c.h.b16 %v7324
  %v7470 = vunpack.c.l.b16 %v7325
  %v7471 = vunpack.c.h.b16 %v7325
  %v7472 = vunpack.c.l.b16 %v7326
  %v7473 = vunpack.c.h.b16 %v7326
  %v7474 = vunpack.c.l.b16 %v7327
  %v7475 = vunpack.c.h.b16 %v7327
  %v7476 = vunpack.c.l.b16 %v7328
  %v7477 = vunpack.c.h.b16 %v7328
  %v7478 = vunpack.c.l.b16 %v7329
  %v7479 = vunpack.c.h.b16 %v7329
  %v7480 = vunpack.c.l.b16 %v7330
  %v7481 = vunpack.c.h.b16 %v7330
  %v7482 = vunpack.c.l.b16 %v7331
  %v7483 = vunpack.c.h.b16 %v7331
  %v7484 = vunpack.c.l.b16 %v7332
  %v7485 = vunpack.c.h.b16 %v7332
  %v7486 = vunpack.c.l.b16 %v7333
  %v7487 = vunpack.c.h.b16 %v7333
  %v7488 = vunpack.c.l.b16 %v7334
  %v7489 = vunpack.c.h.b16 %v7334
  %v7490 = vunpack.c.l.b16 %v7335
  %v7491 = vunpack.c.h.b16 %v7335
  %v7492 = vunpack.c.l.b16 %v7336
  %v7493 = vunpack.c.h.b16 %v7336
  %v7494 = vunpack.c.l.b16 %v7337
  %v7495 = vunpack.c.h.b16 %v7337
  %v7496 = vunpack.c.l.b16 %v7338
  %v7497 = vunpack.c.h.b16 %v7338
  %v7498 = vunpack.c.l.b16 %v7339
  %v7499 = vunpack.c.h.b16 %v7339
  %v7500 = vpack.c.b16 %v7470, %v7468
  %v7501 = vpack.c.b16 %v7471, %v7469
  %v7502 = vpack.c.b16 %v7474, %v7472
  %v7503 = vpack.c.b16 %v7475, %v7473
  %v7504 = vpack.c.b16 %v7478, %v7476
  %v7505 = vpack.c.b16 %v7479, %v7477
  %v7506 = vpack.c.b16 %v7482, %v7480
  %v7507 = vpack.c.b16 %v7483, %v7481
  %v7508 = vpack.c.b16 %v7486, %v7484
  %v7509 = vpack.c.b16 %v7487, %v7485
  %v7510 = vpack.c.b16 %v7490, %v7488
  %v7511 = vpack.c.b16 %v7491, %v7489
  %v7512 = vpack.c.b16 %v7494, %v7492
  %v7513 = vpack.c.b16 %v7495, %v7493
  %v7514 = vpack.c.b16 %v7498, %v7496
  %v7515 = vpack.c.b16 %v7499, %v7497
  %7532 = vmatprep.subr.bf16.mxu0 0
  %7533 = vmatpush1.bf16.msra.mxu0 %v7340
  %7534 = vmatprep.subr.bf16.mxu0 0
  %7535 = vmatpush1.bf16.msra.mxu0 %v7341
  %7536 = vmatprep.subr.bf16.mxu0 0
  %7537 = vmatpush1.bf16.msra.mxu0 %v7342
  %7538 = vmatprep.subr.bf16.mxu0 0
  %7539 = vmatpush1.bf16.msra.mxu0 %v7343
  %7540 = vmatprep.subr.bf16.mxu0 0
  %7541 = vmatpush1.bf16.msra.mxu0 %v7344
  %7542 = vmatprep.subr.bf16.mxu0 0
  %7543 = vmatpush1.bf16.msra.mxu0 %v7345
  %7544 = vmatprep.subr.bf16.mxu0 0
  %7545 = vmatpush1.bf16.msra.mxu0 %v7346
  %7546 = vmatprep.subr.bf16.mxu0 0
  %7547 = vmatpush1.bf16.msra.mxu0 %v7347
  %7548 = vmatprep.subr.bf16.mxu0 0
  %7549 = vmatpush1.bf16.msra.mxu0 %v7348
  %7550 = vmatprep.subr.bf16.mxu0 0
  %7551 = vmatpush1.bf16.msra.mxu0 %v7349
  %7552 = vmatprep.subr.bf16.mxu0 0
  %7553 = vmatpush1.bf16.msra.mxu0 %v7350
  %7554 = vmatprep.subr.bf16.mxu0 0
  %7555 = vmatpush1.bf16.msra.mxu0 %v7351
  %7556 = vmatprep.subr.bf16.mxu0 0
  %7557 = vmatpush1.bf16.msra.mxu0 %v7352
  %7558 = vmatprep.subr.bf16.mxu0 0
  %7559 = vmatpush1.bf16.msra.mxu0 %v7353
  %7560 = vmatprep.subr.bf16.mxu0 0
  %7561 = vmatpush1.bf16.msra.mxu0 %v7354
  %7562 = vmatprep.subr.bf16.mxu0 0
  %7563 = vmatpush1.bf16.msra.mxu0 %v7355
  %7564 = vmatprep.mubr.bf16.mxu0 %v7501
  %7565 = vmatmul.mubr.bf16.gmra.mrb[0].mxu0 %v7500
  %v7566 = vpop.f32.mrb[0].mxu0
  %v7567 = vadd.f32 %v7375, %v7566
  %v7568 = vpop.f32.mrb[0].mxu0
  %v7569 = vpop.f32.mrb[0].mxu0
  %v7570 = vadd.f32 %v7380, %v7569
  %v7571 = vpop.f32.mrb[0].mxu0
  %7572 = vmatprep.mubr.bf16.mxu0 %v7503
  %7573 = vmatmul.mubr.bf16.gmra.mrb[0].mxu0 %v7502
  %v7574 = vpop.f32.mrb[0].mxu0
  %v7575 = vadd.f32 %v7385, %v7574
  %v7576 = vpop.f32.mrb[0].mxu0
  %v7577 = vpop.f32.mrb[0].mxu0
  %v7578 = vadd.f32 %v7390, %v7577
  %v7579 = vpop.f32.mrb[0].mxu0
  %7580 = vmatprep.mubr.bf16.mxu0 %v7505
  %7581 = vmatmul.mubr.bf16.gmra.mrb[0].mxu0 %v7504
  %v7582 = vpop.f32.mrb[0].mxu0
  %v7583 = vadd.f32 %v7395, %v7582
  %v7584 = vpop.f32.mrb[0].mxu0
  %v7585 = vpop.f32.mrb[0].mxu0
  %v7586 = vadd.f32 %v7400, %v7585
  %v7587 = vpop.f32.mrb[0].mxu0
  %7588 = vmatprep.mubr.bf16.mxu0 %v7507
  %7589 = vmatmul.mubr.bf16.gmra.mrb[0].mxu0 %v7506
  %v7590 = vpop.f32.mrb[0].mxu0
  %v7591 = vadd.f32 %v7405, %v7590
  %v7592 = vpop.f32.mrb[0].mxu0
  %v7593 = vpop.f32.mrb[0].mxu0
  %v7594 = vadd.f32 %v7410, %v7593
  %v7595 = vpop.f32.mrb[0].mxu0
  %7596 = vmatprep.mubr.bf16.mxu0 %v7509
  %7597 = vmatmul.mubr.bf16.gmra.mrb[0].mxu0 %v7508
  %v7598 = vpop.f32.mrb[0].mxu0
  %v7599 = vadd.f32 %v7415, %v7598
  %v7600 = vpop.f32.mrb[0].mxu0
  %v7601 = vpop.f32.mrb[0].mxu0
  %v7602 = vadd.f32 %v7420, %v7601
  %v7603 = vpop.f32.mrb[0].mxu0
  %7604 = vmatprep.mubr.bf16.mxu0 %v7511
  %7605 = vmatmul.mubr.bf16.gmra.mrb[0].mxu0 %v7510
  %v7606 = vpop.f32.mrb[0].mxu0
  %v7607 = vadd.f32 %v7425, %v7606
  %v7608 = vpop.f32.mrb[0].mxu0
  %v7609 = vpop.f32.mrb[0].mxu0
  %v7610 = vadd.f32 %v7430, %v7609
  %v7611 = vpop.f32.mrb[0].mxu0
  %7612 = vmatprep.mubr.bf16.mxu0 %v7513
  %7613 = vmatmul.mubr.bf16.gmra.mrb[0].mxu0 %v7512
  %v7614 = vpop.f32.mrb[0].mxu0
  %v7615 = vadd.f32 %v7435, %v7614
  %v7616 = vpop.f32.mrb[0].mxu0
  %v7617 = vpop.f32.mrb[0].mxu0
  %v7618 = vadd.f32 %v7440, %v7617
  %v7619 = vpop.f32.mrb[0].mxu0
  %7620 = vmatprep.mubr.bf16.mxu0 %v7515
  %7621 = vmatmul.mubr.bf16.gmra.mrb[0].mxu0 %v7514
  %v7622 = vpop.f32.mrb[0].mxu0
  %v7623 = vadd.f32 %v7445, %v7622
  %v7624 = vpop.f32.mrb[0].mxu0
  %v7625 = vpop.f32.mrb[0].mxu0
  %v7626 = vadd.f32 %v7450, %v7625
  %v7627 = vpop.f32.mrb[0].mxu0
  %7628 = vdwg.mxu0
  %v7629 = vmax.f32 %v7567, 0.0
  %v7630 = vmax.f32 %v7570, 0.0
  %v7631 = vmax.f32 %v7575, 0.0
  %v7632 = vmax.f32 %v7578, 0.0
  %v7633 = vmax.f32 %v7583, 0.0
  %v7634 = vmax.f32 %v7586, 0.0
  %v7635 = vmax.f32 %v7591, 0.0
  %v7636 = vmax.f32 %v7594, 0.0
  %v7637 = vmax.f32 %v7599, 0.0
  %v7638 = vmax.f32 %v7602, 0.0
  %v7639 = vmax.f32 %v7607, 0.0
  %v7640 = vmax.f32 %v7610, 0.0
  %v7641 = vmax.f32 %v7615, 0.0
  %v7642 = vmax.f32 %v7618, 0.0
  %v7643 = vmax.f32 %v7623, 0.0
  %v7644 = vmax.f32 %v7626, 0.0
  %v7645 = vld [vmem:[%s16] sm:$0xff]
  %v7646 = vld [vmem:[%s16 + $0x8] sm:$0xff]
  %v7647 = vld [vmem:[%s16 + $0x10] sm:$0xff]
  %v7648 = vld [vmem:[%s16 + $0x18] sm:$0xff]
  %v7649 = vld [vmem:[%s16 + $0x20] sm:$0xff]
  %v7650 = vld [vmem:[%s16 + $0x28] sm:$0xff]
  %v7651 = vld [vmem:[%s16 + $0x30] sm:$0xff]
  %v7652 = vld [vmem:[%s16 + $0x38] sm:$0xff]
  %v7653 = vld [vmem:[%s16 + $0x40] sm:$0xff]
  %v7654 = vld [vmem:[%s16 + $0x48] sm:$0xff]
  %v7655 = vld [vmem:[%s16 + $0x50] sm:$0xff]
  %v7656 = vld [vmem:[%s16 + $0x58] sm:$0xff]
  %v7657 = vld [vmem:[%s16 + $0x60] sm:$0xff]
  %v7658 = vld [vmem:[%s16 + $0x68] sm:$0xff]
  %v7659 = vld [vmem:[%s16 + $0x70] sm:$0xff]
  %v7660 = vld [vmem:[%s16 + $0x78] sm:$0xff]
  %7662 = vset.pattern.permute.xlu0 0
  %7663 = vperm.xlu0 %7662, %v7645
  %v7664 = vpop.permute.xlu0 %7663
  %7667 = vset.pattern.permute.xlu0 0
  %7668 = vperm.xlu0 %7667, %v7646
  %v7669 = vpop.permute.xlu0 %7668
  %7672 = vset.pattern.permute.xlu0 0
  %7673 = vperm.xlu0 %7672, %v7647
  %v7674 = vpop.permute.xlu0 %7673
  %7677 = vset.pattern.permute.xlu0 0
  %7678 = vperm.xlu0 %7677, %v7648
  %v7679 = vpop.permute.xlu0 %7678
  %7682 = vset.pattern.permute.xlu0 0
  %7683 = vperm.xlu0 %7682, %v7649
  %v7684 = vpop.permute.xlu0 %7683
  %7687 = vset.pattern.permute.xlu0 0
  %7688 = vperm.xlu0 %7687, %v7650
  %v7689 = vpop.permute.xlu0 %7688
  %7692 = vset.pattern.permute.xlu0 0
  %7693 = vperm.xlu0 %7692, %v7651
  %v7694 = vpop.permute.xlu0 %7693
  %7697 = vset.pattern.permute.xlu0 0
  %7698 = vperm.xlu0 %7697, %v7652
  %v7699 = vpop.permute.xlu0 %7698
  %7702 = vset.pattern.permute.xlu0 0
  %7703 = vperm.xlu0 %7702, %v7653
  %v7704 = vpop.permute.xlu0 %7703
  %7707 = vset.pattern.permute.xlu0 0
  %7708 = vperm.xlu0 %7707, %v7654
  %v7709 = vpop.permute.xlu0 %7708
  %7712 = vset.pattern.permute.xlu0 0
  %7713 = vperm.xlu0 %7712, %v7655
  %v7714 = vpop.permute.xlu0 %7713
  %7717 = vset.pattern.permute.xlu0 0
  %7718 = vperm.xlu0 %7717, %v7656
  %v7719 = vpop.permute.xlu0 %7718
  %7722 = vset.pattern.permute.xlu0 0
  %7723 = vperm.xlu0 %7722, %v7657
  %v7724 = vpop.permute.xlu0 %7723
  %7727 = vset.pattern.permute.xlu0 0
  %7728 = vperm.xlu0 %7727, %v7658
  %v7729 = vpop.permute.xlu0 %7728
  %7732 = vset.pattern.permute.xlu0 0
  %7733 = vperm.xlu0 %7732, %v7659
  %v7734 = vpop.permute.xlu0 %7733
  %7737 = vset.pattern.permute.xlu0 0
  %7738 = vperm.xlu0 %7737, %v7660
  %v7739 = vpop.permute.xlu0 %7738
  %v7741 = vmul.f32 %v7629, %v7664
  %v7742 = vmul.f32 %v7630, %v7669
  %v7743 = vmul.f32 %v7631, %v7674
  %v7744 = vmul.f32 %v7632, %v7679
  %v7745 = vmul.f32 %v7633, %v7684
  %v7746 = vmul.f32 %v7634, %v7689
  %v7747 = vmul.f32 %v7635, %v7694
  %v7748 = vmul.f32 %v7636, %v7699
  %v7749 = vmul.f32 %v7637, %v7704
  %v7750 = vmul.f32 %v7638, %v7709
  %v7751 = vmul.f32 %v7639, %v7714
  %v7752 = vmul.f32 %v7640, %v7719
  %v7753 = vmul.f32 %v7641, %v7724
  %v7754 = vmul.f32 %v7642, %v7729
  %v7755 = vmul.f32 %v7643, %v7734
  %v7756 = vmul.f32 %v7644, %v7739
  %v7757 = vadd.f32 %v7741, %v7742
  %v7758 = vadd.f32 %v7757, %v7743
  %v7759 = vadd.f32 %v7758, %v7744
  %v7760 = vadd.f32 %v7759, %v7745
  %v7761 = vadd.f32 %v7760, %v7746
  %v7762 = vadd.f32 %v7761, %v7747
  %v7763 = vadd.f32 %v7762, %v7748
  %v7764 = vadd.f32 %v7763, %v7749
  %v7765 = vadd.f32 %v7764, %v7750
  %v7766 = vadd.f32 %v7765, %v7751
  %v7767 = vadd.f32 %v7766, %v7752
  %v7768 = vadd.f32 %v7767, %v7753
  %v7769 = vadd.f32 %v7768, %v7754
  %v7770 = vadd.f32 %v7769, %v7755
  %v7771 = vadd.f32 %v7770, %v7756
  %v7772 = vrot.slane %v7771, 4
  %v7773 = vadd.f32 %v7771, %v7772
  %v7774 = vrot.slane %v7773, 2
  %v7775 = vadd.f32 %v7773, %v7774
  %v7776 = vrot.slane %v7775, 1
  %v7777 = vadd.f32 %v7775, %v7776
  %v7778 = vld [vmem:[%s2] sm:$0x1]
  %v7779 = vadd.f32 %v7778, %v6609
  %v7780 = vadd.f32 %v7779, %v7777
  %v7781 = vxor.u32 %v7780, 2147483648
  %v7782 = vmul.f32 %v7781, 1.442695
  %v7783 = vpow.pop %v7782
  %v7784 = vadd.f32 %v7783, 1.0
  %v7785 = vrcp.pop %v7784
  %v7786 = vmul.f32 1.0, %v7785
  %7787 = vst [vmem:[%s17] sm:$0x1] %v7786
  // Predicated region
  $region70: #{xdeepfm_forward.1} parent=0 // pred_check
    _
  $region71: #{xdeepfm_forward.1} parent=0 // pred_check_branch
    %7789 = sbr.rel (0) target = $region73
  $region72: #{xdeepfm_forward.1} parent=0 // pred_region
    _
  $region73: #{xdeepfm_forward.1} parent=0 // pred_fallthru
    _
  // Predicated region
  $region74: #{xdeepfm_forward.1} parent=0 // pred_check
    _
  $region75: #{xdeepfm_forward.1} parent=0 // pred_check_branch
    %7791 = sbr.rel (0) target = $region77
  $region76: #{xdeepfm_forward.1} parent=0 // pred_region
    _
  $region77: #{xdeepfm_forward.1} parent=0 // pred_fallthru
    _

</llo_original>
